<compile_context>
chip_gen: v7x
topology: tpu7x:2x2x1
jax: 0.10.0
libtpu: 0.0.40
codegen_flags: <defaults>
</compile_context>

<pallas_src>
import jax
import jax.numpy as jnp
import numpy as np
from jax import lax
from jax.experimental import pallas as pl
from jax.experimental.pallas import tpu as pltpu


# ----------------------------------------------------------------------------
# Kernel 1: conv1 (1->32, 5x5, VALID) + ReLU, in-kernel im2col via banded weights
#   x block : (1, 28, 28)          one image
#   wb block: (5, 28, 768)         banded weight, row r / col (ow*32+co)
#   out     : (1, 24, 768)         lane-dense (oh, ow*32+co)
# ----------------------------------------------------------------------------
def _conv1_kernel(x_ref, wb_ref, b_ref, o_ref):
    acc = jnp.zeros((24, 768), jnp.float32)
    for di in range(5):                       # static unroll over kernel rows
        acc += jnp.dot(x_ref[0, di:di + 24, :], wb_ref[di],
                       preferred_element_type=jnp.float32)
    o_ref[0] = jnp.maximum(acc + b_ref[...], 0.0)


def conv1_relu(x_img, wb1, b1t):
    N = x_img.shape[0]
    return pl.pallas_call(
        _conv1_kernel,
        out_shape=jax.ShapeDtypeStruct((N, 24, 768), jnp.float32),
        grid=(N,),
        in_specs=[
            pl.BlockSpec((1, 28, 28), lambda i: (i, 0, 0)),
            pl.BlockSpec((5, 28, 768), lambda i: (0, 0, 0)),
            pl.BlockSpec((1, 768), lambda i: (0, 0)),
        ],
        out_specs=pl.BlockSpec((1, 24, 768), lambda i: (i, 0, 0)),
        compiler_params=pltpu.CompilerParams(
            dimension_semantics=("parallel",)),
    )(x_img, wb1, b1t)


# ----------------------------------------------------------------------------
# Kernel 2: conv2 (32->64, 5x5, VALID) + ReLU + 2x2 max-pool, fused.
#   p block : (1, 4, 100, 800)   im2col rows grouped by pooling phase
#   w       : (800, 64),  b: (1, 64)
#   out     : (1, 100, 64)       pooled rows (ph*10+pw), channels in lanes
# max_pool(relu(conv+b)) == relu(max_g(conv_g) + b)  (relu(.+b) is monotone).
# ----------------------------------------------------------------------------
def _conv2_pool_kernel(p_ref, w_ref, b_ref, o_ref):
    w = w_ref[...]
    m = jnp.dot(p_ref[0, 0], w, preferred_element_type=jnp.float32)
    for g in range(1, 4):
        m = jnp.maximum(m, jnp.dot(p_ref[0, g], w,
                                   preferred_element_type=jnp.float32))
    o_ref[0] = jnp.maximum(m + b_ref[...], 0.0)


def conv2_relu_pool(p2, w2m, b2m):
    N = p2.shape[0]
    return pl.pallas_call(
        _conv2_pool_kernel,
        out_shape=jax.ShapeDtypeStruct((N, 100, 64), jnp.float32),
        grid=(N,),
        in_specs=[
            pl.BlockSpec((1, 4, 100, 800), lambda i: (i, 0, 0, 0)),
            pl.BlockSpec((800, 64), lambda i: (0, 0)),
            pl.BlockSpec((1, 64), lambda i: (0, 0)),
        ],
        out_specs=pl.BlockSpec((1, 100, 64), lambda i: (i, 0, 0)),
        compiler_params=pltpu.CompilerParams(
            dimension_semantics=("parallel",),
            vmem_limit_bytes=32 * 1024 * 1024),
    )(p2, w2m, b2m)


# ----------------------------------------------------------------------------
# Kernel 3: fc1 + ReLU + fc2 + log_softmax, fused (full-K, M-tiled batch).
# fw2/fb2 are padded to 128 columns (pad bias = -1e30) for a lane-dense store;
# the wrapper slices back to 10 classes.
# ----------------------------------------------------------------------------
def _fc_fused_kernel(x_ref, w1_ref, b1_ref, w2_ref, b2_ref, o_ref):
    h = jnp.dot(x_ref[...], w1_ref[...],
                preferred_element_type=jnp.float32) + b1_ref[...]
    h = jnp.maximum(h, 0.0)
    logits = jnp.dot(h, w2_ref[...],
                     preferred_element_type=jnp.float32) + b2_ref[...]
    m = jnp.max(logits, axis=-1, keepdims=True)
    s = logits - m
    lse = jnp.log(jnp.sum(jnp.exp(s), axis=-1, keepdims=True))
    o_ref[...] = s - lse


def fc_fused(x, fw1p, fb1m, fw2p, fb2p):
    M, K = x.shape
    tm = 128 if (M % 128 == 0) else M          # M-tile when batch allows
    return pl.pallas_call(
        _fc_fused_kernel,
        out_shape=jax.ShapeDtypeStruct((M, 128), jnp.float32),
        grid=(M // tm,),
        in_specs=[
            pl.BlockSpec((tm, K), lambda i: (i, 0)),
            pl.BlockSpec((K, 128), lambda i: (0, 0)),
            pl.BlockSpec((1, 128), lambda i: (0, 0)),
            pl.BlockSpec((128, 128), lambda i: (0, 0)),
            pl.BlockSpec((1, 128), lambda i: (0, 0)),
        ],
        out_specs=pl.BlockSpec((tm, 128), lambda i: (i, 0)),
        compiler_params=pltpu.CompilerParams(
            dimension_semantics=("parallel",),
            vmem_limit_bytes=48 * 1024 * 1024),
    )(x, fw1p, fb1m, fw2p, fb2p)


# ----------------------------------------------------------------------------
# Forward pass
# ----------------------------------------------------------------------------
def net_forward(x_nchw, params):
    w1, b1, w2, b2, fw1, fb1, fw2, fb2 = params
    N = x_nchw.shape[0]
    f32 = jnp.float32

    # ---- parameter preprocessing (tiny; conceptually done at load time) ----
    # conv1 banded weight: Wb[di, r, ow*32+co] = w1[di, r-ow, 0, co] (band of 5)
    r = jnp.arange(28)[:, None, None]
    owj = jnp.arange(24)[None, :, None] + jnp.arange(5)[None, None, :]
    sel = (r == owj).astype(f32)                              # (28, 24, 5)
    wb1 = jnp.einsum('rwj,ijc->irwc', sel, w1[:, :, 0, :]).reshape(5, 28, 768)
    b1t = jnp.tile(b1, 24).reshape(1, 768)                    # bias per (ow,co)

    w2m = w2.reshape(800, 64)
    b2m = b2.reshape(1, 64)

    # fold the NCHW->NHWC flatten permutation into fw1's rows
    fw1p = fw1.reshape(64, 10, 10, 128).transpose(1, 2, 0, 3).reshape(6400, 128)
    fb1m = fb1.reshape(1, 128)

    # pad fc2 to 128 lane-dense output columns; pad logits get bias -1e30
    fw2p = jnp.zeros((128, 128), f32).at[:, :10].set(fw2)
    fb2p = jnp.full((1, 128), -1e30, f32).at[0, :10].set(fb2)

    # ---- conv1 + ReLU (in-kernel im2col) ----
    y1 = conv1_relu(x_nchw[:, 0, :, :], wb1, b1t)             # (N, 24, 768)

    # ---- XLA glue: im2col for conv2, rows grouped by pooling phase ----
    y1_nhwc = y1.reshape(N, 24, 24, 32)
    cols = [y1_nhwc[:, di:di + 20, dj:dj + 20, :]
            for di in range(5) for dj in range(5)]
    patches = jnp.concatenate(cols, axis=-1)                  # (N, 20, 20, 800)
    p2 = (patches.reshape(N, 10, 2, 10, 2, 800)
          .transpose(0, 2, 4, 1, 3, 5)
          .reshape(N, 4, 100, 800))                           # groups x (ph,pw)

    # ---- conv2 + ReLU + 2x2 max-pool (fused) ----
    pooled = conv2_relu_pool(p2, w2m, b2m)                    # (N, 100, 64)

    # dropout1 / dropout2: identity (eval mode)

    # ---- fc1 + ReLU + fc2 + log_softmax (fused) ----
    flat = pooled.reshape(N, 6400)            # NHWC flatten; fw1 rows permuted
    out = fc_fused(flat, fw1p, fb1m, fw2p, fb2p)              # (N, 128)
    return out[:, :10]


# ----------------------------------------------------------------------------
# Pure-JAX reference (for correctness check)
# ----------------------------------------------------------------------------
def net_forward_ref(x_nchw, params):
    w1, b1, w2, b2, fw1, fb1, fw2, fb2 = params
    w1_oihw = jnp.transpose(w1, (3, 2, 0, 1))
    w2_oihw = jnp.transpose(w2, (3, 2, 0, 1))
    dn = ("NCHW", "OIHW", "NCHW")
    y = lax.conv_general_dilated(x_nchw, w1_oihw, (1, 1), "VALID",
                                 dimension_numbers=dn)
    y = jax.nn.relu(y + b1[None, :, None, None])
    y = lax.conv_general_dilated(y, w2_oihw, (1, 1), "VALID",
                                 dimension_numbers=dn)
    y = jax.nn.relu(y + b2[None, :, None, None])
    y = lax.reduce_window(y, -jnp.inf, lax.max,
                          (1, 1, 2, 2), (1, 1, 2, 2), "VALID")
    y = y.reshape(y.shape[0], -1)
    y = jax.nn.relu(y @ fw1 + fb1)
    y = y @ fw2 + fb2
    return jax.nn.log_softmax(y, axis=1)


if __name__ == "__main__":
    key = jax.random.PRNGKey(0)
    ks = jax.random.split(key, 9)
    # Deterministic synthetic parameters (shapes from Net.__init__; conv
    # weights stored HWIO, equivalent to PyTorch OIHW up to a transpose).
    w1 = jax.random.normal(ks[0], (5, 5, 1, 32), jnp.float32) * 0.10
    b1 = jax.random.normal(ks[1], (32,), jnp.float32) * 0.01
    w2 = jax.random.normal(ks[2], (5, 5, 32, 64), jnp.float32) * 0.05
    b2 = jax.random.normal(ks[3], (64,), jnp.float32) * 0.01
    fw1 = jax.random.normal(ks[4], (6400, 128), jnp.float32) * 0.01
    fb1 = jax.random.normal(ks[5], (128,), jnp.float32) * 0.01
    fw2 = jax.random.normal(ks[6], (128, 10), jnp.float32) * 0.05
    fb2 = jax.random.normal(ks[7], (10,), jnp.float32) * 0.01
    params = (w1, b1, w2, b2, fw1, fb1, fw2, fb2)

    # Spatial size must be 28x28 so fc1's 6400-input-feature contract holds.
    x = jax.random.normal(ks[8], (2, 1, 28, 28), jnp.float32)

    out = jax.block_until_ready(jax.jit(net_forward)(x, params))
    ref = jax.block_until_ready(net_forward_ref(x, params))

    assert out.shape == (2, 10), out.shape
    np.testing.assert_allclose(np.asarray(out), np.asarray(ref),
                               rtol=3e-4, atol=3e-4)
    print("KERNEL_OK")
</pallas_src>

<mosaic_0001>
module attributes {stable_mosaic.version = 11 : i64} {
  func.func @_conv1_kernel(%arg0: i32, %arg1: memref<1x28x28xf32, #tpu.memory_space<vmem>>, %arg2: memref<5x28x768xf32, #tpu.memory_space<vmem>>, %arg3: memref<1x768xf32, #tpu.memory_space<vmem>>, %arg4: memref<1x24x768xf32, #tpu.memory_space<vmem>>) attributes {dimension_semantics = [#tpu.dimension_semantics<parallel>], iteration_bounds = array<i64: 2>, scalar_prefetch = 0 : i64, scratch_operands = 0 : i64, tpu.core_type = #tpu.core_type<tc>, window_params = [{transform_indices = @transform_0, window_bounds = array<i64: 1, 28, 28>}, {pipeline_mode = #tpu.pipeline_mode<synchronous>, transform_indices = @transform_1, window_bounds = array<i64: 5, 28, 768>}, {pipeline_mode = #tpu.pipeline_mode<synchronous>, transform_indices = @transform_2, window_bounds = array<i64: 1, 768>}, {transform_indices = @transform_3, window_bounds = array<i64: 1, 24, 768>}]} {
    %cst = arith.constant 0.000000e+00 : f32
    %0 = vector.broadcast %cst : f32 to vector<24x768xf32>
    %c0 = arith.constant 0 : index
    %c0_0 = arith.constant 0 : index
    %c0_1 = arith.constant 0 : index
    %1 = vector.load %arg1[%c0, %c0_0, %c0_1] : memref<1x28x28xf32, #tpu.memory_space<vmem>>, vector<1x24x28xf32>
    %2 = vector.shape_cast %1 : vector<1x24x28xf32> to vector<24x28xf32>
    %c0_2 = arith.constant 0 : index
    %c0_3 = arith.constant 0 : index
    %c0_4 = arith.constant 0 : index
    %3 = vector.load %arg2[%c0_2, %c0_3, %c0_4] : memref<5x28x768xf32, #tpu.memory_space<vmem>>, vector<1x28x768xf32>
    %4 = vector.shape_cast %3 : vector<1x28x768xf32> to vector<28x768xf32>
    %cst_5 = arith.constant dense<0.000000e+00> : vector<24x768xf32>
    %5 = tpu.matmul %2, %4, %cst_5 {dimension_numbers = #tpu.dot_dimension_numbers<[1], [0], [0], [1], [0, 0, 1, 1], [], []>} : vector<24x28xf32>, vector<28x768xf32>, vector<24x768xf32> -> vector<24x768xf32>
    %6 = arith.addf %0, %5 : vector<24x768xf32>
    %c0_6 = arith.constant 0 : index
    %c1 = arith.constant 1 : index
    %c0_7 = arith.constant 0 : index
    %7 = vector.load %arg1[%c0_6, %c1, %c0_7] : memref<1x28x28xf32, #tpu.memory_space<vmem>>, vector<1x24x28xf32>
    %8 = vector.shape_cast %7 : vector<1x24x28xf32> to vector<24x28xf32>
    %c1_8 = arith.constant 1 : index
    %c0_9 = arith.constant 0 : index
    %c0_10 = arith.constant 0 : index
    %9 = vector.load %arg2[%c1_8, %c0_9, %c0_10] : memref<5x28x768xf32, #tpu.memory_space<vmem>>, vector<1x28x768xf32>
    %10 = vector.shape_cast %9 : vector<1x28x768xf32> to vector<28x768xf32>
    %cst_11 = arith.constant dense<0.000000e+00> : vector<24x768xf32>
    %11 = tpu.matmul %8, %10, %cst_11 {dimension_numbers = #tpu.dot_dimension_numbers<[1], [0], [0], [1], [0, 0, 1, 1], [], []>} : vector<24x28xf32>, vector<28x768xf32>, vector<24x768xf32> -> vector<24x768xf32>
    %12 = arith.addf %6, %11 : vector<24x768xf32>
    %c0_12 = arith.constant 0 : index
    %c2 = arith.constant 2 : index
    %c0_13 = arith.constant 0 : index
    %13 = vector.load %arg1[%c0_12, %c2, %c0_13] : memref<1x28x28xf32, #tpu.memory_space<vmem>>, vector<1x24x28xf32>
    %14 = vector.shape_cast %13 : vector<1x24x28xf32> to vector<24x28xf32>
    %c2_14 = arith.constant 2 : index
    %c0_15 = arith.constant 0 : index
    %c0_16 = arith.constant 0 : index
    %15 = vector.load %arg2[%c2_14, %c0_15, %c0_16] : memref<5x28x768xf32, #tpu.memory_space<vmem>>, vector<1x28x768xf32>
    %16 = vector.shape_cast %15 : vector<1x28x768xf32> to vector<28x768xf32>
    %cst_17 = arith.constant dense<0.000000e+00> : vector<24x768xf32>
    %17 = tpu.matmul %14, %16, %cst_17 {dimension_numbers = #tpu.dot_dimension_numbers<[1], [0], [0], [1], [0, 0, 1, 1], [], []>} : vector<24x28xf32>, vector<28x768xf32>, vector<24x768xf32> -> vector<24x768xf32>
    %18 = arith.addf %12, %17 : vector<24x768xf32>
    %c0_18 = arith.constant 0 : index
    %c3 = arith.constant 3 : index
    %c0_19 = arith.constant 0 : index
    %19 = vector.load %arg1[%c0_18, %c3, %c0_19] : memref<1x28x28xf32, #tpu.memory_space<vmem>>, vector<1x24x28xf32>
    %20 = vector.shape_cast %19 : vector<1x24x28xf32> to vector<24x28xf32>
    %c3_20 = arith.constant 3 : index
    %c0_21 = arith.constant 0 : index
    %c0_22 = arith.constant 0 : index
    %21 = vector.load %arg2[%c3_20, %c0_21, %c0_22] : memref<5x28x768xf32, #tpu.memory_space<vmem>>, vector<1x28x768xf32>
    %22 = vector.shape_cast %21 : vector<1x28x768xf32> to vector<28x768xf32>
    %cst_23 = arith.constant dense<0.000000e+00> : vector<24x768xf32>
    %23 = tpu.matmul %20, %22, %cst_23 {dimension_numbers = #tpu.dot_dimension_numbers<[1], [0], [0], [1], [0, 0, 1, 1], [], []>} : vector<24x28xf32>, vector<28x768xf32>, vector<24x768xf32> -> vector<24x768xf32>
    %24 = arith.addf %18, %23 : vector<24x768xf32>
    %c0_24 = arith.constant 0 : index
    %c4 = arith.constant 4 : index
    %c0_25 = arith.constant 0 : index
    %25 = vector.load %arg1[%c0_24, %c4, %c0_25] : memref<1x28x28xf32, #tpu.memory_space<vmem>>, vector<1x24x28xf32>
    %26 = vector.shape_cast %25 : vector<1x24x28xf32> to vector<24x28xf32>
    %c4_26 = arith.constant 4 : index
    %c0_27 = arith.constant 0 : index
    %c0_28 = arith.constant 0 : index
    %27 = vector.load %arg2[%c4_26, %c0_27, %c0_28] : memref<5x28x768xf32, #tpu.memory_space<vmem>>, vector<1x28x768xf32>
    %28 = vector.shape_cast %27 : vector<1x28x768xf32> to vector<28x768xf32>
    %cst_29 = arith.constant dense<0.000000e+00> : vector<24x768xf32>
    %29 = tpu.matmul %26, %28, %cst_29 {dimension_numbers = #tpu.dot_dimension_numbers<[1], [0], [0], [1], [0, 0, 1, 1], [], []>} : vector<24x28xf32>, vector<28x768xf32>, vector<24x768xf32> -> vector<24x768xf32>
    %30 = arith.addf %24, %29 : vector<24x768xf32>
    %c0_30 = arith.constant 0 : index
    %c0_31 = arith.constant 0 : index
    %31 = vector.load %arg3[%c0_30, %c0_31] : memref<1x768xf32, #tpu.memory_space<vmem>>, vector<1x768xf32>
    %32 = vector.broadcast %31 : vector<1x768xf32> to vector<24x768xf32>
    %33 = arith.addf %30, %32 : vector<24x768xf32>
    %cst_32 = arith.constant 0.000000e+00 : f32
    %34 = vector.broadcast %cst_32 : f32 to vector<24x768xf32>
    %35 = arith.maximumf %33, %34 : vector<24x768xf32>
    %c0_33 = arith.constant 0 : index
    %c0_34 = arith.constant 0 : index
    %c0_35 = arith.constant 0 : index
    %36 = vector.load %arg4[%c0_33, %c0_34, %c0_35] : memref<1x24x768xf32, #tpu.memory_space<vmem>>, vector<1x24x768xf32>
    %37 = vector.shape_cast %36 : vector<1x24x768xf32> to vector<24x768xf32>
    %38 = vector.shape_cast %35 : vector<24x768xf32> to vector<1x24x768xf32>
    tpu.vector_store %arg4[%c0_33, %c0_34, %c0_35], %38 {strides = array<i32>} : memref<1x24x768xf32, #tpu.memory_space<vmem>>, vector<1x24x768xf32>,
    return
  }
  func.func @transform_0(%arg0: i32) -> (i32, i32, i32) {
    %c0_i32 = arith.constant 0 : i32
    %c0_i32_0 = arith.constant 0 : i32
    %c0_i32_1 = arith.constant 0 : i32
    return %arg0, %c0_i32, %c0_i32_0 : i32, i32, i32
  }
  func.func @transform_1(%arg0: i32) -> (i32, i32, i32) {
    %c0_i32 = arith.constant 0 : i32
    %c0_i32_0 = arith.constant 0 : i32
    %c0_i32_1 = arith.constant 0 : i32
    %c0_i32_2 = arith.constant 0 : i32
    return %c0_i32, %c0_i32_0, %c0_i32_1 : i32, i32, i32
  }
  func.func @transform_2(%arg0: i32) -> (i32, i32) {
    %c0_i32 = arith.constant 0 : i32
    %c0_i32_0 = arith.constant 0 : i32
    %c0_i32_1 = arith.constant 0 : i32
    return %c0_i32, %c0_i32_0 : i32, i32
  }
  func.func @transform_3(%arg0: i32) -> (i32, i32, i32) {
    %c0_i32 = arith.constant 0 : i32
    %c0_i32_0 = arith.constant 0 : i32
    %c0_i32_1 = arith.constant 0 : i32
    return %arg0, %c0_i32, %c0_i32_0 : i32, i32, i32
  }
}

module attributes {stable_mosaic.version = 11 : i64} {
  func.func @_conv2_pool_kernel(%arg0: i32, %arg1: memref<1x4x100x800xf32, #tpu.memory_space<vmem>>, %arg2: memref<800x64xf32, #tpu.memory_space<vmem>>, %arg3: memref<1x64xf32, #tpu.memory_space<vmem>>, %arg4: memref<1x100x64xf32, #tpu.memory_space<vmem>>) attributes {dimension_semantics = [#tpu.dimension_semantics<parallel>], iteration_bounds = array<i64: 2>, scalar_prefetch = 0 : i64, scratch_operands = 0 : i64, tpu.core_type = #tpu.core_type<tc>, window_params = [{transform_indices = @transform_0, window_bounds = array<i64: 1, 4, 100, 800>}, {pipeline_mode = #tpu.pipeline_mode<synchronous>, transform_indices = @transform_1, window_bounds = array<i64: 800, 64>}, {pipeline_mode = #tpu.pipeline_mode<synchronous>, transform_indices = @transform_2, window_bounds = array<i64: 1, 64>}, {transform_indices = @transform_3, window_bounds = array<i64: 1, 100, 64>}]} {
    %c0 = arith.constant 0 : index
    %c0_0 = arith.constant 0 : index
    %0 = vector.load %arg2[%c0, %c0_0] : memref<800x64xf32, #tpu.memory_space<vmem>>, vector<800x64xf32>
    %c0_1 = arith.constant 0 : index
    %c0_2 = arith.constant 0 : index
    %c0_3 = arith.constant 0 : index
    %c0_4 = arith.constant 0 : index
    %1 = vector.load %arg1[%c0_1, %c0_2, %c0_3, %c0_4] : memref<1x4x100x800xf32, #tpu.memory_space<vmem>>, vector<1x1x100x800xf32>
    %2 = vector.shape_cast %1 : vector<1x1x100x800xf32> to vector<100x800xf32>
    %cst = arith.constant dense<0.000000e+00> : vector<100x64xf32>
    %3 = tpu.matmul %2, %0, %cst {dimension_numbers = #tpu.dot_dimension_numbers<[1], [0], [0], [1], [0, 0, 1, 1], [], []>} : vector<100x800xf32>, vector<800x64xf32>, vector<100x64xf32> -> vector<100x64xf32>
    %c0_5 = arith.constant 0 : index
    %c1 = arith.constant 1 : index
    %c0_6 = arith.constant 0 : index
    %c0_7 = arith.constant 0 : index
    %4 = vector.load %arg1[%c0_5, %c1, %c0_6, %c0_7] : memref<1x4x100x800xf32, #tpu.memory_space<vmem>>, vector<1x1x100x800xf32>
    %5 = vector.shape_cast %4 : vector<1x1x100x800xf32> to vector<100x800xf32>
    %cst_8 = arith.constant dense<0.000000e+00> : vector<100x64xf32>
    %6 = tpu.matmul %5, %0, %cst_8 {dimension_numbers = #tpu.dot_dimension_numbers<[1], [0], [0], [1], [0, 0, 1, 1], [], []>} : vector<100x800xf32>, vector<800x64xf32>, vector<100x64xf32> -> vector<100x64xf32>
    %7 = arith.maximumf %3, %6 : vector<100x64xf32>
    %c0_9 = arith.constant 0 : index
    %c2 = arith.constant 2 : index
    %c0_10 = arith.constant 0 : index
    %c0_11 = arith.constant 0 : index
    %8 = vector.load %arg1[%c0_9, %c2, %c0_10, %c0_11] : memref<1x4x100x800xf32, #tpu.memory_space<vmem>>, vector<1x1x100x800xf32>
    %9 = vector.shape_cast %8 : vector<1x1x100x800xf32> to vector<100x800xf32>
    %cst_12 = arith.constant dense<0.000000e+00> : vector<100x64xf32>
    %10 = tpu.matmul %9, %0, %cst_12 {dimension_numbers = #tpu.dot_dimension_numbers<[1], [0], [0], [1], [0, 0, 1, 1], [], []>} : vector<100x800xf32>, vector<800x64xf32>, vector<100x64xf32> -> vector<100x64xf32>
    %11 = arith.maximumf %7, %10 : vector<100x64xf32>
    %c0_13 = arith.constant 0 : index
    %c3 = arith.constant 3 : index
    %c0_14 = arith.constant 0 : index
    %c0_15 = arith.constant 0 : index
    %12 = vector.load %arg1[%c0_13, %c3, %c0_14, %c0_15] : memref<1x4x100x800xf32, #tpu.memory_space<vmem>>, vector<1x1x100x800xf32>
    %13 = vector.shape_cast %12 : vector<1x1x100x800xf32> to vector<100x800xf32>
    %cst_16 = arith.constant dense<0.000000e+00> : vector<100x64xf32>
    %14 = tpu.matmul %13, %0, %cst_16 {dimension_numbers = #tpu.dot_dimension_numbers<[1], [0], [0], [1], [0, 0, 1, 1], [], []>} : vector<100x800xf32>, vector<800x64xf32>, vector<100x64xf32> -> vector<100x64xf32>
    %15 = arith.maximumf %11, %14 : vector<100x64xf32>
    %c0_17 = arith.constant 0 : index
    %c0_18 = arith.constant 0 : index
    %16 = vector.load %arg3[%c0_17, %c0_18] : memref<1x64xf32, #tpu.memory_space<vmem>>, vector<1x64xf32>
    %17 = vector.broadcast %16 : vector<1x64xf32> to vector<100x64xf32>
    %18 = arith.addf %15, %17 : vector<100x64xf32>
    %cst_19 = arith.constant 0.000000e+00 : f32
    %19 = vector.broadcast %cst_19 : f32 to vector<100x64xf32>
    %20 = arith.maximumf %18, %19 : vector<100x64xf32>
    %c0_20 = arith.constant 0 : index
    %c0_21 = arith.constant 0 : index
    %c0_22 = arith.constant 0 : index
    %21 = vector.load %arg4[%c0_20, %c0_21, %c0_22] : memref<1x100x64xf32, #tpu.memory_space<vmem>>, vector<1x100x64xf32>
    %22 = vector.shape_cast %21 : vector<1x100x64xf32> to vector<100x64xf32>
    %23 = vector.shape_cast %20 : vector<100x64xf32> to vector<1x100x64xf32>
    tpu.vector_store %arg4[%c0_20, %c0_21, %c0_22], %23 {strides = array<i32>} : memref<1x100x64xf32, #tpu.memory_space<vmem>>, vector<1x100x64xf32>,
    return
  }
  func.func @transform_0(%arg0: i32) -> (i32, i32, i32, i32) {
    %c0_i32 = arith.constant 0 : i32
    %c0_i32_0 = arith.constant 0 : i32
    %c0_i32_1 = arith.constant 0 : i32
    %c0_i32_2 = arith.constant 0 : i32
    return %arg0, %c0_i32, %c0_i32_0, %c0_i32_1 : i32, i32, i32, i32
  }
  func.func @transform_1(%arg0: i32) -> (i32, i32) {
    %c0_i32 = arith.constant 0 : i32
    %c0_i32_0 = arith.constant 0 : i32
    %c0_i32_1 = arith.constant 0 : i32
    return %c0_i32, %c0_i32_0 : i32, i32
  }
  func.func @transform_2(%arg0: i32) -> (i32, i32) {
    %c0_i32 = arith.constant 0 : i32
    %c0_i32_0 = arith.constant 0 : i32
    %c0_i32_1 = arith.constant 0 : i32
    return %c0_i32, %c0_i32_0 : i32, i32
  }
  func.func @transform_3(%arg0: i32) -> (i32, i32, i32) {
    %c0_i32 = arith.constant 0 : i32
    %c0_i32_0 = arith.constant 0 : i32
    %c0_i32_1 = arith.constant 0 : i32
    return %arg0, %c0_i32, %c0_i32_0 : i32, i32, i32
  }
}

module attributes {stable_mosaic.version = 11 : i64} {
  func.func @_fc_fused_kernel(%arg0: i32, %arg1: memref<2x6400xf32, #tpu.memory_space<vmem>>, %arg2: memref<6400x128xf32, #tpu.memory_space<vmem>>, %arg3: memref<1x128xf32, #tpu.memory_space<vmem>>, %arg4: memref<128x128xf32, #tpu.memory_space<vmem>>, %arg5: memref<1x128xf32, #tpu.memory_space<vmem>>, %arg6: memref<2x128xf32, #tpu.memory_space<vmem>>) attributes {dimension_semantics = [#tpu.dimension_semantics<parallel>], iteration_bounds = array<i64: 1>, scalar_prefetch = 0 : i64, scratch_operands = 0 : i64, tpu.core_type = #tpu.core_type<tc>, window_params = [{transform_indices = @transform_0, window_bounds = array<i64: 2, 6400>}, {pipeline_mode = #tpu.pipeline_mode<synchronous>, transform_indices = @transform_1, window_bounds = array<i64: 6400, 128>}, {pipeline_mode = #tpu.pipeline_mode<synchronous>, transform_indices = @transform_2, window_bounds = array<i64: 1, 128>}, {pipeline_mode = #tpu.pipeline_mode<synchronous>, transform_indices = @transform_3, window_bounds = array<i64: 128, 128>}, {pipeline_mode = #tpu.pipeline_mode<synchronous>, transform_indices = @transform_4, window_bounds = array<i64: 1, 128>}, {transform_indices = @transform_5, window_bounds = array<i64: 2, 128>}]} {
    %c0 = arith.constant 0 : index
    %c0_0 = arith.constant 0 : index
    %0 = vector.load %arg1[%c0, %c0_0] : memref<2x6400xf32, #tpu.memory_space<vmem>>, vector<2x6400xf32>
    %c0_1 = arith.constant 0 : index
    %c0_2 = arith.constant 0 : index
    %1 = vector.load %arg2[%c0_1, %c0_2] : memref<6400x128xf32, #tpu.memory_space<vmem>>, vector<6400x128xf32>
    %cst = arith.constant dense<0.000000e+00> : vector<2x128xf32>
    %2 = tpu.matmul %0, %1, %cst {dimension_numbers = #tpu.dot_dimension_numbers<[1], [0], [0], [1], [0, 0, 1, 1], [], []>} : vector<2x6400xf32>, vector<6400x128xf32>, vector<2x128xf32> -> vector<2x128xf32>
    %c0_3 = arith.constant 0 : index
    %c0_4 = arith.constant 0 : index
    %3 = vector.load %arg3[%c0_3, %c0_4] : memref<1x128xf32, #tpu.memory_space<vmem>>, vector<1x128xf32>
    %4 = vector.broadcast %3 : vector<1x128xf32> to vector<2x128xf32>
    %5 = arith.addf %2, %4 : vector<2x128xf32>
    %cst_5 = arith.constant 0.000000e+00 : f32
    %6 = vector.broadcast %cst_5 : f32 to vector<2x128xf32>
    %7 = arith.maximumf %5, %6 : vector<2x128xf32>
    %c0_6 = arith.constant 0 : index
    %c0_7 = arith.constant 0 : index
    %8 = vector.load %arg4[%c0_6, %c0_7] : memref<128x128xf32, #tpu.memory_space<vmem>>, vector<128x128xf32>
    %cst_8 = arith.constant dense<0.000000e+00> : vector<2x128xf32>
    %9 = tpu.matmul %7, %8, %cst_8 {dimension_numbers = #tpu.dot_dimension_numbers<[1], [0], [0], [1], [0, 0, 1, 1], [], []>} : vector<2x128xf32>, vector<128x128xf32>, vector<2x128xf32> -> vector<2x128xf32>
    %c0_9 = arith.constant 0 : index
    %c0_10 = arith.constant 0 : index
    %10 = vector.load %arg5[%c0_9, %c0_10] : memref<1x128xf32, #tpu.memory_space<vmem>>, vector<1x128xf32>
    %11 = vector.broadcast %10 : vector<1x128xf32> to vector<2x128xf32>
    %12 = arith.addf %9, %11 : vector<2x128xf32>
    %cst_11 = arith.constant dense<0xFF800000> : vector<2xf32>
    %13 = vector.multi_reduction <maximumf>, %12, %cst_11 [1] : vector<2x128xf32> to vector<2xf32>
    %14 = vector.shape_cast %13 : vector<2xf32> to vector<2x1xf32>
    %15 = vector.broadcast %14 : vector<2x1xf32> to vector<2x128xf32>
    %16 = arith.subf %12, %15 : vector<2x128xf32>
    %17 = math.exp %16 : vector<2x128xf32>
    %cst_12 = arith.constant dense<0.000000e+00> : vector<2xf32>
    %18 = vector.multi_reduction <add>, %17, %cst_12 [1] : vector<2x128xf32> to vector<2xf32>
    %19 = vector.shape_cast %18 : vector<2xf32> to vector<2x1xf32>
    %20 = math.log %19 : vector<2x1xf32>
    %21 = vector.broadcast %20 : vector<2x1xf32> to vector<2x128xf32>
    %22 = arith.subf %16, %21 : vector<2x128xf32>
    %c0_13 = arith.constant 0 : index
    %c0_14 = arith.constant 0 : index
    %23 = vector.load %arg6[%c0_13, %c0_14] : memref<2x128xf32, #tpu.memory_space<vmem>>, vector<2x128xf32>
    tpu.vector_store %arg6[%c0_13, %c0_14], %22 {strides = array<i32>} : memref<2x128xf32, #tpu.memory_space<vmem>>, vector<2x128xf32>,
    return
  }
  func.func @transform_0(%arg0: i32) -> (i32, i32) {
    %c0_i32 = arith.constant 0 : i32
    %c0_i32_0 = arith.constant 0 : i32
    return %arg0, %c0_i32 : i32, i32
  }
  func.func @transform_1(%arg0: i32) -> (i32, i32) {
    %c0_i32 = arith.constant 0 : i32
    %c0_i32_0 = arith.constant 0 : i32
    %c0_i32_1 = arith.constant 0 : i32
    return %c0_i32, %c0_i32_0 : i32, i32
  }
  func.func @transform_2(%arg0: i32) -> (i32, i32) {
    %c0_i32 = arith.constant 0 : i32
    %c0_i32_0 = arith.constant 0 : i32
    %c0_i32_1 = arith.constant 0 : i32
    return %c0_i32, %c0_i32_0 : i32, i32
  }
  func.func @transform_3(%arg0: i32) -> (i32, i32) {
    %c0_i32 = arith.constant 0 : i32
    %c0_i32_0 = arith.constant 0 : i32
    %c0_i32_1 = arith.constant 0 : i32
    return %c0_i32, %c0_i32_0 : i32, i32
  }
  func.func @transform_4(%arg0: i32) -> (i32, i32) {
    %c0_i32 = arith.constant 0 : i32
    %c0_i32_0 = arith.constant 0 : i32
    %c0_i32_1 = arith.constant 0 : i32
    return %c0_i32, %c0_i32_0 : i32, i32
  }
  func.func @transform_5(%arg0: i32) -> (i32, i32) {
    %c0_i32 = arith.constant 0 : i32
    %c0_i32_0 = arith.constant 0 : i32
    return %arg0, %c0_i32 : i32, i32
  }
}

</mosaic_0001>

<llo_original>
// kernel: tile.8
$region0: #{tile.8}
  #allocation0 [shape = 's32[1]{0}', space=sflag, size = 0x4, scoped, tag = 'scoped memory for tile.8']
  %s0 = inlined_call_operand.vmem [shape: f32[32], index: 0, kind: input, shape index: {}]
  %s1 = inlined_call_operand.vmem [shape: f32[24,32], index: 1, kind: output, shape index: {}]
  // Predicated region
  $region2: #{tile.8} parent=0 // pred_check
    _
  $region3: #{tile.8} parent=0 // pred_check_branch
    %3 = sbr.rel (0) target = $region5
  $region4: #{tile.8} parent=0 // pred_region
    _
  $region5: #{tile.8} parent=0 // pred_fallthru
    _
  %v4 = vld [vmem:[%s0] ss:$0 sm:$0xff]
  %5 = vst [vmem:[%s1] sm:$0xff] %v4
  %s6 = scalar_lea.vmem %s1, 8
  %7 = vst [vmem:[%s6] sm:$0xff] %v4
  %s8 = scalar_lea.vmem %s1, 16
  %9 = vst [vmem:[%s8] sm:$0xff] %v4

// kernel: tile.9
$region0: #{tile.9}
  %s0 = inlined_call_operand.vmem [shape: f32[24,32], index: 0, kind: input, shape index: {}]
  %s1 = inlined_call_operand.vmem [shape: f32[1,768], index: 1, kind: output, shape index: {}]
  $region1: #{tile.9} parent=0
    #allocation0 [shape = 'u8[24576]{0}', space=vmem, size = 0x6000, scoped, tag = 'scoped mem for output reshape']
    %v2 = vld [vmem:[%s0] ss:$4 sm:$0x3f]
    %vm3 = vcmask 261120
    %4 = vst.msk [vmem:[#allocation0] ss:$8 sm:$0xf] %vm3, %v2
    %5 = vst.msk [vmem:[#allocation0] ss:$8 sm:$0x30] %vm3, %v2
    %s6 = scalar_lea.vmem %s0, 3
    %v7 = vld [vmem:[%s6] ss:$4 sm:$0x3f]
    %8 = vrot.lane.b32.xlu0 %v7, 96
    %v9 = vpop.permute.xlu0 %8
    %vm10 = vcmask 1048320
    %11 = vst.msk [vmem:[#allocation0] ss:$8 sm:$0xf] %vm10, %v9
    %12 = vst.msk [vmem:[#allocation0] ss:$8 sm:$0x30] %vm10, %v9
    %s13 = scalar_lea.vmem %s0, 2
    %v14 = vld [vmem:[%s13] ss:$4 sm:$0x3f]
    %15 = vrot.lane.b32.xlu0 %v14, 64
    %v16 = vpop.permute.xlu0 %15
    %vm17 = vcmask 785920
    %18 = vst.msk [vmem:[#allocation0] ss:$8 sm:$0xf] %vm17, %v16
    %19 = vst.msk [vmem:[#allocation0] ss:$8 sm:$0x30] %vm17, %v16
    %s20 = scalar_lea.vmem %s0, 1
    %v21 = vld [vmem:[%s20] ss:$4 sm:$0x3f]
    %22 = vrot.lane.b32.xlu0 %v21, 32
    %v23 = vpop.permute.xlu0 %22
    %vm24 = vcmask 523520
    %25 = vst.msk [vmem:[#allocation0] ss:$8 sm:$0xf] %vm24, %v23
    %26 = vst.msk [vmem:[#allocation0] ss:$8 sm:$0x30] %vm24, %v23
    %s28 = sshllo.u32 0, 1
    %v30 = vld [vmem:[#allocation0] sm:%s28]
    %s31 = sshllo.u32 0, 1
    %32 = vst [vmem:[%s1] sm:%s31] %v30
    %s33 = scalar_lea.vmem [#allocation0], 8
    %v34 = vld [vmem:[%s33] sm:%s28]
    %s35 = sshllo.u32 0, 1
    %s36 = scalar_lea.vmem %s1, 1
    %37 = vst [vmem:[%s36] sm:%s35] %v34
    %s38 = scalar_lea.vmem [#allocation0], 16
    %v39 = vld [vmem:[%s38] sm:%s28]
    %s40 = sshllo.u32 0, 1
    %s41 = smul.addr 1, 2
    %s42 = scalar_lea.vmem %s1, %s41
    %43 = vst [vmem:[%s42] sm:%s40] %v39
    %s44 = scalar_lea.vmem [#allocation0], 24
    %v45 = vld [vmem:[%s44] sm:%s28]
    %s46 = sshllo.u32 0, 1
    %s47 = smul.addr 1, 3
    %s48 = scalar_lea.vmem %s1, %s47
    %49 = vst [vmem:[%s48] sm:%s46] %v45
    %s50 = scalar_lea.vmem [#allocation0], 32
    %v51 = vld [vmem:[%s50] sm:%s28]
    %s52 = sshllo.u32 0, 1
    %s53 = smul.addr 1, 4
    %s54 = scalar_lea.vmem %s1, %s53
    %55 = vst [vmem:[%s54] sm:%s52] %v51
    %s56 = scalar_lea.vmem [#allocation0], 40
    %v57 = vld [vmem:[%s56] sm:%s28]
    %s58 = sshllo.u32 0, 1
    %s59 = smul.addr 1, 5
    %s60 = scalar_lea.vmem %s1, %s59
    %61 = vst [vmem:[%s60] sm:%s58] %v57

// kernel: net_forward.3
$region0: #{net_forward.3}
  #allocation0 [shape = 'u32[]', space=smem, size = 0x4, offset = 0x4, fixed_abs, tag = 'smem constant byte address 0x4 - core index']
  #allocation1 [shape = 'u32[144,128]{1,0:T(1,128)}', space=vmem, size = 0x12000, scoped, tag = 'internal scratch']
  %s0 = inlined_call_operand.vmem [shape: f32[2,28,28], index: 0, kind: input, shape index: {}]
  %s1 = inlined_call_operand.vmem [shape: f32[5,28,768], index: 1, kind: input, shape index: {}]
  %s2 = inlined_call_operand.vmem [shape: f32[1,768], index: 2, kind: input, shape index: {}]
  %s3 = inlined_call_operand.vmem [shape: f32[2,24,768], index: 3, kind: output, shape index: {}]
  %s4 = sld [smem:[#allocation0]]
  $region45: #{net_forward.3} parent=0
    _
  %s6 = ssub.s32 1, %s4
  %s7 = scalar_select 0, %s6, %s4
  loop: start=0, step=1, limit=4
  $region2: #{net_forward.3} parent=0 // loop_pre_header
    _
  $region3: #{net_forward.3} parent=0 // loop_header
    %s9 = sphi 0, %s13
    %p10 = scmp.ge.s32.totalorder %s9, 4
    %s19 = sphi 0, %s21
    %s22 = sphi 0, %s19
    %s23 = sphi 0, %s22
    %s39 = sphi 0, %s23
    %s43 = sphi 0, %s43
    %s45 = sphi 0, %s43
    %s46 = sphi 0, %s45
    %s60 = sphi 0, %s46
    %s64 = sphi 0, %s64
    %s66 = sphi 0, %s64
    %s67 = sphi 0, %s66
    %s81 = sphi 0, %s67
    %s87 = sphi 0, %s89
    %s90 = sphi 0, %s87
    %s91 = sphi 0, %s90
    %s107 = sphi 0, %s91
  $region4: #{net_forward.3} parent=0 // loop_header_branch
    %12 = sbr.rel (%p10) target = $region8
  $region5: #{net_forward.3} parent=0 // loop_body
    %s14 = ssub.s32 %s9, 1
    %s15 = ssub.s32 %s9, 2
    %s16 = sadd.s32 %s9, 1
    %s17 = ssub.s32 %s9, %s16
    %p18 = scmp.eq.s32.totalorder %s17, 0
    %s20 = sadd.s32 %s19, 1
    %s21 = scalar_select %p18, %s19, %s20
    %p24 = pneg %p18
    %p25 = scmp.eq.s32.totalorder %s9, 1
    %p26 = por %p24, %p25
    %p27 = scmp.ne.s32.totalorder %s19, %s22
    %p28 = scmp.eq.s32.totalorder %s9, 0
    %p29 = por %p27, %p28
    %p30 = scmp.ne.s32.totalorder %s19, %s22
    %p31 = scmp.eq.s32.totalorder %s14, 1
    %p32 = por %p30, %p31
    %p33 = scmp.ne.s32.totalorder %s22, %s23
    %p34 = scmp.eq.s32.totalorder %s14, 0
    %p35 = por %p33, %p34
    %p36 = scmp.ne.s32.totalorder %s22, %s23
    %p37 = scmp.eq.s32.totalorder %s15, 1
    %p38 = por %p36, %p37
    %p40 = scmp.ne.s32.totalorder %s23, %s39
    %p41 = scmp.eq.s32.totalorder %s15, 0
    %p42 = por %p40, %p41
    %s44 = sadd.s32 %s43, 1
    %p47 = scmp.eq.s32.totalorder %s9, 1
    %p48 = scmp.ne.s32.totalorder %s43, %s45
    %p49 = scmp.eq.s32.totalorder %s9, 0
    %p50 = por %p48, %p49
    %p51 = scmp.ne.s32.totalorder %s43, %s45
    %p52 = scmp.eq.s32.totalorder %s14, 1
    %p53 = por %p51, %p52
    %p54 = scmp.ne.s32.totalorder %s45, %s46
    %p55 = scmp.eq.s32.totalorder %s14, 0
    %p56 = por %p54, %p55
    %p57 = scmp.ne.s32.totalorder %s45, %s46
    %p58 = scmp.eq.s32.totalorder %s15, 1
    %p59 = por %p57, %p58
    %p61 = scmp.ne.s32.totalorder %s46, %s60
    %p62 = scmp.eq.s32.totalorder %s15, 0
    %p63 = por %p61, %p62
    %s65 = sadd.s32 %s64, 1
    %p68 = scmp.eq.s32.totalorder %s9, 1
    %p69 = scmp.ne.s32.totalorder %s64, %s66
    %p70 = scmp.eq.s32.totalorder %s9, 0
    %p71 = por %p69, %p70
    %p72 = scmp.ne.s32.totalorder %s64, %s66
    %p73 = scmp.eq.s32.totalorder %s14, 1
    %p74 = por %p72, %p73
    %p75 = scmp.ne.s32.totalorder %s66, %s67
    %p76 = scmp.eq.s32.totalorder %s14, 0
    %p77 = por %p75, %p76
    %p78 = scmp.ne.s32.totalorder %s66, %s67
    %p79 = scmp.eq.s32.totalorder %s15, 1
    %p80 = por %p78, %p79
    %p82 = scmp.ne.s32.totalorder %s67, %s81
    %p83 = scmp.eq.s32.totalorder %s15, 0
    %p84 = por %p82, %p83
    %s85 = ssub.s32 %s9, %s16
    %p86 = scmp.eq.s32.totalorder %s85, 0
    %s88 = sadd.s32 %s87, 1
    %s89 = scalar_select %p86, %s87, %s88
    %p92 = pneg %p86
    %p93 = scmp.eq.s32.totalorder %s9, 1
    %p94 = por %p92, %p93
    %p95 = scmp.ne.s32.totalorder %s87, %s90
    %p96 = scmp.eq.s32.totalorder %s9, 0
    %p97 = por %p95, %p96
    %p98 = scmp.ne.s32.totalorder %s87, %s90
    %p99 = scmp.eq.s32.totalorder %s14, 1
    %p100 = por %p98, %p99
    %p101 = scmp.ne.s32.totalorder %s90, %s91
    %p102 = scmp.eq.s32.totalorder %s14, 0
    %p103 = por %p101, %p102
    %p104 = scmp.ne.s32.totalorder %s90, %s91
    %p105 = scmp.eq.s32.totalorder %s15, 1
    %p106 = por %p104, %p105
    %p108 = scmp.ne.s32.totalorder %s91, %s107
    %p109 = scmp.eq.s32.totalorder %s15, 0
    %p110 = por %p108, %p109
    %p111 = scmp.le.s32.totalorder 1, %s9
    %p112 = scmp.lt.s32.totalorder %s9, 3
    %p113 = pnand %p111, %p112
    %p114 = pneg %p113
    // Predicated region
    $region9: #{net_forward.3} parent=5 // pred_check
      _
    $region10: #{net_forward.3} parent=5 // pred_check_branch
      %116 = sbr.rel (%p113) target = $region12
    $region11: #{net_forward.3} parent=5 // pred_region
      %s117 = ssub.s32 %s9, 1
      // Predicated region
      $region13: #{net_forward.3} parent=11 // pred_check
        %p118 = pneg %p56
      $region14: #{net_forward.3} parent=11 // pred_check_branch
        %120 = sbr.rel (%p118) target = $region16
      $region15: #{net_forward.3} parent=11 // pred_region
        _
      $region16: #{net_forward.3} parent=11 // pred_fallthru
        _
      // Predicated region
      $region17: #{net_forward.3} parent=11 // pred_check
        %p121 = pneg %p77
      $region18: #{net_forward.3} parent=11 // pred_check_branch
        %123 = sbr.rel (%p121) target = $region20
      $region19: #{net_forward.3} parent=11 // pred_region
        _
      $region20: #{net_forward.3} parent=11 // pred_fallthru
        _
    $region12: #{net_forward.3} parent=5 // pred_fallthru
      _
    %p124 = scmp.lt.s32.totalorder %s9, 2
    // Predicated region
    $region21: #{net_forward.3} parent=5 // pred_check
      %p125 = pneg %p124
    $region22: #{net_forward.3} parent=5 // pred_check_branch
      %127 = sbr.rel (%p125) target = $region24
    $region23: #{net_forward.3} parent=5 // pred_region
      // Predicated region
      $region25: #{net_forward.3} parent=23 // pred_check
        %p128 = pneg %p29
      $region26: #{net_forward.3} parent=23 // pred_check_branch
        %130 = sbr.rel (%p128) target = $region28
      $region27: #{net_forward.3} parent=23 // pred_region
        %p131 = scmp.lt.s32.totalorder %s9, 1
        %s132 = scalar_select %p131, %s9, 1
        %s133 = smul.addr %s132, 4
        %s134 = smul.addr %s133, 8
        %s135 = scalar_lea.vmem %s0, %s134
      $region28: #{net_forward.3} parent=23 // pred_fallthru
        _
    $region24: #{net_forward.3} parent=5 // pred_fallthru
      _
    %p136 = scmp.le.s32.totalorder 1, %s9
    %p137 = scmp.lt.s32.totalorder %s9, 3
    %p138 = pnand %p136, %p137
    %p139 = pneg %p138
    // Predicated region
    $region29: #{net_forward.3} parent=5 // pred_check
      _
    $region30: #{net_forward.3} parent=5 // pred_check_branch
      %141 = sbr.rel (%p138) target = $region32
    $region31: #{net_forward.3} parent=5 // pred_region
      %s142 = ssub.s32 %s9, 1
      %p143 = scmp.lt.s32.totalorder %s14, 1
      %s144 = scalar_select %p143, %s14, 1
      %s145 = smul.addr %s144, 4
      %s146 = smul.addr %s145, 8
      %s147 = scalar_lea.vmem %s0, %s146
      %p148 = pneg %p35
      %p149 = pneg %p32
      %p150 = pneg %p56
      %p151 = pneg %p53
      %p152 = pneg %p77
      %p153 = pneg %p74
      %p154 = pneg %p103
      %p155 = pneg %p100
      %p156 = scmp.lt.s32.totalorder %s14, 1
      %s157 = scalar_select %p156, %s14, 1
      %s158 = smul.addr %s157, 18
      %s159 = smul.addr %s158, 8
      %s160 = scalar_lea.vmem %s3, %s159
      %p161 = scmp.lt.s32.totalorder %s14, 1
      %s162 = scalar_select %p161, %s14, 1
      %s163 = smul.addr %s162, 4
      %s164 = smul.addr %s163, 8
      %s165 = scalar_lea.vmem %s0, %s164
      %p166 = scmp.lt.s32.totalorder %s14, 1
      %s167 = scalar_select %p166, %s14, 1
      %s168 = smul.addr %s167, 18
      %s169 = smul.addr %s168, 8
      %s170 = scalar_lea.vmem %s3, %s169
      %v171 = vld [vmem:[%s165] sm:$0xff]
      %v172 = vld [vmem:[%s165 + $0x8] sm:$0xff]
      %v173 = vld [vmem:[%s165 + $0x10] sm:$0xff]
      %v174 = vld [vmem:[%s1] sm:$0xff]
      %v175 = vld [vmem:[%s1 + $0x8] sm:$0xff]
      %v176 = vld [vmem:[%s1 + $0x10] sm:$0xff]
      %v177 = vld [vmem:[%s1 + $0x18] sm:$0xff]
      %v178 = vld [vmem:[%s1 + $0x20] sm:$0xff]
      %v179 = vld [vmem:[%s1 + $0x28] sm:$0xff]
      %v180 = vld [vmem:[%s1 + $0x30] sm:$0xff]
      %v181 = vld [vmem:[%s1 + $0x38] sm:$0xff]
      %v182 = vld [vmem:[%s1 + $0x40] sm:$0xff]
      %v183 = vld [vmem:[%s1 + $0x48] sm:$0xff]
      %v184 = vld [vmem:[%s1 + $0x50] sm:$0xff]
      %v185 = vld [vmem:[%s1 + $0x58] sm:$0xff]
      %v186 = vld [vmem:[%s1 + $0x60] sm:$0xff]
      %v187 = vld [vmem:[%s1 + $0x68] sm:$0xff]
      %v188 = vld [vmem:[%s1 + $0x70] sm:$0xff]
      %v189 = vld [vmem:[%s1 + $0x78] sm:$0xff]
      %v190 = vld [vmem:[%s1 + $0x80] sm:$0xff]
      %v191 = vld [vmem:[%s1 + $0x88] sm:$0xff]
      %v192 = vld [vmem:[%s1 + $0x90] sm:$0xf]
      %v193 = vld [vmem:[%s1 + $0x98] sm:$0xf]
      %v194 = vld [vmem:[%s1 + $0xa0] sm:$0xf]
      %v195 = vld [vmem:[%s1 + $0xa8] sm:$0xf]
      %v196 = vld [vmem:[%s1 + $0xb0] sm:$0xf]
      %v197 = vld [vmem:[%s1 + $0xb8] sm:$0xf]
      %v198 = vld [vmem:[%s165 + $0x1] sm:$0xff]
      %v199 = vld [vmem:[%s165 + $0x9] sm:$0xff]
      %v200 = vld [vmem:[%s165 + $0x11] sm:$0xff]
      %s201 = scalar_lea.vmem %s1, 192
      %v202 = vld [vmem:[%s201] sm:$0xff]
      %v203 = vld [vmem:[%s201 + $0x8] sm:$0xff]
      %v204 = vld [vmem:[%s201 + $0x10] sm:$0xff]
      %v205 = vld [vmem:[%s201 + $0x18] sm:$0xff]
      %v206 = vld [vmem:[%s201 + $0x20] sm:$0xff]
      %v207 = vld [vmem:[%s201 + $0x28] sm:$0xff]
      %v208 = vld [vmem:[%s201 + $0x30] sm:$0xff]
      %v209 = vld [vmem:[%s201 + $0x38] sm:$0xff]
      %v210 = vld [vmem:[%s201 + $0x40] sm:$0xff]
      %v211 = vld [vmem:[%s201 + $0x48] sm:$0xff]
      %v212 = vld [vmem:[%s201 + $0x50] sm:$0xff]
      %v213 = vld [vmem:[%s201 + $0x58] sm:$0xff]
      %v214 = vld [vmem:[%s201 + $0x60] sm:$0xff]
      %v215 = vld [vmem:[%s201 + $0x68] sm:$0xff]
      %v216 = vld [vmem:[%s201 + $0x70] sm:$0xff]
      %v217 = vld [vmem:[%s201 + $0x78] sm:$0xff]
      %v218 = vld [vmem:[%s201 + $0x80] sm:$0xff]
      %v219 = vld [vmem:[%s201 + $0x88] sm:$0xff]
      %v220 = vld [vmem:[%s201 + $0x90] sm:$0xf]
      %v221 = vld [vmem:[%s201 + $0x98] sm:$0xf]
      %v222 = vld [vmem:[%s201 + $0xa0] sm:$0xf]
      %v223 = vld [vmem:[%s201 + $0xa8] sm:$0xf]
      %v224 = vld [vmem:[%s201 + $0xb0] sm:$0xf]
      %v225 = vld [vmem:[%s201 + $0xb8] sm:$0xf]
      %vm226 = vcmask 228352
      %v228 = vsel %vm226, %v198, 0
      %v231 = vsel %vm226, %v199, 0
      %v234 = vsel %vm226, %v200, 0
      %vm236 = vcmask 1043456
      %v238 = vsel %vm236, %v220, 0
      %v241 = vsel %vm236, %v221, 0
      %v244 = vsel %vm236, %v222, 0
      %v247 = vsel %vm236, %v223, 0
      %v250 = vsel %vm236, %v224, 0
      %v253 = vsel %vm236, %v225, 0
      %255 = vmatprep.subr.mxu0 %v203
      %256 = vmatpush1.msra.mxu0 %v202
      %257 = vmatprep.subr.mxu0 %v209
      %258 = vmatpush1.msra.mxu0 %v208
      %259 = vmatprep.subr.mxu0 %v215
      %260 = vmatpush1.msra.mxu0 %v214
      %261 = vmatprep.subr.mxu0 %v241
      %262 = vmatpush1.msra.mxu0 %v238
      %263 = vmatprep.subr.mxu0 0.0
      %264 = vmatpush1.msra.mxu0 0.0
      %265 = vmatprep.subr.mxu0 0.0
      %266 = vmatpush1.msra.mxu0 0.0
      %267 = vmatprep.subr.mxu0 0.0
      %268 = vmatpush1.msra.mxu0 0.0
      %269 = vmatprep.subr.mxu0 0.0
      %270 = vmatpush1.msra.mxu0 0.0
      %271 = vmatprep.subr.mxu0 0.0
      %272 = vmatpush1.msra.mxu0 0.0
      %273 = vmatprep.subr.mxu0 0.0
      %274 = vmatpush1.msra.mxu0 0.0
      %275 = vmatprep.subr.mxu0 0.0
      %276 = vmatpush1.msra.mxu0 0.0
      %277 = vmatprep.subr.mxu0 0.0
      %278 = vmatpush1.msra.mxu0 0.0
      %279 = vmatprep.subr.mxu0 0.0
      %280 = vmatpush1.msra.mxu0 0.0
      %281 = vmatprep.subr.mxu0 0.0
      %282 = vmatpush1.msra.mxu0 0.0
      %283 = vmatprep.subr.mxu0 0.0
      %284 = vmatpush1.msra.mxu0 0.0
      %285 = vmatprep.subr.mxu0 0.0
      %286 = vmatpush1.msra.mxu0 0.0
      %287 = vmatprep.subr.mxu0 0.0
      %288 = vmatpush1.msra.mxu0 0.0
      %289 = vmatprep.subr.mxu0 0.0
      %290 = vmatpush1.msra.mxu0 0.0
      %291 = vmatprep.subr.mxu0 0.0
      %292 = vmatpush1.msra.mxu0 0.0
      %293 = vmatprep.subr.mxu0 0.0
      %294 = vmatpush1.msra.mxu0 0.0
      %295 = vmatprep.subr.mxu0 0.0
      %296 = vmatpush1.msra.mxu0 0.0
      %297 = vmatprep.subr.mxu0 0.0
      %298 = vmatpush1.msra.mxu0 0.0
      %299 = vmatprep.subr.mxu0 0.0
      %300 = vmatpush1.msra.mxu0 0.0
      %301 = vmatprep.subr.mxu0 0.0
      %302 = vmatpush1.msra.mxu0 0.0
      %303 = vmatprep.subr.mxu0 0.0
      %304 = vmatpush1.msra.mxu0 0.0
      %305 = vmatprep.subr.mxu0 0.0
      %306 = vmatpush1.msra.mxu0 0.0
      %307 = vmatprep.subr.mxu0 0.0
      %308 = vmatpush1.msra.mxu0 0.0
      %309 = vmatprep.subr.mxu0 0.0
      %310 = vmatpush1.msra.mxu0 0.0
      %311 = vmatprep.subr.mxu0 0.0
      %312 = vmatpush1.msra.mxu0 0.0
      %313 = vmatprep.subr.mxu0 0.0
      %314 = vmatpush1.msra.mxu0 0.0
      %315 = vmatprep.subr.mxu0 0.0
      %316 = vmatpush1.msra.mxu0 0.0
      %317 = vmatprep.subr.mxu0 0.0
      %318 = vmatpush1.msra.mxu0 0.0
      %319 = vmatprep.mubr.f32.mxu0 0.0
      %320 = vmatmul.mubr.f32.gmra.mrb[0].mxu0 %v228
      %v321 = vpop.f32.mrb[0].mxu0
      %v322 = vadd.f32 0.0, %v321
      %v323 = vpop.f32.mrb[0].mxu0
      %v324 = vadd.f32 0.0, %v323
      %325 = vmatprep.mubr.f32.mxu0 0.0
      %326 = vmatmul.mubr.f32.gmra.mrb[0].mxu0 %v231
      %v327 = vpop.f32.mrb[0].mxu0
      %v328 = vadd.f32 0.0, %v327
      %v329 = vpop.f32.mrb[0].mxu0
      %v330 = vadd.f32 0.0, %v329
      %331 = vmatprep.mubr.f32.mxu0 0.0
      %332 = vmatmul.mubr.f32.gmra.mrb[0].mxu0 %v234
      %v333 = vpop.f32.mrb[0].mxu0
      %v334 = vadd.f32 0.0, %v333
      %v335 = vpop.f32.mrb[0].mxu0
      %v336 = vadd.f32 0.0, %v335
      %337 = vdwg.mxu0
      %338 = vmatprep.subr.mxu0 %v205
      %339 = vmatpush1.msra.mxu0 %v204
      %340 = vmatprep.subr.mxu0 %v211
      %341 = vmatpush1.msra.mxu0 %v210
      %342 = vmatprep.subr.mxu0 %v217
      %343 = vmatpush1.msra.mxu0 %v216
      %344 = vmatprep.subr.mxu0 %v247
      %345 = vmatpush1.msra.mxu0 %v244
      %346 = vmatprep.subr.mxu0 0.0
      %347 = vmatpush1.msra.mxu0 0.0
      %348 = vmatprep.subr.mxu0 0.0
      %349 = vmatpush1.msra.mxu0 0.0
      %350 = vmatprep.subr.mxu0 0.0
      %351 = vmatpush1.msra.mxu0 0.0
      %352 = vmatprep.subr.mxu0 0.0
      %353 = vmatpush1.msra.mxu0 0.0
      %354 = vmatprep.subr.mxu0 0.0
      %355 = vmatpush1.msra.mxu0 0.0
      %356 = vmatprep.subr.mxu0 0.0
      %357 = vmatpush1.msra.mxu0 0.0
      %358 = vmatprep.subr.mxu0 0.0
      %359 = vmatpush1.msra.mxu0 0.0
      %360 = vmatprep.subr.mxu0 0.0
      %361 = vmatpush1.msra.mxu0 0.0
      %362 = vmatprep.subr.mxu0 0.0
      %363 = vmatpush1.msra.mxu0 0.0
      %364 = vmatprep.subr.mxu0 0.0
      %365 = vmatpush1.msra.mxu0 0.0
      %366 = vmatprep.subr.mxu0 0.0
      %367 = vmatpush1.msra.mxu0 0.0
      %368 = vmatprep.subr.mxu0 0.0
      %369 = vmatpush1.msra.mxu0 0.0
      %370 = vmatprep.subr.mxu0 0.0
      %371 = vmatpush1.msra.mxu0 0.0
      %372 = vmatprep.subr.mxu0 0.0
      %373 = vmatpush1.msra.mxu0 0.0
      %374 = vmatprep.subr.mxu0 0.0
      %375 = vmatpush1.msra.mxu0 0.0
      %376 = vmatprep.subr.mxu0 0.0
      %377 = vmatpush1.msra.mxu0 0.0
      %378 = vmatprep.subr.mxu0 0.0
      %379 = vmatpush1.msra.mxu0 0.0
      %380 = vmatprep.subr.mxu0 0.0
      %381 = vmatpush1.msra.mxu0 0.0
      %382 = vmatprep.subr.mxu0 0.0
      %383 = vmatpush1.msra.mxu0 0.0
      %384 = vmatprep.subr.mxu0 0.0
      %385 = vmatpush1.msra.mxu0 0.0
      %386 = vmatprep.subr.mxu0 0.0
      %387 = vmatpush1.msra.mxu0 0.0
      %388 = vmatprep.subr.mxu0 0.0
      %389 = vmatpush1.msra.mxu0 0.0
      %390 = vmatprep.subr.mxu0 0.0
      %391 = vmatpush1.msra.mxu0 0.0
      %392 = vmatprep.subr.mxu0 0.0
      %393 = vmatpush1.msra.mxu0 0.0
      %394 = vmatprep.subr.mxu0 0.0
      %395 = vmatpush1.msra.mxu0 0.0
      %396 = vmatprep.subr.mxu0 0.0
      %397 = vmatpush1.msra.mxu0 0.0
      %398 = vmatprep.subr.mxu0 0.0
      %399 = vmatpush1.msra.mxu0 0.0
      %400 = vmatprep.subr.mxu0 0.0
      %401 = vmatpush1.msra.mxu0 0.0
      %402 = vmatprep.mubr.f32.mxu0 0.0
      %403 = vmatmul.mubr.f32.gmra.mrb[0].mxu0 %v228
      %v404 = vpop.f32.mrb[0].mxu0
      %v405 = vadd.f32 0.0, %v404
      %v406 = vpop.f32.mrb[0].mxu0
      %v407 = vadd.f32 0.0, %v406
      %408 = vmatprep.mubr.f32.mxu0 0.0
      %409 = vmatmul.mubr.f32.gmra.mrb[0].mxu0 %v231
      %v410 = vpop.f32.mrb[0].mxu0
      %v411 = vadd.f32 0.0, %v410
      %v412 = vpop.f32.mrb[0].mxu0
      %v413 = vadd.f32 0.0, %v412
      %414 = vmatprep.mubr.f32.mxu0 0.0
      %415 = vmatmul.mubr.f32.gmra.mrb[0].mxu0 %v234
      %v416 = vpop.f32.mrb[0].mxu0
      %v417 = vadd.f32 0.0, %v416
      %v418 = vpop.f32.mrb[0].mxu0
      %v419 = vadd.f32 0.0, %v418
      %420 = vdwg.mxu0
      %421 = vmatprep.subr.mxu0 %v207
      %422 = vmatpush1.msra.mxu0 %v206
      %423 = vmatprep.subr.mxu0 %v213
      %424 = vmatpush1.msra.mxu0 %v212
      %425 = vmatprep.subr.mxu0 %v219
      %426 = vmatpush1.msra.mxu0 %v218
      %427 = vmatprep.subr.mxu0 %v253
      %428 = vmatpush1.msra.mxu0 %v250
      %429 = vmatprep.subr.mxu0 0.0
      %430 = vmatpush1.msra.mxu0 0.0
      %431 = vmatprep.subr.mxu0 0.0
      %432 = vmatpush1.msra.mxu0 0.0
      %433 = vmatprep.subr.mxu0 0.0
      %434 = vmatpush1.msra.mxu0 0.0
      %435 = vmatprep.subr.mxu0 0.0
      %436 = vmatpush1.msra.mxu0 0.0
      %437 = vmatprep.subr.mxu0 0.0
      %438 = vmatpush1.msra.mxu0 0.0
      %439 = vmatprep.subr.mxu0 0.0
      %440 = vmatpush1.msra.mxu0 0.0
      %441 = vmatprep.subr.mxu0 0.0
      %442 = vmatpush1.msra.mxu0 0.0
      %443 = vmatprep.subr.mxu0 0.0
      %444 = vmatpush1.msra.mxu0 0.0
      %445 = vmatprep.subr.mxu0 0.0
      %446 = vmatpush1.msra.mxu0 0.0
      %447 = vmatprep.subr.mxu0 0.0
      %448 = vmatpush1.msra.mxu0 0.0
      %449 = vmatprep.subr.mxu0 0.0
      %450 = vmatpush1.msra.mxu0 0.0
      %451 = vmatprep.subr.mxu0 0.0
      %452 = vmatpush1.msra.mxu0 0.0
      %453 = vmatprep.subr.mxu0 0.0
      %454 = vmatpush1.msra.mxu0 0.0
      %455 = vmatprep.subr.mxu0 0.0
      %456 = vmatpush1.msra.mxu0 0.0
      %457 = vmatprep.subr.mxu0 0.0
      %458 = vmatpush1.msra.mxu0 0.0
      %459 = vmatprep.subr.mxu0 0.0
      %460 = vmatpush1.msra.mxu0 0.0
      %461 = vmatprep.subr.mxu0 0.0
      %462 = vmatpush1.msra.mxu0 0.0
      %463 = vmatprep.subr.mxu0 0.0
      %464 = vmatpush1.msra.mxu0 0.0
      %465 = vmatprep.subr.mxu0 0.0
      %466 = vmatpush1.msra.mxu0 0.0
      %467 = vmatprep.subr.mxu0 0.0
      %468 = vmatpush1.msra.mxu0 0.0
      %469 = vmatprep.subr.mxu0 0.0
      %470 = vmatpush1.msra.mxu0 0.0
      %471 = vmatprep.subr.mxu0 0.0
      %472 = vmatpush1.msra.mxu0 0.0
      %473 = vmatprep.subr.mxu0 0.0
      %474 = vmatpush1.msra.mxu0 0.0
      %475 = vmatprep.subr.mxu0 0.0
      %476 = vmatpush1.msra.mxu0 0.0
      %477 = vmatprep.subr.mxu0 0.0
      %478 = vmatpush1.msra.mxu0 0.0
      %479 = vmatprep.subr.mxu0 0.0
      %480 = vmatpush1.msra.mxu0 0.0
      %481 = vmatprep.subr.mxu0 0.0
      %482 = vmatpush1.msra.mxu0 0.0
      %483 = vmatprep.subr.mxu0 0.0
      %484 = vmatpush1.msra.mxu0 0.0
      %485 = vmatprep.mubr.f32.mxu0 0.0
      %486 = vmatmul.mubr.f32.gmra.mrb[0].mxu0 %v228
      %v487 = vpop.f32.mrb[0].mxu0
      %v488 = vadd.f32 0.0, %v487
      %v489 = vpop.f32.mrb[0].mxu0
      %v490 = vadd.f32 0.0, %v489
      %491 = vmatprep.mubr.f32.mxu0 0.0
      %492 = vmatmul.mubr.f32.gmra.mrb[0].mxu0 %v231
      %v493 = vpop.f32.mrb[0].mxu0
      %v494 = vadd.f32 0.0, %v493
      %v495 = vpop.f32.mrb[0].mxu0
      %v496 = vadd.f32 0.0, %v495
      %497 = vmatprep.mubr.f32.mxu0 0.0
      %498 = vmatmul.mubr.f32.gmra.mrb[0].mxu0 %v234
      %v499 = vpop.f32.mrb[0].mxu0
      %v500 = vadd.f32 0.0, %v499
      %v501 = vpop.f32.mrb[0].mxu0
      %v502 = vadd.f32 0.0, %v501
      %503 = vdwg.mxu0
      %v505 = vsel %vm226, %v171, 0
      %v508 = vsel %vm226, %v172, 0
      %v511 = vsel %vm226, %v173, 0
      %v514 = vsel %vm236, %v192, 0
      %v517 = vsel %vm236, %v193, 0
      %v520 = vsel %vm236, %v194, 0
      %v523 = vsel %vm236, %v195, 0
      %v526 = vsel %vm236, %v196, 0
      %v529 = vsel %vm236, %v197, 0
      %531 = vmatprep.subr.mxu0 %v175
      %532 = vmatpush1.msra.mxu0 %v174
      %533 = vmatprep.subr.mxu0 %v181
      %534 = vmatpush1.msra.mxu0 %v180
      %535 = vmatprep.subr.mxu0 %v187
      %536 = vmatpush1.msra.mxu0 %v186
      %537 = vmatprep.subr.mxu0 %v517
      %538 = vmatpush1.msra.mxu0 %v514
      %539 = vmatprep.subr.mxu0 0.0
      %540 = vmatpush1.msra.mxu0 0.0
      %541 = vmatprep.subr.mxu0 0.0
      %542 = vmatpush1.msra.mxu0 0.0
      %543 = vmatprep.subr.mxu0 0.0
      %544 = vmatpush1.msra.mxu0 0.0
      %545 = vmatprep.subr.mxu0 0.0
      %546 = vmatpush1.msra.mxu0 0.0
      %547 = vmatprep.subr.mxu0 0.0
      %548 = vmatpush1.msra.mxu0 0.0
      %549 = vmatprep.subr.mxu0 0.0
      %550 = vmatpush1.msra.mxu0 0.0
      %551 = vmatprep.subr.mxu0 0.0
      %552 = vmatpush1.msra.mxu0 0.0
      %553 = vmatprep.subr.mxu0 0.0
      %554 = vmatpush1.msra.mxu0 0.0
      %555 = vmatprep.subr.mxu0 0.0
      %556 = vmatpush1.msra.mxu0 0.0
      %557 = vmatprep.subr.mxu0 0.0
      %558 = vmatpush1.msra.mxu0 0.0
      %559 = vmatprep.subr.mxu0 0.0
      %560 = vmatpush1.msra.mxu0 0.0
      %561 = vmatprep.subr.mxu0 0.0
      %562 = vmatpush1.msra.mxu0 0.0
      %563 = vmatprep.subr.mxu0 0.0
      %564 = vmatpush1.msra.mxu0 0.0
      %565 = vmatprep.subr.mxu0 0.0
      %566 = vmatpush1.msra.mxu0 0.0
      %567 = vmatprep.subr.mxu0 0.0
      %568 = vmatpush1.msra.mxu0 0.0
      %569 = vmatprep.subr.mxu0 0.0
      %570 = vmatpush1.msra.mxu0 0.0
      %571 = vmatprep.subr.mxu0 0.0
      %572 = vmatpush1.msra.mxu0 0.0
      %573 = vmatprep.subr.mxu0 0.0
      %574 = vmatpush1.msra.mxu0 0.0
      %575 = vmatprep.subr.mxu0 0.0
      %576 = vmatpush1.msra.mxu0 0.0
      %577 = vmatprep.subr.mxu0 0.0
      %578 = vmatpush1.msra.mxu0 0.0
      %579 = vmatprep.subr.mxu0 0.0
      %580 = vmatpush1.msra.mxu0 0.0
      %581 = vmatprep.subr.mxu0 0.0
      %582 = vmatpush1.msra.mxu0 0.0
      %583 = vmatprep.subr.mxu0 0.0
      %584 = vmatpush1.msra.mxu0 0.0
      %585 = vmatprep.subr.mxu0 0.0
      %586 = vmatpush1.msra.mxu0 0.0
      %587 = vmatprep.subr.mxu0 0.0
      %588 = vmatpush1.msra.mxu0 0.0
      %589 = vmatprep.subr.mxu0 0.0
      %590 = vmatpush1.msra.mxu0 0.0
      %591 = vmatprep.subr.mxu0 0.0
      %592 = vmatpush1.msra.mxu0 0.0
      %593 = vmatprep.subr.mxu0 0.0
      %594 = vmatpush1.msra.mxu0 0.0
      %595 = vmatprep.mubr.f32.mxu0 0.0
      %596 = vmatmul.mubr.f32.gmra.mrb[0].mxu0 %v505
      %v597 = vpop.f32.mrb[0].mxu0
      %v598 = vadd.f32 %v322, %v597
      %v599 = vpop.f32.mrb[0].mxu0
      %v600 = vadd.f32 %v324, %v599
      %601 = vmatprep.mubr.f32.mxu0 0.0
      %602 = vmatmul.mubr.f32.gmra.mrb[0].mxu0 %v508
      %v603 = vpop.f32.mrb[0].mxu0
      %v604 = vadd.f32 %v328, %v603
      %v605 = vpop.f32.mrb[0].mxu0
      %v606 = vadd.f32 %v330, %v605
      %607 = vmatprep.mubr.f32.mxu0 0.0
      %608 = vmatmul.mubr.f32.gmra.mrb[0].mxu0 %v511
      %v609 = vpop.f32.mrb[0].mxu0
      %v610 = vadd.f32 %v334, %v609
      %v611 = vpop.f32.mrb[0].mxu0
      %v612 = vadd.f32 %v336, %v611
      %613 = vdwg.mxu0
      %614 = vmatprep.subr.mxu0 %v177
      %615 = vmatpush1.msra.mxu0 %v176
      %616 = vmatprep.subr.mxu0 %v183
      %617 = vmatpush1.msra.mxu0 %v182
      %618 = vmatprep.subr.mxu0 %v189
      %619 = vmatpush1.msra.mxu0 %v188
      %620 = vmatprep.subr.mxu0 %v523
      %621 = vmatpush1.msra.mxu0 %v520
      %622 = vmatprep.subr.mxu0 0.0
      %623 = vmatpush1.msra.mxu0 0.0
      %624 = vmatprep.subr.mxu0 0.0
      %625 = vmatpush1.msra.mxu0 0.0
      %626 = vmatprep.subr.mxu0 0.0
      %627 = vmatpush1.msra.mxu0 0.0
      %628 = vmatprep.subr.mxu0 0.0
      %629 = vmatpush1.msra.mxu0 0.0
      %630 = vmatprep.subr.mxu0 0.0
      %631 = vmatpush1.msra.mxu0 0.0
      %632 = vmatprep.subr.mxu0 0.0
      %633 = vmatpush1.msra.mxu0 0.0
      %634 = vmatprep.subr.mxu0 0.0
      %635 = vmatpush1.msra.mxu0 0.0
      %636 = vmatprep.subr.mxu0 0.0
      %637 = vmatpush1.msra.mxu0 0.0
      %638 = vmatprep.subr.mxu0 0.0
      %639 = vmatpush1.msra.mxu0 0.0
      %640 = vmatprep.subr.mxu0 0.0
      %641 = vmatpush1.msra.mxu0 0.0
      %642 = vmatprep.subr.mxu0 0.0
      %643 = vmatpush1.msra.mxu0 0.0
      %644 = vmatprep.subr.mxu0 0.0
      %645 = vmatpush1.msra.mxu0 0.0
      %646 = vmatprep.subr.mxu0 0.0
      %647 = vmatpush1.msra.mxu0 0.0
      %648 = vmatprep.subr.mxu0 0.0
      %649 = vmatpush1.msra.mxu0 0.0
      %650 = vmatprep.subr.mxu0 0.0
      %651 = vmatpush1.msra.mxu0 0.0
      %652 = vmatprep.subr.mxu0 0.0
      %653 = vmatpush1.msra.mxu0 0.0
      %654 = vmatprep.subr.mxu0 0.0
      %655 = vmatpush1.msra.mxu0 0.0
      %656 = vmatprep.subr.mxu0 0.0
      %657 = vmatpush1.msra.mxu0 0.0
      %658 = vmatprep.subr.mxu0 0.0
      %659 = vmatpush1.msra.mxu0 0.0
      %660 = vmatprep.subr.mxu0 0.0
      %661 = vmatpush1.msra.mxu0 0.0
      %662 = vmatprep.subr.mxu0 0.0
      %663 = vmatpush1.msra.mxu0 0.0
      %664 = vmatprep.subr.mxu0 0.0
      %665 = vmatpush1.msra.mxu0 0.0
      %666 = vmatprep.subr.mxu0 0.0
      %667 = vmatpush1.msra.mxu0 0.0
      %668 = vmatprep.subr.mxu0 0.0
      %669 = vmatpush1.msra.mxu0 0.0
      %670 = vmatprep.subr.mxu0 0.0
      %671 = vmatpush1.msra.mxu0 0.0
      %672 = vmatprep.subr.mxu0 0.0
      %673 = vmatpush1.msra.mxu0 0.0
      %674 = vmatprep.subr.mxu0 0.0
      %675 = vmatpush1.msra.mxu0 0.0
      %676 = vmatprep.subr.mxu0 0.0
      %677 = vmatpush1.msra.mxu0 0.0
      %678 = vmatprep.mubr.f32.mxu0 0.0
      %679 = vmatmul.mubr.f32.gmra.mrb[0].mxu0 %v505
      %v680 = vpop.f32.mrb[0].mxu0
      %v681 = vadd.f32 %v405, %v680
      %v682 = vpop.f32.mrb[0].mxu0
      %v683 = vadd.f32 %v407, %v682
      %684 = vmatprep.mubr.f32.mxu0 0.0
      %685 = vmatmul.mubr.f32.gmra.mrb[0].mxu0 %v508
      %v686 = vpop.f32.mrb[0].mxu0
      %v687 = vadd.f32 %v411, %v686
      %v688 = vpop.f32.mrb[0].mxu0
      %v689 = vadd.f32 %v413, %v688
      %690 = vmatprep.mubr.f32.mxu0 0.0
      %691 = vmatmul.mubr.f32.gmra.mrb[0].mxu0 %v511
      %v692 = vpop.f32.mrb[0].mxu0
      %v693 = vadd.f32 %v417, %v692
      %v694 = vpop.f32.mrb[0].mxu0
      %v695 = vadd.f32 %v419, %v694
      %696 = vdwg.mxu0
      %697 = vmatprep.subr.mxu0 %v179
      %698 = vmatpush1.msra.mxu0 %v178
      %699 = vmatprep.subr.mxu0 %v185
      %700 = vmatpush1.msra.mxu0 %v184
      %701 = vmatprep.subr.mxu0 %v191
      %702 = vmatpush1.msra.mxu0 %v190
      %703 = vmatprep.subr.mxu0 %v529
      %704 = vmatpush1.msra.mxu0 %v526
      %705 = vmatprep.subr.mxu0 0.0
      %706 = vmatpush1.msra.mxu0 0.0
      %707 = vmatprep.subr.mxu0 0.0
      %708 = vmatpush1.msra.mxu0 0.0
      %709 = vmatprep.subr.mxu0 0.0
      %710 = vmatpush1.msra.mxu0 0.0
      %711 = vmatprep.subr.mxu0 0.0
      %712 = vmatpush1.msra.mxu0 0.0
      %713 = vmatprep.subr.mxu0 0.0
      %714 = vmatpush1.msra.mxu0 0.0
      %715 = vmatprep.subr.mxu0 0.0
      %716 = vmatpush1.msra.mxu0 0.0
      %717 = vmatprep.subr.mxu0 0.0
      %718 = vmatpush1.msra.mxu0 0.0
      %719 = vmatprep.subr.mxu0 0.0
      %720 = vmatpush1.msra.mxu0 0.0
      %721 = vmatprep.subr.mxu0 0.0
      %722 = vmatpush1.msra.mxu0 0.0
      %723 = vmatprep.subr.mxu0 0.0
      %724 = vmatpush1.msra.mxu0 0.0
      %725 = vmatprep.subr.mxu0 0.0
      %726 = vmatpush1.msra.mxu0 0.0
      %727 = vmatprep.subr.mxu0 0.0
      %728 = vmatpush1.msra.mxu0 0.0
      %729 = vmatprep.subr.mxu0 0.0
      %730 = vmatpush1.msra.mxu0 0.0
      %731 = vmatprep.subr.mxu0 0.0
      %732 = vmatpush1.msra.mxu0 0.0
      %733 = vmatprep.subr.mxu0 0.0
      %734 = vmatpush1.msra.mxu0 0.0
      %735 = vmatprep.subr.mxu0 0.0
      %736 = vmatpush1.msra.mxu0 0.0
      %737 = vmatprep.subr.mxu0 0.0
      %738 = vmatpush1.msra.mxu0 0.0
      %739 = vmatprep.subr.mxu0 0.0
      %740 = vmatpush1.msra.mxu0 0.0
      %741 = vmatprep.subr.mxu0 0.0
      %742 = vmatpush1.msra.mxu0 0.0
      %743 = vmatprep.subr.mxu0 0.0
      %744 = vmatpush1.msra.mxu0 0.0
      %745 = vmatprep.subr.mxu0 0.0
      %746 = vmatpush1.msra.mxu0 0.0
      %747 = vmatprep.subr.mxu0 0.0
      %748 = vmatpush1.msra.mxu0 0.0
      %749 = vmatprep.subr.mxu0 0.0
      %750 = vmatpush1.msra.mxu0 0.0
      %751 = vmatprep.subr.mxu0 0.0
      %752 = vmatpush1.msra.mxu0 0.0
      %753 = vmatprep.subr.mxu0 0.0
      %754 = vmatpush1.msra.mxu0 0.0
      %755 = vmatprep.subr.mxu0 0.0
      %756 = vmatpush1.msra.mxu0 0.0
      %757 = vmatprep.subr.mxu0 0.0
      %758 = vmatpush1.msra.mxu0 0.0
      %759 = vmatprep.subr.mxu0 0.0
      %760 = vmatpush1.msra.mxu0 0.0
      %761 = vmatprep.mubr.f32.mxu0 0.0
      %762 = vmatmul.mubr.f32.gmra.mrb[0].mxu0 %v505
      %v763 = vpop.f32.mrb[0].mxu0
      %v764 = vadd.f32 %v488, %v763
      %v765 = vpop.f32.mrb[0].mxu0
      %v766 = vadd.f32 %v490, %v765
      %767 = vmatprep.mubr.f32.mxu0 0.0
      %768 = vmatmul.mubr.f32.gmra.mrb[0].mxu0 %v508
      %v769 = vpop.f32.mrb[0].mxu0
      %v770 = vadd.f32 %v494, %v769
      %v771 = vpop.f32.mrb[0].mxu0
      %v772 = vadd.f32 %v496, %v771
      %773 = vmatprep.mubr.f32.mxu0 0.0
      %774 = vmatmul.mubr.f32.gmra.mrb[0].mxu0 %v511
      %v775 = vpop.f32.mrb[0].mxu0
      %v776 = vadd.f32 %v500, %v775
      %v777 = vpop.f32.mrb[0].mxu0
      %v778 = vadd.f32 %v502, %v777
      %779 = vdwg.mxu0
      %v780 = vld [vmem:[%s165 + $0x2] sm:$0xff]
      %v781 = vld [vmem:[%s165 + $0xa] sm:$0xff]
      %v782 = vld [vmem:[%s165 + $0x12] sm:$0xff]
      %s783 = scalar_lea.vmem %s1, 384
      %v784 = vld [vmem:[%s783] sm:$0xff]
      %v785 = vld [vmem:[%s783 + $0x8] sm:$0xff]
      %v786 = vld [vmem:[%s783 + $0x10] sm:$0xff]
      %v787 = vld [vmem:[%s783 + $0x18] sm:$0xff]
      %v788 = vld [vmem:[%s783 + $0x20] sm:$0xff]
      %v789 = vld [vmem:[%s783 + $0x28] sm:$0xff]
      %v790 = vld [vmem:[%s783 + $0x30] sm:$0xff]
      %v791 = vld [vmem:[%s783 + $0x38] sm:$0xff]
      %v792 = vld [vmem:[%s783 + $0x40] sm:$0xff]
      %v793 = vld [vmem:[%s783 + $0x48] sm:$0xff]
      %v794 = vld [vmem:[%s783 + $0x50] sm:$0xff]
      %v795 = vld [vmem:[%s783 + $0x58] sm:$0xff]
      %v796 = vld [vmem:[%s783 + $0x60] sm:$0xff]
      %v797 = vld [vmem:[%s783 + $0x68] sm:$0xff]
      %v798 = vld [vmem:[%s783 + $0x70] sm:$0xff]
      %v799 = vld [vmem:[%s783 + $0x78] sm:$0xff]
      %v800 = vld [vmem:[%s783 + $0x80] sm:$0xff]
      %v801 = vld [vmem:[%s783 + $0x88] sm:$0xff]
      %v802 = vld [vmem:[%s783 + $0x90] sm:$0xf]
      %v803 = vld [vmem:[%s783 + $0x98] sm:$0xf]
      %v804 = vld [vmem:[%s783 + $0xa0] sm:$0xf]
      %v805 = vld [vmem:[%s783 + $0xa8] sm:$0xf]
      %v806 = vld [vmem:[%s783 + $0xb0] sm:$0xf]
      %v807 = vld [vmem:[%s783 + $0xb8] sm:$0xf]
      %v809 = vsel %vm226, %v780, 0
      %v812 = vsel %vm226, %v781, 0
      %v815 = vsel %vm226, %v782, 0
      %v818 = vsel %vm236, %v802, 0
      %v821 = vsel %vm236, %v803, 0
      %v824 = vsel %vm236, %v804, 0
      %v827 = vsel %vm236, %v805, 0
      %v830 = vsel %vm236, %v806, 0
      %v833 = vsel %vm236, %v807, 0
      %835 = vmatprep.subr.mxu0 %v785
      %836 = vmatpush1.msra.mxu0 %v784
      %837 = vmatprep.subr.mxu0 %v791
      %838 = vmatpush1.msra.mxu0 %v790
      %839 = vmatprep.subr.mxu0 %v797
      %840 = vmatpush1.msra.mxu0 %v796
      %841 = vmatprep.subr.mxu0 %v821
      %842 = vmatpush1.msra.mxu0 %v818
      %843 = vmatprep.subr.mxu0 0.0
      %844 = vmatpush1.msra.mxu0 0.0
      %845 = vmatprep.subr.mxu0 0.0
      %846 = vmatpush1.msra.mxu0 0.0
      %847 = vmatprep.subr.mxu0 0.0
      %848 = vmatpush1.msra.mxu0 0.0
      %849 = vmatprep.subr.mxu0 0.0
      %850 = vmatpush1.msra.mxu0 0.0
      %851 = vmatprep.subr.mxu0 0.0
      %852 = vmatpush1.msra.mxu0 0.0
      %853 = vmatprep.subr.mxu0 0.0
      %854 = vmatpush1.msra.mxu0 0.0
      %855 = vmatprep.subr.mxu0 0.0
      %856 = vmatpush1.msra.mxu0 0.0
      %857 = vmatprep.subr.mxu0 0.0
      %858 = vmatpush1.msra.mxu0 0.0
      %859 = vmatprep.subr.mxu0 0.0
      %860 = vmatpush1.msra.mxu0 0.0
      %861 = vmatprep.subr.mxu0 0.0
      %862 = vmatpush1.msra.mxu0 0.0
      %863 = vmatprep.subr.mxu0 0.0
      %864 = vmatpush1.msra.mxu0 0.0
      %865 = vmatprep.subr.mxu0 0.0
      %866 = vmatpush1.msra.mxu0 0.0
      %867 = vmatprep.subr.mxu0 0.0
      %868 = vmatpush1.msra.mxu0 0.0
      %869 = vmatprep.subr.mxu0 0.0
      %870 = vmatpush1.msra.mxu0 0.0
      %871 = vmatprep.subr.mxu0 0.0
      %872 = vmatpush1.msra.mxu0 0.0
      %873 = vmatprep.subr.mxu0 0.0
      %874 = vmatpush1.msra.mxu0 0.0
      %875 = vmatprep.subr.mxu0 0.0
      %876 = vmatpush1.msra.mxu0 0.0
      %877 = vmatprep.subr.mxu0 0.0
      %878 = vmatpush1.msra.mxu0 0.0
      %879 = vmatprep.subr.mxu0 0.0
      %880 = vmatpush1.msra.mxu0 0.0
      %881 = vmatprep.subr.mxu0 0.0
      %882 = vmatpush1.msra.mxu0 0.0
      %883 = vmatprep.subr.mxu0 0.0
      %884 = vmatpush1.msra.mxu0 0.0
      %885 = vmatprep.subr.mxu0 0.0
      %886 = vmatpush1.msra.mxu0 0.0
      %887 = vmatprep.subr.mxu0 0.0
      %888 = vmatpush1.msra.mxu0 0.0
      %889 = vmatprep.subr.mxu0 0.0
      %890 = vmatpush1.msra.mxu0 0.0
      %891 = vmatprep.subr.mxu0 0.0
      %892 = vmatpush1.msra.mxu0 0.0
      %893 = vmatprep.subr.mxu0 0.0
      %894 = vmatpush1.msra.mxu0 0.0
      %895 = vmatprep.subr.mxu0 0.0
      %896 = vmatpush1.msra.mxu0 0.0
      %897 = vmatprep.subr.mxu0 0.0
      %898 = vmatpush1.msra.mxu0 0.0
      %899 = vmatprep.mubr.f32.mxu0 0.0
      %900 = vmatmul.mubr.f32.gmra.mrb[0].mxu0 %v809
      %v901 = vpop.f32.mrb[0].mxu0
      %v902 = vadd.f32 0.0, %v901
      %v903 = vpop.f32.mrb[0].mxu0
      %v904 = vadd.f32 0.0, %v903
      %905 = vmatprep.mubr.f32.mxu0 0.0
      %906 = vmatmul.mubr.f32.gmra.mrb[0].mxu0 %v812
      %v907 = vpop.f32.mrb[0].mxu0
      %v908 = vadd.f32 0.0, %v907
      %v909 = vpop.f32.mrb[0].mxu0
      %v910 = vadd.f32 0.0, %v909
      %911 = vmatprep.mubr.f32.mxu0 0.0
      %912 = vmatmul.mubr.f32.gmra.mrb[0].mxu0 %v815
      %v913 = vpop.f32.mrb[0].mxu0
      %v914 = vadd.f32 0.0, %v913
      %v915 = vpop.f32.mrb[0].mxu0
      %v916 = vadd.f32 0.0, %v915
      %917 = vdwg.mxu0
      %918 = vmatprep.subr.mxu0 %v787
      %919 = vmatpush1.msra.mxu0 %v786
      %920 = vmatprep.subr.mxu0 %v793
      %921 = vmatpush1.msra.mxu0 %v792
      %922 = vmatprep.subr.mxu0 %v799
      %923 = vmatpush1.msra.mxu0 %v798
      %924 = vmatprep.subr.mxu0 %v827
      %925 = vmatpush1.msra.mxu0 %v824
      %926 = vmatprep.subr.mxu0 0.0
      %927 = vmatpush1.msra.mxu0 0.0
      %928 = vmatprep.subr.mxu0 0.0
      %929 = vmatpush1.msra.mxu0 0.0
      %930 = vmatprep.subr.mxu0 0.0
      %931 = vmatpush1.msra.mxu0 0.0
      %932 = vmatprep.subr.mxu0 0.0
      %933 = vmatpush1.msra.mxu0 0.0
      %934 = vmatprep.subr.mxu0 0.0
      %935 = vmatpush1.msra.mxu0 0.0
      %936 = vmatprep.subr.mxu0 0.0
      %937 = vmatpush1.msra.mxu0 0.0
      %938 = vmatprep.subr.mxu0 0.0
      %939 = vmatpush1.msra.mxu0 0.0
      %940 = vmatprep.subr.mxu0 0.0
      %941 = vmatpush1.msra.mxu0 0.0
      %942 = vmatprep.subr.mxu0 0.0
      %943 = vmatpush1.msra.mxu0 0.0
      %944 = vmatprep.subr.mxu0 0.0
      %945 = vmatpush1.msra.mxu0 0.0
      %946 = vmatprep.subr.mxu0 0.0
      %947 = vmatpush1.msra.mxu0 0.0
      %948 = vmatprep.subr.mxu0 0.0
      %949 = vmatpush1.msra.mxu0 0.0
      %950 = vmatprep.subr.mxu0 0.0
      %951 = vmatpush1.msra.mxu0 0.0
      %952 = vmatprep.subr.mxu0 0.0
      %953 = vmatpush1.msra.mxu0 0.0
      %954 = vmatprep.subr.mxu0 0.0
      %955 = vmatpush1.msra.mxu0 0.0
      %956 = vmatprep.subr.mxu0 0.0
      %957 = vmatpush1.msra.mxu0 0.0
      %958 = vmatprep.subr.mxu0 0.0
      %959 = vmatpush1.msra.mxu0 0.0
      %960 = vmatprep.subr.mxu0 0.0
      %961 = vmatpush1.msra.mxu0 0.0
      %962 = vmatprep.subr.mxu0 0.0
      %963 = vmatpush1.msra.mxu0 0.0
      %964 = vmatprep.subr.mxu0 0.0
      %965 = vmatpush1.msra.mxu0 0.0
      %966 = vmatprep.subr.mxu0 0.0
      %967 = vmatpush1.msra.mxu0 0.0
      %968 = vmatprep.subr.mxu0 0.0
      %969 = vmatpush1.msra.mxu0 0.0
      %970 = vmatprep.subr.mxu0 0.0
      %971 = vmatpush1.msra.mxu0 0.0
      %972 = vmatprep.subr.mxu0 0.0
      %973 = vmatpush1.msra.mxu0 0.0
      %974 = vmatprep.subr.mxu0 0.0
      %975 = vmatpush1.msra.mxu0 0.0
      %976 = vmatprep.subr.mxu0 0.0
      %977 = vmatpush1.msra.mxu0 0.0
      %978 = vmatprep.subr.mxu0 0.0
      %979 = vmatpush1.msra.mxu0 0.0
      %980 = vmatprep.subr.mxu0 0.0
      %981 = vmatpush1.msra.mxu0 0.0
      %982 = vmatprep.mubr.f32.mxu0 0.0
      %983 = vmatmul.mubr.f32.gmra.mrb[0].mxu0 %v809
      %v984 = vpop.f32.mrb[0].mxu0
      %v985 = vadd.f32 0.0, %v984
      %v986 = vpop.f32.mrb[0].mxu0
      %v987 = vadd.f32 0.0, %v986
      %988 = vmatprep.mubr.f32.mxu0 0.0
      %989 = vmatmul.mubr.f32.gmra.mrb[0].mxu0 %v812
      %v990 = vpop.f32.mrb[0].mxu0
      %v991 = vadd.f32 0.0, %v990
      %v992 = vpop.f32.mrb[0].mxu0
      %v993 = vadd.f32 0.0, %v992
      %994 = vmatprep.mubr.f32.mxu0 0.0
      %995 = vmatmul.mubr.f32.gmra.mrb[0].mxu0 %v815
      %v996 = vpop.f32.mrb[0].mxu0
      %v997 = vadd.f32 0.0, %v996
      %v998 = vpop.f32.mrb[0].mxu0
      %v999 = vadd.f32 0.0, %v998
      %1000 = vdwg.mxu0
      %1001 = vmatprep.subr.mxu0 %v789
      %1002 = vmatpush1.msra.mxu0 %v788
      %1003 = vmatprep.subr.mxu0 %v795
      %1004 = vmatpush1.msra.mxu0 %v794
      %1005 = vmatprep.subr.mxu0 %v801
      %1006 = vmatpush1.msra.mxu0 %v800
      %1007 = vmatprep.subr.mxu0 %v833
      %1008 = vmatpush1.msra.mxu0 %v830
      %1009 = vmatprep.subr.mxu0 0.0
      %1010 = vmatpush1.msra.mxu0 0.0
      %1011 = vmatprep.subr.mxu0 0.0
      %1012 = vmatpush1.msra.mxu0 0.0
      %1013 = vmatprep.subr.mxu0 0.0
      %1014 = vmatpush1.msra.mxu0 0.0
      %1015 = vmatprep.subr.mxu0 0.0
      %1016 = vmatpush1.msra.mxu0 0.0
      %1017 = vmatprep.subr.mxu0 0.0
      %1018 = vmatpush1.msra.mxu0 0.0
      %1019 = vmatprep.subr.mxu0 0.0
      %1020 = vmatpush1.msra.mxu0 0.0
      %1021 = vmatprep.subr.mxu0 0.0
      %1022 = vmatpush1.msra.mxu0 0.0
      %1023 = vmatprep.subr.mxu0 0.0
      %1024 = vmatpush1.msra.mxu0 0.0
      %1025 = vmatprep.subr.mxu0 0.0
      %1026 = vmatpush1.msra.mxu0 0.0
      %1027 = vmatprep.subr.mxu0 0.0
      %1028 = vmatpush1.msra.mxu0 0.0
      %1029 = vmatprep.subr.mxu0 0.0
      %1030 = vmatpush1.msra.mxu0 0.0
      %1031 = vmatprep.subr.mxu0 0.0
      %1032 = vmatpush1.msra.mxu0 0.0
      %1033 = vmatprep.subr.mxu0 0.0
      %1034 = vmatpush1.msra.mxu0 0.0
      %1035 = vmatprep.subr.mxu0 0.0
      %1036 = vmatpush1.msra.mxu0 0.0
      %1037 = vmatprep.subr.mxu0 0.0
      %1038 = vmatpush1.msra.mxu0 0.0
      %1039 = vmatprep.subr.mxu0 0.0
      %1040 = vmatpush1.msra.mxu0 0.0
      %1041 = vmatprep.subr.mxu0 0.0
      %1042 = vmatpush1.msra.mxu0 0.0
      %1043 = vmatprep.subr.mxu0 0.0
      %1044 = vmatpush1.msra.mxu0 0.0
      %1045 = vmatprep.subr.mxu0 0.0
      %1046 = vmatpush1.msra.mxu0 0.0
      %1047 = vmatprep.subr.mxu0 0.0
      %1048 = vmatpush1.msra.mxu0 0.0
      %1049 = vmatprep.subr.mxu0 0.0
      %1050 = vmatpush1.msra.mxu0 0.0
      %1051 = vmatprep.subr.mxu0 0.0
      %1052 = vmatpush1.msra.mxu0 0.0
      %1053 = vmatprep.subr.mxu0 0.0
      %1054 = vmatpush1.msra.mxu0 0.0
      %1055 = vmatprep.subr.mxu0 0.0
      %1056 = vmatpush1.msra.mxu0 0.0
      %1057 = vmatprep.subr.mxu0 0.0
      %1058 = vmatpush1.msra.mxu0 0.0
      %1059 = vmatprep.subr.mxu0 0.0
      %1060 = vmatpush1.msra.mxu0 0.0
      %1061 = vmatprep.subr.mxu0 0.0
      %1062 = vmatpush1.msra.mxu0 0.0
      %1063 = vmatprep.subr.mxu0 0.0
      %1064 = vmatpush1.msra.mxu0 0.0
      %1065 = vmatprep.mubr.f32.mxu0 0.0
      %1066 = vmatmul.mubr.f32.gmra.mrb[0].mxu0 %v809
      %v1067 = vpop.f32.mrb[0].mxu0
      %v1068 = vadd.f32 0.0, %v1067
      %v1069 = vpop.f32.mrb[0].mxu0
      %v1070 = vadd.f32 0.0, %v1069
      %1071 = vmatprep.mubr.f32.mxu0 0.0
      %1072 = vmatmul.mubr.f32.gmra.mrb[0].mxu0 %v812
      %v1073 = vpop.f32.mrb[0].mxu0
      %v1074 = vadd.f32 0.0, %v1073
      %v1075 = vpop.f32.mrb[0].mxu0
      %v1076 = vadd.f32 0.0, %v1075
      %1077 = vmatprep.mubr.f32.mxu0 0.0
      %1078 = vmatmul.mubr.f32.gmra.mrb[0].mxu0 %v815
      %v1079 = vpop.f32.mrb[0].mxu0
      %v1080 = vadd.f32 0.0, %v1079
      %v1081 = vpop.f32.mrb[0].mxu0
      %v1082 = vadd.f32 0.0, %v1081
      %1083 = vdwg.mxu0
      %v1084 = vadd.f32 %v598, %v902
      %v1085 = vadd.f32 %v600, %v904
      %v1086 = vadd.f32 %v681, %v985
      %v1087 = vadd.f32 %v683, %v987
      %v1088 = vadd.f32 %v764, %v1068
      %v1089 = vadd.f32 %v766, %v1070
      %v1090 = vadd.f32 %v604, %v908
      %v1091 = vadd.f32 %v606, %v910
      %v1092 = vadd.f32 %v687, %v991
      %v1093 = vadd.f32 %v689, %v993
      %v1094 = vadd.f32 %v770, %v1074
      %v1095 = vadd.f32 %v772, %v1076
      %v1096 = vadd.f32 %v610, %v914
      %v1097 = vadd.f32 %v612, %v916
      %v1098 = vadd.f32 %v693, %v997
      %v1099 = vadd.f32 %v695, %v999
      %v1100 = vadd.f32 %v776, %v1080
      %v1101 = vadd.f32 %v778, %v1082
      %v1102 = vld [vmem:[%s165 + $0x3] sm:$0xff]
      %v1103 = vld [vmem:[%s165 + $0xb] sm:$0xff]
      %v1104 = vld [vmem:[%s165 + $0x13] sm:$0xff]
      %s1105 = scalar_lea.vmem %s1, 576
      %v1106 = vld [vmem:[%s1105] sm:$0xff]
      %v1107 = vld [vmem:[%s1105 + $0x8] sm:$0xff]
      %v1108 = vld [vmem:[%s1105 + $0x10] sm:$0xff]
      %v1109 = vld [vmem:[%s1105 + $0x18] sm:$0xff]
      %v1110 = vld [vmem:[%s1105 + $0x20] sm:$0xff]
      %v1111 = vld [vmem:[%s1105 + $0x28] sm:$0xff]
      %v1112 = vld [vmem:[%s1105 + $0x30] sm:$0xff]
      %v1113 = vld [vmem:[%s1105 + $0x38] sm:$0xff]
      %v1114 = vld [vmem:[%s1105 + $0x40] sm:$0xff]
      %v1115 = vld [vmem:[%s1105 + $0x48] sm:$0xff]
      %v1116 = vld [vmem:[%s1105 + $0x50] sm:$0xff]
      %v1117 = vld [vmem:[%s1105 + $0x58] sm:$0xff]
      %v1118 = vld [vmem:[%s1105 + $0x60] sm:$0xff]
      %v1119 = vld [vmem:[%s1105 + $0x68] sm:$0xff]
      %v1120 = vld [vmem:[%s1105 + $0x70] sm:$0xff]
      %v1121 = vld [vmem:[%s1105 + $0x78] sm:$0xff]
      %v1122 = vld [vmem:[%s1105 + $0x80] sm:$0xff]
      %v1123 = vld [vmem:[%s1105 + $0x88] sm:$0xff]
      %v1124 = vld [vmem:[%s1105 + $0x90] sm:$0xf]
      %v1125 = vld [vmem:[%s1105 + $0x98] sm:$0xf]
      %v1126 = vld [vmem:[%s1105 + $0xa0] sm:$0xf]
      %v1127 = vld [vmem:[%s1105 + $0xa8] sm:$0xf]
      %v1128 = vld [vmem:[%s1105 + $0xb0] sm:$0xf]
      %v1129 = vld [vmem:[%s1105 + $0xb8] sm:$0xf]
      %v1131 = vsel %vm226, %v1102, 0
      %v1134 = vsel %vm226, %v1103, 0
      %v1137 = vsel %vm226, %v1104, 0
      %v1140 = vsel %vm236, %v1124, 0
      %v1143 = vsel %vm236, %v1125, 0
      %v1146 = vsel %vm236, %v1126, 0
      %v1149 = vsel %vm236, %v1127, 0
      %v1152 = vsel %vm236, %v1128, 0
      %v1155 = vsel %vm236, %v1129, 0
      %1157 = vmatprep.subr.mxu0 %v1107
      %1158 = vmatpush1.msra.mxu0 %v1106
      %1159 = vmatprep.subr.mxu0 %v1113
      %1160 = vmatpush1.msra.mxu0 %v1112
      %1161 = vmatprep.subr.mxu0 %v1119
      %1162 = vmatpush1.msra.mxu0 %v1118
      %1163 = vmatprep.subr.mxu0 %v1143
      %1164 = vmatpush1.msra.mxu0 %v1140
      %1165 = vmatprep.subr.mxu0 0.0
      %1166 = vmatpush1.msra.mxu0 0.0
      %1167 = vmatprep.subr.mxu0 0.0
      %1168 = vmatpush1.msra.mxu0 0.0
      %1169 = vmatprep.subr.mxu0 0.0
      %1170 = vmatpush1.msra.mxu0 0.0
      %1171 = vmatprep.subr.mxu0 0.0
      %1172 = vmatpush1.msra.mxu0 0.0
      %1173 = vmatprep.subr.mxu0 0.0
      %1174 = vmatpush1.msra.mxu0 0.0
      %1175 = vmatprep.subr.mxu0 0.0
      %1176 = vmatpush1.msra.mxu0 0.0
      %1177 = vmatprep.subr.mxu0 0.0
      %1178 = vmatpush1.msra.mxu0 0.0
      %1179 = vmatprep.subr.mxu0 0.0
      %1180 = vmatpush1.msra.mxu0 0.0
      %1181 = vmatprep.subr.mxu0 0.0
      %1182 = vmatpush1.msra.mxu0 0.0
      %1183 = vmatprep.subr.mxu0 0.0
      %1184 = vmatpush1.msra.mxu0 0.0
      %1185 = vmatprep.subr.mxu0 0.0
      %1186 = vmatpush1.msra.mxu0 0.0
      %1187 = vmatprep.subr.mxu0 0.0
      %1188 = vmatpush1.msra.mxu0 0.0
      %1189 = vmatprep.subr.mxu0 0.0
      %1190 = vmatpush1.msra.mxu0 0.0
      %1191 = vmatprep.subr.mxu0 0.0
      %1192 = vmatpush1.msra.mxu0 0.0
      %1193 = vmatprep.subr.mxu0 0.0
      %1194 = vmatpush1.msra.mxu0 0.0
      %1195 = vmatprep.subr.mxu0 0.0
      %1196 = vmatpush1.msra.mxu0 0.0
      %1197 = vmatprep.subr.mxu0 0.0
      %1198 = vmatpush1.msra.mxu0 0.0
      %1199 = vmatprep.subr.mxu0 0.0
      %1200 = vmatpush1.msra.mxu0 0.0
      %1201 = vmatprep.subr.mxu0 0.0
      %1202 = vmatpush1.msra.mxu0 0.0
      %1203 = vmatprep.subr.mxu0 0.0
      %1204 = vmatpush1.msra.mxu0 0.0
      %1205 = vmatprep.subr.mxu0 0.0
      %1206 = vmatpush1.msra.mxu0 0.0
      %1207 = vmatprep.subr.mxu0 0.0
      %1208 = vmatpush1.msra.mxu0 0.0
      %1209 = vmatprep.subr.mxu0 0.0
      %1210 = vmatpush1.msra.mxu0 0.0
      %1211 = vmatprep.subr.mxu0 0.0
      %1212 = vmatpush1.msra.mxu0 0.0
      %1213 = vmatprep.subr.mxu0 0.0
      %1214 = vmatpush1.msra.mxu0 0.0
      %1215 = vmatprep.subr.mxu0 0.0
      %1216 = vmatpush1.msra.mxu0 0.0
      %1217 = vmatprep.subr.mxu0 0.0
      %1218 = vmatpush1.msra.mxu0 0.0
      %1219 = vmatprep.subr.mxu0 0.0
      %1220 = vmatpush1.msra.mxu0 0.0
      %1221 = vmatprep.mubr.f32.mxu0 0.0
      %1222 = vmatmul.mubr.f32.gmra.mrb[0].mxu0 %v1131
      %v1223 = vpop.f32.mrb[0].mxu0
      %v1224 = vadd.f32 0.0, %v1223
      %v1225 = vpop.f32.mrb[0].mxu0
      %v1226 = vadd.f32 0.0, %v1225
      %1227 = vmatprep.mubr.f32.mxu0 0.0
      %1228 = vmatmul.mubr.f32.gmra.mrb[0].mxu0 %v1134
      %v1229 = vpop.f32.mrb[0].mxu0
      %v1230 = vadd.f32 0.0, %v1229
      %v1231 = vpop.f32.mrb[0].mxu0
      %v1232 = vadd.f32 0.0, %v1231
      %1233 = vmatprep.mubr.f32.mxu0 0.0
      %1234 = vmatmul.mubr.f32.gmra.mrb[0].mxu0 %v1137
      %v1235 = vpop.f32.mrb[0].mxu0
      %v1236 = vadd.f32 0.0, %v1235
      %v1237 = vpop.f32.mrb[0].mxu0
      %v1238 = vadd.f32 0.0, %v1237
      %1239 = vdwg.mxu0
      %1240 = vmatprep.subr.mxu0 %v1109
      %1241 = vmatpush1.msra.mxu0 %v1108
      %1242 = vmatprep.subr.mxu0 %v1115
      %1243 = vmatpush1.msra.mxu0 %v1114
      %1244 = vmatprep.subr.mxu0 %v1121
      %1245 = vmatpush1.msra.mxu0 %v1120
      %1246 = vmatprep.subr.mxu0 %v1149
      %1247 = vmatpush1.msra.mxu0 %v1146
      %1248 = vmatprep.subr.mxu0 0.0
      %1249 = vmatpush1.msra.mxu0 0.0
      %1250 = vmatprep.subr.mxu0 0.0
      %1251 = vmatpush1.msra.mxu0 0.0
      %1252 = vmatprep.subr.mxu0 0.0
      %1253 = vmatpush1.msra.mxu0 0.0
      %1254 = vmatprep.subr.mxu0 0.0
      %1255 = vmatpush1.msra.mxu0 0.0
      %1256 = vmatprep.subr.mxu0 0.0
      %1257 = vmatpush1.msra.mxu0 0.0
      %1258 = vmatprep.subr.mxu0 0.0
      %1259 = vmatpush1.msra.mxu0 0.0
      %1260 = vmatprep.subr.mxu0 0.0
      %1261 = vmatpush1.msra.mxu0 0.0
      %1262 = vmatprep.subr.mxu0 0.0
      %1263 = vmatpush1.msra.mxu0 0.0
      %1264 = vmatprep.subr.mxu0 0.0
      %1265 = vmatpush1.msra.mxu0 0.0
      %1266 = vmatprep.subr.mxu0 0.0
      %1267 = vmatpush1.msra.mxu0 0.0
      %1268 = vmatprep.subr.mxu0 0.0
      %1269 = vmatpush1.msra.mxu0 0.0
      %1270 = vmatprep.subr.mxu0 0.0
      %1271 = vmatpush1.msra.mxu0 0.0
      %1272 = vmatprep.subr.mxu0 0.0
      %1273 = vmatpush1.msra.mxu0 0.0
      %1274 = vmatprep.subr.mxu0 0.0
      %1275 = vmatpush1.msra.mxu0 0.0
      %1276 = vmatprep.subr.mxu0 0.0
      %1277 = vmatpush1.msra.mxu0 0.0
      %1278 = vmatprep.subr.mxu0 0.0
      %1279 = vmatpush1.msra.mxu0 0.0
      %1280 = vmatprep.subr.mxu0 0.0
      %1281 = vmatpush1.msra.mxu0 0.0
      %1282 = vmatprep.subr.mxu0 0.0
      %1283 = vmatpush1.msra.mxu0 0.0
      %1284 = vmatprep.subr.mxu0 0.0
      %1285 = vmatpush1.msra.mxu0 0.0
      %1286 = vmatprep.subr.mxu0 0.0
      %1287 = vmatpush1.msra.mxu0 0.0
      %1288 = vmatprep.subr.mxu0 0.0
      %1289 = vmatpush1.msra.mxu0 0.0
      %1290 = vmatprep.subr.mxu0 0.0
      %1291 = vmatpush1.msra.mxu0 0.0
      %1292 = vmatprep.subr.mxu0 0.0
      %1293 = vmatpush1.msra.mxu0 0.0
      %1294 = vmatprep.subr.mxu0 0.0
      %1295 = vmatpush1.msra.mxu0 0.0
      %1296 = vmatprep.subr.mxu0 0.0
      %1297 = vmatpush1.msra.mxu0 0.0
      %1298 = vmatprep.subr.mxu0 0.0
      %1299 = vmatpush1.msra.mxu0 0.0
      %1300 = vmatprep.subr.mxu0 0.0
      %1301 = vmatpush1.msra.mxu0 0.0
      %1302 = vmatprep.subr.mxu0 0.0
      %1303 = vmatpush1.msra.mxu0 0.0
      %1304 = vmatprep.mubr.f32.mxu0 0.0
      %1305 = vmatmul.mubr.f32.gmra.mrb[0].mxu0 %v1131
      %v1306 = vpop.f32.mrb[0].mxu0
      %v1307 = vadd.f32 0.0, %v1306
      %v1308 = vpop.f32.mrb[0].mxu0
      %v1309 = vadd.f32 0.0, %v1308
      %1310 = vmatprep.mubr.f32.mxu0 0.0
      %1311 = vmatmul.mubr.f32.gmra.mrb[0].mxu0 %v1134
      %v1312 = vpop.f32.mrb[0].mxu0
      %v1313 = vadd.f32 0.0, %v1312
      %v1314 = vpop.f32.mrb[0].mxu0
      %v1315 = vadd.f32 0.0, %v1314
      %1316 = vmatprep.mubr.f32.mxu0 0.0
      %1317 = vmatmul.mubr.f32.gmra.mrb[0].mxu0 %v1137
      %v1318 = vpop.f32.mrb[0].mxu0
      %v1319 = vadd.f32 0.0, %v1318
      %v1320 = vpop.f32.mrb[0].mxu0
      %v1321 = vadd.f32 0.0, %v1320
      %1322 = vdwg.mxu0
      %1323 = vmatprep.subr.mxu0 %v1111
      %1324 = vmatpush1.msra.mxu0 %v1110
      %1325 = vmatprep.subr.mxu0 %v1117
      %1326 = vmatpush1.msra.mxu0 %v1116
      %1327 = vmatprep.subr.mxu0 %v1123
      %1328 = vmatpush1.msra.mxu0 %v1122
      %1329 = vmatprep.subr.mxu0 %v1155
      %1330 = vmatpush1.msra.mxu0 %v1152
      %1331 = vmatprep.subr.mxu0 0.0
      %1332 = vmatpush1.msra.mxu0 0.0
      %1333 = vmatprep.subr.mxu0 0.0
      %1334 = vmatpush1.msra.mxu0 0.0
      %1335 = vmatprep.subr.mxu0 0.0
      %1336 = vmatpush1.msra.mxu0 0.0
      %1337 = vmatprep.subr.mxu0 0.0
      %1338 = vmatpush1.msra.mxu0 0.0
      %1339 = vmatprep.subr.mxu0 0.0
      %1340 = vmatpush1.msra.mxu0 0.0
      %1341 = vmatprep.subr.mxu0 0.0
      %1342 = vmatpush1.msra.mxu0 0.0
      %1343 = vmatprep.subr.mxu0 0.0
      %1344 = vmatpush1.msra.mxu0 0.0
      %1345 = vmatprep.subr.mxu0 0.0
      %1346 = vmatpush1.msra.mxu0 0.0
      %1347 = vmatprep.subr.mxu0 0.0
      %1348 = vmatpush1.msra.mxu0 0.0
      %1349 = vmatprep.subr.mxu0 0.0
      %1350 = vmatpush1.msra.mxu0 0.0
      %1351 = vmatprep.subr.mxu0 0.0
      %1352 = vmatpush1.msra.mxu0 0.0
      %1353 = vmatprep.subr.mxu0 0.0
      %1354 = vmatpush1.msra.mxu0 0.0
      %1355 = vmatprep.subr.mxu0 0.0
      %1356 = vmatpush1.msra.mxu0 0.0
      %1357 = vmatprep.subr.mxu0 0.0
      %1358 = vmatpush1.msra.mxu0 0.0
      %1359 = vmatprep.subr.mxu0 0.0
      %1360 = vmatpush1.msra.mxu0 0.0
      %1361 = vmatprep.subr.mxu0 0.0
      %1362 = vmatpush1.msra.mxu0 0.0
      %1363 = vmatprep.subr.mxu0 0.0
      %1364 = vmatpush1.msra.mxu0 0.0
      %1365 = vmatprep.subr.mxu0 0.0
      %1366 = vmatpush1.msra.mxu0 0.0
      %1367 = vmatprep.subr.mxu0 0.0
      %1368 = vmatpush1.msra.mxu0 0.0
      %1369 = vmatprep.subr.mxu0 0.0
      %1370 = vmatpush1.msra.mxu0 0.0
      %1371 = vmatprep.subr.mxu0 0.0
      %1372 = vmatpush1.msra.mxu0 0.0
      %1373 = vmatprep.subr.mxu0 0.0
      %1374 = vmatpush1.msra.mxu0 0.0
      %1375 = vmatprep.subr.mxu0 0.0
      %1376 = vmatpush1.msra.mxu0 0.0
      %1377 = vmatprep.subr.mxu0 0.0
      %1378 = vmatpush1.msra.mxu0 0.0
      %1379 = vmatprep.subr.mxu0 0.0
      %1380 = vmatpush1.msra.mxu0 0.0
      %1381 = vmatprep.subr.mxu0 0.0
      %1382 = vmatpush1.msra.mxu0 0.0
      %1383 = vmatprep.subr.mxu0 0.0
      %1384 = vmatpush1.msra.mxu0 0.0
      %1385 = vmatprep.subr.mxu0 0.0
      %1386 = vmatpush1.msra.mxu0 0.0
      %1387 = vmatprep.mubr.f32.mxu0 0.0
      %1388 = vmatmul.mubr.f32.gmra.mrb[0].mxu0 %v1131
      %v1389 = vpop.f32.mrb[0].mxu0
      %v1390 = vadd.f32 0.0, %v1389
      %v1391 = vpop.f32.mrb[0].mxu0
      %v1392 = vadd.f32 0.0, %v1391
      %1393 = vmatprep.mubr.f32.mxu0 0.0
      %1394 = vmatmul.mubr.f32.gmra.mrb[0].mxu0 %v1134
      %v1395 = vpop.f32.mrb[0].mxu0
      %v1396 = vadd.f32 0.0, %v1395
      %v1397 = vpop.f32.mrb[0].mxu0
      %v1398 = vadd.f32 0.0, %v1397
      %1399 = vmatprep.mubr.f32.mxu0 0.0
      %1400 = vmatmul.mubr.f32.gmra.mrb[0].mxu0 %v1137
      %v1401 = vpop.f32.mrb[0].mxu0
      %v1402 = vadd.f32 0.0, %v1401
      %v1403 = vpop.f32.mrb[0].mxu0
      %v1404 = vadd.f32 0.0, %v1403
      %1405 = vdwg.mxu0
      %v1406 = vadd.f32 %v1084, %v1224
      %v1407 = vadd.f32 %v1085, %v1226
      %v1408 = vadd.f32 %v1086, %v1307
      %v1409 = vadd.f32 %v1087, %v1309
      %v1410 = vadd.f32 %v1088, %v1390
      %v1411 = vadd.f32 %v1089, %v1392
      %v1412 = vadd.f32 %v1090, %v1230
      %v1413 = vadd.f32 %v1091, %v1232
      %v1414 = vadd.f32 %v1092, %v1313
      %v1415 = vadd.f32 %v1093, %v1315
      %v1416 = vadd.f32 %v1094, %v1396
      %v1417 = vadd.f32 %v1095, %v1398
      %v1418 = vadd.f32 %v1096, %v1236
      %v1419 = vadd.f32 %v1097, %v1238
      %v1420 = vadd.f32 %v1098, %v1319
      %v1421 = vadd.f32 %v1099, %v1321
      %v1422 = vadd.f32 %v1100, %v1402
      %v1423 = vadd.f32 %v1101, %v1404
      %v1424 = vld [vmem:[%s165 + $0x4] sm:$0xff]
      %v1425 = vld [vmem:[%s165 + $0xc] sm:$0xff]
      %v1426 = vld [vmem:[%s165 + $0x14] sm:$0xff]
      %s1427 = scalar_lea.vmem %s1, 768
      %v1428 = vld [vmem:[%s1427] sm:$0xff]
      %v1429 = vld [vmem:[%s1427 + $0x8] sm:$0xff]
      %v1430 = vld [vmem:[%s1427 + $0x10] sm:$0xff]
      %v1431 = vld [vmem:[%s1427 + $0x18] sm:$0xff]
      %v1432 = vld [vmem:[%s1427 + $0x20] sm:$0xff]
      %v1433 = vld [vmem:[%s1427 + $0x28] sm:$0xff]
      %v1434 = vld [vmem:[%s1427 + $0x30] sm:$0xff]
      %v1435 = vld [vmem:[%s1427 + $0x38] sm:$0xff]
      %v1436 = vld [vmem:[%s1427 + $0x40] sm:$0xff]
      %v1437 = vld [vmem:[%s1427 + $0x48] sm:$0xff]
      %v1438 = vld [vmem:[%s1427 + $0x50] sm:$0xff]
      %v1439 = vld [vmem:[%s1427 + $0x58] sm:$0xff]
      %v1440 = vld [vmem:[%s1427 + $0x60] sm:$0xff]
      %v1441 = vld [vmem:[%s1427 + $0x68] sm:$0xff]
      %v1442 = vld [vmem:[%s1427 + $0x70] sm:$0xff]
      %v1443 = vld [vmem:[%s1427 + $0x78] sm:$0xff]
      %v1444 = vld [vmem:[%s1427 + $0x80] sm:$0xff]
      %v1445 = vld [vmem:[%s1427 + $0x88] sm:$0xff]
      %v1446 = vld [vmem:[%s1427 + $0x90] sm:$0xf]
      %v1447 = vld [vmem:[%s1427 + $0x98] sm:$0xf]
      %v1448 = vld [vmem:[%s1427 + $0xa0] sm:$0xf]
      %v1449 = vld [vmem:[%s1427 + $0xa8] sm:$0xf]
      %v1450 = vld [vmem:[%s1427 + $0xb0] sm:$0xf]
      %v1451 = vld [vmem:[%s1427 + $0xb8] sm:$0xf]
      %v1453 = vsel %vm226, %v1424, 0
      %v1456 = vsel %vm226, %v1425, 0
      %v1459 = vsel %vm226, %v1426, 0
      %v1462 = vsel %vm236, %v1446, 0
      %v1465 = vsel %vm236, %v1447, 0
      %v1468 = vsel %vm236, %v1448, 0
      %v1471 = vsel %vm236, %v1449, 0
      %v1474 = vsel %vm236, %v1450, 0
      %v1477 = vsel %vm236, %v1451, 0
      %1479 = vmatprep.subr.mxu0 %v1429
      %1480 = vmatpush1.msra.mxu0 %v1428
      %1481 = vmatprep.subr.mxu0 %v1435
      %1482 = vmatpush1.msra.mxu0 %v1434
      %1483 = vmatprep.subr.mxu0 %v1441
      %1484 = vmatpush1.msra.mxu0 %v1440
      %1485 = vmatprep.subr.mxu0 %v1465
      %1486 = vmatpush1.msra.mxu0 %v1462
      %1487 = vmatprep.subr.mxu0 0.0
      %1488 = vmatpush1.msra.mxu0 0.0
      %1489 = vmatprep.subr.mxu0 0.0
      %1490 = vmatpush1.msra.mxu0 0.0
      %1491 = vmatprep.subr.mxu0 0.0
      %1492 = vmatpush1.msra.mxu0 0.0
      %1493 = vmatprep.subr.mxu0 0.0
      %1494 = vmatpush1.msra.mxu0 0.0
      %1495 = vmatprep.subr.mxu0 0.0
      %1496 = vmatpush1.msra.mxu0 0.0
      %1497 = vmatprep.subr.mxu0 0.0
      %1498 = vmatpush1.msra.mxu0 0.0
      %1499 = vmatprep.subr.mxu0 0.0
      %1500 = vmatpush1.msra.mxu0 0.0
      %1501 = vmatprep.subr.mxu0 0.0
      %1502 = vmatpush1.msra.mxu0 0.0
      %1503 = vmatprep.subr.mxu0 0.0
      %1504 = vmatpush1.msra.mxu0 0.0
      %1505 = vmatprep.subr.mxu0 0.0
      %1506 = vmatpush1.msra.mxu0 0.0
      %1507 = vmatprep.subr.mxu0 0.0
      %1508 = vmatpush1.msra.mxu0 0.0
      %1509 = vmatprep.subr.mxu0 0.0
      %1510 = vmatpush1.msra.mxu0 0.0
      %1511 = vmatprep.subr.mxu0 0.0
      %1512 = vmatpush1.msra.mxu0 0.0
      %1513 = vmatprep.subr.mxu0 0.0
      %1514 = vmatpush1.msra.mxu0 0.0
      %1515 = vmatprep.subr.mxu0 0.0
      %1516 = vmatpush1.msra.mxu0 0.0
      %1517 = vmatprep.subr.mxu0 0.0
      %1518 = vmatpush1.msra.mxu0 0.0
      %1519 = vmatprep.subr.mxu0 0.0
      %1520 = vmatpush1.msra.mxu0 0.0
      %1521 = vmatprep.subr.mxu0 0.0
      %1522 = vmatpush1.msra.mxu0 0.0
      %1523 = vmatprep.subr.mxu0 0.0
      %1524 = vmatpush1.msra.mxu0 0.0
      %1525 = vmatprep.subr.mxu0 0.0
      %1526 = vmatpush1.msra.mxu0 0.0
      %1527 = vmatprep.subr.mxu0 0.0
      %1528 = vmatpush1.msra.mxu0 0.0
      %1529 = vmatprep.subr.mxu0 0.0
      %1530 = vmatpush1.msra.mxu0 0.0
      %1531 = vmatprep.subr.mxu0 0.0
      %1532 = vmatpush1.msra.mxu0 0.0
      %1533 = vmatprep.subr.mxu0 0.0
      %1534 = vmatpush1.msra.mxu0 0.0
      %1535 = vmatprep.subr.mxu0 0.0
      %1536 = vmatpush1.msra.mxu0 0.0
      %1537 = vmatprep.subr.mxu0 0.0
      %1538 = vmatpush1.msra.mxu0 0.0
      %1539 = vmatprep.subr.mxu0 0.0
      %1540 = vmatpush1.msra.mxu0 0.0
      %1541 = vmatprep.subr.mxu0 0.0
      %1542 = vmatpush1.msra.mxu0 0.0
      %1543 = vmatprep.mubr.f32.mxu0 0.0
      %1544 = vmatmul.mubr.f32.gmra.mrb[0].mxu0 %v1453
      %v1545 = vpop.f32.mrb[0].mxu0
      %v1546 = vadd.f32 0.0, %v1545
      %v1547 = vpop.f32.mrb[0].mxu0
      %v1548 = vadd.f32 0.0, %v1547
      %1549 = vmatprep.mubr.f32.mxu0 0.0
      %1550 = vmatmul.mubr.f32.gmra.mrb[0].mxu0 %v1456
      %v1551 = vpop.f32.mrb[0].mxu0
      %v1552 = vadd.f32 0.0, %v1551
      %v1553 = vpop.f32.mrb[0].mxu0
      %v1554 = vadd.f32 0.0, %v1553
      %1555 = vmatprep.mubr.f32.mxu0 0.0
      %1556 = vmatmul.mubr.f32.gmra.mrb[0].mxu0 %v1459
      %v1557 = vpop.f32.mrb[0].mxu0
      %v1558 = vadd.f32 0.0, %v1557
      %v1559 = vpop.f32.mrb[0].mxu0
      %v1560 = vadd.f32 0.0, %v1559
      %1561 = vdwg.mxu0
      %1562 = vmatprep.subr.mxu0 %v1431
      %1563 = vmatpush1.msra.mxu0 %v1430
      %1564 = vmatprep.subr.mxu0 %v1437
      %1565 = vmatpush1.msra.mxu0 %v1436
      %1566 = vmatprep.subr.mxu0 %v1443
      %1567 = vmatpush1.msra.mxu0 %v1442
      %1568 = vmatprep.subr.mxu0 %v1471
      %1569 = vmatpush1.msra.mxu0 %v1468
      %1570 = vmatprep.subr.mxu0 0.0
      %1571 = vmatpush1.msra.mxu0 0.0
      %1572 = vmatprep.subr.mxu0 0.0
      %1573 = vmatpush1.msra.mxu0 0.0
      %1574 = vmatprep.subr.mxu0 0.0
      %1575 = vmatpush1.msra.mxu0 0.0
      %1576 = vmatprep.subr.mxu0 0.0
      %1577 = vmatpush1.msra.mxu0 0.0
      %1578 = vmatprep.subr.mxu0 0.0
      %1579 = vmatpush1.msra.mxu0 0.0
      %1580 = vmatprep.subr.mxu0 0.0
      %1581 = vmatpush1.msra.mxu0 0.0
      %1582 = vmatprep.subr.mxu0 0.0
      %1583 = vmatpush1.msra.mxu0 0.0
      %1584 = vmatprep.subr.mxu0 0.0
      %1585 = vmatpush1.msra.mxu0 0.0
      %1586 = vmatprep.subr.mxu0 0.0
      %1587 = vmatpush1.msra.mxu0 0.0
      %1588 = vmatprep.subr.mxu0 0.0
      %1589 = vmatpush1.msra.mxu0 0.0
      %1590 = vmatprep.subr.mxu0 0.0
      %1591 = vmatpush1.msra.mxu0 0.0
      %1592 = vmatprep.subr.mxu0 0.0
      %1593 = vmatpush1.msra.mxu0 0.0
      %1594 = vmatprep.subr.mxu0 0.0
      %1595 = vmatpush1.msra.mxu0 0.0
      %1596 = vmatprep.subr.mxu0 0.0
      %1597 = vmatpush1.msra.mxu0 0.0
      %1598 = vmatprep.subr.mxu0 0.0
      %1599 = vmatpush1.msra.mxu0 0.0
      %1600 = vmatprep.subr.mxu0 0.0
      %1601 = vmatpush1.msra.mxu0 0.0
      %1602 = vmatprep.subr.mxu0 0.0
      %1603 = vmatpush1.msra.mxu0 0.0
      %1604 = vmatprep.subr.mxu0 0.0
      %1605 = vmatpush1.msra.mxu0 0.0
      %1606 = vmatprep.subr.mxu0 0.0
      %1607 = vmatpush1.msra.mxu0 0.0
      %1608 = vmatprep.subr.mxu0 0.0
      %1609 = vmatpush1.msra.mxu0 0.0
      %1610 = vmatprep.subr.mxu0 0.0
      %1611 = vmatpush1.msra.mxu0 0.0
      %1612 = vmatprep.subr.mxu0 0.0
      %1613 = vmatpush1.msra.mxu0 0.0
      %1614 = vmatprep.subr.mxu0 0.0
      %1615 = vmatpush1.msra.mxu0 0.0
      %1616 = vmatprep.subr.mxu0 0.0
      %1617 = vmatpush1.msra.mxu0 0.0
      %1618 = vmatprep.subr.mxu0 0.0
      %1619 = vmatpush1.msra.mxu0 0.0
      %1620 = vmatprep.subr.mxu0 0.0
      %1621 = vmatpush1.msra.mxu0 0.0
      %1622 = vmatprep.subr.mxu0 0.0
      %1623 = vmatpush1.msra.mxu0 0.0
      %1624 = vmatprep.subr.mxu0 0.0
      %1625 = vmatpush1.msra.mxu0 0.0
      %1626 = vmatprep.mubr.f32.mxu0 0.0
      %1627 = vmatmul.mubr.f32.gmra.mrb[0].mxu0 %v1453
      %v1628 = vpop.f32.mrb[0].mxu0
      %v1629 = vadd.f32 0.0, %v1628
      %v1630 = vpop.f32.mrb[0].mxu0
      %v1631 = vadd.f32 0.0, %v1630
      %1632 = vmatprep.mubr.f32.mxu0 0.0
      %1633 = vmatmul.mubr.f32.gmra.mrb[0].mxu0 %v1456
      %v1634 = vpop.f32.mrb[0].mxu0
      %v1635 = vadd.f32 0.0, %v1634
      %v1636 = vpop.f32.mrb[0].mxu0
      %v1637 = vadd.f32 0.0, %v1636
      %1638 = vmatprep.mubr.f32.mxu0 0.0
      %1639 = vmatmul.mubr.f32.gmra.mrb[0].mxu0 %v1459
      %v1640 = vpop.f32.mrb[0].mxu0
      %v1641 = vadd.f32 0.0, %v1640
      %v1642 = vpop.f32.mrb[0].mxu0
      %v1643 = vadd.f32 0.0, %v1642
      %1644 = vdwg.mxu0
      %1645 = vmatprep.subr.mxu0 %v1433
      %1646 = vmatpush1.msra.mxu0 %v1432
      %1647 = vmatprep.subr.mxu0 %v1439
      %1648 = vmatpush1.msra.mxu0 %v1438
      %1649 = vmatprep.subr.mxu0 %v1445
      %1650 = vmatpush1.msra.mxu0 %v1444
      %1651 = vmatprep.subr.mxu0 %v1477
      %1652 = vmatpush1.msra.mxu0 %v1474
      %1653 = vmatprep.subr.mxu0 0.0
      %1654 = vmatpush1.msra.mxu0 0.0
      %1655 = vmatprep.subr.mxu0 0.0
      %1656 = vmatpush1.msra.mxu0 0.0
      %1657 = vmatprep.subr.mxu0 0.0
      %1658 = vmatpush1.msra.mxu0 0.0
      %1659 = vmatprep.subr.mxu0 0.0
      %1660 = vmatpush1.msra.mxu0 0.0
      %1661 = vmatprep.subr.mxu0 0.0
      %1662 = vmatpush1.msra.mxu0 0.0
      %1663 = vmatprep.subr.mxu0 0.0
      %1664 = vmatpush1.msra.mxu0 0.0
      %1665 = vmatprep.subr.mxu0 0.0
      %1666 = vmatpush1.msra.mxu0 0.0
      %1667 = vmatprep.subr.mxu0 0.0
      %1668 = vmatpush1.msra.mxu0 0.0
      %1669 = vmatprep.subr.mxu0 0.0
      %1670 = vmatpush1.msra.mxu0 0.0
      %1671 = vmatprep.subr.mxu0 0.0
      %1672 = vmatpush1.msra.mxu0 0.0
      %1673 = vmatprep.subr.mxu0 0.0
      %1674 = vmatpush1.msra.mxu0 0.0
      %1675 = vmatprep.subr.mxu0 0.0
      %1676 = vmatpush1.msra.mxu0 0.0
      %1677 = vmatprep.subr.mxu0 0.0
      %1678 = vmatpush1.msra.mxu0 0.0
      %1679 = vmatprep.subr.mxu0 0.0
      %1680 = vmatpush1.msra.mxu0 0.0
      %1681 = vmatprep.subr.mxu0 0.0
      %1682 = vmatpush1.msra.mxu0 0.0
      %1683 = vmatprep.subr.mxu0 0.0
      %1684 = vmatpush1.msra.mxu0 0.0
      %1685 = vmatprep.subr.mxu0 0.0
      %1686 = vmatpush1.msra.mxu0 0.0
      %1687 = vmatprep.subr.mxu0 0.0
      %1688 = vmatpush1.msra.mxu0 0.0
      %1689 = vmatprep.subr.mxu0 0.0
      %1690 = vmatpush1.msra.mxu0 0.0
      %1691 = vmatprep.subr.mxu0 0.0
      %1692 = vmatpush1.msra.mxu0 0.0
      %1693 = vmatprep.subr.mxu0 0.0
      %1694 = vmatpush1.msra.mxu0 0.0
      %1695 = vmatprep.subr.mxu0 0.0
      %1696 = vmatpush1.msra.mxu0 0.0
      %1697 = vmatprep.subr.mxu0 0.0
      %1698 = vmatpush1.msra.mxu0 0.0
      %1699 = vmatprep.subr.mxu0 0.0
      %1700 = vmatpush1.msra.mxu0 0.0
      %1701 = vmatprep.subr.mxu0 0.0
      %1702 = vmatpush1.msra.mxu0 0.0
      %1703 = vmatprep.subr.mxu0 0.0
      %1704 = vmatpush1.msra.mxu0 0.0
      %1705 = vmatprep.subr.mxu0 0.0
      %1706 = vmatpush1.msra.mxu0 0.0
      %1707 = vmatprep.subr.mxu0 0.0
      %1708 = vmatpush1.msra.mxu0 0.0
      %1709 = vmatprep.mubr.f32.mxu0 0.0
      %1710 = vmatmul.mubr.f32.gmra.mrb[0].mxu0 %v1453
      %v1711 = vpop.f32.mrb[0].mxu0
      %v1712 = vadd.f32 0.0, %v1711
      %v1713 = vpop.f32.mrb[0].mxu0
      %v1714 = vadd.f32 0.0, %v1713
      %1715 = vmatprep.mubr.f32.mxu0 0.0
      %1716 = vmatmul.mubr.f32.gmra.mrb[0].mxu0 %v1456
      %v1717 = vpop.f32.mrb[0].mxu0
      %v1718 = vadd.f32 0.0, %v1717
      %v1719 = vpop.f32.mrb[0].mxu0
      %v1720 = vadd.f32 0.0, %v1719
      %1721 = vmatprep.mubr.f32.mxu0 0.0
      %1722 = vmatmul.mubr.f32.gmra.mrb[0].mxu0 %v1459
      %v1723 = vpop.f32.mrb[0].mxu0
      %v1724 = vadd.f32 0.0, %v1723
      %v1725 = vpop.f32.mrb[0].mxu0
      %v1726 = vadd.f32 0.0, %v1725
      %1727 = vdwg.mxu0
      %v1728 = vadd.f32 %v1406, %v1546
      %v1729 = vadd.f32 %v1407, %v1548
      %v1730 = vadd.f32 %v1408, %v1629
      %v1731 = vadd.f32 %v1409, %v1631
      %v1732 = vadd.f32 %v1410, %v1712
      %v1733 = vadd.f32 %v1411, %v1714
      %v1734 = vadd.f32 %v1412, %v1552
      %v1735 = vadd.f32 %v1413, %v1554
      %v1736 = vadd.f32 %v1414, %v1635
      %v1737 = vadd.f32 %v1415, %v1637
      %v1738 = vadd.f32 %v1416, %v1718
      %v1739 = vadd.f32 %v1417, %v1720
      %v1740 = vadd.f32 %v1418, %v1558
      %v1741 = vadd.f32 %v1419, %v1560
      %v1742 = vadd.f32 %v1420, %v1641
      %v1743 = vadd.f32 %v1421, %v1643
      %v1744 = vadd.f32 %v1422, %v1724
      %v1745 = vadd.f32 %v1423, %v1726
      %v1746 = vld [vmem:[%s2] sm:$0x3f]
      %v1748 = vlaneseq
      %v1749 = vshrl.u32 %v1748, 7
      %v1750 = vsub.s32 0, %v1749
      %v1751 = vrot.slane %v1746, %v1750
      %v1752 = vlaneseq
      %v1753 = vshrl.u32 %v1752, 7
      %v1754 = vsub.s32 1, %v1753
      %v1755 = vrot.slane %v1746, %v1754
      %v1756 = vlaneseq
      %v1757 = vshrl.u32 %v1756, 7
      %v1758 = vsub.s32 2, %v1757
      %v1759 = vrot.slane %v1746, %v1758
      %v1760 = vlaneseq
      %v1761 = vshrl.u32 %v1760, 7
      %v1762 = vsub.s32 3, %v1761
      %v1763 = vrot.slane %v1746, %v1762
      %v1764 = vlaneseq
      %v1765 = vshrl.u32 %v1764, 7
      %v1766 = vsub.s32 4, %v1765
      %v1767 = vrot.slane %v1746, %v1766
      %v1768 = vlaneseq
      %v1769 = vshrl.u32 %v1768, 7
      %v1770 = vsub.s32 5, %v1769
      %v1771 = vrot.slane %v1746, %v1770
      %v1778 = vadd.f32 %v1728, %v1751
      %v1779 = vadd.f32 %v1729, %v1755
      %v1780 = vadd.f32 %v1730, %v1759
      %v1781 = vadd.f32 %v1731, %v1763
      %v1782 = vadd.f32 %v1732, %v1767
      %v1783 = vadd.f32 %v1733, %v1771
      %v1784 = vadd.f32 %v1734, %v1751
      %v1785 = vadd.f32 %v1735, %v1755
      %v1786 = vadd.f32 %v1736, %v1759
      %v1787 = vadd.f32 %v1737, %v1763
      %v1788 = vadd.f32 %v1738, %v1767
      %v1789 = vadd.f32 %v1739, %v1771
      %v1790 = vadd.f32 %v1740, %v1751
      %v1791 = vadd.f32 %v1741, %v1755
      %v1792 = vadd.f32 %v1742, %v1759
      %v1793 = vadd.f32 %v1743, %v1763
      %v1794 = vadd.f32 %v1744, %v1767
      %v1795 = vadd.f32 %v1745, %v1771
      %v1796 = vmax.f32 %v1778, 0.0
      %v1797 = vmax.f32 %v1779, 0.0
      %v1798 = vmax.f32 %v1780, 0.0
      %v1799 = vmax.f32 %v1781, 0.0
      %v1800 = vmax.f32 %v1782, 0.0
      %v1801 = vmax.f32 %v1783, 0.0
      %v1802 = vmax.f32 %v1784, 0.0
      %v1803 = vmax.f32 %v1785, 0.0
      %v1804 = vmax.f32 %v1786, 0.0
      %v1805 = vmax.f32 %v1787, 0.0
      %v1806 = vmax.f32 %v1788, 0.0
      %v1807 = vmax.f32 %v1789, 0.0
      %v1808 = vmax.f32 %v1790, 0.0
      %v1809 = vmax.f32 %v1791, 0.0
      %v1810 = vmax.f32 %v1792, 0.0
      %v1811 = vmax.f32 %v1793, 0.0
      %v1812 = vmax.f32 %v1794, 0.0
      %v1813 = vmax.f32 %v1795, 0.0
      %1814 = vst [vmem:[%s170] sm:$0xff] %v1796
      %1815 = vst [vmem:[%s170 + $0x8] sm:$0xff] %v1797
      %1816 = vst [vmem:[%s170 + $0x10] sm:$0xff] %v1798
      %1817 = vst [vmem:[%s170 + $0x18] sm:$0xff] %v1799
      %1818 = vst [vmem:[%s170 + $0x20] sm:$0xff] %v1800
      %1819 = vst [vmem:[%s170 + $0x28] sm:$0xff] %v1801
      %1820 = vst [vmem:[%s170 + $0x30] sm:$0xff] %v1802
      %1821 = vst [vmem:[%s170 + $0x38] sm:$0xff] %v1803
      %1822 = vst [vmem:[%s170 + $0x40] sm:$0xff] %v1804
      %1823 = vst [vmem:[%s170 + $0x48] sm:$0xff] %v1805
      %1824 = vst [vmem:[%s170 + $0x50] sm:$0xff] %v1806
      %1825 = vst [vmem:[%s170 + $0x58] sm:$0xff] %v1807
      %1826 = vst [vmem:[%s170 + $0x60] sm:$0xff] %v1808
      %1827 = vst [vmem:[%s170 + $0x68] sm:$0xff] %v1809
      %1828 = vst [vmem:[%s170 + $0x70] sm:$0xff] %v1810
      %1829 = vst [vmem:[%s170 + $0x78] sm:$0xff] %v1811
      %1830 = vst [vmem:[%s170 + $0x80] sm:$0xff] %v1812
      %1831 = vst [vmem:[%s170 + $0x88] sm:$0xff] %v1813
      %p1832 = scmp.lt.s32.totalorder %s14, 1
      %s1833 = scalar_select %p1832, %s14, 1
      %s1834 = smul.addr %s1833, 18
      %s1835 = smul.addr %s1834, 8
      %s1836 = scalar_lea.vmem %s3, %s1835
      // Predicated region
      $region33: #{net_forward.3} parent=31 // pred_check
        %p1837 = pneg %p100
      $region34: #{net_forward.3} parent=31 // pred_check_branch
        %1839 = sbr.rel (%p1837) target = $region36
      $region35: #{net_forward.3} parent=31 // pred_region
        _
      $region36: #{net_forward.3} parent=31 // pred_fallthru
        _
    $region32: #{net_forward.3} parent=5 // pred_fallthru
      _
    %p1840 = scmp.le.s32.totalorder 2, %s9
    // Predicated region
    $region37: #{net_forward.3} parent=5 // pred_check
      %p1841 = pneg %p1840
    $region38: #{net_forward.3} parent=5 // pred_check_branch
      %1843 = sbr.rel (%p1841) target = $region40
    $region39: #{net_forward.3} parent=5 // pred_region
      %s1844 = ssub.s32 %s9, 2
      // Predicated region
      $region41: #{net_forward.3} parent=39 // pred_check
        %p1845 = pneg %p106
      $region42: #{net_forward.3} parent=39 // pred_check_branch
        %1847 = sbr.rel (%p1845) target = $region44
      $region43: #{net_forward.3} parent=39 // pred_region
        %p1848 = scmp.lt.s32.totalorder %s15, 1
        %s1849 = scalar_select %p1848, %s15, 1
        %s1850 = smul.addr %s1849, 18
        %s1851 = smul.addr %s1850, 8
        %s1852 = scalar_lea.vmem %s3, %s1851
      $region44: #{net_forward.3} parent=39 // pred_fallthru
        _
    $region40: #{net_forward.3} parent=5 // pred_fallthru
      _
  $region6: #{net_forward.3} parent=0 // loop_footer
    %s13 = sadd.s32 1, %s9
  $region7: #{net_forward.3} parent=0 // loop_footer_branch
    %8 = sbr.rel target = $region3
  $region8: #{net_forward.3} parent=0 // loop_exit
    _

// kernel: net_forward.4
$region0: #{net_forward.4}
  #allocation0 [shape = 'u32[]', space=smem, size = 0x4, offset = 0x4, fixed_abs, tag = 'smem constant byte address 0x4 - core index']
  #allocation1 [shape = 'u32[144,128]{1,0:T(1,128)}', space=vmem, size = 0x12000, scoped, tag = 'internal scratch']
  %s0 = inlined_call_operand.vmem [shape: f32[2,4,100,800], index: 0, kind: input, shape index: {}]
  %s1 = inlined_call_operand.vmem [shape: f32[800,64], index: 1, kind: input, shape index: {}]
  %s2 = inlined_call_operand.vmem [shape: f32[1,64], index: 2, kind: input, shape index: {}]
  %s3 = inlined_call_operand.vmem [shape: f32[2,100,64], index: 3, kind: output, shape index: {}]
  %s4 = sld [smem:[#allocation0]]
  $region45: #{net_forward.4} parent=0
    _
  %s6 = ssub.s32 1, %s4
  %s7 = scalar_select 0, %s6, %s4
  loop: start=0, step=1, limit=4
  $region2: #{net_forward.4} parent=0 // loop_pre_header
    _
  $region3: #{net_forward.4} parent=0 // loop_header
    %s9 = sphi 0, %s13
    %p10 = scmp.ge.s32.totalorder %s9, 4
    %s19 = sphi 0, %s21
    %s22 = sphi 0, %s19
    %s23 = sphi 0, %s22
    %s39 = sphi 0, %s23
    %s43 = sphi 0, %s43
    %s45 = sphi 0, %s43
    %s46 = sphi 0, %s45
    %s60 = sphi 0, %s46
    %s64 = sphi 0, %s64
    %s66 = sphi 0, %s64
    %s67 = sphi 0, %s66
    %s81 = sphi 0, %s67
    %s87 = sphi 0, %s89
    %s90 = sphi 0, %s87
    %s91 = sphi 0, %s90
    %s107 = sphi 0, %s91
  $region4: #{net_forward.4} parent=0 // loop_header_branch
    %12 = sbr.rel (%p10) target = $region8
  $region5: #{net_forward.4} parent=0 // loop_body
    %s14 = ssub.s32 %s9, 1
    %s15 = ssub.s32 %s9, 2
    %s16 = sadd.s32 %s9, 1
    %s17 = ssub.s32 %s9, %s16
    %p18 = scmp.eq.s32.totalorder %s17, 0
    %s20 = sadd.s32 %s19, 1
    %s21 = scalar_select %p18, %s19, %s20
    %p24 = pneg %p18
    %p25 = scmp.eq.s32.totalorder %s9, 1
    %p26 = por %p24, %p25
    %p27 = scmp.ne.s32.totalorder %s19, %s22
    %p28 = scmp.eq.s32.totalorder %s9, 0
    %p29 = por %p27, %p28
    %p30 = scmp.ne.s32.totalorder %s19, %s22
    %p31 = scmp.eq.s32.totalorder %s14, 1
    %p32 = por %p30, %p31
    %p33 = scmp.ne.s32.totalorder %s22, %s23
    %p34 = scmp.eq.s32.totalorder %s14, 0
    %p35 = por %p33, %p34
    %p36 = scmp.ne.s32.totalorder %s22, %s23
    %p37 = scmp.eq.s32.totalorder %s15, 1
    %p38 = por %p36, %p37
    %p40 = scmp.ne.s32.totalorder %s23, %s39
    %p41 = scmp.eq.s32.totalorder %s15, 0
    %p42 = por %p40, %p41
    %s44 = sadd.s32 %s43, 1
    %p47 = scmp.eq.s32.totalorder %s9, 1
    %p48 = scmp.ne.s32.totalorder %s43, %s45
    %p49 = scmp.eq.s32.totalorder %s9, 0
    %p50 = por %p48, %p49
    %p51 = scmp.ne.s32.totalorder %s43, %s45
    %p52 = scmp.eq.s32.totalorder %s14, 1
    %p53 = por %p51, %p52
    %p54 = scmp.ne.s32.totalorder %s45, %s46
    %p55 = scmp.eq.s32.totalorder %s14, 0
    %p56 = por %p54, %p55
    %p57 = scmp.ne.s32.totalorder %s45, %s46
    %p58 = scmp.eq.s32.totalorder %s15, 1
    %p59 = por %p57, %p58
    %p61 = scmp.ne.s32.totalorder %s46, %s60
    %p62 = scmp.eq.s32.totalorder %s15, 0
    %p63 = por %p61, %p62
    %s65 = sadd.s32 %s64, 1
    %p68 = scmp.eq.s32.totalorder %s9, 1
    %p69 = scmp.ne.s32.totalorder %s64, %s66
    %p70 = scmp.eq.s32.totalorder %s9, 0
    %p71 = por %p69, %p70
    %p72 = scmp.ne.s32.totalorder %s64, %s66
    %p73 = scmp.eq.s32.totalorder %s14, 1
    %p74 = por %p72, %p73
    %p75 = scmp.ne.s32.totalorder %s66, %s67
    %p76 = scmp.eq.s32.totalorder %s14, 0
    %p77 = por %p75, %p76
    %p78 = scmp.ne.s32.totalorder %s66, %s67
    %p79 = scmp.eq.s32.totalorder %s15, 1
    %p80 = por %p78, %p79
    %p82 = scmp.ne.s32.totalorder %s67, %s81
    %p83 = scmp.eq.s32.totalorder %s15, 0
    %p84 = por %p82, %p83
    %s85 = ssub.s32 %s9, %s16
    %p86 = scmp.eq.s32.totalorder %s85, 0
    %s88 = sadd.s32 %s87, 1
    %s89 = scalar_select %p86, %s87, %s88
    %p92 = pneg %p86
    %p93 = scmp.eq.s32.totalorder %s9, 1
    %p94 = por %p92, %p93
    %p95 = scmp.ne.s32.totalorder %s87, %s90
    %p96 = scmp.eq.s32.totalorder %s9, 0
    %p97 = por %p95, %p96
    %p98 = scmp.ne.s32.totalorder %s87, %s90
    %p99 = scmp.eq.s32.totalorder %s14, 1
    %p100 = por %p98, %p99
    %p101 = scmp.ne.s32.totalorder %s90, %s91
    %p102 = scmp.eq.s32.totalorder %s14, 0
    %p103 = por %p101, %p102
    %p104 = scmp.ne.s32.totalorder %s90, %s91
    %p105 = scmp.eq.s32.totalorder %s15, 1
    %p106 = por %p104, %p105
    %p108 = scmp.ne.s32.totalorder %s91, %s107
    %p109 = scmp.eq.s32.totalorder %s15, 0
    %p110 = por %p108, %p109
    %p111 = scmp.le.s32.totalorder 1, %s9
    %p112 = scmp.lt.s32.totalorder %s9, 3
    %p113 = pnand %p111, %p112
    %p114 = pneg %p113
    // Predicated region
    $region9: #{net_forward.4} parent=5 // pred_check
      _
    $region10: #{net_forward.4} parent=5 // pred_check_branch
      %116 = sbr.rel (%p113) target = $region12
    $region11: #{net_forward.4} parent=5 // pred_region
      %s117 = ssub.s32 %s9, 1
      // Predicated region
      $region13: #{net_forward.4} parent=11 // pred_check
        %p118 = pneg %p56
      $region14: #{net_forward.4} parent=11 // pred_check_branch
        %120 = sbr.rel (%p118) target = $region16
      $region15: #{net_forward.4} parent=11 // pred_region
        _
      $region16: #{net_forward.4} parent=11 // pred_fallthru
        _
      // Predicated region
      $region17: #{net_forward.4} parent=11 // pred_check
        %p121 = pneg %p77
      $region18: #{net_forward.4} parent=11 // pred_check_branch
        %123 = sbr.rel (%p121) target = $region20
      $region19: #{net_forward.4} parent=11 // pred_region
        _
      $region20: #{net_forward.4} parent=11 // pred_fallthru
        _
    $region12: #{net_forward.4} parent=5 // pred_fallthru
      _
    %p124 = scmp.lt.s32.totalorder %s9, 2
    // Predicated region
    $region21: #{net_forward.4} parent=5 // pred_check
      %p125 = pneg %p124
    $region22: #{net_forward.4} parent=5 // pred_check_branch
      %127 = sbr.rel (%p125) target = $region24
    $region23: #{net_forward.4} parent=5 // pred_region
      // Predicated region
      $region25: #{net_forward.4} parent=23 // pred_check
        %p128 = pneg %p29
      $region26: #{net_forward.4} parent=23 // pred_check_branch
        %130 = sbr.rel (%p128) target = $region28
      $region27: #{net_forward.4} parent=23 // pred_region
        %p131 = scmp.lt.s32.totalorder %s9, 1
        %s132 = scalar_select %p131, %s9, 1
        %s133 = smul.addr %s132, 364
        %s134 = smul.addr %s133, 8
        %s135 = scalar_lea.vmem %s0, %s134
      $region28: #{net_forward.4} parent=23 // pred_fallthru
        _
    $region24: #{net_forward.4} parent=5 // pred_fallthru
      _
    %p136 = scmp.le.s32.totalorder 1, %s9
    %p137 = scmp.lt.s32.totalorder %s9, 3
    %p138 = pnand %p136, %p137
    %p139 = pneg %p138
    // Predicated region
    $region29: #{net_forward.4} parent=5 // pred_check
      _
    $region30: #{net_forward.4} parent=5 // pred_check_branch
      %141 = sbr.rel (%p138) target = $region32
    $region31: #{net_forward.4} parent=5 // pred_region
      %s142 = ssub.s32 %s9, 1
      %p143 = scmp.lt.s32.totalorder %s14, 1
      %s144 = scalar_select %p143, %s14, 1
      %s145 = smul.addr %s144, 364
      %s146 = smul.addr %s145, 8
      %s147 = scalar_lea.vmem %s0, %s146
      %p148 = pneg %p35
      %p149 = pneg %p32
      %p150 = pneg %p56
      %p151 = pneg %p53
      %p152 = pneg %p77
      %p153 = pneg %p74
      %p154 = pneg %p103
      %p155 = pneg %p100
      %p156 = scmp.lt.s32.totalorder %s14, 1
      %s157 = scalar_select %p156, %s14, 1
      %s158 = smul.addr %s157, 13
      %s159 = smul.addr %s158, 8
      %s160 = scalar_lea.vmem %s3, %s159
      %p161 = scmp.lt.s32.totalorder %s14, 1
      %s162 = scalar_select %p161, %s14, 1
      %s163 = smul.addr %s162, 364
      %s164 = smul.addr %s163, 8
      %s165 = scalar_lea.vmem %s0, %s164
      %p166 = scmp.lt.s32.totalorder %s14, 1
      %s167 = scalar_select %p166, %s14, 1
      %s168 = smul.addr %s167, 13
      %s169 = smul.addr %s168, 8
      %s170 = scalar_lea.vmem %s3, %s169
      %v171 = vld [vmem:[%s1] sm:$0xff]
      %v172 = vld [vmem:[%s1 + $0x8] sm:$0xff]
      %v173 = vld [vmem:[%s1 + $0x10] sm:$0xff]
      %v174 = vld [vmem:[%s1 + $0x18] sm:$0xff]
      %v175 = vld [vmem:[%s1 + $0x20] sm:$0xff]
      %v176 = vld [vmem:[%s1 + $0x28] sm:$0xff]
      %v177 = vld [vmem:[%s1 + $0x30] sm:$0xff]
      %v178 = vld [vmem:[%s1 + $0x38] sm:$0xff]
      %v179 = vld [vmem:[%s1 + $0x40] sm:$0xff]
      %v180 = vld [vmem:[%s1 + $0x48] sm:$0xff]
      %v181 = vld [vmem:[%s1 + $0x50] sm:$0xff]
      %v182 = vld [vmem:[%s1 + $0x58] sm:$0xff]
      %v183 = vld [vmem:[%s1 + $0x60] sm:$0xff]
      %v184 = vld [vmem:[%s1 + $0x68] sm:$0xff]
      %v185 = vld [vmem:[%s1 + $0x70] sm:$0xff]
      %v186 = vld [vmem:[%s1 + $0x78] sm:$0xff]
      %v187 = vld [vmem:[%s1 + $0x80] sm:$0xff]
      %v188 = vld [vmem:[%s1 + $0x88] sm:$0xff]
      %v189 = vld [vmem:[%s1 + $0x90] sm:$0xff]
      %v190 = vld [vmem:[%s1 + $0x98] sm:$0xff]
      %v191 = vld [vmem:[%s1 + $0xa0] sm:$0xff]
      %v192 = vld [vmem:[%s1 + $0xa8] sm:$0xff]
      %v193 = vld [vmem:[%s1 + $0xb0] sm:$0xff]
      %v194 = vld [vmem:[%s1 + $0xb8] sm:$0xff]
      %v195 = vld [vmem:[%s1 + $0xc0] sm:$0xff]
      %v196 = vld [vmem:[%s1 + $0xc8] sm:$0xff]
      %v197 = vld [vmem:[%s1 + $0xd0] sm:$0xff]
      %v198 = vld [vmem:[%s1 + $0xd8] sm:$0xff]
      %v199 = vld [vmem:[%s1 + $0xe0] sm:$0xff]
      %v200 = vld [vmem:[%s1 + $0xe8] sm:$0xff]
      %v201 = vld [vmem:[%s1 + $0xf0] sm:$0xff]
      %v202 = vld [vmem:[%s1 + $0xf8] sm:$0xff]
      %v203 = vld [vmem:[%s1 + $0x100] sm:$0xff]
      %v204 = vld [vmem:[%s1 + $0x108] sm:$0xff]
      %v205 = vld [vmem:[%s1 + $0x110] sm:$0xff]
      %v206 = vld [vmem:[%s1 + $0x118] sm:$0xff]
      %v207 = vld [vmem:[%s1 + $0x120] sm:$0xff]
      %v208 = vld [vmem:[%s1 + $0x128] sm:$0xff]
      %v209 = vld [vmem:[%s1 + $0x130] sm:$0xff]
      %v210 = vld [vmem:[%s1 + $0x138] sm:$0xff]
      %v211 = vld [vmem:[%s1 + $0x140] sm:$0xff]
      %v212 = vld [vmem:[%s1 + $0x148] sm:$0xff]
      %v213 = vld [vmem:[%s1 + $0x150] sm:$0xff]
      %v214 = vld [vmem:[%s1 + $0x158] sm:$0xff]
      %v215 = vld [vmem:[%s1 + $0x160] sm:$0xff]
      %v216 = vld [vmem:[%s1 + $0x168] sm:$0xff]
      %v217 = vld [vmem:[%s1 + $0x170] sm:$0xff]
      %v218 = vld [vmem:[%s1 + $0x178] sm:$0xff]
      %v219 = vld [vmem:[%s1 + $0x180] sm:$0xff]
      %v220 = vld [vmem:[%s1 + $0x188] sm:$0xff]
      %v221 = vld [vmem:[%s1 + $0x190] sm:$0xff]
      %v222 = vld [vmem:[%s1 + $0x198] sm:$0xff]
      %v223 = vld [vmem:[%s1 + $0x1a0] sm:$0xff]
      %v224 = vld [vmem:[%s1 + $0x1a8] sm:$0xff]
      %v225 = vld [vmem:[%s1 + $0x1b0] sm:$0xff]
      %v226 = vld [vmem:[%s1 + $0x1b8] sm:$0xff]
      %v227 = vld [vmem:[%s1 + $0x1c0] sm:$0xff]
      %v228 = vld [vmem:[%s1 + $0x1c8] sm:$0xff]
      %v229 = vld [vmem:[%s1 + $0x1d0] sm:$0xff]
      %v230 = vld [vmem:[%s1 + $0x1d8] sm:$0xff]
      %v231 = vld [vmem:[%s1 + $0x1e0] sm:$0xff]
      %v232 = vld [vmem:[%s1 + $0x1e8] sm:$0xff]
      %v233 = vld [vmem:[%s1 + $0x1f0] sm:$0xff]
      %v234 = vld [vmem:[%s1 + $0x1f8] sm:$0xff]
      %v235 = vld [vmem:[%s1 + $0x200] sm:$0xff]
      %v236 = vld [vmem:[%s1 + $0x208] sm:$0xff]
      %v237 = vld [vmem:[%s1 + $0x210] sm:$0xff]
      %v238 = vld [vmem:[%s1 + $0x218] sm:$0xff]
      %v239 = vld [vmem:[%s1 + $0x220] sm:$0xff]
      %v240 = vld [vmem:[%s1 + $0x228] sm:$0xff]
      %v241 = vld [vmem:[%s1 + $0x230] sm:$0xff]
      %v242 = vld [vmem:[%s1 + $0x238] sm:$0xff]
      %v243 = vld [vmem:[%s1 + $0x240] sm:$0xff]
      %v244 = vld [vmem:[%s1 + $0x248] sm:$0xff]
      %v245 = vld [vmem:[%s1 + $0x250] sm:$0xff]
      %v246 = vld [vmem:[%s1 + $0x258] sm:$0xff]
      %v247 = vld [vmem:[%s1 + $0x260] sm:$0xff]
      %v248 = vld [vmem:[%s1 + $0x268] sm:$0xff]
      %v249 = vld [vmem:[%s1 + $0x270] sm:$0xff]
      %v250 = vld [vmem:[%s1 + $0x278] sm:$0xff]
      %v251 = vld [vmem:[%s1 + $0x280] sm:$0xff]
      %v252 = vld [vmem:[%s1 + $0x288] sm:$0xff]
      %v253 = vld [vmem:[%s1 + $0x290] sm:$0xff]
      %v254 = vld [vmem:[%s1 + $0x298] sm:$0xff]
      %v255 = vld [vmem:[%s1 + $0x2a0] sm:$0xff]
      %v256 = vld [vmem:[%s1 + $0x2a8] sm:$0xff]
      %v257 = vld [vmem:[%s1 + $0x2b0] sm:$0xff]
      %v258 = vld [vmem:[%s1 + $0x2b8] sm:$0xff]
      %v259 = vld [vmem:[%s1 + $0x2c0] sm:$0xff]
      %v260 = vld [vmem:[%s1 + $0x2c8] sm:$0xff]
      %v261 = vld [vmem:[%s1 + $0x2d0] sm:$0xff]
      %v262 = vld [vmem:[%s1 + $0x2d8] sm:$0xff]
      %v263 = vld [vmem:[%s1 + $0x2e0] sm:$0xff]
      %v264 = vld [vmem:[%s1 + $0x2e8] sm:$0xff]
      %v265 = vld [vmem:[%s1 + $0x2f0] sm:$0xff]
      %v266 = vld [vmem:[%s1 + $0x2f8] sm:$0xff]
      %v267 = vld [vmem:[%s1 + $0x300] sm:$0xff]
      %v268 = vld [vmem:[%s1 + $0x308] sm:$0xff]
      %v269 = vld [vmem:[%s1 + $0x310] sm:$0xff]
      %v270 = vld [vmem:[%s1 + $0x318] sm:$0xff]
      %v271 = vld [vmem:[%s165] sm:$0xff]
      %v272 = vld [vmem:[%s165 + $0x8] sm:$0xff]
      %v273 = vld [vmem:[%s165 + $0x10] sm:$0xff]
      %v274 = vld [vmem:[%s165 + $0x18] sm:$0xff]
      %v275 = vld [vmem:[%s165 + $0x20] sm:$0xff]
      %v276 = vld [vmem:[%s165 + $0x28] sm:$0xff]
      %v277 = vld [vmem:[%s165 + $0x30] sm:$0xff]
      %v278 = vld [vmem:[%s165 + $0x38] sm:$0xff]
      %v279 = vld [vmem:[%s165 + $0x40] sm:$0xff]
      %v280 = vld [vmem:[%s165 + $0x48] sm:$0xff]
      %v281 = vld [vmem:[%s165 + $0x50] sm:$0xff]
      %v282 = vld [vmem:[%s165 + $0x58] sm:$0xff]
      %v283 = vld [vmem:[%s165 + $0x60] sm:$0xff]
      %v284 = vld [vmem:[%s165 + $0x68] sm:$0xff]
      %v285 = vld [vmem:[%s165 + $0x70] sm:$0xff]
      %v286 = vld [vmem:[%s165 + $0x78] sm:$0xff]
      %v287 = vld [vmem:[%s165 + $0x80] sm:$0xff]
      %v288 = vld [vmem:[%s165 + $0x88] sm:$0xff]
      %v289 = vld [vmem:[%s165 + $0x90] sm:$0xff]
      %v290 = vld [vmem:[%s165 + $0x98] sm:$0xff]
      %v291 = vld [vmem:[%s165 + $0xa0] sm:$0xff]
      %v292 = vld [vmem:[%s165 + $0xa8] sm:$0xff]
      %v293 = vld [vmem:[%s165 + $0xb0] sm:$0xff]
      %v294 = vld [vmem:[%s165 + $0xb8] sm:$0xff]
      %v295 = vld [vmem:[%s165 + $0xc0] sm:$0xff]
      %v296 = vld [vmem:[%s165 + $0xc8] sm:$0xff]
      %v297 = vld [vmem:[%s165 + $0xd0] sm:$0xff]
      %v298 = vld [vmem:[%s165 + $0xd8] sm:$0xff]
      %v299 = vld [vmem:[%s165 + $0xe0] sm:$0xff]
      %v300 = vld [vmem:[%s165 + $0xe8] sm:$0xff]
      %v301 = vld [vmem:[%s165 + $0xf0] sm:$0xff]
      %v302 = vld [vmem:[%s165 + $0xf8] sm:$0xff]
      %v303 = vld [vmem:[%s165 + $0x100] sm:$0xff]
      %v304 = vld [vmem:[%s165 + $0x108] sm:$0xff]
      %v305 = vld [vmem:[%s165 + $0x110] sm:$0xff]
      %v306 = vld [vmem:[%s165 + $0x118] sm:$0xff]
      %v307 = vld [vmem:[%s165 + $0x120] sm:$0xff]
      %v308 = vld [vmem:[%s165 + $0x128] sm:$0xff]
      %v309 = vld [vmem:[%s165 + $0x130] sm:$0xff]
      %v310 = vld [vmem:[%s165 + $0x138] sm:$0xff]
      %v311 = vld [vmem:[%s165 + $0x140] sm:$0xff]
      %v312 = vld [vmem:[%s165 + $0x148] sm:$0xff]
      %v313 = vld [vmem:[%s165 + $0x150] sm:$0xff]
      %v314 = vld [vmem:[%s165 + $0x158] sm:$0xff]
      %v315 = vld [vmem:[%s165 + $0x160] sm:$0xff]
      %v316 = vld [vmem:[%s165 + $0x168] sm:$0xff]
      %v317 = vld [vmem:[%s165 + $0x170] sm:$0xff]
      %v318 = vld [vmem:[%s165 + $0x178] sm:$0xff]
      %v319 = vld [vmem:[%s165 + $0x180] sm:$0xff]
      %v320 = vld [vmem:[%s165 + $0x188] sm:$0xff]
      %v321 = vld [vmem:[%s165 + $0x190] sm:$0xff]
      %v322 = vld [vmem:[%s165 + $0x198] sm:$0xff]
      %v323 = vld [vmem:[%s165 + $0x1a0] sm:$0xff]
      %v324 = vld [vmem:[%s165 + $0x1a8] sm:$0xff]
      %v325 = vld [vmem:[%s165 + $0x1b0] sm:$0xff]
      %v326 = vld [vmem:[%s165 + $0x1b8] sm:$0xff]
      %v327 = vld [vmem:[%s165 + $0x1c0] sm:$0xff]
      %v328 = vld [vmem:[%s165 + $0x1c8] sm:$0xff]
      %v329 = vld [vmem:[%s165 + $0x1d0] sm:$0xff]
      %v330 = vld [vmem:[%s165 + $0x1d8] sm:$0xff]
      %v331 = vld [vmem:[%s165 + $0x1e0] sm:$0xff]
      %v332 = vld [vmem:[%s165 + $0x1e8] sm:$0xff]
      %v333 = vld [vmem:[%s165 + $0x1f0] sm:$0xff]
      %v334 = vld [vmem:[%s165 + $0x1f8] sm:$0xff]
      %v335 = vld [vmem:[%s165 + $0x200] sm:$0xff]
      %v336 = vld [vmem:[%s165 + $0x208] sm:$0xff]
      %v337 = vld [vmem:[%s165 + $0x210] sm:$0xff]
      %v338 = vld [vmem:[%s165 + $0x218] sm:$0xff]
      %v339 = vld [vmem:[%s165 + $0x220] sm:$0xff]
      %v340 = vld [vmem:[%s165 + $0x228] sm:$0xff]
      %v341 = vld [vmem:[%s165 + $0x230] sm:$0xff]
      %v342 = vld [vmem:[%s165 + $0x238] sm:$0xff]
      %v343 = vld [vmem:[%s165 + $0x240] sm:$0xff]
      %v344 = vld [vmem:[%s165 + $0x248] sm:$0xff]
      %v345 = vld [vmem:[%s165 + $0x250] sm:$0xff]
      %v346 = vld [vmem:[%s165 + $0x258] sm:$0xff]
      %v347 = vld [vmem:[%s165 + $0x260] sm:$0xff]
      %v348 = vld [vmem:[%s165 + $0x268] sm:$0xff]
      %v349 = vld [vmem:[%s165 + $0x270] sm:$0xff]
      %v350 = vld [vmem:[%s165 + $0x278] sm:$0xff]
      %v351 = vld [vmem:[%s165 + $0x280] sm:$0xff]
      %v352 = vld [vmem:[%s165 + $0x288] sm:$0xff]
      %v353 = vld [vmem:[%s165 + $0x290] sm:$0xff]
      %v354 = vld [vmem:[%s165 + $0x298] sm:$0xff]
      %v355 = vld [vmem:[%s165 + $0x2a0] sm:$0xf]
      %v356 = vld [vmem:[%s165 + $0x2a8] sm:$0xf]
      %v357 = vld [vmem:[%s165 + $0x2b0] sm:$0xf]
      %v358 = vld [vmem:[%s165 + $0x2b8] sm:$0xf]
      %v359 = vld [vmem:[%s165 + $0x2c0] sm:$0xf]
      %v360 = vld [vmem:[%s165 + $0x2c8] sm:$0xf]
      %v361 = vld [vmem:[%s165 + $0x2d0] sm:$0xf]
      %vm362 = vcmask 261120
      %v364 = vsel %vm362, %v277, 0
      %v367 = vsel %vm362, %v284, 0
      %v370 = vsel %vm362, %v291, 0
      %v373 = vsel %vm362, %v298, 0
      %v376 = vsel %vm362, %v305, 0
      %v379 = vsel %vm362, %v312, 0
      %v382 = vsel %vm362, %v319, 0
      %v385 = vsel %vm362, %v326, 0
      %v388 = vsel %vm362, %v333, 0
      %v391 = vsel %vm362, %v340, 0
      %v394 = vsel %vm362, %v347, 0
      %v397 = vsel %vm362, %v354, 0
      %v400 = vsel %vm362, %v361, 0
      %402 = vmatprep.subr.mxu0 0.0
      %403 = vmatpush1.msra.mxu0 %v171
      %404 = vmatprep.subr.mxu0 0.0
      %405 = vmatpush1.msra.mxu0 %v172
      %406 = vmatprep.subr.mxu0 0.0
      %407 = vmatpush1.msra.mxu0 %v173
      %408 = vmatprep.subr.mxu0 0.0
      %409 = vmatpush1.msra.mxu0 %v174
      %410 = vmatprep.subr.mxu0 0.0
      %411 = vmatpush1.msra.mxu0 %v175
      %412 = vmatprep.subr.mxu0 0.0
      %413 = vmatpush1.msra.mxu0 %v176
      %414 = vmatprep.subr.mxu0 0.0
      %415 = vmatpush1.msra.mxu0 %v177
      %416 = vmatprep.subr.mxu0 0.0
      %417 = vmatpush1.msra.mxu0 %v178
      %418 = vmatprep.subr.mxu0 0.0
      %419 = vmatpush1.msra.mxu0 %v179
      %420 = vmatprep.subr.mxu0 0.0
      %421 = vmatpush1.msra.mxu0 %v180
      %422 = vmatprep.subr.mxu0 0.0
      %423 = vmatpush1.msra.mxu0 %v181
      %424 = vmatprep.subr.mxu0 0.0
      %425 = vmatpush1.msra.mxu0 %v182
      %426 = vmatprep.subr.mxu0 0.0
      %427 = vmatpush1.msra.mxu0 %v183
      %428 = vmatprep.subr.mxu0 0.0
      %429 = vmatpush1.msra.mxu0 %v184
      %430 = vmatprep.subr.mxu0 0.0
      %431 = vmatpush1.msra.mxu0 %v185
      %432 = vmatprep.subr.mxu0 0.0
      %433 = vmatpush1.msra.mxu0 %v186
      %434 = vmatprep.subr.mxu0 0.0
      %435 = vmatpush1.msra.mxu0 %v187
      %436 = vmatprep.subr.mxu0 0.0
      %437 = vmatpush1.msra.mxu0 %v188
      %438 = vmatprep.subr.mxu0 0.0
      %439 = vmatpush1.msra.mxu0 %v189
      %440 = vmatprep.subr.mxu0 0.0
      %441 = vmatpush1.msra.mxu0 %v190
      %442 = vmatprep.subr.mxu0 0.0
      %443 = vmatpush1.msra.mxu0 %v191
      %444 = vmatprep.subr.mxu0 0.0
      %445 = vmatpush1.msra.mxu0 %v192
      %446 = vmatprep.subr.mxu0 0.0
      %447 = vmatpush1.msra.mxu0 %v193
      %448 = vmatprep.subr.mxu0 0.0
      %449 = vmatpush1.msra.mxu0 %v194
      %450 = vmatprep.subr.mxu0 0.0
      %451 = vmatpush1.msra.mxu0 %v195
      %452 = vmatprep.subr.mxu0 0.0
      %453 = vmatpush1.msra.mxu0 %v196
      %454 = vmatprep.subr.mxu0 0.0
      %455 = vmatpush1.msra.mxu0 %v197
      %456 = vmatprep.subr.mxu0 0.0
      %457 = vmatpush1.msra.mxu0 %v198
      %458 = vmatprep.subr.mxu0 0.0
      %459 = vmatpush1.msra.mxu0 %v199
      %460 = vmatprep.subr.mxu0 0.0
      %461 = vmatpush1.msra.mxu0 %v200
      %462 = vmatprep.subr.mxu0 0.0
      %463 = vmatpush1.msra.mxu0 %v201
      %464 = vmatprep.subr.mxu0 0.0
      %465 = vmatpush1.msra.mxu0 %v202
      %466 = vmatprep.mubr.f32.mxu0 %v272
      %467 = vmatmul.mubr.f32.gmra.mrb[0].mxu0 %v271
      %v468 = vpop.f32.mrb[0].mxu0
      %v469 = vadd.f32 0.0, %v468
      %v470 = vpop.f32.mrb[0].mxu0
      %471 = vmatprep.mubr.f32.mxu0 %v279
      %472 = vmatmul.mubr.f32.gmra.mrb[0].mxu0 %v278
      %v473 = vpop.f32.mrb[0].mxu0
      %v474 = vadd.f32 0.0, %v473
      %v475 = vpop.f32.mrb[0].mxu0
      %476 = vmatprep.mubr.f32.mxu0 %v286
      %477 = vmatmul.mubr.f32.gmra.mrb[0].mxu0 %v285
      %v478 = vpop.f32.mrb[0].mxu0
      %v479 = vadd.f32 0.0, %v478
      %v480 = vpop.f32.mrb[0].mxu0
      %481 = vmatprep.mubr.f32.mxu0 %v293
      %482 = vmatmul.mubr.f32.gmra.mrb[0].mxu0 %v292
      %v483 = vpop.f32.mrb[0].mxu0
      %v484 = vadd.f32 0.0, %v483
      %v485 = vpop.f32.mrb[0].mxu0
      %486 = vmatprep.mubr.f32.mxu0 %v300
      %487 = vmatmul.mubr.f32.gmra.mrb[0].mxu0 %v299
      %v488 = vpop.f32.mrb[0].mxu0
      %v489 = vadd.f32 0.0, %v488
      %v490 = vpop.f32.mrb[0].mxu0
      %491 = vmatprep.mubr.f32.mxu0 %v307
      %492 = vmatmul.mubr.f32.gmra.mrb[0].mxu0 %v306
      %v493 = vpop.f32.mrb[0].mxu0
      %v494 = vadd.f32 0.0, %v493
      %v495 = vpop.f32.mrb[0].mxu0
      %496 = vmatprep.mubr.f32.mxu0 %v314
      %497 = vmatmul.mubr.f32.gmra.mrb[0].mxu0 %v313
      %v498 = vpop.f32.mrb[0].mxu0
      %v499 = vadd.f32 0.0, %v498
      %v500 = vpop.f32.mrb[0].mxu0
      %501 = vmatprep.mubr.f32.mxu0 %v321
      %502 = vmatmul.mubr.f32.gmra.mrb[0].mxu0 %v320
      %v503 = vpop.f32.mrb[0].mxu0
      %v504 = vadd.f32 0.0, %v503
      %v505 = vpop.f32.mrb[0].mxu0
      %506 = vmatprep.mubr.f32.mxu0 %v328
      %507 = vmatmul.mubr.f32.gmra.mrb[0].mxu0 %v327
      %v508 = vpop.f32.mrb[0].mxu0
      %v509 = vadd.f32 0.0, %v508
      %v510 = vpop.f32.mrb[0].mxu0
      %511 = vmatprep.mubr.f32.mxu0 %v335
      %512 = vmatmul.mubr.f32.gmra.mrb[0].mxu0 %v334
      %v513 = vpop.f32.mrb[0].mxu0
      %v514 = vadd.f32 0.0, %v513
      %v515 = vpop.f32.mrb[0].mxu0
      %516 = vmatprep.mubr.f32.mxu0 %v342
      %517 = vmatmul.mubr.f32.gmra.mrb[0].mxu0 %v341
      %v518 = vpop.f32.mrb[0].mxu0
      %v519 = vadd.f32 0.0, %v518
      %v520 = vpop.f32.mrb[0].mxu0
      %521 = vmatprep.mubr.f32.mxu0 %v349
      %522 = vmatmul.mubr.f32.gmra.mrb[0].mxu0 %v348
      %v523 = vpop.f32.mrb[0].mxu0
      %v524 = vadd.f32 0.0, %v523
      %v525 = vpop.f32.mrb[0].mxu0
      %526 = vmatprep.mubr.f32.mxu0 %v356
      %527 = vmatmul.mubr.f32.gmra.mrb[0].mxu0 %v355
      %v528 = vpop.f32.mrb[0].mxu0
      %v529 = vadd.f32 0.0, %v528
      %v530 = vpop.f32.mrb[0].mxu0
      %531 = vdwg.mxu0
      %532 = vmatprep.subr.mxu0 0.0
      %533 = vmatpush1.msra.mxu0 %v203
      %534 = vmatprep.subr.mxu0 0.0
      %535 = vmatpush1.msra.mxu0 %v204
      %536 = vmatprep.subr.mxu0 0.0
      %537 = vmatpush1.msra.mxu0 %v205
      %538 = vmatprep.subr.mxu0 0.0
      %539 = vmatpush1.msra.mxu0 %v206
      %540 = vmatprep.subr.mxu0 0.0
      %541 = vmatpush1.msra.mxu0 %v207
      %542 = vmatprep.subr.mxu0 0.0
      %543 = vmatpush1.msra.mxu0 %v208
      %544 = vmatprep.subr.mxu0 0.0
      %545 = vmatpush1.msra.mxu0 %v209
      %546 = vmatprep.subr.mxu0 0.0
      %547 = vmatpush1.msra.mxu0 %v210
      %548 = vmatprep.subr.mxu0 0.0
      %549 = vmatpush1.msra.mxu0 %v211
      %550 = vmatprep.subr.mxu0 0.0
      %551 = vmatpush1.msra.mxu0 %v212
      %552 = vmatprep.subr.mxu0 0.0
      %553 = vmatpush1.msra.mxu0 %v213
      %554 = vmatprep.subr.mxu0 0.0
      %555 = vmatpush1.msra.mxu0 %v214
      %556 = vmatprep.subr.mxu0 0.0
      %557 = vmatpush1.msra.mxu0 %v215
      %558 = vmatprep.subr.mxu0 0.0
      %559 = vmatpush1.msra.mxu0 %v216
      %560 = vmatprep.subr.mxu0 0.0
      %561 = vmatpush1.msra.mxu0 %v217
      %562 = vmatprep.subr.mxu0 0.0
      %563 = vmatpush1.msra.mxu0 %v218
      %564 = vmatprep.subr.mxu0 0.0
      %565 = vmatpush1.msra.mxu0 %v219
      %566 = vmatprep.subr.mxu0 0.0
      %567 = vmatpush1.msra.mxu0 %v220
      %568 = vmatprep.subr.mxu0 0.0
      %569 = vmatpush1.msra.mxu0 %v221
      %570 = vmatprep.subr.mxu0 0.0
      %571 = vmatpush1.msra.mxu0 %v222
      %572 = vmatprep.subr.mxu0 0.0
      %573 = vmatpush1.msra.mxu0 %v223
      %574 = vmatprep.subr.mxu0 0.0
      %575 = vmatpush1.msra.mxu0 %v224
      %576 = vmatprep.subr.mxu0 0.0
      %577 = vmatpush1.msra.mxu0 %v225
      %578 = vmatprep.subr.mxu0 0.0
      %579 = vmatpush1.msra.mxu0 %v226
      %580 = vmatprep.subr.mxu0 0.0
      %581 = vmatpush1.msra.mxu0 %v227
      %582 = vmatprep.subr.mxu0 0.0
      %583 = vmatpush1.msra.mxu0 %v228
      %584 = vmatprep.subr.mxu0 0.0
      %585 = vmatpush1.msra.mxu0 %v229
      %586 = vmatprep.subr.mxu0 0.0
      %587 = vmatpush1.msra.mxu0 %v230
      %588 = vmatprep.subr.mxu0 0.0
      %589 = vmatpush1.msra.mxu0 %v231
      %590 = vmatprep.subr.mxu0 0.0
      %591 = vmatpush1.msra.mxu0 %v232
      %592 = vmatprep.subr.mxu0 0.0
      %593 = vmatpush1.msra.mxu0 %v233
      %594 = vmatprep.subr.mxu0 0.0
      %595 = vmatpush1.msra.mxu0 %v234
      %596 = vmatprep.mubr.f32.mxu0 %v274
      %597 = vmatmul.mubr.f32.gmra.mrb[0].mxu0 %v273
      %v598 = vpop.f32.mrb[0].mxu0
      %v599 = vadd.f32 %v469, %v598
      %v600 = vpop.f32.mrb[0].mxu0
      %601 = vmatprep.mubr.f32.mxu0 %v281
      %602 = vmatmul.mubr.f32.gmra.mrb[0].mxu0 %v280
      %v603 = vpop.f32.mrb[0].mxu0
      %v604 = vadd.f32 %v474, %v603
      %v605 = vpop.f32.mrb[0].mxu0
      %606 = vmatprep.mubr.f32.mxu0 %v288
      %607 = vmatmul.mubr.f32.gmra.mrb[0].mxu0 %v287
      %v608 = vpop.f32.mrb[0].mxu0
      %v609 = vadd.f32 %v479, %v608
      %v610 = vpop.f32.mrb[0].mxu0
      %611 = vmatprep.mubr.f32.mxu0 %v295
      %612 = vmatmul.mubr.f32.gmra.mrb[0].mxu0 %v294
      %v613 = vpop.f32.mrb[0].mxu0
      %v614 = vadd.f32 %v484, %v613
      %v615 = vpop.f32.mrb[0].mxu0
      %616 = vmatprep.mubr.f32.mxu0 %v302
      %617 = vmatmul.mubr.f32.gmra.mrb[0].mxu0 %v301
      %v618 = vpop.f32.mrb[0].mxu0
      %v619 = vadd.f32 %v489, %v618
      %v620 = vpop.f32.mrb[0].mxu0
      %621 = vmatprep.mubr.f32.mxu0 %v309
      %622 = vmatmul.mubr.f32.gmra.mrb[0].mxu0 %v308
      %v623 = vpop.f32.mrb[0].mxu0
      %v624 = vadd.f32 %v494, %v623
      %v625 = vpop.f32.mrb[0].mxu0
      %626 = vmatprep.mubr.f32.mxu0 %v316
      %627 = vmatmul.mubr.f32.gmra.mrb[0].mxu0 %v315
      %v628 = vpop.f32.mrb[0].mxu0
      %v629 = vadd.f32 %v499, %v628
      %v630 = vpop.f32.mrb[0].mxu0
      %631 = vmatprep.mubr.f32.mxu0 %v323
      %632 = vmatmul.mubr.f32.gmra.mrb[0].mxu0 %v322
      %v633 = vpop.f32.mrb[0].mxu0
      %v634 = vadd.f32 %v504, %v633
      %v635 = vpop.f32.mrb[0].mxu0
      %636 = vmatprep.mubr.f32.mxu0 %v330
      %637 = vmatmul.mubr.f32.gmra.mrb[0].mxu0 %v329
      %v638 = vpop.f32.mrb[0].mxu0
      %v639 = vadd.f32 %v509, %v638
      %v640 = vpop.f32.mrb[0].mxu0
      %641 = vmatprep.mubr.f32.mxu0 %v337
      %642 = vmatmul.mubr.f32.gmra.mrb[0].mxu0 %v336
      %v643 = vpop.f32.mrb[0].mxu0
      %v644 = vadd.f32 %v514, %v643
      %v645 = vpop.f32.mrb[0].mxu0
      %646 = vmatprep.mubr.f32.mxu0 %v344
      %647 = vmatmul.mubr.f32.gmra.mrb[0].mxu0 %v343
      %v648 = vpop.f32.mrb[0].mxu0
      %v649 = vadd.f32 %v519, %v648
      %v650 = vpop.f32.mrb[0].mxu0
      %651 = vmatprep.mubr.f32.mxu0 %v351
      %652 = vmatmul.mubr.f32.gmra.mrb[0].mxu0 %v350
      %v653 = vpop.f32.mrb[0].mxu0
      %v654 = vadd.f32 %v524, %v653
      %v655 = vpop.f32.mrb[0].mxu0
      %656 = vmatprep.mubr.f32.mxu0 %v358
      %657 = vmatmul.mubr.f32.gmra.mrb[0].mxu0 %v357
      %v658 = vpop.f32.mrb[0].mxu0
      %v659 = vadd.f32 %v529, %v658
      %v660 = vpop.f32.mrb[0].mxu0
      %661 = vdwg.mxu0
      %662 = vmatprep.subr.mxu0 0.0
      %663 = vmatpush1.msra.mxu0 %v235
      %664 = vmatprep.subr.mxu0 0.0
      %665 = vmatpush1.msra.mxu0 %v236
      %666 = vmatprep.subr.mxu0 0.0
      %667 = vmatpush1.msra.mxu0 %v237
      %668 = vmatprep.subr.mxu0 0.0
      %669 = vmatpush1.msra.mxu0 %v238
      %670 = vmatprep.subr.mxu0 0.0
      %671 = vmatpush1.msra.mxu0 %v239
      %672 = vmatprep.subr.mxu0 0.0
      %673 = vmatpush1.msra.mxu0 %v240
      %674 = vmatprep.subr.mxu0 0.0
      %675 = vmatpush1.msra.mxu0 %v241
      %676 = vmatprep.subr.mxu0 0.0
      %677 = vmatpush1.msra.mxu0 %v242
      %678 = vmatprep.subr.mxu0 0.0
      %679 = vmatpush1.msra.mxu0 %v243
      %680 = vmatprep.subr.mxu0 0.0
      %681 = vmatpush1.msra.mxu0 %v244
      %682 = vmatprep.subr.mxu0 0.0
      %683 = vmatpush1.msra.mxu0 %v245
      %684 = vmatprep.subr.mxu0 0.0
      %685 = vmatpush1.msra.mxu0 %v246
      %686 = vmatprep.subr.mxu0 0.0
      %687 = vmatpush1.msra.mxu0 %v247
      %688 = vmatprep.subr.mxu0 0.0
      %689 = vmatpush1.msra.mxu0 %v248
      %690 = vmatprep.subr.mxu0 0.0
      %691 = vmatpush1.msra.mxu0 %v249
      %692 = vmatprep.subr.mxu0 0.0
      %693 = vmatpush1.msra.mxu0 %v250
      %694 = vmatprep.subr.mxu0 0.0
      %695 = vmatpush1.msra.mxu0 %v251
      %696 = vmatprep.subr.mxu0 0.0
      %697 = vmatpush1.msra.mxu0 %v252
      %698 = vmatprep.subr.mxu0 0.0
      %699 = vmatpush1.msra.mxu0 %v253
      %700 = vmatprep.subr.mxu0 0.0
      %701 = vmatpush1.msra.mxu0 %v254
      %702 = vmatprep.subr.mxu0 0.0
      %703 = vmatpush1.msra.mxu0 %v255
      %704 = vmatprep.subr.mxu0 0.0
      %705 = vmatpush1.msra.mxu0 %v256
      %706 = vmatprep.subr.mxu0 0.0
      %707 = vmatpush1.msra.mxu0 %v257
      %708 = vmatprep.subr.mxu0 0.0
      %709 = vmatpush1.msra.mxu0 %v258
      %710 = vmatprep.subr.mxu0 0.0
      %711 = vmatpush1.msra.mxu0 %v259
      %712 = vmatprep.subr.mxu0 0.0
      %713 = vmatpush1.msra.mxu0 %v260
      %714 = vmatprep.subr.mxu0 0.0
      %715 = vmatpush1.msra.mxu0 %v261
      %716 = vmatprep.subr.mxu0 0.0
      %717 = vmatpush1.msra.mxu0 %v262
      %718 = vmatprep.subr.mxu0 0.0
      %719 = vmatpush1.msra.mxu0 %v263
      %720 = vmatprep.subr.mxu0 0.0
      %721 = vmatpush1.msra.mxu0 %v264
      %722 = vmatprep.subr.mxu0 0.0
      %723 = vmatpush1.msra.mxu0 %v265
      %724 = vmatprep.subr.mxu0 0.0
      %725 = vmatpush1.msra.mxu0 %v266
      %726 = vmatprep.mubr.f32.mxu0 %v276
      %727 = vmatmul.mubr.f32.gmra.mrb[0].mxu0 %v275
      %v728 = vpop.f32.mrb[0].mxu0
      %v729 = vadd.f32 %v599, %v728
      %v730 = vpop.f32.mrb[0].mxu0
      %731 = vmatprep.mubr.f32.mxu0 %v283
      %732 = vmatmul.mubr.f32.gmra.mrb[0].mxu0 %v282
      %v733 = vpop.f32.mrb[0].mxu0
      %v734 = vadd.f32 %v604, %v733
      %v735 = vpop.f32.mrb[0].mxu0
      %736 = vmatprep.mubr.f32.mxu0 %v290
      %737 = vmatmul.mubr.f32.gmra.mrb[0].mxu0 %v289
      %v738 = vpop.f32.mrb[0].mxu0
      %v739 = vadd.f32 %v609, %v738
      %v740 = vpop.f32.mrb[0].mxu0
      %741 = vmatprep.mubr.f32.mxu0 %v297
      %742 = vmatmul.mubr.f32.gmra.mrb[0].mxu0 %v296
      %v743 = vpop.f32.mrb[0].mxu0
      %v744 = vadd.f32 %v614, %v743
      %v745 = vpop.f32.mrb[0].mxu0
      %746 = vmatprep.mubr.f32.mxu0 %v304
      %747 = vmatmul.mubr.f32.gmra.mrb[0].mxu0 %v303
      %v748 = vpop.f32.mrb[0].mxu0
      %v749 = vadd.f32 %v619, %v748
      %v750 = vpop.f32.mrb[0].mxu0
      %751 = vmatprep.mubr.f32.mxu0 %v311
      %752 = vmatmul.mubr.f32.gmra.mrb[0].mxu0 %v310
      %v753 = vpop.f32.mrb[0].mxu0
      %v754 = vadd.f32 %v624, %v753
      %v755 = vpop.f32.mrb[0].mxu0
      %756 = vmatprep.mubr.f32.mxu0 %v318
      %757 = vmatmul.mubr.f32.gmra.mrb[0].mxu0 %v317
      %v758 = vpop.f32.mrb[0].mxu0
      %v759 = vadd.f32 %v629, %v758
      %v760 = vpop.f32.mrb[0].mxu0
      %761 = vmatprep.mubr.f32.mxu0 %v325
      %762 = vmatmul.mubr.f32.gmra.mrb[0].mxu0 %v324
      %v763 = vpop.f32.mrb[0].mxu0
      %v764 = vadd.f32 %v634, %v763
      %v765 = vpop.f32.mrb[0].mxu0
      %766 = vmatprep.mubr.f32.mxu0 %v332
      %767 = vmatmul.mubr.f32.gmra.mrb[0].mxu0 %v331
      %v768 = vpop.f32.mrb[0].mxu0
      %v769 = vadd.f32 %v639, %v768
      %v770 = vpop.f32.mrb[0].mxu0
      %771 = vmatprep.mubr.f32.mxu0 %v339
      %772 = vmatmul.mubr.f32.gmra.mrb[0].mxu0 %v338
      %v773 = vpop.f32.mrb[0].mxu0
      %v774 = vadd.f32 %v644, %v773
      %v775 = vpop.f32.mrb[0].mxu0
      %776 = vmatprep.mubr.f32.mxu0 %v346
      %777 = vmatmul.mubr.f32.gmra.mrb[0].mxu0 %v345
      %v778 = vpop.f32.mrb[0].mxu0
      %v779 = vadd.f32 %v649, %v778
      %v780 = vpop.f32.mrb[0].mxu0
      %781 = vmatprep.mubr.f32.mxu0 %v353
      %782 = vmatmul.mubr.f32.gmra.mrb[0].mxu0 %v352
      %v783 = vpop.f32.mrb[0].mxu0
      %v784 = vadd.f32 %v654, %v783
      %v785 = vpop.f32.mrb[0].mxu0
      %786 = vmatprep.mubr.f32.mxu0 %v360
      %787 = vmatmul.mubr.f32.gmra.mrb[0].mxu0 %v359
      %v788 = vpop.f32.mrb[0].mxu0
      %v789 = vadd.f32 %v659, %v788
      %v790 = vpop.f32.mrb[0].mxu0
      %791 = vdwg.mxu0
      %792 = vmatprep.subr.mxu0 0.0
      %793 = vmatpush1.msra.mxu0 %v267
      %794 = vmatprep.subr.mxu0 0.0
      %795 = vmatpush1.msra.mxu0 %v268
      %796 = vmatprep.subr.mxu0 0.0
      %797 = vmatpush1.msra.mxu0 %v269
      %798 = vmatprep.subr.mxu0 0.0
      %799 = vmatpush1.msra.mxu0 %v270
      %800 = vmatprep.subr.mxu0 0.0
      %801 = vmatpush1.msra.mxu0 0.0
      %802 = vmatprep.subr.mxu0 0.0
      %803 = vmatpush1.msra.mxu0 0.0
      %804 = vmatprep.subr.mxu0 0.0
      %805 = vmatpush1.msra.mxu0 0.0
      %806 = vmatprep.subr.mxu0 0.0
      %807 = vmatpush1.msra.mxu0 0.0
      %808 = vmatprep.subr.mxu0 0.0
      %809 = vmatpush1.msra.mxu0 0.0
      %810 = vmatprep.subr.mxu0 0.0
      %811 = vmatpush1.msra.mxu0 0.0
      %812 = vmatprep.subr.mxu0 0.0
      %813 = vmatpush1.msra.mxu0 0.0
      %814 = vmatprep.subr.mxu0 0.0
      %815 = vmatpush1.msra.mxu0 0.0
      %816 = vmatprep.subr.mxu0 0.0
      %817 = vmatpush1.msra.mxu0 0.0
      %818 = vmatprep.subr.mxu0 0.0
      %819 = vmatpush1.msra.mxu0 0.0
      %820 = vmatprep.subr.mxu0 0.0
      %821 = vmatpush1.msra.mxu0 0.0
      %822 = vmatprep.subr.mxu0 0.0
      %823 = vmatpush1.msra.mxu0 0.0
      %824 = vmatprep.subr.mxu0 0.0
      %825 = vmatpush1.msra.mxu0 0.0
      %826 = vmatprep.subr.mxu0 0.0
      %827 = vmatpush1.msra.mxu0 0.0
      %828 = vmatprep.subr.mxu0 0.0
      %829 = vmatpush1.msra.mxu0 0.0
      %830 = vmatprep.subr.mxu0 0.0
      %831 = vmatpush1.msra.mxu0 0.0
      %832 = vmatprep.subr.mxu0 0.0
      %833 = vmatpush1.msra.mxu0 0.0
      %834 = vmatprep.subr.mxu0 0.0
      %835 = vmatpush1.msra.mxu0 0.0
      %836 = vmatprep.subr.mxu0 0.0
      %837 = vmatpush1.msra.mxu0 0.0
      %838 = vmatprep.subr.mxu0 0.0
      %839 = vmatpush1.msra.mxu0 0.0
      %840 = vmatprep.subr.mxu0 0.0
      %841 = vmatpush1.msra.mxu0 0.0
      %842 = vmatprep.subr.mxu0 0.0
      %843 = vmatpush1.msra.mxu0 0.0
      %844 = vmatprep.subr.mxu0 0.0
      %845 = vmatpush1.msra.mxu0 0.0
      %846 = vmatprep.subr.mxu0 0.0
      %847 = vmatpush1.msra.mxu0 0.0
      %848 = vmatprep.subr.mxu0 0.0
      %849 = vmatpush1.msra.mxu0 0.0
      %850 = vmatprep.subr.mxu0 0.0
      %851 = vmatpush1.msra.mxu0 0.0
      %852 = vmatprep.subr.mxu0 0.0
      %853 = vmatpush1.msra.mxu0 0.0
      %854 = vmatprep.subr.mxu0 0.0
      %855 = vmatpush1.msra.mxu0 0.0
      %856 = vmatprep.mubr.f32.mxu0 0.0
      %857 = vmatmul.mubr.f32.gmra.mrb[0].mxu0 %v364
      %v858 = vpop.f32.mrb[0].mxu0
      %v859 = vadd.f32 %v729, %v858
      %v860 = vpop.f32.mrb[0].mxu0
      %861 = vmatprep.mubr.f32.mxu0 0.0
      %862 = vmatmul.mubr.f32.gmra.mrb[0].mxu0 %v367
      %v863 = vpop.f32.mrb[0].mxu0
      %v864 = vadd.f32 %v734, %v863
      %v865 = vpop.f32.mrb[0].mxu0
      %866 = vmatprep.mubr.f32.mxu0 0.0
      %867 = vmatmul.mubr.f32.gmra.mrb[0].mxu0 %v370
      %v868 = vpop.f32.mrb[0].mxu0
      %v869 = vadd.f32 %v739, %v868
      %v870 = vpop.f32.mrb[0].mxu0
      %871 = vmatprep.mubr.f32.mxu0 0.0
      %872 = vmatmul.mubr.f32.gmra.mrb[0].mxu0 %v373
      %v873 = vpop.f32.mrb[0].mxu0
      %v874 = vadd.f32 %v744, %v873
      %v875 = vpop.f32.mrb[0].mxu0
      %876 = vmatprep.mubr.f32.mxu0 0.0
      %877 = vmatmul.mubr.f32.gmra.mrb[0].mxu0 %v376
      %v878 = vpop.f32.mrb[0].mxu0
      %v879 = vadd.f32 %v749, %v878
      %v880 = vpop.f32.mrb[0].mxu0
      %881 = vmatprep.mubr.f32.mxu0 0.0
      %882 = vmatmul.mubr.f32.gmra.mrb[0].mxu0 %v379
      %v883 = vpop.f32.mrb[0].mxu0
      %v884 = vadd.f32 %v754, %v883
      %v885 = vpop.f32.mrb[0].mxu0
      %886 = vmatprep.mubr.f32.mxu0 0.0
      %887 = vmatmul.mubr.f32.gmra.mrb[0].mxu0 %v382
      %v888 = vpop.f32.mrb[0].mxu0
      %v889 = vadd.f32 %v759, %v888
      %v890 = vpop.f32.mrb[0].mxu0
      %891 = vmatprep.mubr.f32.mxu0 0.0
      %892 = vmatmul.mubr.f32.gmra.mrb[0].mxu0 %v385
      %v893 = vpop.f32.mrb[0].mxu0
      %v894 = vadd.f32 %v764, %v893
      %v895 = vpop.f32.mrb[0].mxu0
      %896 = vmatprep.mubr.f32.mxu0 0.0
      %897 = vmatmul.mubr.f32.gmra.mrb[0].mxu0 %v388
      %v898 = vpop.f32.mrb[0].mxu0
      %v899 = vadd.f32 %v769, %v898
      %v900 = vpop.f32.mrb[0].mxu0
      %901 = vmatprep.mubr.f32.mxu0 0.0
      %902 = vmatmul.mubr.f32.gmra.mrb[0].mxu0 %v391
      %v903 = vpop.f32.mrb[0].mxu0
      %v904 = vadd.f32 %v774, %v903
      %v905 = vpop.f32.mrb[0].mxu0
      %906 = vmatprep.mubr.f32.mxu0 0.0
      %907 = vmatmul.mubr.f32.gmra.mrb[0].mxu0 %v394
      %v908 = vpop.f32.mrb[0].mxu0
      %v909 = vadd.f32 %v779, %v908
      %v910 = vpop.f32.mrb[0].mxu0
      %911 = vmatprep.mubr.f32.mxu0 0.0
      %912 = vmatmul.mubr.f32.gmra.mrb[0].mxu0 %v397
      %v913 = vpop.f32.mrb[0].mxu0
      %v914 = vadd.f32 %v784, %v913
      %v915 = vpop.f32.mrb[0].mxu0
      %916 = vmatprep.mubr.f32.mxu0 0.0
      %917 = vmatmul.mubr.f32.gmra.mrb[0].mxu0 %v400
      %v918 = vpop.f32.mrb[0].mxu0
      %v919 = vadd.f32 %v789, %v918
      %v920 = vpop.f32.mrb[0].mxu0
      %921 = vdwg.mxu0
      %s922 = scalar_lea.vmem %s165, 728
      %v923 = vld [vmem:[%s922] sm:$0xff]
      %v924 = vld [vmem:[%s922 + $0x8] sm:$0xff]
      %v925 = vld [vmem:[%s922 + $0x10] sm:$0xff]
      %v926 = vld [vmem:[%s922 + $0x18] sm:$0xff]
      %v927 = vld [vmem:[%s922 + $0x20] sm:$0xff]
      %v928 = vld [vmem:[%s922 + $0x28] sm:$0xff]
      %v929 = vld [vmem:[%s922 + $0x30] sm:$0xff]
      %v930 = vld [vmem:[%s922 + $0x38] sm:$0xff]
      %v931 = vld [vmem:[%s922 + $0x40] sm:$0xff]
      %v932 = vld [vmem:[%s922 + $0x48] sm:$0xff]
      %v933 = vld [vmem:[%s922 + $0x50] sm:$0xff]
      %v934 = vld [vmem:[%s922 + $0x58] sm:$0xff]
      %v935 = vld [vmem:[%s922 + $0x60] sm:$0xff]
      %v936 = vld [vmem:[%s922 + $0x68] sm:$0xff]
      %v937 = vld [vmem:[%s922 + $0x70] sm:$0xff]
      %v938 = vld [vmem:[%s922 + $0x78] sm:$0xff]
      %v939 = vld [vmem:[%s922 + $0x80] sm:$0xff]
      %v940 = vld [vmem:[%s922 + $0x88] sm:$0xff]
      %v941 = vld [vmem:[%s922 + $0x90] sm:$0xff]
      %v942 = vld [vmem:[%s922 + $0x98] sm:$0xff]
      %v943 = vld [vmem:[%s922 + $0xa0] sm:$0xff]
      %v944 = vld [vmem:[%s922 + $0xa8] sm:$0xff]
      %v945 = vld [vmem:[%s922 + $0xb0] sm:$0xff]
      %v946 = vld [vmem:[%s922 + $0xb8] sm:$0xff]
      %v947 = vld [vmem:[%s922 + $0xc0] sm:$0xff]
      %v948 = vld [vmem:[%s922 + $0xc8] sm:$0xff]
      %v949 = vld [vmem:[%s922 + $0xd0] sm:$0xff]
      %v950 = vld [vmem:[%s922 + $0xd8] sm:$0xff]
      %v951 = vld [vmem:[%s922 + $0xe0] sm:$0xff]
      %v952 = vld [vmem:[%s922 + $0xe8] sm:$0xff]
      %v953 = vld [vmem:[%s922 + $0xf0] sm:$0xff]
      %v954 = vld [vmem:[%s922 + $0xf8] sm:$0xff]
      %v955 = vld [vmem:[%s922 + $0x100] sm:$0xff]
      %v956 = vld [vmem:[%s922 + $0x108] sm:$0xff]
      %v957 = vld [vmem:[%s922 + $0x110] sm:$0xff]
      %v958 = vld [vmem:[%s922 + $0x118] sm:$0xff]
      %v959 = vld [vmem:[%s922 + $0x120] sm:$0xff]
      %v960 = vld [vmem:[%s922 + $0x128] sm:$0xff]
      %v961 = vld [vmem:[%s922 + $0x130] sm:$0xff]
      %v962 = vld [vmem:[%s922 + $0x138] sm:$0xff]
      %v963 = vld [vmem:[%s922 + $0x140] sm:$0xff]
      %v964 = vld [vmem:[%s922 + $0x148] sm:$0xff]
      %v965 = vld [vmem:[%s922 + $0x150] sm:$0xff]
      %v966 = vld [vmem:[%s922 + $0x158] sm:$0xff]
      %v967 = vld [vmem:[%s922 + $0x160] sm:$0xff]
      %v968 = vld [vmem:[%s922 + $0x168] sm:$0xff]
      %v969 = vld [vmem:[%s922 + $0x170] sm:$0xff]
      %v970 = vld [vmem:[%s922 + $0x178] sm:$0xff]
      %v971 = vld [vmem:[%s922 + $0x180] sm:$0xff]
      %v972 = vld [vmem:[%s922 + $0x188] sm:$0xff]
      %v973 = vld [vmem:[%s922 + $0x190] sm:$0xff]
      %v974 = vld [vmem:[%s922 + $0x198] sm:$0xff]
      %v975 = vld [vmem:[%s922 + $0x1a0] sm:$0xff]
      %v976 = vld [vmem:[%s922 + $0x1a8] sm:$0xff]
      %v977 = vld [vmem:[%s922 + $0x1b0] sm:$0xff]
      %v978 = vld [vmem:[%s922 + $0x1b8] sm:$0xff]
      %v979 = vld [vmem:[%s922 + $0x1c0] sm:$0xff]
      %v980 = vld [vmem:[%s922 + $0x1c8] sm:$0xff]
      %v981 = vld [vmem:[%s922 + $0x1d0] sm:$0xff]
      %v982 = vld [vmem:[%s922 + $0x1d8] sm:$0xff]
      %v983 = vld [vmem:[%s922 + $0x1e0] sm:$0xff]
      %v984 = vld [vmem:[%s922 + $0x1e8] sm:$0xff]
      %v985 = vld [vmem:[%s922 + $0x1f0] sm:$0xff]
      %v986 = vld [vmem:[%s922 + $0x1f8] sm:$0xff]
      %v987 = vld [vmem:[%s922 + $0x200] sm:$0xff]
      %v988 = vld [vmem:[%s922 + $0x208] sm:$0xff]
      %v989 = vld [vmem:[%s922 + $0x210] sm:$0xff]
      %v990 = vld [vmem:[%s922 + $0x218] sm:$0xff]
      %v991 = vld [vmem:[%s922 + $0x220] sm:$0xff]
      %v992 = vld [vmem:[%s922 + $0x228] sm:$0xff]
      %v993 = vld [vmem:[%s922 + $0x230] sm:$0xff]
      %v994 = vld [vmem:[%s922 + $0x238] sm:$0xff]
      %v995 = vld [vmem:[%s922 + $0x240] sm:$0xff]
      %v996 = vld [vmem:[%s922 + $0x248] sm:$0xff]
      %v997 = vld [vmem:[%s922 + $0x250] sm:$0xff]
      %v998 = vld [vmem:[%s922 + $0x258] sm:$0xff]
      %v999 = vld [vmem:[%s922 + $0x260] sm:$0xff]
      %v1000 = vld [vmem:[%s922 + $0x268] sm:$0xff]
      %v1001 = vld [vmem:[%s922 + $0x270] sm:$0xff]
      %v1002 = vld [vmem:[%s922 + $0x278] sm:$0xff]
      %v1003 = vld [vmem:[%s922 + $0x280] sm:$0xff]
      %v1004 = vld [vmem:[%s922 + $0x288] sm:$0xff]
      %v1005 = vld [vmem:[%s922 + $0x290] sm:$0xff]
      %v1006 = vld [vmem:[%s922 + $0x298] sm:$0xff]
      %v1007 = vld [vmem:[%s922 + $0x2a0] sm:$0xf]
      %v1008 = vld [vmem:[%s922 + $0x2a8] sm:$0xf]
      %v1009 = vld [vmem:[%s922 + $0x2b0] sm:$0xf]
      %v1010 = vld [vmem:[%s922 + $0x2b8] sm:$0xf]
      %v1011 = vld [vmem:[%s922 + $0x2c0] sm:$0xf]
      %v1012 = vld [vmem:[%s922 + $0x2c8] sm:$0xf]
      %v1013 = vld [vmem:[%s922 + $0x2d0] sm:$0xf]
      %v1015 = vsel %vm362, %v929, 0
      %v1018 = vsel %vm362, %v936, 0
      %v1021 = vsel %vm362, %v943, 0
      %v1024 = vsel %vm362, %v950, 0
      %v1027 = vsel %vm362, %v957, 0
      %v1030 = vsel %vm362, %v964, 0
      %v1033 = vsel %vm362, %v971, 0
      %v1036 = vsel %vm362, %v978, 0
      %v1039 = vsel %vm362, %v985, 0
      %v1042 = vsel %vm362, %v992, 0
      %v1045 = vsel %vm362, %v999, 0
      %v1048 = vsel %vm362, %v1006, 0
      %v1051 = vsel %vm362, %v1013, 0
      %1053 = vmatprep.subr.mxu0 0.0
      %1054 = vmatpush1.msra.mxu0 %v171
      %1055 = vmatprep.subr.mxu0 0.0
      %1056 = vmatpush1.msra.mxu0 %v172
      %1057 = vmatprep.subr.mxu0 0.0
      %1058 = vmatpush1.msra.mxu0 %v173
      %1059 = vmatprep.subr.mxu0 0.0
      %1060 = vmatpush1.msra.mxu0 %v174
      %1061 = vmatprep.subr.mxu0 0.0
      %1062 = vmatpush1.msra.mxu0 %v175
      %1063 = vmatprep.subr.mxu0 0.0
      %1064 = vmatpush1.msra.mxu0 %v176
      %1065 = vmatprep.subr.mxu0 0.0
      %1066 = vmatpush1.msra.mxu0 %v177
      %1067 = vmatprep.subr.mxu0 0.0
      %1068 = vmatpush1.msra.mxu0 %v178
      %1069 = vmatprep.subr.mxu0 0.0
      %1070 = vmatpush1.msra.mxu0 %v179
      %1071 = vmatprep.subr.mxu0 0.0
      %1072 = vmatpush1.msra.mxu0 %v180
      %1073 = vmatprep.subr.mxu0 0.0
      %1074 = vmatpush1.msra.mxu0 %v181
      %1075 = vmatprep.subr.mxu0 0.0
      %1076 = vmatpush1.msra.mxu0 %v182
      %1077 = vmatprep.subr.mxu0 0.0
      %1078 = vmatpush1.msra.mxu0 %v183
      %1079 = vmatprep.subr.mxu0 0.0
      %1080 = vmatpush1.msra.mxu0 %v184
      %1081 = vmatprep.subr.mxu0 0.0
      %1082 = vmatpush1.msra.mxu0 %v185
      %1083 = vmatprep.subr.mxu0 0.0
      %1084 = vmatpush1.msra.mxu0 %v186
      %1085 = vmatprep.subr.mxu0 0.0
      %1086 = vmatpush1.msra.mxu0 %v187
      %1087 = vmatprep.subr.mxu0 0.0
      %1088 = vmatpush1.msra.mxu0 %v188
      %1089 = vmatprep.subr.mxu0 0.0
      %1090 = vmatpush1.msra.mxu0 %v189
      %1091 = vmatprep.subr.mxu0 0.0
      %1092 = vmatpush1.msra.mxu0 %v190
      %1093 = vmatprep.subr.mxu0 0.0
      %1094 = vmatpush1.msra.mxu0 %v191
      %1095 = vmatprep.subr.mxu0 0.0
      %1096 = vmatpush1.msra.mxu0 %v192
      %1097 = vmatprep.subr.mxu0 0.0
      %1098 = vmatpush1.msra.mxu0 %v193
      %1099 = vmatprep.subr.mxu0 0.0
      %1100 = vmatpush1.msra.mxu0 %v194
      %1101 = vmatprep.subr.mxu0 0.0
      %1102 = vmatpush1.msra.mxu0 %v195
      %1103 = vmatprep.subr.mxu0 0.0
      %1104 = vmatpush1.msra.mxu0 %v196
      %1105 = vmatprep.subr.mxu0 0.0
      %1106 = vmatpush1.msra.mxu0 %v197
      %1107 = vmatprep.subr.mxu0 0.0
      %1108 = vmatpush1.msra.mxu0 %v198
      %1109 = vmatprep.subr.mxu0 0.0
      %1110 = vmatpush1.msra.mxu0 %v199
      %1111 = vmatprep.subr.mxu0 0.0
      %1112 = vmatpush1.msra.mxu0 %v200
      %1113 = vmatprep.subr.mxu0 0.0
      %1114 = vmatpush1.msra.mxu0 %v201
      %1115 = vmatprep.subr.mxu0 0.0
      %1116 = vmatpush1.msra.mxu0 %v202
      %1117 = vmatprep.mubr.f32.mxu0 %v924
      %1118 = vmatmul.mubr.f32.gmra.mrb[0].mxu0 %v923
      %v1119 = vpop.f32.mrb[0].mxu0
      %v1120 = vadd.f32 0.0, %v1119
      %v1121 = vpop.f32.mrb[0].mxu0
      %1122 = vmatprep.mubr.f32.mxu0 %v931
      %1123 = vmatmul.mubr.f32.gmra.mrb[0].mxu0 %v930
      %v1124 = vpop.f32.mrb[0].mxu0
      %v1125 = vadd.f32 0.0, %v1124
      %v1126 = vpop.f32.mrb[0].mxu0
      %1127 = vmatprep.mubr.f32.mxu0 %v938
      %1128 = vmatmul.mubr.f32.gmra.mrb[0].mxu0 %v937
      %v1129 = vpop.f32.mrb[0].mxu0
      %v1130 = vadd.f32 0.0, %v1129
      %v1131 = vpop.f32.mrb[0].mxu0
      %1132 = vmatprep.mubr.f32.mxu0 %v945
      %1133 = vmatmul.mubr.f32.gmra.mrb[0].mxu0 %v944
      %v1134 = vpop.f32.mrb[0].mxu0
      %v1135 = vadd.f32 0.0, %v1134
      %v1136 = vpop.f32.mrb[0].mxu0
      %1137 = vmatprep.mubr.f32.mxu0 %v952
      %1138 = vmatmul.mubr.f32.gmra.mrb[0].mxu0 %v951
      %v1139 = vpop.f32.mrb[0].mxu0
      %v1140 = vadd.f32 0.0, %v1139
      %v1141 = vpop.f32.mrb[0].mxu0
      %1142 = vmatprep.mubr.f32.mxu0 %v959
      %1143 = vmatmul.mubr.f32.gmra.mrb[0].mxu0 %v958
      %v1144 = vpop.f32.mrb[0].mxu0
      %v1145 = vadd.f32 0.0, %v1144
      %v1146 = vpop.f32.mrb[0].mxu0
      %1147 = vmatprep.mubr.f32.mxu0 %v966
      %1148 = vmatmul.mubr.f32.gmra.mrb[0].mxu0 %v965
      %v1149 = vpop.f32.mrb[0].mxu0
      %v1150 = vadd.f32 0.0, %v1149
      %v1151 = vpop.f32.mrb[0].mxu0
      %1152 = vmatprep.mubr.f32.mxu0 %v973
      %1153 = vmatmul.mubr.f32.gmra.mrb[0].mxu0 %v972
      %v1154 = vpop.f32.mrb[0].mxu0
      %v1155 = vadd.f32 0.0, %v1154
      %v1156 = vpop.f32.mrb[0].mxu0
      %1157 = vmatprep.mubr.f32.mxu0 %v980
      %1158 = vmatmul.mubr.f32.gmra.mrb[0].mxu0 %v979
      %v1159 = vpop.f32.mrb[0].mxu0
      %v1160 = vadd.f32 0.0, %v1159
      %v1161 = vpop.f32.mrb[0].mxu0
      %1162 = vmatprep.mubr.f32.mxu0 %v987
      %1163 = vmatmul.mubr.f32.gmra.mrb[0].mxu0 %v986
      %v1164 = vpop.f32.mrb[0].mxu0
      %v1165 = vadd.f32 0.0, %v1164
      %v1166 = vpop.f32.mrb[0].mxu0
      %1167 = vmatprep.mubr.f32.mxu0 %v994
      %1168 = vmatmul.mubr.f32.gmra.mrb[0].mxu0 %v993
      %v1169 = vpop.f32.mrb[0].mxu0
      %v1170 = vadd.f32 0.0, %v1169
      %v1171 = vpop.f32.mrb[0].mxu0
      %1172 = vmatprep.mubr.f32.mxu0 %v1001
      %1173 = vmatmul.mubr.f32.gmra.mrb[0].mxu0 %v1000
      %v1174 = vpop.f32.mrb[0].mxu0
      %v1175 = vadd.f32 0.0, %v1174
      %v1176 = vpop.f32.mrb[0].mxu0
      %1177 = vmatprep.mubr.f32.mxu0 %v1008
      %1178 = vmatmul.mubr.f32.gmra.mrb[0].mxu0 %v1007
      %v1179 = vpop.f32.mrb[0].mxu0
      %v1180 = vadd.f32 0.0, %v1179
      %v1181 = vpop.f32.mrb[0].mxu0
      %1182 = vdwg.mxu0
      %1183 = vmatprep.subr.mxu0 0.0
      %1184 = vmatpush1.msra.mxu0 %v203
      %1185 = vmatprep.subr.mxu0 0.0
      %1186 = vmatpush1.msra.mxu0 %v204
      %1187 = vmatprep.subr.mxu0 0.0
      %1188 = vmatpush1.msra.mxu0 %v205
      %1189 = vmatprep.subr.mxu0 0.0
      %1190 = vmatpush1.msra.mxu0 %v206
      %1191 = vmatprep.subr.mxu0 0.0
      %1192 = vmatpush1.msra.mxu0 %v207
      %1193 = vmatprep.subr.mxu0 0.0
      %1194 = vmatpush1.msra.mxu0 %v208
      %1195 = vmatprep.subr.mxu0 0.0
      %1196 = vmatpush1.msra.mxu0 %v209
      %1197 = vmatprep.subr.mxu0 0.0
      %1198 = vmatpush1.msra.mxu0 %v210
      %1199 = vmatprep.subr.mxu0 0.0
      %1200 = vmatpush1.msra.mxu0 %v211
      %1201 = vmatprep.subr.mxu0 0.0
      %1202 = vmatpush1.msra.mxu0 %v212
      %1203 = vmatprep.subr.mxu0 0.0
      %1204 = vmatpush1.msra.mxu0 %v213
      %1205 = vmatprep.subr.mxu0 0.0
      %1206 = vmatpush1.msra.mxu0 %v214
      %1207 = vmatprep.subr.mxu0 0.0
      %1208 = vmatpush1.msra.mxu0 %v215
      %1209 = vmatprep.subr.mxu0 0.0
      %1210 = vmatpush1.msra.mxu0 %v216
      %1211 = vmatprep.subr.mxu0 0.0
      %1212 = vmatpush1.msra.mxu0 %v217
      %1213 = vmatprep.subr.mxu0 0.0
      %1214 = vmatpush1.msra.mxu0 %v218
      %1215 = vmatprep.subr.mxu0 0.0
      %1216 = vmatpush1.msra.mxu0 %v219
      %1217 = vmatprep.subr.mxu0 0.0
      %1218 = vmatpush1.msra.mxu0 %v220
      %1219 = vmatprep.subr.mxu0 0.0
      %1220 = vmatpush1.msra.mxu0 %v221
      %1221 = vmatprep.subr.mxu0 0.0
      %1222 = vmatpush1.msra.mxu0 %v222
      %1223 = vmatprep.subr.mxu0 0.0
      %1224 = vmatpush1.msra.mxu0 %v223
      %1225 = vmatprep.subr.mxu0 0.0
      %1226 = vmatpush1.msra.mxu0 %v224
      %1227 = vmatprep.subr.mxu0 0.0
      %1228 = vmatpush1.msra.mxu0 %v225
      %1229 = vmatprep.subr.mxu0 0.0
      %1230 = vmatpush1.msra.mxu0 %v226
      %1231 = vmatprep.subr.mxu0 0.0
      %1232 = vmatpush1.msra.mxu0 %v227
      %1233 = vmatprep.subr.mxu0 0.0
      %1234 = vmatpush1.msra.mxu0 %v228
      %1235 = vmatprep.subr.mxu0 0.0
      %1236 = vmatpush1.msra.mxu0 %v229
      %1237 = vmatprep.subr.mxu0 0.0
      %1238 = vmatpush1.msra.mxu0 %v230
      %1239 = vmatprep.subr.mxu0 0.0
      %1240 = vmatpush1.msra.mxu0 %v231
      %1241 = vmatprep.subr.mxu0 0.0
      %1242 = vmatpush1.msra.mxu0 %v232
      %1243 = vmatprep.subr.mxu0 0.0
      %1244 = vmatpush1.msra.mxu0 %v233
      %1245 = vmatprep.subr.mxu0 0.0
      %1246 = vmatpush1.msra.mxu0 %v234
      %1247 = vmatprep.mubr.f32.mxu0 %v926
      %1248 = vmatmul.mubr.f32.gmra.mrb[0].mxu0 %v925
      %v1249 = vpop.f32.mrb[0].mxu0
      %v1250 = vadd.f32 %v1120, %v1249
      %v1251 = vpop.f32.mrb[0].mxu0
      %1252 = vmatprep.mubr.f32.mxu0 %v933
      %1253 = vmatmul.mubr.f32.gmra.mrb[0].mxu0 %v932
      %v1254 = vpop.f32.mrb[0].mxu0
      %v1255 = vadd.f32 %v1125, %v1254
      %v1256 = vpop.f32.mrb[0].mxu0
      %1257 = vmatprep.mubr.f32.mxu0 %v940
      %1258 = vmatmul.mubr.f32.gmra.mrb[0].mxu0 %v939
      %v1259 = vpop.f32.mrb[0].mxu0
      %v1260 = vadd.f32 %v1130, %v1259
      %v1261 = vpop.f32.mrb[0].mxu0
      %1262 = vmatprep.mubr.f32.mxu0 %v947
      %1263 = vmatmul.mubr.f32.gmra.mrb[0].mxu0 %v946
      %v1264 = vpop.f32.mrb[0].mxu0
      %v1265 = vadd.f32 %v1135, %v1264
      %v1266 = vpop.f32.mrb[0].mxu0
      %1267 = vmatprep.mubr.f32.mxu0 %v954
      %1268 = vmatmul.mubr.f32.gmra.mrb[0].mxu0 %v953
      %v1269 = vpop.f32.mrb[0].mxu0
      %v1270 = vadd.f32 %v1140, %v1269
      %v1271 = vpop.f32.mrb[0].mxu0
      %1272 = vmatprep.mubr.f32.mxu0 %v961
      %1273 = vmatmul.mubr.f32.gmra.mrb[0].mxu0 %v960
      %v1274 = vpop.f32.mrb[0].mxu0
      %v1275 = vadd.f32 %v1145, %v1274
      %v1276 = vpop.f32.mrb[0].mxu0
      %1277 = vmatprep.mubr.f32.mxu0 %v968
      %1278 = vmatmul.mubr.f32.gmra.mrb[0].mxu0 %v967
      %v1279 = vpop.f32.mrb[0].mxu0
      %v1280 = vadd.f32 %v1150, %v1279
      %v1281 = vpop.f32.mrb[0].mxu0
      %1282 = vmatprep.mubr.f32.mxu0 %v975
      %1283 = vmatmul.mubr.f32.gmra.mrb[0].mxu0 %v974
      %v1284 = vpop.f32.mrb[0].mxu0
      %v1285 = vadd.f32 %v1155, %v1284
      %v1286 = vpop.f32.mrb[0].mxu0
      %1287 = vmatprep.mubr.f32.mxu0 %v982
      %1288 = vmatmul.mubr.f32.gmra.mrb[0].mxu0 %v981
      %v1289 = vpop.f32.mrb[0].mxu0
      %v1290 = vadd.f32 %v1160, %v1289
      %v1291 = vpop.f32.mrb[0].mxu0
      %1292 = vmatprep.mubr.f32.mxu0 %v989
      %1293 = vmatmul.mubr.f32.gmra.mrb[0].mxu0 %v988
      %v1294 = vpop.f32.mrb[0].mxu0
      %v1295 = vadd.f32 %v1165, %v1294
      %v1296 = vpop.f32.mrb[0].mxu0
      %1297 = vmatprep.mubr.f32.mxu0 %v996
      %1298 = vmatmul.mubr.f32.gmra.mrb[0].mxu0 %v995
      %v1299 = vpop.f32.mrb[0].mxu0
      %v1300 = vadd.f32 %v1170, %v1299
      %v1301 = vpop.f32.mrb[0].mxu0
      %1302 = vmatprep.mubr.f32.mxu0 %v1003
      %1303 = vmatmul.mubr.f32.gmra.mrb[0].mxu0 %v1002
      %v1304 = vpop.f32.mrb[0].mxu0
      %v1305 = vadd.f32 %v1175, %v1304
      %v1306 = vpop.f32.mrb[0].mxu0
      %1307 = vmatprep.mubr.f32.mxu0 %v1010
      %1308 = vmatmul.mubr.f32.gmra.mrb[0].mxu0 %v1009
      %v1309 = vpop.f32.mrb[0].mxu0
      %v1310 = vadd.f32 %v1180, %v1309
      %v1311 = vpop.f32.mrb[0].mxu0
      %1312 = vdwg.mxu0
      %1313 = vmatprep.subr.mxu0 0.0
      %1314 = vmatpush1.msra.mxu0 %v235
      %1315 = vmatprep.subr.mxu0 0.0
      %1316 = vmatpush1.msra.mxu0 %v236
      %1317 = vmatprep.subr.mxu0 0.0
      %1318 = vmatpush1.msra.mxu0 %v237
      %1319 = vmatprep.subr.mxu0 0.0
      %1320 = vmatpush1.msra.mxu0 %v238
      %1321 = vmatprep.subr.mxu0 0.0
      %1322 = vmatpush1.msra.mxu0 %v239
      %1323 = vmatprep.subr.mxu0 0.0
      %1324 = vmatpush1.msra.mxu0 %v240
      %1325 = vmatprep.subr.mxu0 0.0
      %1326 = vmatpush1.msra.mxu0 %v241
      %1327 = vmatprep.subr.mxu0 0.0
      %1328 = vmatpush1.msra.mxu0 %v242
      %1329 = vmatprep.subr.mxu0 0.0
      %1330 = vmatpush1.msra.mxu0 %v243
      %1331 = vmatprep.subr.mxu0 0.0
      %1332 = vmatpush1.msra.mxu0 %v244
      %1333 = vmatprep.subr.mxu0 0.0
      %1334 = vmatpush1.msra.mxu0 %v245
      %1335 = vmatprep.subr.mxu0 0.0
      %1336 = vmatpush1.msra.mxu0 %v246
      %1337 = vmatprep.subr.mxu0 0.0
      %1338 = vmatpush1.msra.mxu0 %v247
      %1339 = vmatprep.subr.mxu0 0.0
      %1340 = vmatpush1.msra.mxu0 %v248
      %1341 = vmatprep.subr.mxu0 0.0
      %1342 = vmatpush1.msra.mxu0 %v249
      %1343 = vmatprep.subr.mxu0 0.0
      %1344 = vmatpush1.msra.mxu0 %v250
      %1345 = vmatprep.subr.mxu0 0.0
      %1346 = vmatpush1.msra.mxu0 %v251
      %1347 = vmatprep.subr.mxu0 0.0
      %1348 = vmatpush1.msra.mxu0 %v252
      %1349 = vmatprep.subr.mxu0 0.0
      %1350 = vmatpush1.msra.mxu0 %v253
      %1351 = vmatprep.subr.mxu0 0.0
      %1352 = vmatpush1.msra.mxu0 %v254
      %1353 = vmatprep.subr.mxu0 0.0
      %1354 = vmatpush1.msra.mxu0 %v255
      %1355 = vmatprep.subr.mxu0 0.0
      %1356 = vmatpush1.msra.mxu0 %v256
      %1357 = vmatprep.subr.mxu0 0.0
      %1358 = vmatpush1.msra.mxu0 %v257
      %1359 = vmatprep.subr.mxu0 0.0
      %1360 = vmatpush1.msra.mxu0 %v258
      %1361 = vmatprep.subr.mxu0 0.0
      %1362 = vmatpush1.msra.mxu0 %v259
      %1363 = vmatprep.subr.mxu0 0.0
      %1364 = vmatpush1.msra.mxu0 %v260
      %1365 = vmatprep.subr.mxu0 0.0
      %1366 = vmatpush1.msra.mxu0 %v261
      %1367 = vmatprep.subr.mxu0 0.0
      %1368 = vmatpush1.msra.mxu0 %v262
      %1369 = vmatprep.subr.mxu0 0.0
      %1370 = vmatpush1.msra.mxu0 %v263
      %1371 = vmatprep.subr.mxu0 0.0
      %1372 = vmatpush1.msra.mxu0 %v264
      %1373 = vmatprep.subr.mxu0 0.0
      %1374 = vmatpush1.msra.mxu0 %v265
      %1375 = vmatprep.subr.mxu0 0.0
      %1376 = vmatpush1.msra.mxu0 %v266
      %1377 = vmatprep.mubr.f32.mxu0 %v928
      %1378 = vmatmul.mubr.f32.gmra.mrb[0].mxu0 %v927
      %v1379 = vpop.f32.mrb[0].mxu0
      %v1380 = vadd.f32 %v1250, %v1379
      %v1381 = vpop.f32.mrb[0].mxu0
      %1382 = vmatprep.mubr.f32.mxu0 %v935
      %1383 = vmatmul.mubr.f32.gmra.mrb[0].mxu0 %v934
      %v1384 = vpop.f32.mrb[0].mxu0
      %v1385 = vadd.f32 %v1255, %v1384
      %v1386 = vpop.f32.mrb[0].mxu0
      %1387 = vmatprep.mubr.f32.mxu0 %v942
      %1388 = vmatmul.mubr.f32.gmra.mrb[0].mxu0 %v941
      %v1389 = vpop.f32.mrb[0].mxu0
      %v1390 = vadd.f32 %v1260, %v1389
      %v1391 = vpop.f32.mrb[0].mxu0
      %1392 = vmatprep.mubr.f32.mxu0 %v949
      %1393 = vmatmul.mubr.f32.gmra.mrb[0].mxu0 %v948
      %v1394 = vpop.f32.mrb[0].mxu0
      %v1395 = vadd.f32 %v1265, %v1394
      %v1396 = vpop.f32.mrb[0].mxu0
      %1397 = vmatprep.mubr.f32.mxu0 %v956
      %1398 = vmatmul.mubr.f32.gmra.mrb[0].mxu0 %v955
      %v1399 = vpop.f32.mrb[0].mxu0
      %v1400 = vadd.f32 %v1270, %v1399
      %v1401 = vpop.f32.mrb[0].mxu0
      %1402 = vmatprep.mubr.f32.mxu0 %v963
      %1403 = vmatmul.mubr.f32.gmra.mrb[0].mxu0 %v962
      %v1404 = vpop.f32.mrb[0].mxu0
      %v1405 = vadd.f32 %v1275, %v1404
      %v1406 = vpop.f32.mrb[0].mxu0
      %1407 = vmatprep.mubr.f32.mxu0 %v970
      %1408 = vmatmul.mubr.f32.gmra.mrb[0].mxu0 %v969
      %v1409 = vpop.f32.mrb[0].mxu0
      %v1410 = vadd.f32 %v1280, %v1409
      %v1411 = vpop.f32.mrb[0].mxu0
      %1412 = vmatprep.mubr.f32.mxu0 %v977
      %1413 = vmatmul.mubr.f32.gmra.mrb[0].mxu0 %v976
      %v1414 = vpop.f32.mrb[0].mxu0
      %v1415 = vadd.f32 %v1285, %v1414
      %v1416 = vpop.f32.mrb[0].mxu0
      %1417 = vmatprep.mubr.f32.mxu0 %v984
      %1418 = vmatmul.mubr.f32.gmra.mrb[0].mxu0 %v983
      %v1419 = vpop.f32.mrb[0].mxu0
      %v1420 = vadd.f32 %v1290, %v1419
      %v1421 = vpop.f32.mrb[0].mxu0
      %1422 = vmatprep.mubr.f32.mxu0 %v991
      %1423 = vmatmul.mubr.f32.gmra.mrb[0].mxu0 %v990
      %v1424 = vpop.f32.mrb[0].mxu0
      %v1425 = vadd.f32 %v1295, %v1424
      %v1426 = vpop.f32.mrb[0].mxu0
      %1427 = vmatprep.mubr.f32.mxu0 %v998
      %1428 = vmatmul.mubr.f32.gmra.mrb[0].mxu0 %v997
      %v1429 = vpop.f32.mrb[0].mxu0
      %v1430 = vadd.f32 %v1300, %v1429
      %v1431 = vpop.f32.mrb[0].mxu0
      %1432 = vmatprep.mubr.f32.mxu0 %v1005
      %1433 = vmatmul.mubr.f32.gmra.mrb[0].mxu0 %v1004
      %v1434 = vpop.f32.mrb[0].mxu0
      %v1435 = vadd.f32 %v1305, %v1434
      %v1436 = vpop.f32.mrb[0].mxu0
      %1437 = vmatprep.mubr.f32.mxu0 %v1012
      %1438 = vmatmul.mubr.f32.gmra.mrb[0].mxu0 %v1011
      %v1439 = vpop.f32.mrb[0].mxu0
      %v1440 = vadd.f32 %v1310, %v1439
      %v1441 = vpop.f32.mrb[0].mxu0
      %1442 = vdwg.mxu0
      %1443 = vmatprep.subr.mxu0 0.0
      %1444 = vmatpush1.msra.mxu0 %v267
      %1445 = vmatprep.subr.mxu0 0.0
      %1446 = vmatpush1.msra.mxu0 %v268
      %1447 = vmatprep.subr.mxu0 0.0
      %1448 = vmatpush1.msra.mxu0 %v269
      %1449 = vmatprep.subr.mxu0 0.0
      %1450 = vmatpush1.msra.mxu0 %v270
      %1451 = vmatprep.subr.mxu0 0.0
      %1452 = vmatpush1.msra.mxu0 0.0
      %1453 = vmatprep.subr.mxu0 0.0
      %1454 = vmatpush1.msra.mxu0 0.0
      %1455 = vmatprep.subr.mxu0 0.0
      %1456 = vmatpush1.msra.mxu0 0.0
      %1457 = vmatprep.subr.mxu0 0.0
      %1458 = vmatpush1.msra.mxu0 0.0
      %1459 = vmatprep.subr.mxu0 0.0
      %1460 = vmatpush1.msra.mxu0 0.0
      %1461 = vmatprep.subr.mxu0 0.0
      %1462 = vmatpush1.msra.mxu0 0.0
      %1463 = vmatprep.subr.mxu0 0.0
      %1464 = vmatpush1.msra.mxu0 0.0
      %1465 = vmatprep.subr.mxu0 0.0
      %1466 = vmatpush1.msra.mxu0 0.0
      %1467 = vmatprep.subr.mxu0 0.0
      %1468 = vmatpush1.msra.mxu0 0.0
      %1469 = vmatprep.subr.mxu0 0.0
      %1470 = vmatpush1.msra.mxu0 0.0
      %1471 = vmatprep.subr.mxu0 0.0
      %1472 = vmatpush1.msra.mxu0 0.0
      %1473 = vmatprep.subr.mxu0 0.0
      %1474 = vmatpush1.msra.mxu0 0.0
      %1475 = vmatprep.subr.mxu0 0.0
      %1476 = vmatpush1.msra.mxu0 0.0
      %1477 = vmatprep.subr.mxu0 0.0
      %1478 = vmatpush1.msra.mxu0 0.0
      %1479 = vmatprep.subr.mxu0 0.0
      %1480 = vmatpush1.msra.mxu0 0.0
      %1481 = vmatprep.subr.mxu0 0.0
      %1482 = vmatpush1.msra.mxu0 0.0
      %1483 = vmatprep.subr.mxu0 0.0
      %1484 = vmatpush1.msra.mxu0 0.0
      %1485 = vmatprep.subr.mxu0 0.0
      %1486 = vmatpush1.msra.mxu0 0.0
      %1487 = vmatprep.subr.mxu0 0.0
      %1488 = vmatpush1.msra.mxu0 0.0
      %1489 = vmatprep.subr.mxu0 0.0
      %1490 = vmatpush1.msra.mxu0 0.0
      %1491 = vmatprep.subr.mxu0 0.0
      %1492 = vmatpush1.msra.mxu0 0.0
      %1493 = vmatprep.subr.mxu0 0.0
      %1494 = vmatpush1.msra.mxu0 0.0
      %1495 = vmatprep.subr.mxu0 0.0
      %1496 = vmatpush1.msra.mxu0 0.0
      %1497 = vmatprep.subr.mxu0 0.0
      %1498 = vmatpush1.msra.mxu0 0.0
      %1499 = vmatprep.subr.mxu0 0.0
      %1500 = vmatpush1.msra.mxu0 0.0
      %1501 = vmatprep.subr.mxu0 0.0
      %1502 = vmatpush1.msra.mxu0 0.0
      %1503 = vmatprep.subr.mxu0 0.0
      %1504 = vmatpush1.msra.mxu0 0.0
      %1505 = vmatprep.subr.mxu0 0.0
      %1506 = vmatpush1.msra.mxu0 0.0
      %1507 = vmatprep.mubr.f32.mxu0 0.0
      %1508 = vmatmul.mubr.f32.gmra.mrb[0].mxu0 %v1015
      %v1509 = vpop.f32.mrb[0].mxu0
      %v1510 = vadd.f32 %v1380, %v1509
      %v1511 = vpop.f32.mrb[0].mxu0
      %1512 = vmatprep.mubr.f32.mxu0 0.0
      %1513 = vmatmul.mubr.f32.gmra.mrb[0].mxu0 %v1018
      %v1514 = vpop.f32.mrb[0].mxu0
      %v1515 = vadd.f32 %v1385, %v1514
      %v1516 = vpop.f32.mrb[0].mxu0
      %1517 = vmatprep.mubr.f32.mxu0 0.0
      %1518 = vmatmul.mubr.f32.gmra.mrb[0].mxu0 %v1021
      %v1519 = vpop.f32.mrb[0].mxu0
      %v1520 = vadd.f32 %v1390, %v1519
      %v1521 = vpop.f32.mrb[0].mxu0
      %1522 = vmatprep.mubr.f32.mxu0 0.0
      %1523 = vmatmul.mubr.f32.gmra.mrb[0].mxu0 %v1024
      %v1524 = vpop.f32.mrb[0].mxu0
      %v1525 = vadd.f32 %v1395, %v1524
      %v1526 = vpop.f32.mrb[0].mxu0
      %1527 = vmatprep.mubr.f32.mxu0 0.0
      %1528 = vmatmul.mubr.f32.gmra.mrb[0].mxu0 %v1027
      %v1529 = vpop.f32.mrb[0].mxu0
      %v1530 = vadd.f32 %v1400, %v1529
      %v1531 = vpop.f32.mrb[0].mxu0
      %1532 = vmatprep.mubr.f32.mxu0 0.0
      %1533 = vmatmul.mubr.f32.gmra.mrb[0].mxu0 %v1030
      %v1534 = vpop.f32.mrb[0].mxu0
      %v1535 = vadd.f32 %v1405, %v1534
      %v1536 = vpop.f32.mrb[0].mxu0
      %1537 = vmatprep.mubr.f32.mxu0 0.0
      %1538 = vmatmul.mubr.f32.gmra.mrb[0].mxu0 %v1033
      %v1539 = vpop.f32.mrb[0].mxu0
      %v1540 = vadd.f32 %v1410, %v1539
      %v1541 = vpop.f32.mrb[0].mxu0
      %1542 = vmatprep.mubr.f32.mxu0 0.0
      %1543 = vmatmul.mubr.f32.gmra.mrb[0].mxu0 %v1036
      %v1544 = vpop.f32.mrb[0].mxu0
      %v1545 = vadd.f32 %v1415, %v1544
      %v1546 = vpop.f32.mrb[0].mxu0
      %1547 = vmatprep.mubr.f32.mxu0 0.0
      %1548 = vmatmul.mubr.f32.gmra.mrb[0].mxu0 %v1039
      %v1549 = vpop.f32.mrb[0].mxu0
      %v1550 = vadd.f32 %v1420, %v1549
      %v1551 = vpop.f32.mrb[0].mxu0
      %1552 = vmatprep.mubr.f32.mxu0 0.0
      %1553 = vmatmul.mubr.f32.gmra.mrb[0].mxu0 %v1042
      %v1554 = vpop.f32.mrb[0].mxu0
      %v1555 = vadd.f32 %v1425, %v1554
      %v1556 = vpop.f32.mrb[0].mxu0
      %1557 = vmatprep.mubr.f32.mxu0 0.0
      %1558 = vmatmul.mubr.f32.gmra.mrb[0].mxu0 %v1045
      %v1559 = vpop.f32.mrb[0].mxu0
      %v1560 = vadd.f32 %v1430, %v1559
      %v1561 = vpop.f32.mrb[0].mxu0
      %1562 = vmatprep.mubr.f32.mxu0 0.0
      %1563 = vmatmul.mubr.f32.gmra.mrb[0].mxu0 %v1048
      %v1564 = vpop.f32.mrb[0].mxu0
      %v1565 = vadd.f32 %v1435, %v1564
      %v1566 = vpop.f32.mrb[0].mxu0
      %1567 = vmatprep.mubr.f32.mxu0 0.0
      %1568 = vmatmul.mubr.f32.gmra.mrb[0].mxu0 %v1051
      %v1569 = vpop.f32.mrb[0].mxu0
      %v1570 = vadd.f32 %v1440, %v1569
      %v1571 = vpop.f32.mrb[0].mxu0
      %1572 = vdwg.mxu0
      %v1573 = vmax.f32 %v859, %v1510
      %v1574 = vmax.f32 %v864, %v1515
      %v1575 = vmax.f32 %v869, %v1520
      %v1576 = vmax.f32 %v874, %v1525
      %v1577 = vmax.f32 %v879, %v1530
      %v1578 = vmax.f32 %v884, %v1535
      %v1579 = vmax.f32 %v889, %v1540
      %v1580 = vmax.f32 %v894, %v1545
      %v1581 = vmax.f32 %v899, %v1550
      %v1582 = vmax.f32 %v904, %v1555
      %v1583 = vmax.f32 %v909, %v1560
      %v1584 = vmax.f32 %v914, %v1565
      %v1585 = vmax.f32 %v919, %v1570
      %s1586 = scalar_lea.vmem %s165, 1456
      %v1587 = vld [vmem:[%s1586] sm:$0xff]
      %v1588 = vld [vmem:[%s1586 + $0x8] sm:$0xff]
      %v1589 = vld [vmem:[%s1586 + $0x10] sm:$0xff]
      %v1590 = vld [vmem:[%s1586 + $0x18] sm:$0xff]
      %v1591 = vld [vmem:[%s1586 + $0x20] sm:$0xff]
      %v1592 = vld [vmem:[%s1586 + $0x28] sm:$0xff]
      %v1593 = vld [vmem:[%s1586 + $0x30] sm:$0xff]
      %v1594 = vld [vmem:[%s1586 + $0x38] sm:$0xff]
      %v1595 = vld [vmem:[%s1586 + $0x40] sm:$0xff]
      %v1596 = vld [vmem:[%s1586 + $0x48] sm:$0xff]
      %v1597 = vld [vmem:[%s1586 + $0x50] sm:$0xff]
      %v1598 = vld [vmem:[%s1586 + $0x58] sm:$0xff]
      %v1599 = vld [vmem:[%s1586 + $0x60] sm:$0xff]
      %v1600 = vld [vmem:[%s1586 + $0x68] sm:$0xff]
      %v1601 = vld [vmem:[%s1586 + $0x70] sm:$0xff]
      %v1602 = vld [vmem:[%s1586 + $0x78] sm:$0xff]
      %v1603 = vld [vmem:[%s1586 + $0x80] sm:$0xff]
      %v1604 = vld [vmem:[%s1586 + $0x88] sm:$0xff]
      %v1605 = vld [vmem:[%s1586 + $0x90] sm:$0xff]
      %v1606 = vld [vmem:[%s1586 + $0x98] sm:$0xff]
      %v1607 = vld [vmem:[%s1586 + $0xa0] sm:$0xff]
      %v1608 = vld [vmem:[%s1586 + $0xa8] sm:$0xff]
      %v1609 = vld [vmem:[%s1586 + $0xb0] sm:$0xff]
      %v1610 = vld [vmem:[%s1586 + $0xb8] sm:$0xff]
      %v1611 = vld [vmem:[%s1586 + $0xc0] sm:$0xff]
      %v1612 = vld [vmem:[%s1586 + $0xc8] sm:$0xff]
      %v1613 = vld [vmem:[%s1586 + $0xd0] sm:$0xff]
      %v1614 = vld [vmem:[%s1586 + $0xd8] sm:$0xff]
      %v1615 = vld [vmem:[%s1586 + $0xe0] sm:$0xff]
      %v1616 = vld [vmem:[%s1586 + $0xe8] sm:$0xff]
      %v1617 = vld [vmem:[%s1586 + $0xf0] sm:$0xff]
      %v1618 = vld [vmem:[%s1586 + $0xf8] sm:$0xff]
      %v1619 = vld [vmem:[%s1586 + $0x100] sm:$0xff]
      %v1620 = vld [vmem:[%s1586 + $0x108] sm:$0xff]
      %v1621 = vld [vmem:[%s1586 + $0x110] sm:$0xff]
      %v1622 = vld [vmem:[%s1586 + $0x118] sm:$0xff]
      %v1623 = vld [vmem:[%s1586 + $0x120] sm:$0xff]
      %v1624 = vld [vmem:[%s1586 + $0x128] sm:$0xff]
      %v1625 = vld [vmem:[%s1586 + $0x130] sm:$0xff]
      %v1626 = vld [vmem:[%s1586 + $0x138] sm:$0xff]
      %v1627 = vld [vmem:[%s1586 + $0x140] sm:$0xff]
      %v1628 = vld [vmem:[%s1586 + $0x148] sm:$0xff]
      %v1629 = vld [vmem:[%s1586 + $0x150] sm:$0xff]
      %v1630 = vld [vmem:[%s1586 + $0x158] sm:$0xff]
      %v1631 = vld [vmem:[%s1586 + $0x160] sm:$0xff]
      %v1632 = vld [vmem:[%s1586 + $0x168] sm:$0xff]
      %v1633 = vld [vmem:[%s1586 + $0x170] sm:$0xff]
      %v1634 = vld [vmem:[%s1586 + $0x178] sm:$0xff]
      %v1635 = vld [vmem:[%s1586 + $0x180] sm:$0xff]
      %v1636 = vld [vmem:[%s1586 + $0x188] sm:$0xff]
      %v1637 = vld [vmem:[%s1586 + $0x190] sm:$0xff]
      %v1638 = vld [vmem:[%s1586 + $0x198] sm:$0xff]
      %v1639 = vld [vmem:[%s1586 + $0x1a0] sm:$0xff]
      %v1640 = vld [vmem:[%s1586 + $0x1a8] sm:$0xff]
      %v1641 = vld [vmem:[%s1586 + $0x1b0] sm:$0xff]
      %v1642 = vld [vmem:[%s1586 + $0x1b8] sm:$0xff]
      %v1643 = vld [vmem:[%s1586 + $0x1c0] sm:$0xff]
      %v1644 = vld [vmem:[%s1586 + $0x1c8] sm:$0xff]
      %v1645 = vld [vmem:[%s1586 + $0x1d0] sm:$0xff]
      %v1646 = vld [vmem:[%s1586 + $0x1d8] sm:$0xff]
      %v1647 = vld [vmem:[%s1586 + $0x1e0] sm:$0xff]
      %v1648 = vld [vmem:[%s1586 + $0x1e8] sm:$0xff]
      %v1649 = vld [vmem:[%s1586 + $0x1f0] sm:$0xff]
      %v1650 = vld [vmem:[%s1586 + $0x1f8] sm:$0xff]
      %v1651 = vld [vmem:[%s1586 + $0x200] sm:$0xff]
      %v1652 = vld [vmem:[%s1586 + $0x208] sm:$0xff]
      %v1653 = vld [vmem:[%s1586 + $0x210] sm:$0xff]
      %v1654 = vld [vmem:[%s1586 + $0x218] sm:$0xff]
      %v1655 = vld [vmem:[%s1586 + $0x220] sm:$0xff]
      %v1656 = vld [vmem:[%s1586 + $0x228] sm:$0xff]
      %v1657 = vld [vmem:[%s1586 + $0x230] sm:$0xff]
      %v1658 = vld [vmem:[%s1586 + $0x238] sm:$0xff]
      %v1659 = vld [vmem:[%s1586 + $0x240] sm:$0xff]
      %v1660 = vld [vmem:[%s1586 + $0x248] sm:$0xff]
      %v1661 = vld [vmem:[%s1586 + $0x250] sm:$0xff]
      %v1662 = vld [vmem:[%s1586 + $0x258] sm:$0xff]
      %v1663 = vld [vmem:[%s1586 + $0x260] sm:$0xff]
      %v1664 = vld [vmem:[%s1586 + $0x268] sm:$0xff]
      %v1665 = vld [vmem:[%s1586 + $0x270] sm:$0xff]
      %v1666 = vld [vmem:[%s1586 + $0x278] sm:$0xff]
      %v1667 = vld [vmem:[%s1586 + $0x280] sm:$0xff]
      %v1668 = vld [vmem:[%s1586 + $0x288] sm:$0xff]
      %v1669 = vld [vmem:[%s1586 + $0x290] sm:$0xff]
      %v1670 = vld [vmem:[%s1586 + $0x298] sm:$0xff]
      %v1671 = vld [vmem:[%s1586 + $0x2a0] sm:$0xf]
      %v1672 = vld [vmem:[%s1586 + $0x2a8] sm:$0xf]
      %v1673 = vld [vmem:[%s1586 + $0x2b0] sm:$0xf]
      %v1674 = vld [vmem:[%s1586 + $0x2b8] sm:$0xf]
      %v1675 = vld [vmem:[%s1586 + $0x2c0] sm:$0xf]
      %v1676 = vld [vmem:[%s1586 + $0x2c8] sm:$0xf]
      %v1677 = vld [vmem:[%s1586 + $0x2d0] sm:$0xf]
      %v1679 = vsel %vm362, %v1593, 0
      %v1682 = vsel %vm362, %v1600, 0
      %v1685 = vsel %vm362, %v1607, 0
      %v1688 = vsel %vm362, %v1614, 0
      %v1691 = vsel %vm362, %v1621, 0
      %v1694 = vsel %vm362, %v1628, 0
      %v1697 = vsel %vm362, %v1635, 0
      %v1700 = vsel %vm362, %v1642, 0
      %v1703 = vsel %vm362, %v1649, 0
      %v1706 = vsel %vm362, %v1656, 0
      %v1709 = vsel %vm362, %v1663, 0
      %v1712 = vsel %vm362, %v1670, 0
      %v1715 = vsel %vm362, %v1677, 0
      %1717 = vmatprep.subr.mxu0 0.0
      %1718 = vmatpush1.msra.mxu0 %v171
      %1719 = vmatprep.subr.mxu0 0.0
      %1720 = vmatpush1.msra.mxu0 %v172
      %1721 = vmatprep.subr.mxu0 0.0
      %1722 = vmatpush1.msra.mxu0 %v173
      %1723 = vmatprep.subr.mxu0 0.0
      %1724 = vmatpush1.msra.mxu0 %v174
      %1725 = vmatprep.subr.mxu0 0.0
      %1726 = vmatpush1.msra.mxu0 %v175
      %1727 = vmatprep.subr.mxu0 0.0
      %1728 = vmatpush1.msra.mxu0 %v176
      %1729 = vmatprep.subr.mxu0 0.0
      %1730 = vmatpush1.msra.mxu0 %v177
      %1731 = vmatprep.subr.mxu0 0.0
      %1732 = vmatpush1.msra.mxu0 %v178
      %1733 = vmatprep.subr.mxu0 0.0
      %1734 = vmatpush1.msra.mxu0 %v179
      %1735 = vmatprep.subr.mxu0 0.0
      %1736 = vmatpush1.msra.mxu0 %v180
      %1737 = vmatprep.subr.mxu0 0.0
      %1738 = vmatpush1.msra.mxu0 %v181
      %1739 = vmatprep.subr.mxu0 0.0
      %1740 = vmatpush1.msra.mxu0 %v182
      %1741 = vmatprep.subr.mxu0 0.0
      %1742 = vmatpush1.msra.mxu0 %v183
      %1743 = vmatprep.subr.mxu0 0.0
      %1744 = vmatpush1.msra.mxu0 %v184
      %1745 = vmatprep.subr.mxu0 0.0
      %1746 = vmatpush1.msra.mxu0 %v185
      %1747 = vmatprep.subr.mxu0 0.0
      %1748 = vmatpush1.msra.mxu0 %v186
      %1749 = vmatprep.subr.mxu0 0.0
      %1750 = vmatpush1.msra.mxu0 %v187
      %1751 = vmatprep.subr.mxu0 0.0
      %1752 = vmatpush1.msra.mxu0 %v188
      %1753 = vmatprep.subr.mxu0 0.0
      %1754 = vmatpush1.msra.mxu0 %v189
      %1755 = vmatprep.subr.mxu0 0.0
      %1756 = vmatpush1.msra.mxu0 %v190
      %1757 = vmatprep.subr.mxu0 0.0
      %1758 = vmatpush1.msra.mxu0 %v191
      %1759 = vmatprep.subr.mxu0 0.0
      %1760 = vmatpush1.msra.mxu0 %v192
      %1761 = vmatprep.subr.mxu0 0.0
      %1762 = vmatpush1.msra.mxu0 %v193
      %1763 = vmatprep.subr.mxu0 0.0
      %1764 = vmatpush1.msra.mxu0 %v194
      %1765 = vmatprep.subr.mxu0 0.0
      %1766 = vmatpush1.msra.mxu0 %v195
      %1767 = vmatprep.subr.mxu0 0.0
      %1768 = vmatpush1.msra.mxu0 %v196
      %1769 = vmatprep.subr.mxu0 0.0
      %1770 = vmatpush1.msra.mxu0 %v197
      %1771 = vmatprep.subr.mxu0 0.0
      %1772 = vmatpush1.msra.mxu0 %v198
      %1773 = vmatprep.subr.mxu0 0.0
      %1774 = vmatpush1.msra.mxu0 %v199
      %1775 = vmatprep.subr.mxu0 0.0
      %1776 = vmatpush1.msra.mxu0 %v200
      %1777 = vmatprep.subr.mxu0 0.0
      %1778 = vmatpush1.msra.mxu0 %v201
      %1779 = vmatprep.subr.mxu0 0.0
      %1780 = vmatpush1.msra.mxu0 %v202
      %1781 = vmatprep.mubr.f32.mxu0 %v1588
      %1782 = vmatmul.mubr.f32.gmra.mrb[0].mxu0 %v1587
      %v1783 = vpop.f32.mrb[0].mxu0
      %v1784 = vadd.f32 0.0, %v1783
      %v1785 = vpop.f32.mrb[0].mxu0
      %1786 = vmatprep.mubr.f32.mxu0 %v1595
      %1787 = vmatmul.mubr.f32.gmra.mrb[0].mxu0 %v1594
      %v1788 = vpop.f32.mrb[0].mxu0
      %v1789 = vadd.f32 0.0, %v1788
      %v1790 = vpop.f32.mrb[0].mxu0
      %1791 = vmatprep.mubr.f32.mxu0 %v1602
      %1792 = vmatmul.mubr.f32.gmra.mrb[0].mxu0 %v1601
      %v1793 = vpop.f32.mrb[0].mxu0
      %v1794 = vadd.f32 0.0, %v1793
      %v1795 = vpop.f32.mrb[0].mxu0
      %1796 = vmatprep.mubr.f32.mxu0 %v1609
      %1797 = vmatmul.mubr.f32.gmra.mrb[0].mxu0 %v1608
      %v1798 = vpop.f32.mrb[0].mxu0
      %v1799 = vadd.f32 0.0, %v1798
      %v1800 = vpop.f32.mrb[0].mxu0
      %1801 = vmatprep.mubr.f32.mxu0 %v1616
      %1802 = vmatmul.mubr.f32.gmra.mrb[0].mxu0 %v1615
      %v1803 = vpop.f32.mrb[0].mxu0
      %v1804 = vadd.f32 0.0, %v1803
      %v1805 = vpop.f32.mrb[0].mxu0
      %1806 = vmatprep.mubr.f32.mxu0 %v1623
      %1807 = vmatmul.mubr.f32.gmra.mrb[0].mxu0 %v1622
      %v1808 = vpop.f32.mrb[0].mxu0
      %v1809 = vadd.f32 0.0, %v1808
      %v1810 = vpop.f32.mrb[0].mxu0
      %1811 = vmatprep.mubr.f32.mxu0 %v1630
      %1812 = vmatmul.mubr.f32.gmra.mrb[0].mxu0 %v1629
      %v1813 = vpop.f32.mrb[0].mxu0
      %v1814 = vadd.f32 0.0, %v1813
      %v1815 = vpop.f32.mrb[0].mxu0
      %1816 = vmatprep.mubr.f32.mxu0 %v1637
      %1817 = vmatmul.mubr.f32.gmra.mrb[0].mxu0 %v1636
      %v1818 = vpop.f32.mrb[0].mxu0
      %v1819 = vadd.f32 0.0, %v1818
      %v1820 = vpop.f32.mrb[0].mxu0
      %1821 = vmatprep.mubr.f32.mxu0 %v1644
      %1822 = vmatmul.mubr.f32.gmra.mrb[0].mxu0 %v1643
      %v1823 = vpop.f32.mrb[0].mxu0
      %v1824 = vadd.f32 0.0, %v1823
      %v1825 = vpop.f32.mrb[0].mxu0
      %1826 = vmatprep.mubr.f32.mxu0 %v1651
      %1827 = vmatmul.mubr.f32.gmra.mrb[0].mxu0 %v1650
      %v1828 = vpop.f32.mrb[0].mxu0
      %v1829 = vadd.f32 0.0, %v1828
      %v1830 = vpop.f32.mrb[0].mxu0
      %1831 = vmatprep.mubr.f32.mxu0 %v1658
      %1832 = vmatmul.mubr.f32.gmra.mrb[0].mxu0 %v1657
      %v1833 = vpop.f32.mrb[0].mxu0
      %v1834 = vadd.f32 0.0, %v1833
      %v1835 = vpop.f32.mrb[0].mxu0
      %1836 = vmatprep.mubr.f32.mxu0 %v1665
      %1837 = vmatmul.mubr.f32.gmra.mrb[0].mxu0 %v1664
      %v1838 = vpop.f32.mrb[0].mxu0
      %v1839 = vadd.f32 0.0, %v1838
      %v1840 = vpop.f32.mrb[0].mxu0
      %1841 = vmatprep.mubr.f32.mxu0 %v1672
      %1842 = vmatmul.mubr.f32.gmra.mrb[0].mxu0 %v1671
      %v1843 = vpop.f32.mrb[0].mxu0
      %v1844 = vadd.f32 0.0, %v1843
      %v1845 = vpop.f32.mrb[0].mxu0
      %1846 = vdwg.mxu0
      %1847 = vmatprep.subr.mxu0 0.0
      %1848 = vmatpush1.msra.mxu0 %v203
      %1849 = vmatprep.subr.mxu0 0.0
      %1850 = vmatpush1.msra.mxu0 %v204
      %1851 = vmatprep.subr.mxu0 0.0
      %1852 = vmatpush1.msra.mxu0 %v205
      %1853 = vmatprep.subr.mxu0 0.0
      %1854 = vmatpush1.msra.mxu0 %v206
      %1855 = vmatprep.subr.mxu0 0.0
      %1856 = vmatpush1.msra.mxu0 %v207
      %1857 = vmatprep.subr.mxu0 0.0
      %1858 = vmatpush1.msra.mxu0 %v208
      %1859 = vmatprep.subr.mxu0 0.0
      %1860 = vmatpush1.msra.mxu0 %v209
      %1861 = vmatprep.subr.mxu0 0.0
      %1862 = vmatpush1.msra.mxu0 %v210
      %1863 = vmatprep.subr.mxu0 0.0
      %1864 = vmatpush1.msra.mxu0 %v211
      %1865 = vmatprep.subr.mxu0 0.0
      %1866 = vmatpush1.msra.mxu0 %v212
      %1867 = vmatprep.subr.mxu0 0.0
      %1868 = vmatpush1.msra.mxu0 %v213
      %1869 = vmatprep.subr.mxu0 0.0
      %1870 = vmatpush1.msra.mxu0 %v214
      %1871 = vmatprep.subr.mxu0 0.0
      %1872 = vmatpush1.msra.mxu0 %v215
      %1873 = vmatprep.subr.mxu0 0.0
      %1874 = vmatpush1.msra.mxu0 %v216
      %1875 = vmatprep.subr.mxu0 0.0
      %1876 = vmatpush1.msra.mxu0 %v217
      %1877 = vmatprep.subr.mxu0 0.0
      %1878 = vmatpush1.msra.mxu0 %v218
      %1879 = vmatprep.subr.mxu0 0.0
      %1880 = vmatpush1.msra.mxu0 %v219
      %1881 = vmatprep.subr.mxu0 0.0
      %1882 = vmatpush1.msra.mxu0 %v220
      %1883 = vmatprep.subr.mxu0 0.0
      %1884 = vmatpush1.msra.mxu0 %v221
      %1885 = vmatprep.subr.mxu0 0.0
      %1886 = vmatpush1.msra.mxu0 %v222
      %1887 = vmatprep.subr.mxu0 0.0
      %1888 = vmatpush1.msra.mxu0 %v223
      %1889 = vmatprep.subr.mxu0 0.0
      %1890 = vmatpush1.msra.mxu0 %v224
      %1891 = vmatprep.subr.mxu0 0.0
      %1892 = vmatpush1.msra.mxu0 %v225
      %1893 = vmatprep.subr.mxu0 0.0
      %1894 = vmatpush1.msra.mxu0 %v226
      %1895 = vmatprep.subr.mxu0 0.0
      %1896 = vmatpush1.msra.mxu0 %v227
      %1897 = vmatprep.subr.mxu0 0.0
      %1898 = vmatpush1.msra.mxu0 %v228
      %1899 = vmatprep.subr.mxu0 0.0
      %1900 = vmatpush1.msra.mxu0 %v229
      %1901 = vmatprep.subr.mxu0 0.0
      %1902 = vmatpush1.msra.mxu0 %v230
      %1903 = vmatprep.subr.mxu0 0.0
      %1904 = vmatpush1.msra.mxu0 %v231
      %1905 = vmatprep.subr.mxu0 0.0
      %1906 = vmatpush1.msra.mxu0 %v232
      %1907 = vmatprep.subr.mxu0 0.0
      %1908 = vmatpush1.msra.mxu0 %v233
      %1909 = vmatprep.subr.mxu0 0.0
      %1910 = vmatpush1.msra.mxu0 %v234
      %1911 = vmatprep.mubr.f32.mxu0 %v1590
      %1912 = vmatmul.mubr.f32.gmra.mrb[0].mxu0 %v1589
      %v1913 = vpop.f32.mrb[0].mxu0
      %v1914 = vadd.f32 %v1784, %v1913
      %v1915 = vpop.f32.mrb[0].mxu0
      %1916 = vmatprep.mubr.f32.mxu0 %v1597
      %1917 = vmatmul.mubr.f32.gmra.mrb[0].mxu0 %v1596
      %v1918 = vpop.f32.mrb[0].mxu0
      %v1919 = vadd.f32 %v1789, %v1918
      %v1920 = vpop.f32.mrb[0].mxu0
      %1921 = vmatprep.mubr.f32.mxu0 %v1604
      %1922 = vmatmul.mubr.f32.gmra.mrb[0].mxu0 %v1603
      %v1923 = vpop.f32.mrb[0].mxu0
      %v1924 = vadd.f32 %v1794, %v1923
      %v1925 = vpop.f32.mrb[0].mxu0
      %1926 = vmatprep.mubr.f32.mxu0 %v1611
      %1927 = vmatmul.mubr.f32.gmra.mrb[0].mxu0 %v1610
      %v1928 = vpop.f32.mrb[0].mxu0
      %v1929 = vadd.f32 %v1799, %v1928
      %v1930 = vpop.f32.mrb[0].mxu0
      %1931 = vmatprep.mubr.f32.mxu0 %v1618
      %1932 = vmatmul.mubr.f32.gmra.mrb[0].mxu0 %v1617
      %v1933 = vpop.f32.mrb[0].mxu0
      %v1934 = vadd.f32 %v1804, %v1933
      %v1935 = vpop.f32.mrb[0].mxu0
      %1936 = vmatprep.mubr.f32.mxu0 %v1625
      %1937 = vmatmul.mubr.f32.gmra.mrb[0].mxu0 %v1624
      %v1938 = vpop.f32.mrb[0].mxu0
      %v1939 = vadd.f32 %v1809, %v1938
      %v1940 = vpop.f32.mrb[0].mxu0
      %1941 = vmatprep.mubr.f32.mxu0 %v1632
      %1942 = vmatmul.mubr.f32.gmra.mrb[0].mxu0 %v1631
      %v1943 = vpop.f32.mrb[0].mxu0
      %v1944 = vadd.f32 %v1814, %v1943
      %v1945 = vpop.f32.mrb[0].mxu0
      %1946 = vmatprep.mubr.f32.mxu0 %v1639
      %1947 = vmatmul.mubr.f32.gmra.mrb[0].mxu0 %v1638
      %v1948 = vpop.f32.mrb[0].mxu0
      %v1949 = vadd.f32 %v1819, %v1948
      %v1950 = vpop.f32.mrb[0].mxu0
      %1951 = vmatprep.mubr.f32.mxu0 %v1646
      %1952 = vmatmul.mubr.f32.gmra.mrb[0].mxu0 %v1645
      %v1953 = vpop.f32.mrb[0].mxu0
      %v1954 = vadd.f32 %v1824, %v1953
      %v1955 = vpop.f32.mrb[0].mxu0
      %1956 = vmatprep.mubr.f32.mxu0 %v1653
      %1957 = vmatmul.mubr.f32.gmra.mrb[0].mxu0 %v1652
      %v1958 = vpop.f32.mrb[0].mxu0
      %v1959 = vadd.f32 %v1829, %v1958
      %v1960 = vpop.f32.mrb[0].mxu0
      %1961 = vmatprep.mubr.f32.mxu0 %v1660
      %1962 = vmatmul.mubr.f32.gmra.mrb[0].mxu0 %v1659
      %v1963 = vpop.f32.mrb[0].mxu0
      %v1964 = vadd.f32 %v1834, %v1963
      %v1965 = vpop.f32.mrb[0].mxu0
      %1966 = vmatprep.mubr.f32.mxu0 %v1667
      %1967 = vmatmul.mubr.f32.gmra.mrb[0].mxu0 %v1666
      %v1968 = vpop.f32.mrb[0].mxu0
      %v1969 = vadd.f32 %v1839, %v1968
      %v1970 = vpop.f32.mrb[0].mxu0
      %1971 = vmatprep.mubr.f32.mxu0 %v1674
      %1972 = vmatmul.mubr.f32.gmra.mrb[0].mxu0 %v1673
      %v1973 = vpop.f32.mrb[0].mxu0
      %v1974 = vadd.f32 %v1844, %v1973
      %v1975 = vpop.f32.mrb[0].mxu0
      %1976 = vdwg.mxu0
      %1977 = vmatprep.subr.mxu0 0.0
      %1978 = vmatpush1.msra.mxu0 %v235
      %1979 = vmatprep.subr.mxu0 0.0
      %1980 = vmatpush1.msra.mxu0 %v236
      %1981 = vmatprep.subr.mxu0 0.0
      %1982 = vmatpush1.msra.mxu0 %v237
      %1983 = vmatprep.subr.mxu0 0.0
      %1984 = vmatpush1.msra.mxu0 %v238
      %1985 = vmatprep.subr.mxu0 0.0
      %1986 = vmatpush1.msra.mxu0 %v239
      %1987 = vmatprep.subr.mxu0 0.0
      %1988 = vmatpush1.msra.mxu0 %v240
      %1989 = vmatprep.subr.mxu0 0.0
      %1990 = vmatpush1.msra.mxu0 %v241
      %1991 = vmatprep.subr.mxu0 0.0
      %1992 = vmatpush1.msra.mxu0 %v242
      %1993 = vmatprep.subr.mxu0 0.0
      %1994 = vmatpush1.msra.mxu0 %v243
      %1995 = vmatprep.subr.mxu0 0.0
      %1996 = vmatpush1.msra.mxu0 %v244
      %1997 = vmatprep.subr.mxu0 0.0
      %1998 = vmatpush1.msra.mxu0 %v245
      %1999 = vmatprep.subr.mxu0 0.0
      %2000 = vmatpush1.msra.mxu0 %v246
      %2001 = vmatprep.subr.mxu0 0.0
      %2002 = vmatpush1.msra.mxu0 %v247
      %2003 = vmatprep.subr.mxu0 0.0
      %2004 = vmatpush1.msra.mxu0 %v248
      %2005 = vmatprep.subr.mxu0 0.0
      %2006 = vmatpush1.msra.mxu0 %v249
      %2007 = vmatprep.subr.mxu0 0.0
      %2008 = vmatpush1.msra.mxu0 %v250
      %2009 = vmatprep.subr.mxu0 0.0
      %2010 = vmatpush1.msra.mxu0 %v251
      %2011 = vmatprep.subr.mxu0 0.0
      %2012 = vmatpush1.msra.mxu0 %v252
      %2013 = vmatprep.subr.mxu0 0.0
      %2014 = vmatpush1.msra.mxu0 %v253
      %2015 = vmatprep.subr.mxu0 0.0
      %2016 = vmatpush1.msra.mxu0 %v254
      %2017 = vmatprep.subr.mxu0 0.0
      %2018 = vmatpush1.msra.mxu0 %v255
      %2019 = vmatprep.subr.mxu0 0.0
      %2020 = vmatpush1.msra.mxu0 %v256
      %2021 = vmatprep.subr.mxu0 0.0
      %2022 = vmatpush1.msra.mxu0 %v257
      %2023 = vmatprep.subr.mxu0 0.0
      %2024 = vmatpush1.msra.mxu0 %v258
      %2025 = vmatprep.subr.mxu0 0.0
      %2026 = vmatpush1.msra.mxu0 %v259
      %2027 = vmatprep.subr.mxu0 0.0
      %2028 = vmatpush1.msra.mxu0 %v260
      %2029 = vmatprep.subr.mxu0 0.0
      %2030 = vmatpush1.msra.mxu0 %v261
      %2031 = vmatprep.subr.mxu0 0.0
      %2032 = vmatpush1.msra.mxu0 %v262
      %2033 = vmatprep.subr.mxu0 0.0
      %2034 = vmatpush1.msra.mxu0 %v263
      %2035 = vmatprep.subr.mxu0 0.0
      %2036 = vmatpush1.msra.mxu0 %v264
      %2037 = vmatprep.subr.mxu0 0.0
      %2038 = vmatpush1.msra.mxu0 %v265
      %2039 = vmatprep.subr.mxu0 0.0
      %2040 = vmatpush1.msra.mxu0 %v266
      %2041 = vmatprep.mubr.f32.mxu0 %v1592
      %2042 = vmatmul.mubr.f32.gmra.mrb[0].mxu0 %v1591
      %v2043 = vpop.f32.mrb[0].mxu0
      %v2044 = vadd.f32 %v1914, %v2043
      %v2045 = vpop.f32.mrb[0].mxu0
      %2046 = vmatprep.mubr.f32.mxu0 %v1599
      %2047 = vmatmul.mubr.f32.gmra.mrb[0].mxu0 %v1598
      %v2048 = vpop.f32.mrb[0].mxu0
      %v2049 = vadd.f32 %v1919, %v2048
      %v2050 = vpop.f32.mrb[0].mxu0
      %2051 = vmatprep.mubr.f32.mxu0 %v1606
      %2052 = vmatmul.mubr.f32.gmra.mrb[0].mxu0 %v1605
      %v2053 = vpop.f32.mrb[0].mxu0
      %v2054 = vadd.f32 %v1924, %v2053
      %v2055 = vpop.f32.mrb[0].mxu0
      %2056 = vmatprep.mubr.f32.mxu0 %v1613
      %2057 = vmatmul.mubr.f32.gmra.mrb[0].mxu0 %v1612
      %v2058 = vpop.f32.mrb[0].mxu0
      %v2059 = vadd.f32 %v1929, %v2058
      %v2060 = vpop.f32.mrb[0].mxu0
      %2061 = vmatprep.mubr.f32.mxu0 %v1620
      %2062 = vmatmul.mubr.f32.gmra.mrb[0].mxu0 %v1619
      %v2063 = vpop.f32.mrb[0].mxu0
      %v2064 = vadd.f32 %v1934, %v2063
      %v2065 = vpop.f32.mrb[0].mxu0
      %2066 = vmatprep.mubr.f32.mxu0 %v1627
      %2067 = vmatmul.mubr.f32.gmra.mrb[0].mxu0 %v1626
      %v2068 = vpop.f32.mrb[0].mxu0
      %v2069 = vadd.f32 %v1939, %v2068
      %v2070 = vpop.f32.mrb[0].mxu0
      %2071 = vmatprep.mubr.f32.mxu0 %v1634
      %2072 = vmatmul.mubr.f32.gmra.mrb[0].mxu0 %v1633
      %v2073 = vpop.f32.mrb[0].mxu0
      %v2074 = vadd.f32 %v1944, %v2073
      %v2075 = vpop.f32.mrb[0].mxu0
      %2076 = vmatprep.mubr.f32.mxu0 %v1641
      %2077 = vmatmul.mubr.f32.gmra.mrb[0].mxu0 %v1640
      %v2078 = vpop.f32.mrb[0].mxu0
      %v2079 = vadd.f32 %v1949, %v2078
      %v2080 = vpop.f32.mrb[0].mxu0
      %2081 = vmatprep.mubr.f32.mxu0 %v1648
      %2082 = vmatmul.mubr.f32.gmra.mrb[0].mxu0 %v1647
      %v2083 = vpop.f32.mrb[0].mxu0
      %v2084 = vadd.f32 %v1954, %v2083
      %v2085 = vpop.f32.mrb[0].mxu0
      %2086 = vmatprep.mubr.f32.mxu0 %v1655
      %2087 = vmatmul.mubr.f32.gmra.mrb[0].mxu0 %v1654
      %v2088 = vpop.f32.mrb[0].mxu0
      %v2089 = vadd.f32 %v1959, %v2088
      %v2090 = vpop.f32.mrb[0].mxu0
      %2091 = vmatprep.mubr.f32.mxu0 %v1662
      %2092 = vmatmul.mubr.f32.gmra.mrb[0].mxu0 %v1661
      %v2093 = vpop.f32.mrb[0].mxu0
      %v2094 = vadd.f32 %v1964, %v2093
      %v2095 = vpop.f32.mrb[0].mxu0
      %2096 = vmatprep.mubr.f32.mxu0 %v1669
      %2097 = vmatmul.mubr.f32.gmra.mrb[0].mxu0 %v1668
      %v2098 = vpop.f32.mrb[0].mxu0
      %v2099 = vadd.f32 %v1969, %v2098
      %v2100 = vpop.f32.mrb[0].mxu0
      %2101 = vmatprep.mubr.f32.mxu0 %v1676
      %2102 = vmatmul.mubr.f32.gmra.mrb[0].mxu0 %v1675
      %v2103 = vpop.f32.mrb[0].mxu0
      %v2104 = vadd.f32 %v1974, %v2103
      %v2105 = vpop.f32.mrb[0].mxu0
      %2106 = vdwg.mxu0
      %2107 = vmatprep.subr.mxu0 0.0
      %2108 = vmatpush1.msra.mxu0 %v267
      %2109 = vmatprep.subr.mxu0 0.0
      %2110 = vmatpush1.msra.mxu0 %v268
      %2111 = vmatprep.subr.mxu0 0.0
      %2112 = vmatpush1.msra.mxu0 %v269
      %2113 = vmatprep.subr.mxu0 0.0
      %2114 = vmatpush1.msra.mxu0 %v270
      %2115 = vmatprep.subr.mxu0 0.0
      %2116 = vmatpush1.msra.mxu0 0.0
      %2117 = vmatprep.subr.mxu0 0.0
      %2118 = vmatpush1.msra.mxu0 0.0
      %2119 = vmatprep.subr.mxu0 0.0
      %2120 = vmatpush1.msra.mxu0 0.0
      %2121 = vmatprep.subr.mxu0 0.0
      %2122 = vmatpush1.msra.mxu0 0.0
      %2123 = vmatprep.subr.mxu0 0.0
      %2124 = vmatpush1.msra.mxu0 0.0
      %2125 = vmatprep.subr.mxu0 0.0
      %2126 = vmatpush1.msra.mxu0 0.0
      %2127 = vmatprep.subr.mxu0 0.0
      %2128 = vmatpush1.msra.mxu0 0.0
      %2129 = vmatprep.subr.mxu0 0.0
      %2130 = vmatpush1.msra.mxu0 0.0
      %2131 = vmatprep.subr.mxu0 0.0
      %2132 = vmatpush1.msra.mxu0 0.0
      %2133 = vmatprep.subr.mxu0 0.0
      %2134 = vmatpush1.msra.mxu0 0.0
      %2135 = vmatprep.subr.mxu0 0.0
      %2136 = vmatpush1.msra.mxu0 0.0
      %2137 = vmatprep.subr.mxu0 0.0
      %2138 = vmatpush1.msra.mxu0 0.0
      %2139 = vmatprep.subr.mxu0 0.0
      %2140 = vmatpush1.msra.mxu0 0.0
      %2141 = vmatprep.subr.mxu0 0.0
      %2142 = vmatpush1.msra.mxu0 0.0
      %2143 = vmatprep.subr.mxu0 0.0
      %2144 = vmatpush1.msra.mxu0 0.0
      %2145 = vmatprep.subr.mxu0 0.0
      %2146 = vmatpush1.msra.mxu0 0.0
      %2147 = vmatprep.subr.mxu0 0.0
      %2148 = vmatpush1.msra.mxu0 0.0
      %2149 = vmatprep.subr.mxu0 0.0
      %2150 = vmatpush1.msra.mxu0 0.0
      %2151 = vmatprep.subr.mxu0 0.0
      %2152 = vmatpush1.msra.mxu0 0.0
      %2153 = vmatprep.subr.mxu0 0.0
      %2154 = vmatpush1.msra.mxu0 0.0
      %2155 = vmatprep.subr.mxu0 0.0
      %2156 = vmatpush1.msra.mxu0 0.0
      %2157 = vmatprep.subr.mxu0 0.0
      %2158 = vmatpush1.msra.mxu0 0.0
      %2159 = vmatprep.subr.mxu0 0.0
      %2160 = vmatpush1.msra.mxu0 0.0
      %2161 = vmatprep.subr.mxu0 0.0
      %2162 = vmatpush1.msra.mxu0 0.0
      %2163 = vmatprep.subr.mxu0 0.0
      %2164 = vmatpush1.msra.mxu0 0.0
      %2165 = vmatprep.subr.mxu0 0.0
      %2166 = vmatpush1.msra.mxu0 0.0
      %2167 = vmatprep.subr.mxu0 0.0
      %2168 = vmatpush1.msra.mxu0 0.0
      %2169 = vmatprep.subr.mxu0 0.0
      %2170 = vmatpush1.msra.mxu0 0.0
      %2171 = vmatprep.mubr.f32.mxu0 0.0
      %2172 = vmatmul.mubr.f32.gmra.mrb[0].mxu0 %v1679
      %v2173 = vpop.f32.mrb[0].mxu0
      %v2174 = vadd.f32 %v2044, %v2173
      %v2175 = vpop.f32.mrb[0].mxu0
      %2176 = vmatprep.mubr.f32.mxu0 0.0
      %2177 = vmatmul.mubr.f32.gmra.mrb[0].mxu0 %v1682
      %v2178 = vpop.f32.mrb[0].mxu0
      %v2179 = vadd.f32 %v2049, %v2178
      %v2180 = vpop.f32.mrb[0].mxu0
      %2181 = vmatprep.mubr.f32.mxu0 0.0
      %2182 = vmatmul.mubr.f32.gmra.mrb[0].mxu0 %v1685
      %v2183 = vpop.f32.mrb[0].mxu0
      %v2184 = vadd.f32 %v2054, %v2183
      %v2185 = vpop.f32.mrb[0].mxu0
      %2186 = vmatprep.mubr.f32.mxu0 0.0
      %2187 = vmatmul.mubr.f32.gmra.mrb[0].mxu0 %v1688
      %v2188 = vpop.f32.mrb[0].mxu0
      %v2189 = vadd.f32 %v2059, %v2188
      %v2190 = vpop.f32.mrb[0].mxu0
      %2191 = vmatprep.mubr.f32.mxu0 0.0
      %2192 = vmatmul.mubr.f32.gmra.mrb[0].mxu0 %v1691
      %v2193 = vpop.f32.mrb[0].mxu0
      %v2194 = vadd.f32 %v2064, %v2193
      %v2195 = vpop.f32.mrb[0].mxu0
      %2196 = vmatprep.mubr.f32.mxu0 0.0
      %2197 = vmatmul.mubr.f32.gmra.mrb[0].mxu0 %v1694
      %v2198 = vpop.f32.mrb[0].mxu0
      %v2199 = vadd.f32 %v2069, %v2198
      %v2200 = vpop.f32.mrb[0].mxu0
      %2201 = vmatprep.mubr.f32.mxu0 0.0
      %2202 = vmatmul.mubr.f32.gmra.mrb[0].mxu0 %v1697
      %v2203 = vpop.f32.mrb[0].mxu0
      %v2204 = vadd.f32 %v2074, %v2203
      %v2205 = vpop.f32.mrb[0].mxu0
      %2206 = vmatprep.mubr.f32.mxu0 0.0
      %2207 = vmatmul.mubr.f32.gmra.mrb[0].mxu0 %v1700
      %v2208 = vpop.f32.mrb[0].mxu0
      %v2209 = vadd.f32 %v2079, %v2208
      %v2210 = vpop.f32.mrb[0].mxu0
      %2211 = vmatprep.mubr.f32.mxu0 0.0
      %2212 = vmatmul.mubr.f32.gmra.mrb[0].mxu0 %v1703
      %v2213 = vpop.f32.mrb[0].mxu0
      %v2214 = vadd.f32 %v2084, %v2213
      %v2215 = vpop.f32.mrb[0].mxu0
      %2216 = vmatprep.mubr.f32.mxu0 0.0
      %2217 = vmatmul.mubr.f32.gmra.mrb[0].mxu0 %v1706
      %v2218 = vpop.f32.mrb[0].mxu0
      %v2219 = vadd.f32 %v2089, %v2218
      %v2220 = vpop.f32.mrb[0].mxu0
      %2221 = vmatprep.mubr.f32.mxu0 0.0
      %2222 = vmatmul.mubr.f32.gmra.mrb[0].mxu0 %v1709
      %v2223 = vpop.f32.mrb[0].mxu0
      %v2224 = vadd.f32 %v2094, %v2223
      %v2225 = vpop.f32.mrb[0].mxu0
      %2226 = vmatprep.mubr.f32.mxu0 0.0
      %2227 = vmatmul.mubr.f32.gmra.mrb[0].mxu0 %v1712
      %v2228 = vpop.f32.mrb[0].mxu0
      %v2229 = vadd.f32 %v2099, %v2228
      %v2230 = vpop.f32.mrb[0].mxu0
      %2231 = vmatprep.mubr.f32.mxu0 0.0
      %2232 = vmatmul.mubr.f32.gmra.mrb[0].mxu0 %v1715
      %v2233 = vpop.f32.mrb[0].mxu0
      %v2234 = vadd.f32 %v2104, %v2233
      %v2235 = vpop.f32.mrb[0].mxu0
      %2236 = vdwg.mxu0
      %v2237 = vmax.f32 %v1573, %v2174
      %v2238 = vmax.f32 %v1574, %v2179
      %v2239 = vmax.f32 %v1575, %v2184
      %v2240 = vmax.f32 %v1576, %v2189
      %v2241 = vmax.f32 %v1577, %v2194
      %v2242 = vmax.f32 %v1578, %v2199
      %v2243 = vmax.f32 %v1579, %v2204
      %v2244 = vmax.f32 %v1580, %v2209
      %v2245 = vmax.f32 %v1581, %v2214
      %v2246 = vmax.f32 %v1582, %v2219
      %v2247 = vmax.f32 %v1583, %v2224
      %v2248 = vmax.f32 %v1584, %v2229
      %v2249 = vmax.f32 %v1585, %v2234
      %s2250 = scalar_lea.vmem %s165, 2184
      %v2251 = vld [vmem:[%s2250] sm:$0xff]
      %v2252 = vld [vmem:[%s2250 + $0x8] sm:$0xff]
      %v2253 = vld [vmem:[%s2250 + $0x10] sm:$0xff]
      %v2254 = vld [vmem:[%s2250 + $0x18] sm:$0xff]
      %v2255 = vld [vmem:[%s2250 + $0x20] sm:$0xff]
      %v2256 = vld [vmem:[%s2250 + $0x28] sm:$0xff]
      %v2257 = vld [vmem:[%s2250 + $0x30] sm:$0xff]
      %v2258 = vld [vmem:[%s2250 + $0x38] sm:$0xff]
      %v2259 = vld [vmem:[%s2250 + $0x40] sm:$0xff]
      %v2260 = vld [vmem:[%s2250 + $0x48] sm:$0xff]
      %v2261 = vld [vmem:[%s2250 + $0x50] sm:$0xff]
      %v2262 = vld [vmem:[%s2250 + $0x58] sm:$0xff]
      %v2263 = vld [vmem:[%s2250 + $0x60] sm:$0xff]
      %v2264 = vld [vmem:[%s2250 + $0x68] sm:$0xff]
      %v2265 = vld [vmem:[%s2250 + $0x70] sm:$0xff]
      %v2266 = vld [vmem:[%s2250 + $0x78] sm:$0xff]
      %v2267 = vld [vmem:[%s2250 + $0x80] sm:$0xff]
      %v2268 = vld [vmem:[%s2250 + $0x88] sm:$0xff]
      %v2269 = vld [vmem:[%s2250 + $0x90] sm:$0xff]
      %v2270 = vld [vmem:[%s2250 + $0x98] sm:$0xff]
      %v2271 = vld [vmem:[%s2250 + $0xa0] sm:$0xff]
      %v2272 = vld [vmem:[%s2250 + $0xa8] sm:$0xff]
      %v2273 = vld [vmem:[%s2250 + $0xb0] sm:$0xff]
      %v2274 = vld [vmem:[%s2250 + $0xb8] sm:$0xff]
      %v2275 = vld [vmem:[%s2250 + $0xc0] sm:$0xff]
      %v2276 = vld [vmem:[%s2250 + $0xc8] sm:$0xff]
      %v2277 = vld [vmem:[%s2250 + $0xd0] sm:$0xff]
      %v2278 = vld [vmem:[%s2250 + $0xd8] sm:$0xff]
      %v2279 = vld [vmem:[%s2250 + $0xe0] sm:$0xff]
      %v2280 = vld [vmem:[%s2250 + $0xe8] sm:$0xff]
      %v2281 = vld [vmem:[%s2250 + $0xf0] sm:$0xff]
      %v2282 = vld [vmem:[%s2250 + $0xf8] sm:$0xff]
      %v2283 = vld [vmem:[%s2250 + $0x100] sm:$0xff]
      %v2284 = vld [vmem:[%s2250 + $0x108] sm:$0xff]
      %v2285 = vld [vmem:[%s2250 + $0x110] sm:$0xff]
      %v2286 = vld [vmem:[%s2250 + $0x118] sm:$0xff]
      %v2287 = vld [vmem:[%s2250 + $0x120] sm:$0xff]
      %v2288 = vld [vmem:[%s2250 + $0x128] sm:$0xff]
      %v2289 = vld [vmem:[%s2250 + $0x130] sm:$0xff]
      %v2290 = vld [vmem:[%s2250 + $0x138] sm:$0xff]
      %v2291 = vld [vmem:[%s2250 + $0x140] sm:$0xff]
      %v2292 = vld [vmem:[%s2250 + $0x148] sm:$0xff]
      %v2293 = vld [vmem:[%s2250 + $0x150] sm:$0xff]
      %v2294 = vld [vmem:[%s2250 + $0x158] sm:$0xff]
      %v2295 = vld [vmem:[%s2250 + $0x160] sm:$0xff]
      %v2296 = vld [vmem:[%s2250 + $0x168] sm:$0xff]
      %v2297 = vld [vmem:[%s2250 + $0x170] sm:$0xff]
      %v2298 = vld [vmem:[%s2250 + $0x178] sm:$0xff]
      %v2299 = vld [vmem:[%s2250 + $0x180] sm:$0xff]
      %v2300 = vld [vmem:[%s2250 + $0x188] sm:$0xff]
      %v2301 = vld [vmem:[%s2250 + $0x190] sm:$0xff]
      %v2302 = vld [vmem:[%s2250 + $0x198] sm:$0xff]
      %v2303 = vld [vmem:[%s2250 + $0x1a0] sm:$0xff]
      %v2304 = vld [vmem:[%s2250 + $0x1a8] sm:$0xff]
      %v2305 = vld [vmem:[%s2250 + $0x1b0] sm:$0xff]
      %v2306 = vld [vmem:[%s2250 + $0x1b8] sm:$0xff]
      %v2307 = vld [vmem:[%s2250 + $0x1c0] sm:$0xff]
      %v2308 = vld [vmem:[%s2250 + $0x1c8] sm:$0xff]
      %v2309 = vld [vmem:[%s2250 + $0x1d0] sm:$0xff]
      %v2310 = vld [vmem:[%s2250 + $0x1d8] sm:$0xff]
      %v2311 = vld [vmem:[%s2250 + $0x1e0] sm:$0xff]
      %v2312 = vld [vmem:[%s2250 + $0x1e8] sm:$0xff]
      %v2313 = vld [vmem:[%s2250 + $0x1f0] sm:$0xff]
      %v2314 = vld [vmem:[%s2250 + $0x1f8] sm:$0xff]
      %v2315 = vld [vmem:[%s2250 + $0x200] sm:$0xff]
      %v2316 = vld [vmem:[%s2250 + $0x208] sm:$0xff]
      %v2317 = vld [vmem:[%s2250 + $0x210] sm:$0xff]
      %v2318 = vld [vmem:[%s2250 + $0x218] sm:$0xff]
      %v2319 = vld [vmem:[%s2250 + $0x220] sm:$0xff]
      %v2320 = vld [vmem:[%s2250 + $0x228] sm:$0xff]
      %v2321 = vld [vmem:[%s2250 + $0x230] sm:$0xff]
      %v2322 = vld [vmem:[%s2250 + $0x238] sm:$0xff]
      %v2323 = vld [vmem:[%s2250 + $0x240] sm:$0xff]
      %v2324 = vld [vmem:[%s2250 + $0x248] sm:$0xff]
      %v2325 = vld [vmem:[%s2250 + $0x250] sm:$0xff]
      %v2326 = vld [vmem:[%s2250 + $0x258] sm:$0xff]
      %v2327 = vld [vmem:[%s2250 + $0x260] sm:$0xff]
      %v2328 = vld [vmem:[%s2250 + $0x268] sm:$0xff]
      %v2329 = vld [vmem:[%s2250 + $0x270] sm:$0xff]
      %v2330 = vld [vmem:[%s2250 + $0x278] sm:$0xff]
      %v2331 = vld [vmem:[%s2250 + $0x280] sm:$0xff]
      %v2332 = vld [vmem:[%s2250 + $0x288] sm:$0xff]
      %v2333 = vld [vmem:[%s2250 + $0x290] sm:$0xff]
      %v2334 = vld [vmem:[%s2250 + $0x298] sm:$0xff]
      %v2335 = vld [vmem:[%s2250 + $0x2a0] sm:$0xf]
      %v2336 = vld [vmem:[%s2250 + $0x2a8] sm:$0xf]
      %v2337 = vld [vmem:[%s2250 + $0x2b0] sm:$0xf]
      %v2338 = vld [vmem:[%s2250 + $0x2b8] sm:$0xf]
      %v2339 = vld [vmem:[%s2250 + $0x2c0] sm:$0xf]
      %v2340 = vld [vmem:[%s2250 + $0x2c8] sm:$0xf]
      %v2341 = vld [vmem:[%s2250 + $0x2d0] sm:$0xf]
      %v2343 = vsel %vm362, %v2257, 0
      %v2346 = vsel %vm362, %v2264, 0
      %v2349 = vsel %vm362, %v2271, 0
      %v2352 = vsel %vm362, %v2278, 0
      %v2355 = vsel %vm362, %v2285, 0
      %v2358 = vsel %vm362, %v2292, 0
      %v2361 = vsel %vm362, %v2299, 0
      %v2364 = vsel %vm362, %v2306, 0
      %v2367 = vsel %vm362, %v2313, 0
      %v2370 = vsel %vm362, %v2320, 0
      %v2373 = vsel %vm362, %v2327, 0
      %v2376 = vsel %vm362, %v2334, 0
      %v2379 = vsel %vm362, %v2341, 0
      %2381 = vmatprep.subr.mxu0 0.0
      %2382 = vmatpush1.msra.mxu0 %v171
      %2383 = vmatprep.subr.mxu0 0.0
      %2384 = vmatpush1.msra.mxu0 %v172
      %2385 = vmatprep.subr.mxu0 0.0
      %2386 = vmatpush1.msra.mxu0 %v173
      %2387 = vmatprep.subr.mxu0 0.0
      %2388 = vmatpush1.msra.mxu0 %v174
      %2389 = vmatprep.subr.mxu0 0.0
      %2390 = vmatpush1.msra.mxu0 %v175
      %2391 = vmatprep.subr.mxu0 0.0
      %2392 = vmatpush1.msra.mxu0 %v176
      %2393 = vmatprep.subr.mxu0 0.0
      %2394 = vmatpush1.msra.mxu0 %v177
      %2395 = vmatprep.subr.mxu0 0.0
      %2396 = vmatpush1.msra.mxu0 %v178
      %2397 = vmatprep.subr.mxu0 0.0
      %2398 = vmatpush1.msra.mxu0 %v179
      %2399 = vmatprep.subr.mxu0 0.0
      %2400 = vmatpush1.msra.mxu0 %v180
      %2401 = vmatprep.subr.mxu0 0.0
      %2402 = vmatpush1.msra.mxu0 %v181
      %2403 = vmatprep.subr.mxu0 0.0
      %2404 = vmatpush1.msra.mxu0 %v182
      %2405 = vmatprep.subr.mxu0 0.0
      %2406 = vmatpush1.msra.mxu0 %v183
      %2407 = vmatprep.subr.mxu0 0.0
      %2408 = vmatpush1.msra.mxu0 %v184
      %2409 = vmatprep.subr.mxu0 0.0
      %2410 = vmatpush1.msra.mxu0 %v185
      %2411 = vmatprep.subr.mxu0 0.0
      %2412 = vmatpush1.msra.mxu0 %v186
      %2413 = vmatprep.subr.mxu0 0.0
      %2414 = vmatpush1.msra.mxu0 %v187
      %2415 = vmatprep.subr.mxu0 0.0
      %2416 = vmatpush1.msra.mxu0 %v188
      %2417 = vmatprep.subr.mxu0 0.0
      %2418 = vmatpush1.msra.mxu0 %v189
      %2419 = vmatprep.subr.mxu0 0.0
      %2420 = vmatpush1.msra.mxu0 %v190
      %2421 = vmatprep.subr.mxu0 0.0
      %2422 = vmatpush1.msra.mxu0 %v191
      %2423 = vmatprep.subr.mxu0 0.0
      %2424 = vmatpush1.msra.mxu0 %v192
      %2425 = vmatprep.subr.mxu0 0.0
      %2426 = vmatpush1.msra.mxu0 %v193
      %2427 = vmatprep.subr.mxu0 0.0
      %2428 = vmatpush1.msra.mxu0 %v194
      %2429 = vmatprep.subr.mxu0 0.0
      %2430 = vmatpush1.msra.mxu0 %v195
      %2431 = vmatprep.subr.mxu0 0.0
      %2432 = vmatpush1.msra.mxu0 %v196
      %2433 = vmatprep.subr.mxu0 0.0
      %2434 = vmatpush1.msra.mxu0 %v197
      %2435 = vmatprep.subr.mxu0 0.0
      %2436 = vmatpush1.msra.mxu0 %v198
      %2437 = vmatprep.subr.mxu0 0.0
      %2438 = vmatpush1.msra.mxu0 %v199
      %2439 = vmatprep.subr.mxu0 0.0
      %2440 = vmatpush1.msra.mxu0 %v200
      %2441 = vmatprep.subr.mxu0 0.0
      %2442 = vmatpush1.msra.mxu0 %v201
      %2443 = vmatprep.subr.mxu0 0.0
      %2444 = vmatpush1.msra.mxu0 %v202
      %2445 = vmatprep.mubr.f32.mxu0 %v2252
      %2446 = vmatmul.mubr.f32.gmra.mrb[0].mxu0 %v2251
      %v2447 = vpop.f32.mrb[0].mxu0
      %v2448 = vadd.f32 0.0, %v2447
      %v2449 = vpop.f32.mrb[0].mxu0
      %2450 = vmatprep.mubr.f32.mxu0 %v2259
      %2451 = vmatmul.mubr.f32.gmra.mrb[0].mxu0 %v2258
      %v2452 = vpop.f32.mrb[0].mxu0
      %v2453 = vadd.f32 0.0, %v2452
      %v2454 = vpop.f32.mrb[0].mxu0
      %2455 = vmatprep.mubr.f32.mxu0 %v2266
      %2456 = vmatmul.mubr.f32.gmra.mrb[0].mxu0 %v2265
      %v2457 = vpop.f32.mrb[0].mxu0
      %v2458 = vadd.f32 0.0, %v2457
      %v2459 = vpop.f32.mrb[0].mxu0
      %2460 = vmatprep.mubr.f32.mxu0 %v2273
      %2461 = vmatmul.mubr.f32.gmra.mrb[0].mxu0 %v2272
      %v2462 = vpop.f32.mrb[0].mxu0
      %v2463 = vadd.f32 0.0, %v2462
      %v2464 = vpop.f32.mrb[0].mxu0
      %2465 = vmatprep.mubr.f32.mxu0 %v2280
      %2466 = vmatmul.mubr.f32.gmra.mrb[0].mxu0 %v2279
      %v2467 = vpop.f32.mrb[0].mxu0
      %v2468 = vadd.f32 0.0, %v2467
      %v2469 = vpop.f32.mrb[0].mxu0
      %2470 = vmatprep.mubr.f32.mxu0 %v2287
      %2471 = vmatmul.mubr.f32.gmra.mrb[0].mxu0 %v2286
      %v2472 = vpop.f32.mrb[0].mxu0
      %v2473 = vadd.f32 0.0, %v2472
      %v2474 = vpop.f32.mrb[0].mxu0
      %2475 = vmatprep.mubr.f32.mxu0 %v2294
      %2476 = vmatmul.mubr.f32.gmra.mrb[0].mxu0 %v2293
      %v2477 = vpop.f32.mrb[0].mxu0
      %v2478 = vadd.f32 0.0, %v2477
      %v2479 = vpop.f32.mrb[0].mxu0
      %2480 = vmatprep.mubr.f32.mxu0 %v2301
      %2481 = vmatmul.mubr.f32.gmra.mrb[0].mxu0 %v2300
      %v2482 = vpop.f32.mrb[0].mxu0
      %v2483 = vadd.f32 0.0, %v2482
      %v2484 = vpop.f32.mrb[0].mxu0
      %2485 = vmatprep.mubr.f32.mxu0 %v2308
      %2486 = vmatmul.mubr.f32.gmra.mrb[0].mxu0 %v2307
      %v2487 = vpop.f32.mrb[0].mxu0
      %v2488 = vadd.f32 0.0, %v2487
      %v2489 = vpop.f32.mrb[0].mxu0
      %2490 = vmatprep.mubr.f32.mxu0 %v2315
      %2491 = vmatmul.mubr.f32.gmra.mrb[0].mxu0 %v2314
      %v2492 = vpop.f32.mrb[0].mxu0
      %v2493 = vadd.f32 0.0, %v2492
      %v2494 = vpop.f32.mrb[0].mxu0
      %2495 = vmatprep.mubr.f32.mxu0 %v2322
      %2496 = vmatmul.mubr.f32.gmra.mrb[0].mxu0 %v2321
      %v2497 = vpop.f32.mrb[0].mxu0
      %v2498 = vadd.f32 0.0, %v2497
      %v2499 = vpop.f32.mrb[0].mxu0
      %2500 = vmatprep.mubr.f32.mxu0 %v2329
      %2501 = vmatmul.mubr.f32.gmra.mrb[0].mxu0 %v2328
      %v2502 = vpop.f32.mrb[0].mxu0
      %v2503 = vadd.f32 0.0, %v2502
      %v2504 = vpop.f32.mrb[0].mxu0
      %2505 = vmatprep.mubr.f32.mxu0 %v2336
      %2506 = vmatmul.mubr.f32.gmra.mrb[0].mxu0 %v2335
      %v2507 = vpop.f32.mrb[0].mxu0
      %v2508 = vadd.f32 0.0, %v2507
      %v2509 = vpop.f32.mrb[0].mxu0
      %2510 = vdwg.mxu0
      %2511 = vmatprep.subr.mxu0 0.0
      %2512 = vmatpush1.msra.mxu0 %v203
      %2513 = vmatprep.subr.mxu0 0.0
      %2514 = vmatpush1.msra.mxu0 %v204
      %2515 = vmatprep.subr.mxu0 0.0
      %2516 = vmatpush1.msra.mxu0 %v205
      %2517 = vmatprep.subr.mxu0 0.0
      %2518 = vmatpush1.msra.mxu0 %v206
      %2519 = vmatprep.subr.mxu0 0.0
      %2520 = vmatpush1.msra.mxu0 %v207
      %2521 = vmatprep.subr.mxu0 0.0
      %2522 = vmatpush1.msra.mxu0 %v208
      %2523 = vmatprep.subr.mxu0 0.0
      %2524 = vmatpush1.msra.mxu0 %v209
      %2525 = vmatprep.subr.mxu0 0.0
      %2526 = vmatpush1.msra.mxu0 %v210
      %2527 = vmatprep.subr.mxu0 0.0
      %2528 = vmatpush1.msra.mxu0 %v211
      %2529 = vmatprep.subr.mxu0 0.0
      %2530 = vmatpush1.msra.mxu0 %v212
      %2531 = vmatprep.subr.mxu0 0.0
      %2532 = vmatpush1.msra.mxu0 %v213
      %2533 = vmatprep.subr.mxu0 0.0
      %2534 = vmatpush1.msra.mxu0 %v214
      %2535 = vmatprep.subr.mxu0 0.0
      %2536 = vmatpush1.msra.mxu0 %v215
      %2537 = vmatprep.subr.mxu0 0.0
      %2538 = vmatpush1.msra.mxu0 %v216
      %2539 = vmatprep.subr.mxu0 0.0
      %2540 = vmatpush1.msra.mxu0 %v217
      %2541 = vmatprep.subr.mxu0 0.0
      %2542 = vmatpush1.msra.mxu0 %v218
      %2543 = vmatprep.subr.mxu0 0.0
      %2544 = vmatpush1.msra.mxu0 %v219
      %2545 = vmatprep.subr.mxu0 0.0
      %2546 = vmatpush1.msra.mxu0 %v220
      %2547 = vmatprep.subr.mxu0 0.0
      %2548 = vmatpush1.msra.mxu0 %v221
      %2549 = vmatprep.subr.mxu0 0.0
      %2550 = vmatpush1.msra.mxu0 %v222
      %2551 = vmatprep.subr.mxu0 0.0
      %2552 = vmatpush1.msra.mxu0 %v223
      %2553 = vmatprep.subr.mxu0 0.0
      %2554 = vmatpush1.msra.mxu0 %v224
      %2555 = vmatprep.subr.mxu0 0.0
      %2556 = vmatpush1.msra.mxu0 %v225
      %2557 = vmatprep.subr.mxu0 0.0
      %2558 = vmatpush1.msra.mxu0 %v226
      %2559 = vmatprep.subr.mxu0 0.0
      %2560 = vmatpush1.msra.mxu0 %v227
      %2561 = vmatprep.subr.mxu0 0.0
      %2562 = vmatpush1.msra.mxu0 %v228
      %2563 = vmatprep.subr.mxu0 0.0
      %2564 = vmatpush1.msra.mxu0 %v229
      %2565 = vmatprep.subr.mxu0 0.0
      %2566 = vmatpush1.msra.mxu0 %v230
      %2567 = vmatprep.subr.mxu0 0.0
      %2568 = vmatpush1.msra.mxu0 %v231
      %2569 = vmatprep.subr.mxu0 0.0
      %2570 = vmatpush1.msra.mxu0 %v232
      %2571 = vmatprep.subr.mxu0 0.0
      %2572 = vmatpush1.msra.mxu0 %v233
      %2573 = vmatprep.subr.mxu0 0.0
      %2574 = vmatpush1.msra.mxu0 %v234
      %2575 = vmatprep.mubr.f32.mxu0 %v2254
      %2576 = vmatmul.mubr.f32.gmra.mrb[0].mxu0 %v2253
      %v2577 = vpop.f32.mrb[0].mxu0
      %v2578 = vadd.f32 %v2448, %v2577
      %v2579 = vpop.f32.mrb[0].mxu0
      %2580 = vmatprep.mubr.f32.mxu0 %v2261
      %2581 = vmatmul.mubr.f32.gmra.mrb[0].mxu0 %v2260
      %v2582 = vpop.f32.mrb[0].mxu0
      %v2583 = vadd.f32 %v2453, %v2582
      %v2584 = vpop.f32.mrb[0].mxu0
      %2585 = vmatprep.mubr.f32.mxu0 %v2268
      %2586 = vmatmul.mubr.f32.gmra.mrb[0].mxu0 %v2267
      %v2587 = vpop.f32.mrb[0].mxu0
      %v2588 = vadd.f32 %v2458, %v2587
      %v2589 = vpop.f32.mrb[0].mxu0
      %2590 = vmatprep.mubr.f32.mxu0 %v2275
      %2591 = vmatmul.mubr.f32.gmra.mrb[0].mxu0 %v2274
      %v2592 = vpop.f32.mrb[0].mxu0
      %v2593 = vadd.f32 %v2463, %v2592
      %v2594 = vpop.f32.mrb[0].mxu0
      %2595 = vmatprep.mubr.f32.mxu0 %v2282
      %2596 = vmatmul.mubr.f32.gmra.mrb[0].mxu0 %v2281
      %v2597 = vpop.f32.mrb[0].mxu0
      %v2598 = vadd.f32 %v2468, %v2597
      %v2599 = vpop.f32.mrb[0].mxu0
      %2600 = vmatprep.mubr.f32.mxu0 %v2289
      %2601 = vmatmul.mubr.f32.gmra.mrb[0].mxu0 %v2288
      %v2602 = vpop.f32.mrb[0].mxu0
      %v2603 = vadd.f32 %v2473, %v2602
      %v2604 = vpop.f32.mrb[0].mxu0
      %2605 = vmatprep.mubr.f32.mxu0 %v2296
      %2606 = vmatmul.mubr.f32.gmra.mrb[0].mxu0 %v2295
      %v2607 = vpop.f32.mrb[0].mxu0
      %v2608 = vadd.f32 %v2478, %v2607
      %v2609 = vpop.f32.mrb[0].mxu0
      %2610 = vmatprep.mubr.f32.mxu0 %v2303
      %2611 = vmatmul.mubr.f32.gmra.mrb[0].mxu0 %v2302
      %v2612 = vpop.f32.mrb[0].mxu0
      %v2613 = vadd.f32 %v2483, %v2612
      %v2614 = vpop.f32.mrb[0].mxu0
      %2615 = vmatprep.mubr.f32.mxu0 %v2310
      %2616 = vmatmul.mubr.f32.gmra.mrb[0].mxu0 %v2309
      %v2617 = vpop.f32.mrb[0].mxu0
      %v2618 = vadd.f32 %v2488, %v2617
      %v2619 = vpop.f32.mrb[0].mxu0
      %2620 = vmatprep.mubr.f32.mxu0 %v2317
      %2621 = vmatmul.mubr.f32.gmra.mrb[0].mxu0 %v2316
      %v2622 = vpop.f32.mrb[0].mxu0
      %v2623 = vadd.f32 %v2493, %v2622
      %v2624 = vpop.f32.mrb[0].mxu0
      %2625 = vmatprep.mubr.f32.mxu0 %v2324
      %2626 = vmatmul.mubr.f32.gmra.mrb[0].mxu0 %v2323
      %v2627 = vpop.f32.mrb[0].mxu0
      %v2628 = vadd.f32 %v2498, %v2627
      %v2629 = vpop.f32.mrb[0].mxu0
      %2630 = vmatprep.mubr.f32.mxu0 %v2331
      %2631 = vmatmul.mubr.f32.gmra.mrb[0].mxu0 %v2330
      %v2632 = vpop.f32.mrb[0].mxu0
      %v2633 = vadd.f32 %v2503, %v2632
      %v2634 = vpop.f32.mrb[0].mxu0
      %2635 = vmatprep.mubr.f32.mxu0 %v2338
      %2636 = vmatmul.mubr.f32.gmra.mrb[0].mxu0 %v2337
      %v2637 = vpop.f32.mrb[0].mxu0
      %v2638 = vadd.f32 %v2508, %v2637
      %v2639 = vpop.f32.mrb[0].mxu0
      %2640 = vdwg.mxu0
      %2641 = vmatprep.subr.mxu0 0.0
      %2642 = vmatpush1.msra.mxu0 %v235
      %2643 = vmatprep.subr.mxu0 0.0
      %2644 = vmatpush1.msra.mxu0 %v236
      %2645 = vmatprep.subr.mxu0 0.0
      %2646 = vmatpush1.msra.mxu0 %v237
      %2647 = vmatprep.subr.mxu0 0.0
      %2648 = vmatpush1.msra.mxu0 %v238
      %2649 = vmatprep.subr.mxu0 0.0
      %2650 = vmatpush1.msra.mxu0 %v239
      %2651 = vmatprep.subr.mxu0 0.0
      %2652 = vmatpush1.msra.mxu0 %v240
      %2653 = vmatprep.subr.mxu0 0.0
      %2654 = vmatpush1.msra.mxu0 %v241
      %2655 = vmatprep.subr.mxu0 0.0
      %2656 = vmatpush1.msra.mxu0 %v242
      %2657 = vmatprep.subr.mxu0 0.0
      %2658 = vmatpush1.msra.mxu0 %v243
      %2659 = vmatprep.subr.mxu0 0.0
      %2660 = vmatpush1.msra.mxu0 %v244
      %2661 = vmatprep.subr.mxu0 0.0
      %2662 = vmatpush1.msra.mxu0 %v245
      %2663 = vmatprep.subr.mxu0 0.0
      %2664 = vmatpush1.msra.mxu0 %v246
      %2665 = vmatprep.subr.mxu0 0.0
      %2666 = vmatpush1.msra.mxu0 %v247
      %2667 = vmatprep.subr.mxu0 0.0
      %2668 = vmatpush1.msra.mxu0 %v248
      %2669 = vmatprep.subr.mxu0 0.0
      %2670 = vmatpush1.msra.mxu0 %v249
      %2671 = vmatprep.subr.mxu0 0.0
      %2672 = vmatpush1.msra.mxu0 %v250
      %2673 = vmatprep.subr.mxu0 0.0
      %2674 = vmatpush1.msra.mxu0 %v251
      %2675 = vmatprep.subr.mxu0 0.0
      %2676 = vmatpush1.msra.mxu0 %v252
      %2677 = vmatprep.subr.mxu0 0.0
      %2678 = vmatpush1.msra.mxu0 %v253
      %2679 = vmatprep.subr.mxu0 0.0
      %2680 = vmatpush1.msra.mxu0 %v254
      %2681 = vmatprep.subr.mxu0 0.0
      %2682 = vmatpush1.msra.mxu0 %v255
      %2683 = vmatprep.subr.mxu0 0.0
      %2684 = vmatpush1.msra.mxu0 %v256
      %2685 = vmatprep.subr.mxu0 0.0
      %2686 = vmatpush1.msra.mxu0 %v257
      %2687 = vmatprep.subr.mxu0 0.0
      %2688 = vmatpush1.msra.mxu0 %v258
      %2689 = vmatprep.subr.mxu0 0.0
      %2690 = vmatpush1.msra.mxu0 %v259
      %2691 = vmatprep.subr.mxu0 0.0
      %2692 = vmatpush1.msra.mxu0 %v260
      %2693 = vmatprep.subr.mxu0 0.0
      %2694 = vmatpush1.msra.mxu0 %v261
      %2695 = vmatprep.subr.mxu0 0.0
      %2696 = vmatpush1.msra.mxu0 %v262
      %2697 = vmatprep.subr.mxu0 0.0
      %2698 = vmatpush1.msra.mxu0 %v263
      %2699 = vmatprep.subr.mxu0 0.0
      %2700 = vmatpush1.msra.mxu0 %v264
      %2701 = vmatprep.subr.mxu0 0.0
      %2702 = vmatpush1.msra.mxu0 %v265
      %2703 = vmatprep.subr.mxu0 0.0
      %2704 = vmatpush1.msra.mxu0 %v266
      %2705 = vmatprep.mubr.f32.mxu0 %v2256
      %2706 = vmatmul.mubr.f32.gmra.mrb[0].mxu0 %v2255
      %v2707 = vpop.f32.mrb[0].mxu0
      %v2708 = vadd.f32 %v2578, %v2707
      %v2709 = vpop.f32.mrb[0].mxu0
      %2710 = vmatprep.mubr.f32.mxu0 %v2263
      %2711 = vmatmul.mubr.f32.gmra.mrb[0].mxu0 %v2262
      %v2712 = vpop.f32.mrb[0].mxu0
      %v2713 = vadd.f32 %v2583, %v2712
      %v2714 = vpop.f32.mrb[0].mxu0
      %2715 = vmatprep.mubr.f32.mxu0 %v2270
      %2716 = vmatmul.mubr.f32.gmra.mrb[0].mxu0 %v2269
      %v2717 = vpop.f32.mrb[0].mxu0
      %v2718 = vadd.f32 %v2588, %v2717
      %v2719 = vpop.f32.mrb[0].mxu0
      %2720 = vmatprep.mubr.f32.mxu0 %v2277
      %2721 = vmatmul.mubr.f32.gmra.mrb[0].mxu0 %v2276
      %v2722 = vpop.f32.mrb[0].mxu0
      %v2723 = vadd.f32 %v2593, %v2722
      %v2724 = vpop.f32.mrb[0].mxu0
      %2725 = vmatprep.mubr.f32.mxu0 %v2284
      %2726 = vmatmul.mubr.f32.gmra.mrb[0].mxu0 %v2283
      %v2727 = vpop.f32.mrb[0].mxu0
      %v2728 = vadd.f32 %v2598, %v2727
      %v2729 = vpop.f32.mrb[0].mxu0
      %2730 = vmatprep.mubr.f32.mxu0 %v2291
      %2731 = vmatmul.mubr.f32.gmra.mrb[0].mxu0 %v2290
      %v2732 = vpop.f32.mrb[0].mxu0
      %v2733 = vadd.f32 %v2603, %v2732
      %v2734 = vpop.f32.mrb[0].mxu0
      %2735 = vmatprep.mubr.f32.mxu0 %v2298
      %2736 = vmatmul.mubr.f32.gmra.mrb[0].mxu0 %v2297
      %v2737 = vpop.f32.mrb[0].mxu0
      %v2738 = vadd.f32 %v2608, %v2737
      %v2739 = vpop.f32.mrb[0].mxu0
      %2740 = vmatprep.mubr.f32.mxu0 %v2305
      %2741 = vmatmul.mubr.f32.gmra.mrb[0].mxu0 %v2304
      %v2742 = vpop.f32.mrb[0].mxu0
      %v2743 = vadd.f32 %v2613, %v2742
      %v2744 = vpop.f32.mrb[0].mxu0
      %2745 = vmatprep.mubr.f32.mxu0 %v2312
      %2746 = vmatmul.mubr.f32.gmra.mrb[0].mxu0 %v2311
      %v2747 = vpop.f32.mrb[0].mxu0
      %v2748 = vadd.f32 %v2618, %v2747
      %v2749 = vpop.f32.mrb[0].mxu0
      %2750 = vmatprep.mubr.f32.mxu0 %v2319
      %2751 = vmatmul.mubr.f32.gmra.mrb[0].mxu0 %v2318
      %v2752 = vpop.f32.mrb[0].mxu0
      %v2753 = vadd.f32 %v2623, %v2752
      %v2754 = vpop.f32.mrb[0].mxu0
      %2755 = vmatprep.mubr.f32.mxu0 %v2326
      %2756 = vmatmul.mubr.f32.gmra.mrb[0].mxu0 %v2325
      %v2757 = vpop.f32.mrb[0].mxu0
      %v2758 = vadd.f32 %v2628, %v2757
      %v2759 = vpop.f32.mrb[0].mxu0
      %2760 = vmatprep.mubr.f32.mxu0 %v2333
      %2761 = vmatmul.mubr.f32.gmra.mrb[0].mxu0 %v2332
      %v2762 = vpop.f32.mrb[0].mxu0
      %v2763 = vadd.f32 %v2633, %v2762
      %v2764 = vpop.f32.mrb[0].mxu0
      %2765 = vmatprep.mubr.f32.mxu0 %v2340
      %2766 = vmatmul.mubr.f32.gmra.mrb[0].mxu0 %v2339
      %v2767 = vpop.f32.mrb[0].mxu0
      %v2768 = vadd.f32 %v2638, %v2767
      %v2769 = vpop.f32.mrb[0].mxu0
      %2770 = vdwg.mxu0
      %2771 = vmatprep.subr.mxu0 0.0
      %2772 = vmatpush1.msra.mxu0 %v267
      %2773 = vmatprep.subr.mxu0 0.0
      %2774 = vmatpush1.msra.mxu0 %v268
      %2775 = vmatprep.subr.mxu0 0.0
      %2776 = vmatpush1.msra.mxu0 %v269
      %2777 = vmatprep.subr.mxu0 0.0
      %2778 = vmatpush1.msra.mxu0 %v270
      %2779 = vmatprep.subr.mxu0 0.0
      %2780 = vmatpush1.msra.mxu0 0.0
      %2781 = vmatprep.subr.mxu0 0.0
      %2782 = vmatpush1.msra.mxu0 0.0
      %2783 = vmatprep.subr.mxu0 0.0
      %2784 = vmatpush1.msra.mxu0 0.0
      %2785 = vmatprep.subr.mxu0 0.0
      %2786 = vmatpush1.msra.mxu0 0.0
      %2787 = vmatprep.subr.mxu0 0.0
      %2788 = vmatpush1.msra.mxu0 0.0
      %2789 = vmatprep.subr.mxu0 0.0
      %2790 = vmatpush1.msra.mxu0 0.0
      %2791 = vmatprep.subr.mxu0 0.0
      %2792 = vmatpush1.msra.mxu0 0.0
      %2793 = vmatprep.subr.mxu0 0.0
      %2794 = vmatpush1.msra.mxu0 0.0
      %2795 = vmatprep.subr.mxu0 0.0
      %2796 = vmatpush1.msra.mxu0 0.0
      %2797 = vmatprep.subr.mxu0 0.0
      %2798 = vmatpush1.msra.mxu0 0.0
      %2799 = vmatprep.subr.mxu0 0.0
      %2800 = vmatpush1.msra.mxu0 0.0
      %2801 = vmatprep.subr.mxu0 0.0
      %2802 = vmatpush1.msra.mxu0 0.0
      %2803 = vmatprep.subr.mxu0 0.0
      %2804 = vmatpush1.msra.mxu0 0.0
      %2805 = vmatprep.subr.mxu0 0.0
      %2806 = vmatpush1.msra.mxu0 0.0
      %2807 = vmatprep.subr.mxu0 0.0
      %2808 = vmatpush1.msra.mxu0 0.0
      %2809 = vmatprep.subr.mxu0 0.0
      %2810 = vmatpush1.msra.mxu0 0.0
      %2811 = vmatprep.subr.mxu0 0.0
      %2812 = vmatpush1.msra.mxu0 0.0
      %2813 = vmatprep.subr.mxu0 0.0
      %2814 = vmatpush1.msra.mxu0 0.0
      %2815 = vmatprep.subr.mxu0 0.0
      %2816 = vmatpush1.msra.mxu0 0.0
      %2817 = vmatprep.subr.mxu0 0.0
      %2818 = vmatpush1.msra.mxu0 0.0
      %2819 = vmatprep.subr.mxu0 0.0
      %2820 = vmatpush1.msra.mxu0 0.0
      %2821 = vmatprep.subr.mxu0 0.0
      %2822 = vmatpush1.msra.mxu0 0.0
      %2823 = vmatprep.subr.mxu0 0.0
      %2824 = vmatpush1.msra.mxu0 0.0
      %2825 = vmatprep.subr.mxu0 0.0
      %2826 = vmatpush1.msra.mxu0 0.0
      %2827 = vmatprep.subr.mxu0 0.0
      %2828 = vmatpush1.msra.mxu0 0.0
      %2829 = vmatprep.subr.mxu0 0.0
      %2830 = vmatpush1.msra.mxu0 0.0
      %2831 = vmatprep.subr.mxu0 0.0
      %2832 = vmatpush1.msra.mxu0 0.0
      %2833 = vmatprep.subr.mxu0 0.0
      %2834 = vmatpush1.msra.mxu0 0.0
      %2835 = vmatprep.mubr.f32.mxu0 0.0
      %2836 = vmatmul.mubr.f32.gmra.mrb[0].mxu0 %v2343
      %v2837 = vpop.f32.mrb[0].mxu0
      %v2838 = vadd.f32 %v2708, %v2837
      %v2839 = vpop.f32.mrb[0].mxu0
      %2840 = vmatprep.mubr.f32.mxu0 0.0
      %2841 = vmatmul.mubr.f32.gmra.mrb[0].mxu0 %v2346
      %v2842 = vpop.f32.mrb[0].mxu0
      %v2843 = vadd.f32 %v2713, %v2842
      %v2844 = vpop.f32.mrb[0].mxu0
      %2845 = vmatprep.mubr.f32.mxu0 0.0
      %2846 = vmatmul.mubr.f32.gmra.mrb[0].mxu0 %v2349
      %v2847 = vpop.f32.mrb[0].mxu0
      %v2848 = vadd.f32 %v2718, %v2847
      %v2849 = vpop.f32.mrb[0].mxu0
      %2850 = vmatprep.mubr.f32.mxu0 0.0
      %2851 = vmatmul.mubr.f32.gmra.mrb[0].mxu0 %v2352
      %v2852 = vpop.f32.mrb[0].mxu0
      %v2853 = vadd.f32 %v2723, %v2852
      %v2854 = vpop.f32.mrb[0].mxu0
      %2855 = vmatprep.mubr.f32.mxu0 0.0
      %2856 = vmatmul.mubr.f32.gmra.mrb[0].mxu0 %v2355
      %v2857 = vpop.f32.mrb[0].mxu0
      %v2858 = vadd.f32 %v2728, %v2857
      %v2859 = vpop.f32.mrb[0].mxu0
      %2860 = vmatprep.mubr.f32.mxu0 0.0
      %2861 = vmatmul.mubr.f32.gmra.mrb[0].mxu0 %v2358
      %v2862 = vpop.f32.mrb[0].mxu0
      %v2863 = vadd.f32 %v2733, %v2862
      %v2864 = vpop.f32.mrb[0].mxu0
      %2865 = vmatprep.mubr.f32.mxu0 0.0
      %2866 = vmatmul.mubr.f32.gmra.mrb[0].mxu0 %v2361
      %v2867 = vpop.f32.mrb[0].mxu0
      %v2868 = vadd.f32 %v2738, %v2867
      %v2869 = vpop.f32.mrb[0].mxu0
      %2870 = vmatprep.mubr.f32.mxu0 0.0
      %2871 = vmatmul.mubr.f32.gmra.mrb[0].mxu0 %v2364
      %v2872 = vpop.f32.mrb[0].mxu0
      %v2873 = vadd.f32 %v2743, %v2872
      %v2874 = vpop.f32.mrb[0].mxu0
      %2875 = vmatprep.mubr.f32.mxu0 0.0
      %2876 = vmatmul.mubr.f32.gmra.mrb[0].mxu0 %v2367
      %v2877 = vpop.f32.mrb[0].mxu0
      %v2878 = vadd.f32 %v2748, %v2877
      %v2879 = vpop.f32.mrb[0].mxu0
      %2880 = vmatprep.mubr.f32.mxu0 0.0
      %2881 = vmatmul.mubr.f32.gmra.mrb[0].mxu0 %v2370
      %v2882 = vpop.f32.mrb[0].mxu0
      %v2883 = vadd.f32 %v2753, %v2882
      %v2884 = vpop.f32.mrb[0].mxu0
      %2885 = vmatprep.mubr.f32.mxu0 0.0
      %2886 = vmatmul.mubr.f32.gmra.mrb[0].mxu0 %v2373
      %v2887 = vpop.f32.mrb[0].mxu0
      %v2888 = vadd.f32 %v2758, %v2887
      %v2889 = vpop.f32.mrb[0].mxu0
      %2890 = vmatprep.mubr.f32.mxu0 0.0
      %2891 = vmatmul.mubr.f32.gmra.mrb[0].mxu0 %v2376
      %v2892 = vpop.f32.mrb[0].mxu0
      %v2893 = vadd.f32 %v2763, %v2892
      %v2894 = vpop.f32.mrb[0].mxu0
      %2895 = vmatprep.mubr.f32.mxu0 0.0
      %2896 = vmatmul.mubr.f32.gmra.mrb[0].mxu0 %v2379
      %v2897 = vpop.f32.mrb[0].mxu0
      %v2898 = vadd.f32 %v2768, %v2897
      %v2899 = vpop.f32.mrb[0].mxu0
      %2900 = vdwg.mxu0
      %v2901 = vmax.f32 %v2237, %v2838
      %v2902 = vmax.f32 %v2238, %v2843
      %v2903 = vmax.f32 %v2239, %v2848
      %v2904 = vmax.f32 %v2240, %v2853
      %v2905 = vmax.f32 %v2241, %v2858
      %v2906 = vmax.f32 %v2242, %v2863
      %v2907 = vmax.f32 %v2243, %v2868
      %v2908 = vmax.f32 %v2244, %v2873
      %v2909 = vmax.f32 %v2245, %v2878
      %v2910 = vmax.f32 %v2246, %v2883
      %v2911 = vmax.f32 %v2247, %v2888
      %v2912 = vmax.f32 %v2248, %v2893
      %v2913 = vmax.f32 %v2249, %v2898
      %v2914 = vld [vmem:[%s2] sm:$0x1]
      %v2916 = vlaneseq
      %v2917 = vshrl.u32 %v2916, 7
      %v2918 = vsub.s32 0, %v2917
      %v2919 = vrot.slane %v2914, %v2918
      %v2921 = vadd.f32 %v2901, %v2919
      %v2922 = vadd.f32 %v2902, %v2919
      %v2923 = vadd.f32 %v2903, %v2919
      %v2924 = vadd.f32 %v2904, %v2919
      %v2925 = vadd.f32 %v2905, %v2919
      %v2926 = vadd.f32 %v2906, %v2919
      %v2927 = vadd.f32 %v2907, %v2919
      %v2928 = vadd.f32 %v2908, %v2919
      %v2929 = vadd.f32 %v2909, %v2919
      %v2930 = vadd.f32 %v2910, %v2919
      %v2931 = vadd.f32 %v2911, %v2919
      %v2932 = vadd.f32 %v2912, %v2919
      %v2933 = vadd.f32 %v2913, %v2919
      %v2934 = vmax.f32 %v2921, 0.0
      %v2935 = vmax.f32 %v2922, 0.0
      %v2936 = vmax.f32 %v2923, 0.0
      %v2937 = vmax.f32 %v2924, 0.0
      %v2938 = vmax.f32 %v2925, 0.0
      %v2939 = vmax.f32 %v2926, 0.0
      %v2940 = vmax.f32 %v2927, 0.0
      %v2941 = vmax.f32 %v2928, 0.0
      %v2942 = vmax.f32 %v2929, 0.0
      %v2943 = vmax.f32 %v2930, 0.0
      %v2944 = vmax.f32 %v2931, 0.0
      %v2945 = vmax.f32 %v2932, 0.0
      %v2946 = vmax.f32 %v2933, 0.0
      %vm2947 = vcmask 523264
      %2948 = vst.msk [vmem:[%s170] sm:$0xff] %vm2947, %v2934
      %2949 = vst.msk [vmem:[%s170 + $0x8] sm:$0xff] %vm2947, %v2935
      %2950 = vst.msk [vmem:[%s170 + $0x10] sm:$0xff] %vm2947, %v2936
      %2951 = vst.msk [vmem:[%s170 + $0x18] sm:$0xff] %vm2947, %v2937
      %2952 = vst.msk [vmem:[%s170 + $0x20] sm:$0xff] %vm2947, %v2938
      %2953 = vst.msk [vmem:[%s170 + $0x28] sm:$0xff] %vm2947, %v2939
      %2954 = vst.msk [vmem:[%s170 + $0x30] sm:$0xff] %vm2947, %v2940
      %2955 = vst.msk [vmem:[%s170 + $0x38] sm:$0xff] %vm2947, %v2941
      %2956 = vst.msk [vmem:[%s170 + $0x40] sm:$0xff] %vm2947, %v2942
      %2957 = vst.msk [vmem:[%s170 + $0x48] sm:$0xff] %vm2947, %v2943
      %2958 = vst.msk [vmem:[%s170 + $0x50] sm:$0xff] %vm2947, %v2944
      %2959 = vst.msk [vmem:[%s170 + $0x58] sm:$0xff] %vm2947, %v2945
      %vm2960 = vcmask 519168
      %2961 = vst.msk [vmem:[%s170 + $0x60] sm:$0xf] %vm2960, %v2946
      %p2962 = scmp.lt.s32.totalorder %s14, 1
      %s2963 = scalar_select %p2962, %s14, 1
      %s2964 = smul.addr %s2963, 13
      %s2965 = smul.addr %s2964, 8
      %s2966 = scalar_lea.vmem %s3, %s2965
      // Predicated region
      $region33: #{net_forward.4} parent=31 // pred_check
        %p2967 = pneg %p100
      $region34: #{net_forward.4} parent=31 // pred_check_branch
        %2969 = sbr.rel (%p2967) target = $region36
      $region35: #{net_forward.4} parent=31 // pred_region
        _
      $region36: #{net_forward.4} parent=31 // pred_fallthru
        _
    $region32: #{net_forward.4} parent=5 // pred_fallthru
      _
    %p2970 = scmp.le.s32.totalorder 2, %s9
    // Predicated region
    $region37: #{net_forward.4} parent=5 // pred_check
      %p2971 = pneg %p2970
    $region38: #{net_forward.4} parent=5 // pred_check_branch
      %2973 = sbr.rel (%p2971) target = $region40
    $region39: #{net_forward.4} parent=5 // pred_region
      %s2974 = ssub.s32 %s9, 2
      // Predicated region
      $region41: #{net_forward.4} parent=39 // pred_check
        %p2975 = pneg %p106
      $region42: #{net_forward.4} parent=39 // pred_check_branch
        %2977 = sbr.rel (%p2975) target = $region44
      $region43: #{net_forward.4} parent=39 // pred_region
        %p2978 = scmp.lt.s32.totalorder %s15, 1
        %s2979 = scalar_select %p2978, %s15, 1
        %s2980 = smul.addr %s2979, 13
        %s2981 = smul.addr %s2980, 8
        %s2982 = scalar_lea.vmem %s3, %s2981
      $region44: #{net_forward.4} parent=39 // pred_fallthru
        _
    $region40: #{net_forward.4} parent=5 // pred_fallthru
      _
  $region6: #{net_forward.4} parent=0 // loop_footer
    %s13 = sadd.s32 1, %s9
  $region7: #{net_forward.4} parent=0 // loop_footer_branch
    %8 = sbr.rel target = $region3
  $region8: #{net_forward.4} parent=0 // loop_exit
    _

// kernel: net_forward.5
$region0: #{net_forward.5}
  #allocation0 [shape = 'u32[]', space=smem, size = 0x4, offset = 0x4, fixed_abs, tag = 'smem constant byte address 0x4 - core index']
  #allocation1 [shape = 'u32[144,128]{1,0:T(1,128)}', space=vmem, size = 0x12000, scoped, tag = 'internal scratch']
  %s0 = inlined_call_operand.vmem [shape: f32[2,6400], index: 0, kind: input, shape index: {}]
  %s1 = inlined_call_operand.vmem [shape: f32[6400,128], index: 1, kind: input, shape index: {}]
  %s2 = inlined_call_operand.vmem [shape: f32[1,128], index: 2, kind: input, shape index: {}]
  %s3 = inlined_call_operand.vmem [shape: f32[128,128], index: 3, kind: input, shape index: {}]
  %s4 = inlined_call_operand.vmem [shape: f32[1,128], index: 4, kind: input, shape index: {}]
  %s5 = inlined_call_operand.hbm [shape: f32[2,128], index: 5, kind: output, shape index: {}]
  %s6 = sld [smem:[#allocation0]]
  $region30: #{net_forward.5} parent=0
    _
  %s8 = ssub.s32 1, %s6
  %s9 = scalar_select 0, %s8, %s6
  $region1: #{net_forward.5} parent=0
    #allocation2 [shape = 'u8[1024]{0}', space=vmem, size = 0x400, scoped, tag = 'output window, operand 0, single buffered']
    #allocation3 [shape = 's32[1]{0}', space=sflag, size = 0x4, scoped, tag = 'scoped memory for net_forward.5']
    %10 = vsyncpa [#allocation3], 0
    // Predicated region
    $region2: #{net_forward.5} parent=1 // pred_check
      _
    $region3: #{net_forward.5} parent=1 // pred_check_branch
      %12 = sbr.rel (0) target = $region5
    $region4: #{net_forward.5} parent=1 // pred_region
      _
    $region5: #{net_forward.5} parent=1 // pred_fallthru
      _
    // Predicated region
    $region6: #{net_forward.5} parent=1 // pred_check
      _
    $region7: #{net_forward.5} parent=1 // pred_check_branch
      %14 = sbr.rel (0) target = $region9
    $region8: #{net_forward.5} parent=1 // pred_region
      _
    $region9: #{net_forward.5} parent=1 // pred_fallthru
      _
    // Predicated region
    $region10: #{net_forward.5} parent=1 // pred_check
      _
    $region11: #{net_forward.5} parent=1 // pred_check_branch
      %16 = sbr.rel (0) target = $region13
    $region12: #{net_forward.5} parent=1 // pred_region
      _
    $region13: #{net_forward.5} parent=1 // pred_fallthru
      _
    // Predicated region
    $region14: #{net_forward.5} parent=1 // pred_check
      _
    $region15: #{net_forward.5} parent=1 // pred_check_branch
      %18 = sbr.rel (0) target = $region17
    $region16: #{net_forward.5} parent=1 // pred_region
      _
    $region17: #{net_forward.5} parent=1 // pred_fallthru
      _
    // Predicated region
    $region18: #{net_forward.5} parent=1 // pred_check
      _
    $region19: #{net_forward.5} parent=1 // pred_check_branch
      %20 = sbr.rel (0) target = $region21
    $region20: #{net_forward.5} parent=1 // pred_region
      _
    $region21: #{net_forward.5} parent=1 // pred_fallthru
      _
    %v21 = vld [vmem:[%s0] sm:$0xff]
    %v22 = vld [vmem:[%s0 + $0x8] sm:$0xff]
    %v23 = vld [vmem:[%s0 + $0x10] sm:$0xff]
    %v24 = vld [vmem:[%s0 + $0x18] sm:$0xff]
    %v25 = vld [vmem:[%s0 + $0x20] sm:$0xff]
    %v26 = vld [vmem:[%s0 + $0x28] sm:$0xff]
    %v27 = vld [vmem:[%s0 + $0x30] sm:$0xff]
    %v28 = vld [vmem:[%s0 + $0x38] sm:$0xff]
    %v29 = vld [vmem:[%s0 + $0x40] sm:$0xff]
    %v30 = vld [vmem:[%s0 + $0x48] sm:$0xff]
    %v31 = vld [vmem:[%s0 + $0x50] sm:$0xff]
    %v32 = vld [vmem:[%s0 + $0x58] sm:$0xff]
    %v33 = vld [vmem:[%s0 + $0x60] sm:$0xf]
    %v34 = vld [vmem:[%s1] sm:$0xff]
    %v35 = vld [vmem:[%s1 + $0x8] sm:$0xff]
    %v36 = vld [vmem:[%s1 + $0x10] sm:$0xff]
    %v37 = vld [vmem:[%s1 + $0x18] sm:$0xff]
    %v38 = vld [vmem:[%s1 + $0x20] sm:$0xff]
    %v39 = vld [vmem:[%s1 + $0x28] sm:$0xff]
    %v40 = vld [vmem:[%s1 + $0x30] sm:$0xff]
    %v41 = vld [vmem:[%s1 + $0x38] sm:$0xff]
    %v42 = vld [vmem:[%s1 + $0x40] sm:$0xff]
    %v43 = vld [vmem:[%s1 + $0x48] sm:$0xff]
    %v44 = vld [vmem:[%s1 + $0x50] sm:$0xff]
    %v45 = vld [vmem:[%s1 + $0x58] sm:$0xff]
    %v46 = vld [vmem:[%s1 + $0x60] sm:$0xff]
    %v47 = vld [vmem:[%s1 + $0x68] sm:$0xff]
    %v48 = vld [vmem:[%s1 + $0x70] sm:$0xff]
    %v49 = vld [vmem:[%s1 + $0x78] sm:$0xff]
    %v50 = vld [vmem:[%s1 + $0x80] sm:$0xff]
    %v51 = vld [vmem:[%s1 + $0x88] sm:$0xff]
    %v52 = vld [vmem:[%s1 + $0x90] sm:$0xff]
    %v53 = vld [vmem:[%s1 + $0x98] sm:$0xff]
    %v54 = vld [vmem:[%s1 + $0xa0] sm:$0xff]
    %v55 = vld [vmem:[%s1 + $0xa8] sm:$0xff]
    %v56 = vld [vmem:[%s1 + $0xb0] sm:$0xff]
    %v57 = vld [vmem:[%s1 + $0xb8] sm:$0xff]
    %v58 = vld [vmem:[%s1 + $0xc0] sm:$0xff]
    %v59 = vld [vmem:[%s1 + $0xc8] sm:$0xff]
    %v60 = vld [vmem:[%s1 + $0xd0] sm:$0xff]
    %v61 = vld [vmem:[%s1 + $0xd8] sm:$0xff]
    %v62 = vld [vmem:[%s1 + $0xe0] sm:$0xff]
    %v63 = vld [vmem:[%s1 + $0xe8] sm:$0xff]
    %v64 = vld [vmem:[%s1 + $0xf0] sm:$0xff]
    %v65 = vld [vmem:[%s1 + $0xf8] sm:$0xff]
    %v66 = vld [vmem:[%s1 + $0x100] sm:$0xff]
    %v67 = vld [vmem:[%s1 + $0x108] sm:$0xff]
    %v68 = vld [vmem:[%s1 + $0x110] sm:$0xff]
    %v69 = vld [vmem:[%s1 + $0x118] sm:$0xff]
    %v70 = vld [vmem:[%s1 + $0x120] sm:$0xff]
    %v71 = vld [vmem:[%s1 + $0x128] sm:$0xff]
    %v72 = vld [vmem:[%s1 + $0x130] sm:$0xff]
    %v73 = vld [vmem:[%s1 + $0x138] sm:$0xff]
    %v74 = vld [vmem:[%s1 + $0x140] sm:$0xff]
    %v75 = vld [vmem:[%s1 + $0x148] sm:$0xff]
    %v76 = vld [vmem:[%s1 + $0x150] sm:$0xff]
    %v77 = vld [vmem:[%s1 + $0x158] sm:$0xff]
    %v78 = vld [vmem:[%s1 + $0x160] sm:$0xff]
    %v79 = vld [vmem:[%s1 + $0x168] sm:$0xff]
    %v80 = vld [vmem:[%s1 + $0x170] sm:$0xff]
    %v81 = vld [vmem:[%s1 + $0x178] sm:$0xff]
    %v82 = vld [vmem:[%s1 + $0x180] sm:$0xff]
    %v83 = vld [vmem:[%s1 + $0x188] sm:$0xff]
    %v84 = vld [vmem:[%s1 + $0x190] sm:$0xff]
    %v85 = vld [vmem:[%s1 + $0x198] sm:$0xff]
    %v86 = vld [vmem:[%s1 + $0x1a0] sm:$0xff]
    %v87 = vld [vmem:[%s1 + $0x1a8] sm:$0xff]
    %v88 = vld [vmem:[%s1 + $0x1b0] sm:$0xff]
    %v89 = vld [vmem:[%s1 + $0x1b8] sm:$0xff]
    %v90 = vld [vmem:[%s1 + $0x1c0] sm:$0xff]
    %v91 = vld [vmem:[%s1 + $0x1c8] sm:$0xff]
    %v92 = vld [vmem:[%s1 + $0x1d0] sm:$0xff]
    %v93 = vld [vmem:[%s1 + $0x1d8] sm:$0xff]
    %v94 = vld [vmem:[%s1 + $0x1e0] sm:$0xff]
    %v95 = vld [vmem:[%s1 + $0x1e8] sm:$0xff]
    %v96 = vld [vmem:[%s1 + $0x1f0] sm:$0xff]
    %v97 = vld [vmem:[%s1 + $0x1f8] sm:$0xff]
    %v98 = vld [vmem:[%s1 + $0x200] sm:$0xff]
    %v99 = vld [vmem:[%s1 + $0x208] sm:$0xff]
    %v100 = vld [vmem:[%s1 + $0x210] sm:$0xff]
    %v101 = vld [vmem:[%s1 + $0x218] sm:$0xff]
    %v102 = vld [vmem:[%s1 + $0x220] sm:$0xff]
    %v103 = vld [vmem:[%s1 + $0x228] sm:$0xff]
    %v104 = vld [vmem:[%s1 + $0x230] sm:$0xff]
    %v105 = vld [vmem:[%s1 + $0x238] sm:$0xff]
    %v106 = vld [vmem:[%s1 + $0x240] sm:$0xff]
    %v107 = vld [vmem:[%s1 + $0x248] sm:$0xff]
    %v108 = vld [vmem:[%s1 + $0x250] sm:$0xff]
    %v109 = vld [vmem:[%s1 + $0x258] sm:$0xff]
    %v110 = vld [vmem:[%s1 + $0x260] sm:$0xff]
    %v111 = vld [vmem:[%s1 + $0x268] sm:$0xff]
    %v112 = vld [vmem:[%s1 + $0x270] sm:$0xff]
    %v113 = vld [vmem:[%s1 + $0x278] sm:$0xff]
    %v114 = vld [vmem:[%s1 + $0x280] sm:$0xff]
    %v115 = vld [vmem:[%s1 + $0x288] sm:$0xff]
    %v116 = vld [vmem:[%s1 + $0x290] sm:$0xff]
    %v117 = vld [vmem:[%s1 + $0x298] sm:$0xff]
    %v118 = vld [vmem:[%s1 + $0x2a0] sm:$0xff]
    %v119 = vld [vmem:[%s1 + $0x2a8] sm:$0xff]
    %v120 = vld [vmem:[%s1 + $0x2b0] sm:$0xff]
    %v121 = vld [vmem:[%s1 + $0x2b8] sm:$0xff]
    %v122 = vld [vmem:[%s1 + $0x2c0] sm:$0xff]
    %v123 = vld [vmem:[%s1 + $0x2c8] sm:$0xff]
    %v124 = vld [vmem:[%s1 + $0x2d0] sm:$0xff]
    %v125 = vld [vmem:[%s1 + $0x2d8] sm:$0xff]
    %v126 = vld [vmem:[%s1 + $0x2e0] sm:$0xff]
    %v127 = vld [vmem:[%s1 + $0x2e8] sm:$0xff]
    %v128 = vld [vmem:[%s1 + $0x2f0] sm:$0xff]
    %v129 = vld [vmem:[%s1 + $0x2f8] sm:$0xff]
    %v130 = vld [vmem:[%s1 + $0x300] sm:$0xff]
    %v131 = vld [vmem:[%s1 + $0x308] sm:$0xff]
    %v132 = vld [vmem:[%s1 + $0x310] sm:$0xff]
    %v133 = vld [vmem:[%s1 + $0x318] sm:$0xff]
    %v134 = vld [vmem:[%s1 + $0x320] sm:$0xff]
    %v135 = vld [vmem:[%s1 + $0x328] sm:$0xff]
    %v136 = vld [vmem:[%s1 + $0x330] sm:$0xff]
    %v137 = vld [vmem:[%s1 + $0x338] sm:$0xff]
    %v138 = vld [vmem:[%s1 + $0x340] sm:$0xff]
    %v139 = vld [vmem:[%s1 + $0x348] sm:$0xff]
    %v140 = vld [vmem:[%s1 + $0x350] sm:$0xff]
    %v141 = vld [vmem:[%s1 + $0x358] sm:$0xff]
    %v142 = vld [vmem:[%s1 + $0x360] sm:$0xff]
    %v143 = vld [vmem:[%s1 + $0x368] sm:$0xff]
    %v144 = vld [vmem:[%s1 + $0x370] sm:$0xff]
    %v145 = vld [vmem:[%s1 + $0x378] sm:$0xff]
    %v146 = vld [vmem:[%s1 + $0x380] sm:$0xff]
    %v147 = vld [vmem:[%s1 + $0x388] sm:$0xff]
    %v148 = vld [vmem:[%s1 + $0x390] sm:$0xff]
    %v149 = vld [vmem:[%s1 + $0x398] sm:$0xff]
    %v150 = vld [vmem:[%s1 + $0x3a0] sm:$0xff]
    %v151 = vld [vmem:[%s1 + $0x3a8] sm:$0xff]
    %v152 = vld [vmem:[%s1 + $0x3b0] sm:$0xff]
    %v153 = vld [vmem:[%s1 + $0x3b8] sm:$0xff]
    %v154 = vld [vmem:[%s1 + $0x3c0] sm:$0xff]
    %v155 = vld [vmem:[%s1 + $0x3c8] sm:$0xff]
    %v156 = vld [vmem:[%s1 + $0x3d0] sm:$0xff]
    %v157 = vld [vmem:[%s1 + $0x3d8] sm:$0xff]
    %v158 = vld [vmem:[%s1 + $0x3e0] sm:$0xff]
    %v159 = vld [vmem:[%s1 + $0x3e8] sm:$0xff]
    %v160 = vld [vmem:[%s1 + $0x3f0] sm:$0xff]
    %v161 = vld [vmem:[%s1 + $0x3f8] sm:$0xff]
    %v162 = vld [vmem:[%s1 + $0x400] sm:$0xff]
    %v163 = vld [vmem:[%s1 + $0x408] sm:$0xff]
    %v164 = vld [vmem:[%s1 + $0x410] sm:$0xff]
    %v165 = vld [vmem:[%s1 + $0x418] sm:$0xff]
    %v166 = vld [vmem:[%s1 + $0x420] sm:$0xff]
    %v167 = vld [vmem:[%s1 + $0x428] sm:$0xff]
    %v168 = vld [vmem:[%s1 + $0x430] sm:$0xff]
    %v169 = vld [vmem:[%s1 + $0x438] sm:$0xff]
    %v170 = vld [vmem:[%s1 + $0x440] sm:$0xff]
    %v171 = vld [vmem:[%s1 + $0x448] sm:$0xff]
    %v172 = vld [vmem:[%s1 + $0x450] sm:$0xff]
    %v173 = vld [vmem:[%s1 + $0x458] sm:$0xff]
    %v174 = vld [vmem:[%s1 + $0x460] sm:$0xff]
    %v175 = vld [vmem:[%s1 + $0x468] sm:$0xff]
    %v176 = vld [vmem:[%s1 + $0x470] sm:$0xff]
    %v177 = vld [vmem:[%s1 + $0x478] sm:$0xff]
    %v178 = vld [vmem:[%s1 + $0x480] sm:$0xff]
    %v179 = vld [vmem:[%s1 + $0x488] sm:$0xff]
    %v180 = vld [vmem:[%s1 + $0x490] sm:$0xff]
    %v181 = vld [vmem:[%s1 + $0x498] sm:$0xff]
    %v182 = vld [vmem:[%s1 + $0x4a0] sm:$0xff]
    %v183 = vld [vmem:[%s1 + $0x4a8] sm:$0xff]
    %v184 = vld [vmem:[%s1 + $0x4b0] sm:$0xff]
    %v185 = vld [vmem:[%s1 + $0x4b8] sm:$0xff]
    %v186 = vld [vmem:[%s1 + $0x4c0] sm:$0xff]
    %v187 = vld [vmem:[%s1 + $0x4c8] sm:$0xff]
    %v188 = vld [vmem:[%s1 + $0x4d0] sm:$0xff]
    %v189 = vld [vmem:[%s1 + $0x4d8] sm:$0xff]
    %v190 = vld [vmem:[%s1 + $0x4e0] sm:$0xff]
    %v191 = vld [vmem:[%s1 + $0x4e8] sm:$0xff]
    %v192 = vld [vmem:[%s1 + $0x4f0] sm:$0xff]
    %v193 = vld [vmem:[%s1 + $0x4f8] sm:$0xff]
    %v194 = vld [vmem:[%s1 + $0x500] sm:$0xff]
    %v195 = vld [vmem:[%s1 + $0x508] sm:$0xff]
    %v196 = vld [vmem:[%s1 + $0x510] sm:$0xff]
    %v197 = vld [vmem:[%s1 + $0x518] sm:$0xff]
    %v198 = vld [vmem:[%s1 + $0x520] sm:$0xff]
    %v199 = vld [vmem:[%s1 + $0x528] sm:$0xff]
    %v200 = vld [vmem:[%s1 + $0x530] sm:$0xff]
    %v201 = vld [vmem:[%s1 + $0x538] sm:$0xff]
    %v202 = vld [vmem:[%s1 + $0x540] sm:$0xff]
    %v203 = vld [vmem:[%s1 + $0x548] sm:$0xff]
    %v204 = vld [vmem:[%s1 + $0x550] sm:$0xff]
    %v205 = vld [vmem:[%s1 + $0x558] sm:$0xff]
    %v206 = vld [vmem:[%s1 + $0x560] sm:$0xff]
    %v207 = vld [vmem:[%s1 + $0x568] sm:$0xff]
    %v208 = vld [vmem:[%s1 + $0x570] sm:$0xff]
    %v209 = vld [vmem:[%s1 + $0x578] sm:$0xff]
    %v210 = vld [vmem:[%s1 + $0x580] sm:$0xff]
    %v211 = vld [vmem:[%s1 + $0x588] sm:$0xff]
    %v212 = vld [vmem:[%s1 + $0x590] sm:$0xff]
    %v213 = vld [vmem:[%s1 + $0x598] sm:$0xff]
    %v214 = vld [vmem:[%s1 + $0x5a0] sm:$0xff]
    %v215 = vld [vmem:[%s1 + $0x5a8] sm:$0xff]
    %v216 = vld [vmem:[%s1 + $0x5b0] sm:$0xff]
    %v217 = vld [vmem:[%s1 + $0x5b8] sm:$0xff]
    %v218 = vld [vmem:[%s1 + $0x5c0] sm:$0xff]
    %v219 = vld [vmem:[%s1 + $0x5c8] sm:$0xff]
    %v220 = vld [vmem:[%s1 + $0x5d0] sm:$0xff]
    %v221 = vld [vmem:[%s1 + $0x5d8] sm:$0xff]
    %v222 = vld [vmem:[%s1 + $0x5e0] sm:$0xff]
    %v223 = vld [vmem:[%s1 + $0x5e8] sm:$0xff]
    %v224 = vld [vmem:[%s1 + $0x5f0] sm:$0xff]
    %v225 = vld [vmem:[%s1 + $0x5f8] sm:$0xff]
    %v226 = vld [vmem:[%s1 + $0x600] sm:$0xff]
    %v227 = vld [vmem:[%s1 + $0x608] sm:$0xff]
    %v228 = vld [vmem:[%s1 + $0x610] sm:$0xff]
    %v229 = vld [vmem:[%s1 + $0x618] sm:$0xff]
    %v230 = vld [vmem:[%s1 + $0x620] sm:$0xff]
    %v231 = vld [vmem:[%s1 + $0x628] sm:$0xff]
    %v232 = vld [vmem:[%s1 + $0x630] sm:$0xff]
    %v233 = vld [vmem:[%s1 + $0x638] sm:$0xff]
    %v234 = vld [vmem:[%s1 + $0x640] sm:$0xff]
    %v235 = vld [vmem:[%s1 + $0x648] sm:$0xff]
    %v236 = vld [vmem:[%s1 + $0x650] sm:$0xff]
    %v237 = vld [vmem:[%s1 + $0x658] sm:$0xff]
    %v238 = vld [vmem:[%s1 + $0x660] sm:$0xff]
    %v239 = vld [vmem:[%s1 + $0x668] sm:$0xff]
    %v240 = vld [vmem:[%s1 + $0x670] sm:$0xff]
    %v241 = vld [vmem:[%s1 + $0x678] sm:$0xff]
    %v242 = vld [vmem:[%s1 + $0x680] sm:$0xff]
    %v243 = vld [vmem:[%s1 + $0x688] sm:$0xff]
    %v244 = vld [vmem:[%s1 + $0x690] sm:$0xff]
    %v245 = vld [vmem:[%s1 + $0x698] sm:$0xff]
    %v246 = vld [vmem:[%s1 + $0x6a0] sm:$0xff]
    %v247 = vld [vmem:[%s1 + $0x6a8] sm:$0xff]
    %v248 = vld [vmem:[%s1 + $0x6b0] sm:$0xff]
    %v249 = vld [vmem:[%s1 + $0x6b8] sm:$0xff]
    %v250 = vld [vmem:[%s1 + $0x6c0] sm:$0xff]
    %v251 = vld [vmem:[%s1 + $0x6c8] sm:$0xff]
    %v252 = vld [vmem:[%s1 + $0x6d0] sm:$0xff]
    %v253 = vld [vmem:[%s1 + $0x6d8] sm:$0xff]
    %v254 = vld [vmem:[%s1 + $0x6e0] sm:$0xff]
    %v255 = vld [vmem:[%s1 + $0x6e8] sm:$0xff]
    %v256 = vld [vmem:[%s1 + $0x6f0] sm:$0xff]
    %v257 = vld [vmem:[%s1 + $0x6f8] sm:$0xff]
    %v258 = vld [vmem:[%s1 + $0x700] sm:$0xff]
    %v259 = vld [vmem:[%s1 + $0x708] sm:$0xff]
    %v260 = vld [vmem:[%s1 + $0x710] sm:$0xff]
    %v261 = vld [vmem:[%s1 + $0x718] sm:$0xff]
    %v262 = vld [vmem:[%s1 + $0x720] sm:$0xff]
    %v263 = vld [vmem:[%s1 + $0x728] sm:$0xff]
    %v264 = vld [vmem:[%s1 + $0x730] sm:$0xff]
    %v265 = vld [vmem:[%s1 + $0x738] sm:$0xff]
    %v266 = vld [vmem:[%s1 + $0x740] sm:$0xff]
    %v267 = vld [vmem:[%s1 + $0x748] sm:$0xff]
    %v268 = vld [vmem:[%s1 + $0x750] sm:$0xff]
    %v269 = vld [vmem:[%s1 + $0x758] sm:$0xff]
    %v270 = vld [vmem:[%s1 + $0x760] sm:$0xff]
    %v271 = vld [vmem:[%s1 + $0x768] sm:$0xff]
    %v272 = vld [vmem:[%s1 + $0x770] sm:$0xff]
    %v273 = vld [vmem:[%s1 + $0x778] sm:$0xff]
    %v274 = vld [vmem:[%s1 + $0x780] sm:$0xff]
    %v275 = vld [vmem:[%s1 + $0x788] sm:$0xff]
    %v276 = vld [vmem:[%s1 + $0x790] sm:$0xff]
    %v277 = vld [vmem:[%s1 + $0x798] sm:$0xff]
    %v278 = vld [vmem:[%s1 + $0x7a0] sm:$0xff]
    %v279 = vld [vmem:[%s1 + $0x7a8] sm:$0xff]
    %v280 = vld [vmem:[%s1 + $0x7b0] sm:$0xff]
    %v281 = vld [vmem:[%s1 + $0x7b8] sm:$0xff]
    %v282 = vld [vmem:[%s1 + $0x7c0] sm:$0xff]
    %v283 = vld [vmem:[%s1 + $0x7c8] sm:$0xff]
    %v284 = vld [vmem:[%s1 + $0x7d0] sm:$0xff]
    %v285 = vld [vmem:[%s1 + $0x7d8] sm:$0xff]
    %v286 = vld [vmem:[%s1 + $0x7e0] sm:$0xff]
    %v287 = vld [vmem:[%s1 + $0x7e8] sm:$0xff]
    %v288 = vld [vmem:[%s1 + $0x7f0] sm:$0xff]
    %v289 = vld [vmem:[%s1 + $0x7f8] sm:$0xff]
    %v290 = vld [vmem:[%s1 + $0x800] sm:$0xff]
    %v291 = vld [vmem:[%s1 + $0x808] sm:$0xff]
    %v292 = vld [vmem:[%s1 + $0x810] sm:$0xff]
    %v293 = vld [vmem:[%s1 + $0x818] sm:$0xff]
    %v294 = vld [vmem:[%s1 + $0x820] sm:$0xff]
    %v295 = vld [vmem:[%s1 + $0x828] sm:$0xff]
    %v296 = vld [vmem:[%s1 + $0x830] sm:$0xff]
    %v297 = vld [vmem:[%s1 + $0x838] sm:$0xff]
    %v298 = vld [vmem:[%s1 + $0x840] sm:$0xff]
    %v299 = vld [vmem:[%s1 + $0x848] sm:$0xff]
    %v300 = vld [vmem:[%s1 + $0x850] sm:$0xff]
    %v301 = vld [vmem:[%s1 + $0x858] sm:$0xff]
    %v302 = vld [vmem:[%s1 + $0x860] sm:$0xff]
    %v303 = vld [vmem:[%s1 + $0x868] sm:$0xff]
    %v304 = vld [vmem:[%s1 + $0x870] sm:$0xff]
    %v305 = vld [vmem:[%s1 + $0x878] sm:$0xff]
    %v306 = vld [vmem:[%s1 + $0x880] sm:$0xff]
    %v307 = vld [vmem:[%s1 + $0x888] sm:$0xff]
    %v308 = vld [vmem:[%s1 + $0x890] sm:$0xff]
    %v309 = vld [vmem:[%s1 + $0x898] sm:$0xff]
    %v310 = vld [vmem:[%s1 + $0x8a0] sm:$0xff]
    %v311 = vld [vmem:[%s1 + $0x8a8] sm:$0xff]
    %v312 = vld [vmem:[%s1 + $0x8b0] sm:$0xff]
    %v313 = vld [vmem:[%s1 + $0x8b8] sm:$0xff]
    %v314 = vld [vmem:[%s1 + $0x8c0] sm:$0xff]
    %v315 = vld [vmem:[%s1 + $0x8c8] sm:$0xff]
    %v316 = vld [vmem:[%s1 + $0x8d0] sm:$0xff]
    %v317 = vld [vmem:[%s1 + $0x8d8] sm:$0xff]
    %v318 = vld [vmem:[%s1 + $0x8e0] sm:$0xff]
    %v319 = vld [vmem:[%s1 + $0x8e8] sm:$0xff]
    %v320 = vld [vmem:[%s1 + $0x8f0] sm:$0xff]
    %v321 = vld [vmem:[%s1 + $0x8f8] sm:$0xff]
    %v322 = vld [vmem:[%s1 + $0x900] sm:$0xff]
    %v323 = vld [vmem:[%s1 + $0x908] sm:$0xff]
    %v324 = vld [vmem:[%s1 + $0x910] sm:$0xff]
    %v325 = vld [vmem:[%s1 + $0x918] sm:$0xff]
    %v326 = vld [vmem:[%s1 + $0x920] sm:$0xff]
    %v327 = vld [vmem:[%s1 + $0x928] sm:$0xff]
    %v328 = vld [vmem:[%s1 + $0x930] sm:$0xff]
    %v329 = vld [vmem:[%s1 + $0x938] sm:$0xff]
    %v330 = vld [vmem:[%s1 + $0x940] sm:$0xff]
    %v331 = vld [vmem:[%s1 + $0x948] sm:$0xff]
    %v332 = vld [vmem:[%s1 + $0x950] sm:$0xff]
    %v333 = vld [vmem:[%s1 + $0x958] sm:$0xff]
    %v334 = vld [vmem:[%s1 + $0x960] sm:$0xff]
    %v335 = vld [vmem:[%s1 + $0x968] sm:$0xff]
    %v336 = vld [vmem:[%s1 + $0x970] sm:$0xff]
    %v337 = vld [vmem:[%s1 + $0x978] sm:$0xff]
    %v338 = vld [vmem:[%s1 + $0x980] sm:$0xff]
    %v339 = vld [vmem:[%s1 + $0x988] sm:$0xff]
    %v340 = vld [vmem:[%s1 + $0x990] sm:$0xff]
    %v341 = vld [vmem:[%s1 + $0x998] sm:$0xff]
    %v342 = vld [vmem:[%s1 + $0x9a0] sm:$0xff]
    %v343 = vld [vmem:[%s1 + $0x9a8] sm:$0xff]
    %v344 = vld [vmem:[%s1 + $0x9b0] sm:$0xff]
    %v345 = vld [vmem:[%s1 + $0x9b8] sm:$0xff]
    %v346 = vld [vmem:[%s1 + $0x9c0] sm:$0xff]
    %v347 = vld [vmem:[%s1 + $0x9c8] sm:$0xff]
    %v348 = vld [vmem:[%s1 + $0x9d0] sm:$0xff]
    %v349 = vld [vmem:[%s1 + $0x9d8] sm:$0xff]
    %v350 = vld [vmem:[%s1 + $0x9e0] sm:$0xff]
    %v351 = vld [vmem:[%s1 + $0x9e8] sm:$0xff]
    %v352 = vld [vmem:[%s1 + $0x9f0] sm:$0xff]
    %v353 = vld [vmem:[%s1 + $0x9f8] sm:$0xff]
    %v354 = vld [vmem:[%s1 + $0xa00] sm:$0xff]
    %v355 = vld [vmem:[%s1 + $0xa08] sm:$0xff]
    %v356 = vld [vmem:[%s1 + $0xa10] sm:$0xff]
    %v357 = vld [vmem:[%s1 + $0xa18] sm:$0xff]
    %v358 = vld [vmem:[%s1 + $0xa20] sm:$0xff]
    %v359 = vld [vmem:[%s1 + $0xa28] sm:$0xff]
    %v360 = vld [vmem:[%s1 + $0xa30] sm:$0xff]
    %v361 = vld [vmem:[%s1 + $0xa38] sm:$0xff]
    %v362 = vld [vmem:[%s1 + $0xa40] sm:$0xff]
    %v363 = vld [vmem:[%s1 + $0xa48] sm:$0xff]
    %v364 = vld [vmem:[%s1 + $0xa50] sm:$0xff]
    %v365 = vld [vmem:[%s1 + $0xa58] sm:$0xff]
    %v366 = vld [vmem:[%s1 + $0xa60] sm:$0xff]
    %v367 = vld [vmem:[%s1 + $0xa68] sm:$0xff]
    %v368 = vld [vmem:[%s1 + $0xa70] sm:$0xff]
    %v369 = vld [vmem:[%s1 + $0xa78] sm:$0xff]
    %v370 = vld [vmem:[%s1 + $0xa80] sm:$0xff]
    %v371 = vld [vmem:[%s1 + $0xa88] sm:$0xff]
    %v372 = vld [vmem:[%s1 + $0xa90] sm:$0xff]
    %v373 = vld [vmem:[%s1 + $0xa98] sm:$0xff]
    %v374 = vld [vmem:[%s1 + $0xaa0] sm:$0xff]
    %v375 = vld [vmem:[%s1 + $0xaa8] sm:$0xff]
    %v376 = vld [vmem:[%s1 + $0xab0] sm:$0xff]
    %v377 = vld [vmem:[%s1 + $0xab8] sm:$0xff]
    %v378 = vld [vmem:[%s1 + $0xac0] sm:$0xff]
    %v379 = vld [vmem:[%s1 + $0xac8] sm:$0xff]
    %v380 = vld [vmem:[%s1 + $0xad0] sm:$0xff]
    %v381 = vld [vmem:[%s1 + $0xad8] sm:$0xff]
    %v382 = vld [vmem:[%s1 + $0xae0] sm:$0xff]
    %v383 = vld [vmem:[%s1 + $0xae8] sm:$0xff]
    %v384 = vld [vmem:[%s1 + $0xaf0] sm:$0xff]
    %v385 = vld [vmem:[%s1 + $0xaf8] sm:$0xff]
    %v386 = vld [vmem:[%s1 + $0xb00] sm:$0xff]
    %v387 = vld [vmem:[%s1 + $0xb08] sm:$0xff]
    %v388 = vld [vmem:[%s1 + $0xb10] sm:$0xff]
    %v389 = vld [vmem:[%s1 + $0xb18] sm:$0xff]
    %v390 = vld [vmem:[%s1 + $0xb20] sm:$0xff]
    %v391 = vld [vmem:[%s1 + $0xb28] sm:$0xff]
    %v392 = vld [vmem:[%s1 + $0xb30] sm:$0xff]
    %v393 = vld [vmem:[%s1 + $0xb38] sm:$0xff]
    %v394 = vld [vmem:[%s1 + $0xb40] sm:$0xff]
    %v395 = vld [vmem:[%s1 + $0xb48] sm:$0xff]
    %v396 = vld [vmem:[%s1 + $0xb50] sm:$0xff]
    %v397 = vld [vmem:[%s1 + $0xb58] sm:$0xff]
    %v398 = vld [vmem:[%s1 + $0xb60] sm:$0xff]
    %v399 = vld [vmem:[%s1 + $0xb68] sm:$0xff]
    %v400 = vld [vmem:[%s1 + $0xb70] sm:$0xff]
    %v401 = vld [vmem:[%s1 + $0xb78] sm:$0xff]
    %v402 = vld [vmem:[%s1 + $0xb80] sm:$0xff]
    %v403 = vld [vmem:[%s1 + $0xb88] sm:$0xff]
    %v404 = vld [vmem:[%s1 + $0xb90] sm:$0xff]
    %v405 = vld [vmem:[%s1 + $0xb98] sm:$0xff]
    %v406 = vld [vmem:[%s1 + $0xba0] sm:$0xff]
    %v407 = vld [vmem:[%s1 + $0xba8] sm:$0xff]
    %v408 = vld [vmem:[%s1 + $0xbb0] sm:$0xff]
    %v409 = vld [vmem:[%s1 + $0xbb8] sm:$0xff]
    %v410 = vld [vmem:[%s1 + $0xbc0] sm:$0xff]
    %v411 = vld [vmem:[%s1 + $0xbc8] sm:$0xff]
    %v412 = vld [vmem:[%s1 + $0xbd0] sm:$0xff]
    %v413 = vld [vmem:[%s1 + $0xbd8] sm:$0xff]
    %v414 = vld [vmem:[%s1 + $0xbe0] sm:$0xff]
    %v415 = vld [vmem:[%s1 + $0xbe8] sm:$0xff]
    %v416 = vld [vmem:[%s1 + $0xbf0] sm:$0xff]
    %v417 = vld [vmem:[%s1 + $0xbf8] sm:$0xff]
    %v418 = vld [vmem:[%s1 + $0xc00] sm:$0xff]
    %v419 = vld [vmem:[%s1 + $0xc08] sm:$0xff]
    %v420 = vld [vmem:[%s1 + $0xc10] sm:$0xff]
    %v421 = vld [vmem:[%s1 + $0xc18] sm:$0xff]
    %v422 = vld [vmem:[%s1 + $0xc20] sm:$0xff]
    %v423 = vld [vmem:[%s1 + $0xc28] sm:$0xff]
    %v424 = vld [vmem:[%s1 + $0xc30] sm:$0xff]
    %v425 = vld [vmem:[%s1 + $0xc38] sm:$0xff]
    %v426 = vld [vmem:[%s1 + $0xc40] sm:$0xff]
    %v427 = vld [vmem:[%s1 + $0xc48] sm:$0xff]
    %v428 = vld [vmem:[%s1 + $0xc50] sm:$0xff]
    %v429 = vld [vmem:[%s1 + $0xc58] sm:$0xff]
    %v430 = vld [vmem:[%s1 + $0xc60] sm:$0xff]
    %v431 = vld [vmem:[%s1 + $0xc68] sm:$0xff]
    %v432 = vld [vmem:[%s1 + $0xc70] sm:$0xff]
    %v433 = vld [vmem:[%s1 + $0xc78] sm:$0xff]
    %v434 = vld [vmem:[%s1 + $0xc80] sm:$0xff]
    %v435 = vld [vmem:[%s1 + $0xc88] sm:$0xff]
    %v436 = vld [vmem:[%s1 + $0xc90] sm:$0xff]
    %v437 = vld [vmem:[%s1 + $0xc98] sm:$0xff]
    %v438 = vld [vmem:[%s1 + $0xca0] sm:$0xff]
    %v439 = vld [vmem:[%s1 + $0xca8] sm:$0xff]
    %v440 = vld [vmem:[%s1 + $0xcb0] sm:$0xff]
    %v441 = vld [vmem:[%s1 + $0xcb8] sm:$0xff]
    %v442 = vld [vmem:[%s1 + $0xcc0] sm:$0xff]
    %v443 = vld [vmem:[%s1 + $0xcc8] sm:$0xff]
    %v444 = vld [vmem:[%s1 + $0xcd0] sm:$0xff]
    %v445 = vld [vmem:[%s1 + $0xcd8] sm:$0xff]
    %v446 = vld [vmem:[%s1 + $0xce0] sm:$0xff]
    %v447 = vld [vmem:[%s1 + $0xce8] sm:$0xff]
    %v448 = vld [vmem:[%s1 + $0xcf0] sm:$0xff]
    %v449 = vld [vmem:[%s1 + $0xcf8] sm:$0xff]
    %v450 = vld [vmem:[%s1 + $0xd00] sm:$0xff]
    %v451 = vld [vmem:[%s1 + $0xd08] sm:$0xff]
    %v452 = vld [vmem:[%s1 + $0xd10] sm:$0xff]
    %v453 = vld [vmem:[%s1 + $0xd18] sm:$0xff]
    %v454 = vld [vmem:[%s1 + $0xd20] sm:$0xff]
    %v455 = vld [vmem:[%s1 + $0xd28] sm:$0xff]
    %v456 = vld [vmem:[%s1 + $0xd30] sm:$0xff]
    %v457 = vld [vmem:[%s1 + $0xd38] sm:$0xff]
    %v458 = vld [vmem:[%s1 + $0xd40] sm:$0xff]
    %v459 = vld [vmem:[%s1 + $0xd48] sm:$0xff]
    %v460 = vld [vmem:[%s1 + $0xd50] sm:$0xff]
    %v461 = vld [vmem:[%s1 + $0xd58] sm:$0xff]
    %v462 = vld [vmem:[%s1 + $0xd60] sm:$0xff]
    %v463 = vld [vmem:[%s1 + $0xd68] sm:$0xff]
    %v464 = vld [vmem:[%s1 + $0xd70] sm:$0xff]
    %v465 = vld [vmem:[%s1 + $0xd78] sm:$0xff]
    %v466 = vld [vmem:[%s1 + $0xd80] sm:$0xff]
    %v467 = vld [vmem:[%s1 + $0xd88] sm:$0xff]
    %v468 = vld [vmem:[%s1 + $0xd90] sm:$0xff]
    %v469 = vld [vmem:[%s1 + $0xd98] sm:$0xff]
    %v470 = vld [vmem:[%s1 + $0xda0] sm:$0xff]
    %v471 = vld [vmem:[%s1 + $0xda8] sm:$0xff]
    %v472 = vld [vmem:[%s1 + $0xdb0] sm:$0xff]
    %v473 = vld [vmem:[%s1 + $0xdb8] sm:$0xff]
    %v474 = vld [vmem:[%s1 + $0xdc0] sm:$0xff]
    %v475 = vld [vmem:[%s1 + $0xdc8] sm:$0xff]
    %v476 = vld [vmem:[%s1 + $0xdd0] sm:$0xff]
    %v477 = vld [vmem:[%s1 + $0xdd8] sm:$0xff]
    %v478 = vld [vmem:[%s1 + $0xde0] sm:$0xff]
    %v479 = vld [vmem:[%s1 + $0xde8] sm:$0xff]
    %v480 = vld [vmem:[%s1 + $0xdf0] sm:$0xff]
    %v481 = vld [vmem:[%s1 + $0xdf8] sm:$0xff]
    %v482 = vld [vmem:[%s1 + $0xe00] sm:$0xff]
    %v483 = vld [vmem:[%s1 + $0xe08] sm:$0xff]
    %v484 = vld [vmem:[%s1 + $0xe10] sm:$0xff]
    %v485 = vld [vmem:[%s1 + $0xe18] sm:$0xff]
    %v486 = vld [vmem:[%s1 + $0xe20] sm:$0xff]
    %v487 = vld [vmem:[%s1 + $0xe28] sm:$0xff]
    %v488 = vld [vmem:[%s1 + $0xe30] sm:$0xff]
    %v489 = vld [vmem:[%s1 + $0xe38] sm:$0xff]
    %v490 = vld [vmem:[%s1 + $0xe40] sm:$0xff]
    %v491 = vld [vmem:[%s1 + $0xe48] sm:$0xff]
    %v492 = vld [vmem:[%s1 + $0xe50] sm:$0xff]
    %v493 = vld [vmem:[%s1 + $0xe58] sm:$0xff]
    %v494 = vld [vmem:[%s1 + $0xe60] sm:$0xff]
    %v495 = vld [vmem:[%s1 + $0xe68] sm:$0xff]
    %v496 = vld [vmem:[%s1 + $0xe70] sm:$0xff]
    %v497 = vld [vmem:[%s1 + $0xe78] sm:$0xff]
    %v498 = vld [vmem:[%s1 + $0xe80] sm:$0xff]
    %v499 = vld [vmem:[%s1 + $0xe88] sm:$0xff]
    %v500 = vld [vmem:[%s1 + $0xe90] sm:$0xff]
    %v501 = vld [vmem:[%s1 + $0xe98] sm:$0xff]
    %v502 = vld [vmem:[%s1 + $0xea0] sm:$0xff]
    %v503 = vld [vmem:[%s1 + $0xea8] sm:$0xff]
    %v504 = vld [vmem:[%s1 + $0xeb0] sm:$0xff]
    %v505 = vld [vmem:[%s1 + $0xeb8] sm:$0xff]
    %v506 = vld [vmem:[%s1 + $0xec0] sm:$0xff]
    %v507 = vld [vmem:[%s1 + $0xec8] sm:$0xff]
    %v508 = vld [vmem:[%s1 + $0xed0] sm:$0xff]
    %v509 = vld [vmem:[%s1 + $0xed8] sm:$0xff]
    %v510 = vld [vmem:[%s1 + $0xee0] sm:$0xff]
    %v511 = vld [vmem:[%s1 + $0xee8] sm:$0xff]
    %v512 = vld [vmem:[%s1 + $0xef0] sm:$0xff]
    %v513 = vld [vmem:[%s1 + $0xef8] sm:$0xff]
    %v514 = vld [vmem:[%s1 + $0xf00] sm:$0xff]
    %v515 = vld [vmem:[%s1 + $0xf08] sm:$0xff]
    %v516 = vld [vmem:[%s1 + $0xf10] sm:$0xff]
    %v517 = vld [vmem:[%s1 + $0xf18] sm:$0xff]
    %v518 = vld [vmem:[%s1 + $0xf20] sm:$0xff]
    %v519 = vld [vmem:[%s1 + $0xf28] sm:$0xff]
    %v520 = vld [vmem:[%s1 + $0xf30] sm:$0xff]
    %v521 = vld [vmem:[%s1 + $0xf38] sm:$0xff]
    %v522 = vld [vmem:[%s1 + $0xf40] sm:$0xff]
    %v523 = vld [vmem:[%s1 + $0xf48] sm:$0xff]
    %v524 = vld [vmem:[%s1 + $0xf50] sm:$0xff]
    %v525 = vld [vmem:[%s1 + $0xf58] sm:$0xff]
    %v526 = vld [vmem:[%s1 + $0xf60] sm:$0xff]
    %v527 = vld [vmem:[%s1 + $0xf68] sm:$0xff]
    %v528 = vld [vmem:[%s1 + $0xf70] sm:$0xff]
    %v529 = vld [vmem:[%s1 + $0xf78] sm:$0xff]
    %v530 = vld [vmem:[%s1 + $0xf80] sm:$0xff]
    %v531 = vld [vmem:[%s1 + $0xf88] sm:$0xff]
    %v532 = vld [vmem:[%s1 + $0xf90] sm:$0xff]
    %v533 = vld [vmem:[%s1 + $0xf98] sm:$0xff]
    %v534 = vld [vmem:[%s1 + $0xfa0] sm:$0xff]
    %v535 = vld [vmem:[%s1 + $0xfa8] sm:$0xff]
    %v536 = vld [vmem:[%s1 + $0xfb0] sm:$0xff]
    %v537 = vld [vmem:[%s1 + $0xfb8] sm:$0xff]
    %v538 = vld [vmem:[%s1 + $0xfc0] sm:$0xff]
    %v539 = vld [vmem:[%s1 + $0xfc8] sm:$0xff]
    %v540 = vld [vmem:[%s1 + $0xfd0] sm:$0xff]
    %v541 = vld [vmem:[%s1 + $0xfd8] sm:$0xff]
    %v542 = vld [vmem:[%s1 + $0xfe0] sm:$0xff]
    %v543 = vld [vmem:[%s1 + $0xfe8] sm:$0xff]
    %v544 = vld [vmem:[%s1 + $0xff0] sm:$0xff]
    %v545 = vld [vmem:[%s1 + $0xff8] sm:$0xff]
    %v546 = vld [vmem:[%s1 + $0x1000] sm:$0xff]
    %v547 = vld [vmem:[%s1 + $0x1008] sm:$0xff]
    %v548 = vld [vmem:[%s1 + $0x1010] sm:$0xff]
    %v549 = vld [vmem:[%s1 + $0x1018] sm:$0xff]
    %v550 = vld [vmem:[%s1 + $0x1020] sm:$0xff]
    %v551 = vld [vmem:[%s1 + $0x1028] sm:$0xff]
    %v552 = vld [vmem:[%s1 + $0x1030] sm:$0xff]
    %v553 = vld [vmem:[%s1 + $0x1038] sm:$0xff]
    %v554 = vld [vmem:[%s1 + $0x1040] sm:$0xff]
    %v555 = vld [vmem:[%s1 + $0x1048] sm:$0xff]
    %v556 = vld [vmem:[%s1 + $0x1050] sm:$0xff]
    %v557 = vld [vmem:[%s1 + $0x1058] sm:$0xff]
    %v558 = vld [vmem:[%s1 + $0x1060] sm:$0xff]
    %v559 = vld [vmem:[%s1 + $0x1068] sm:$0xff]
    %v560 = vld [vmem:[%s1 + $0x1070] sm:$0xff]
    %v561 = vld [vmem:[%s1 + $0x1078] sm:$0xff]
    %v562 = vld [vmem:[%s1 + $0x1080] sm:$0xff]
    %v563 = vld [vmem:[%s1 + $0x1088] sm:$0xff]
    %v564 = vld [vmem:[%s1 + $0x1090] sm:$0xff]
    %v565 = vld [vmem:[%s1 + $0x1098] sm:$0xff]
    %v566 = vld [vmem:[%s1 + $0x10a0] sm:$0xff]
    %v567 = vld [vmem:[%s1 + $0x10a8] sm:$0xff]
    %v568 = vld [vmem:[%s1 + $0x10b0] sm:$0xff]
    %v569 = vld [vmem:[%s1 + $0x10b8] sm:$0xff]
    %v570 = vld [vmem:[%s1 + $0x10c0] sm:$0xff]
    %v571 = vld [vmem:[%s1 + $0x10c8] sm:$0xff]
    %v572 = vld [vmem:[%s1 + $0x10d0] sm:$0xff]
    %v573 = vld [vmem:[%s1 + $0x10d8] sm:$0xff]
    %v574 = vld [vmem:[%s1 + $0x10e0] sm:$0xff]
    %v575 = vld [vmem:[%s1 + $0x10e8] sm:$0xff]
    %v576 = vld [vmem:[%s1 + $0x10f0] sm:$0xff]
    %v577 = vld [vmem:[%s1 + $0x10f8] sm:$0xff]
    %v578 = vld [vmem:[%s1 + $0x1100] sm:$0xff]
    %v579 = vld [vmem:[%s1 + $0x1108] sm:$0xff]
    %v580 = vld [vmem:[%s1 + $0x1110] sm:$0xff]
    %v581 = vld [vmem:[%s1 + $0x1118] sm:$0xff]
    %v582 = vld [vmem:[%s1 + $0x1120] sm:$0xff]
    %v583 = vld [vmem:[%s1 + $0x1128] sm:$0xff]
    %v584 = vld [vmem:[%s1 + $0x1130] sm:$0xff]
    %v585 = vld [vmem:[%s1 + $0x1138] sm:$0xff]
    %v586 = vld [vmem:[%s1 + $0x1140] sm:$0xff]
    %v587 = vld [vmem:[%s1 + $0x1148] sm:$0xff]
    %v588 = vld [vmem:[%s1 + $0x1150] sm:$0xff]
    %v589 = vld [vmem:[%s1 + $0x1158] sm:$0xff]
    %v590 = vld [vmem:[%s1 + $0x1160] sm:$0xff]
    %v591 = vld [vmem:[%s1 + $0x1168] sm:$0xff]
    %v592 = vld [vmem:[%s1 + $0x1170] sm:$0xff]
    %v593 = vld [vmem:[%s1 + $0x1178] sm:$0xff]
    %v594 = vld [vmem:[%s1 + $0x1180] sm:$0xff]
    %v595 = vld [vmem:[%s1 + $0x1188] sm:$0xff]
    %v596 = vld [vmem:[%s1 + $0x1190] sm:$0xff]
    %v597 = vld [vmem:[%s1 + $0x1198] sm:$0xff]
    %v598 = vld [vmem:[%s1 + $0x11a0] sm:$0xff]
    %v599 = vld [vmem:[%s1 + $0x11a8] sm:$0xff]
    %v600 = vld [vmem:[%s1 + $0x11b0] sm:$0xff]
    %v601 = vld [vmem:[%s1 + $0x11b8] sm:$0xff]
    %v602 = vld [vmem:[%s1 + $0x11c0] sm:$0xff]
    %v603 = vld [vmem:[%s1 + $0x11c8] sm:$0xff]
    %v604 = vld [vmem:[%s1 + $0x11d0] sm:$0xff]
    %v605 = vld [vmem:[%s1 + $0x11d8] sm:$0xff]
    %v606 = vld [vmem:[%s1 + $0x11e0] sm:$0xff]
    %v607 = vld [vmem:[%s1 + $0x11e8] sm:$0xff]
    %v608 = vld [vmem:[%s1 + $0x11f0] sm:$0xff]
    %v609 = vld [vmem:[%s1 + $0x11f8] sm:$0xff]
    %v610 = vld [vmem:[%s1 + $0x1200] sm:$0xff]
    %v611 = vld [vmem:[%s1 + $0x1208] sm:$0xff]
    %v612 = vld [vmem:[%s1 + $0x1210] sm:$0xff]
    %v613 = vld [vmem:[%s1 + $0x1218] sm:$0xff]
    %v614 = vld [vmem:[%s1 + $0x1220] sm:$0xff]
    %v615 = vld [vmem:[%s1 + $0x1228] sm:$0xff]
    %v616 = vld [vmem:[%s1 + $0x1230] sm:$0xff]
    %v617 = vld [vmem:[%s1 + $0x1238] sm:$0xff]
    %v618 = vld [vmem:[%s1 + $0x1240] sm:$0xff]
    %v619 = vld [vmem:[%s1 + $0x1248] sm:$0xff]
    %v620 = vld [vmem:[%s1 + $0x1250] sm:$0xff]
    %v621 = vld [vmem:[%s1 + $0x1258] sm:$0xff]
    %v622 = vld [vmem:[%s1 + $0x1260] sm:$0xff]
    %v623 = vld [vmem:[%s1 + $0x1268] sm:$0xff]
    %v624 = vld [vmem:[%s1 + $0x1270] sm:$0xff]
    %v625 = vld [vmem:[%s1 + $0x1278] sm:$0xff]
    %v626 = vld [vmem:[%s1 + $0x1280] sm:$0xff]
    %v627 = vld [vmem:[%s1 + $0x1288] sm:$0xff]
    %v628 = vld [vmem:[%s1 + $0x1290] sm:$0xff]
    %v629 = vld [vmem:[%s1 + $0x1298] sm:$0xff]
    %v630 = vld [vmem:[%s1 + $0x12a0] sm:$0xff]
    %v631 = vld [vmem:[%s1 + $0x12a8] sm:$0xff]
    %v632 = vld [vmem:[%s1 + $0x12b0] sm:$0xff]
    %v633 = vld [vmem:[%s1 + $0x12b8] sm:$0xff]
    %v634 = vld [vmem:[%s1 + $0x12c0] sm:$0xff]
    %v635 = vld [vmem:[%s1 + $0x12c8] sm:$0xff]
    %v636 = vld [vmem:[%s1 + $0x12d0] sm:$0xff]
    %v637 = vld [vmem:[%s1 + $0x12d8] sm:$0xff]
    %v638 = vld [vmem:[%s1 + $0x12e0] sm:$0xff]
    %v639 = vld [vmem:[%s1 + $0x12e8] sm:$0xff]
    %v640 = vld [vmem:[%s1 + $0x12f0] sm:$0xff]
    %v641 = vld [vmem:[%s1 + $0x12f8] sm:$0xff]
    %v642 = vld [vmem:[%s1 + $0x1300] sm:$0xff]
    %v643 = vld [vmem:[%s1 + $0x1308] sm:$0xff]
    %v644 = vld [vmem:[%s1 + $0x1310] sm:$0xff]
    %v645 = vld [vmem:[%s1 + $0x1318] sm:$0xff]
    %v646 = vld [vmem:[%s1 + $0x1320] sm:$0xff]
    %v647 = vld [vmem:[%s1 + $0x1328] sm:$0xff]
    %v648 = vld [vmem:[%s1 + $0x1330] sm:$0xff]
    %v649 = vld [vmem:[%s1 + $0x1338] sm:$0xff]
    %v650 = vld [vmem:[%s1 + $0x1340] sm:$0xff]
    %v651 = vld [vmem:[%s1 + $0x1348] sm:$0xff]
    %v652 = vld [vmem:[%s1 + $0x1350] sm:$0xff]
    %v653 = vld [vmem:[%s1 + $0x1358] sm:$0xff]
    %v654 = vld [vmem:[%s1 + $0x1360] sm:$0xff]
    %v655 = vld [vmem:[%s1 + $0x1368] sm:$0xff]
    %v656 = vld [vmem:[%s1 + $0x1370] sm:$0xff]
    %v657 = vld [vmem:[%s1 + $0x1378] sm:$0xff]
    %v658 = vld [vmem:[%s1 + $0x1380] sm:$0xff]
    %v659 = vld [vmem:[%s1 + $0x1388] sm:$0xff]
    %v660 = vld [vmem:[%s1 + $0x1390] sm:$0xff]
    %v661 = vld [vmem:[%s1 + $0x1398] sm:$0xff]
    %v662 = vld [vmem:[%s1 + $0x13a0] sm:$0xff]
    %v663 = vld [vmem:[%s1 + $0x13a8] sm:$0xff]
    %v664 = vld [vmem:[%s1 + $0x13b0] sm:$0xff]
    %v665 = vld [vmem:[%s1 + $0x13b8] sm:$0xff]
    %v666 = vld [vmem:[%s1 + $0x13c0] sm:$0xff]
    %v667 = vld [vmem:[%s1 + $0x13c8] sm:$0xff]
    %v668 = vld [vmem:[%s1 + $0x13d0] sm:$0xff]
    %v669 = vld [vmem:[%s1 + $0x13d8] sm:$0xff]
    %v670 = vld [vmem:[%s1 + $0x13e0] sm:$0xff]
    %v671 = vld [vmem:[%s1 + $0x13e8] sm:$0xff]
    %v672 = vld [vmem:[%s1 + $0x13f0] sm:$0xff]
    %v673 = vld [vmem:[%s1 + $0x13f8] sm:$0xff]
    %v674 = vld [vmem:[%s1 + $0x1400] sm:$0xff]
    %v675 = vld [vmem:[%s1 + $0x1408] sm:$0xff]
    %v676 = vld [vmem:[%s1 + $0x1410] sm:$0xff]
    %v677 = vld [vmem:[%s1 + $0x1418] sm:$0xff]
    %v678 = vld [vmem:[%s1 + $0x1420] sm:$0xff]
    %v679 = vld [vmem:[%s1 + $0x1428] sm:$0xff]
    %v680 = vld [vmem:[%s1 + $0x1430] sm:$0xff]
    %v681 = vld [vmem:[%s1 + $0x1438] sm:$0xff]
    %v682 = vld [vmem:[%s1 + $0x1440] sm:$0xff]
    %v683 = vld [vmem:[%s1 + $0x1448] sm:$0xff]
    %v684 = vld [vmem:[%s1 + $0x1450] sm:$0xff]
    %v685 = vld [vmem:[%s1 + $0x1458] sm:$0xff]
    %v686 = vld [vmem:[%s1 + $0x1460] sm:$0xff]
    %v687 = vld [vmem:[%s1 + $0x1468] sm:$0xff]
    %v688 = vld [vmem:[%s1 + $0x1470] sm:$0xff]
    %v689 = vld [vmem:[%s1 + $0x1478] sm:$0xff]
    %v690 = vld [vmem:[%s1 + $0x1480] sm:$0xff]
    %v691 = vld [vmem:[%s1 + $0x1488] sm:$0xff]
    %v692 = vld [vmem:[%s1 + $0x1490] sm:$0xff]
    %v693 = vld [vmem:[%s1 + $0x1498] sm:$0xff]
    %v694 = vld [vmem:[%s1 + $0x14a0] sm:$0xff]
    %v695 = vld [vmem:[%s1 + $0x14a8] sm:$0xff]
    %v696 = vld [vmem:[%s1 + $0x14b0] sm:$0xff]
    %v697 = vld [vmem:[%s1 + $0x14b8] sm:$0xff]
    %v698 = vld [vmem:[%s1 + $0x14c0] sm:$0xff]
    %v699 = vld [vmem:[%s1 + $0x14c8] sm:$0xff]
    %v700 = vld [vmem:[%s1 + $0x14d0] sm:$0xff]
    %v701 = vld [vmem:[%s1 + $0x14d8] sm:$0xff]
    %v702 = vld [vmem:[%s1 + $0x14e0] sm:$0xff]
    %v703 = vld [vmem:[%s1 + $0x14e8] sm:$0xff]
    %v704 = vld [vmem:[%s1 + $0x14f0] sm:$0xff]
    %v705 = vld [vmem:[%s1 + $0x14f8] sm:$0xff]
    %v706 = vld [vmem:[%s1 + $0x1500] sm:$0xff]
    %v707 = vld [vmem:[%s1 + $0x1508] sm:$0xff]
    %v708 = vld [vmem:[%s1 + $0x1510] sm:$0xff]
    %v709 = vld [vmem:[%s1 + $0x1518] sm:$0xff]
    %v710 = vld [vmem:[%s1 + $0x1520] sm:$0xff]
    %v711 = vld [vmem:[%s1 + $0x1528] sm:$0xff]
    %v712 = vld [vmem:[%s1 + $0x1530] sm:$0xff]
    %v713 = vld [vmem:[%s1 + $0x1538] sm:$0xff]
    %v714 = vld [vmem:[%s1 + $0x1540] sm:$0xff]
    %v715 = vld [vmem:[%s1 + $0x1548] sm:$0xff]
    %v716 = vld [vmem:[%s1 + $0x1550] sm:$0xff]
    %v717 = vld [vmem:[%s1 + $0x1558] sm:$0xff]
    %v718 = vld [vmem:[%s1 + $0x1560] sm:$0xff]
    %v719 = vld [vmem:[%s1 + $0x1568] sm:$0xff]
    %v720 = vld [vmem:[%s1 + $0x1570] sm:$0xff]
    %v721 = vld [vmem:[%s1 + $0x1578] sm:$0xff]
    %v722 = vld [vmem:[%s1 + $0x1580] sm:$0xff]
    %v723 = vld [vmem:[%s1 + $0x1588] sm:$0xff]
    %v724 = vld [vmem:[%s1 + $0x1590] sm:$0xff]
    %v725 = vld [vmem:[%s1 + $0x1598] sm:$0xff]
    %v726 = vld [vmem:[%s1 + $0x15a0] sm:$0xff]
    %v727 = vld [vmem:[%s1 + $0x15a8] sm:$0xff]
    %v728 = vld [vmem:[%s1 + $0x15b0] sm:$0xff]
    %v729 = vld [vmem:[%s1 + $0x15b8] sm:$0xff]
    %v730 = vld [vmem:[%s1 + $0x15c0] sm:$0xff]
    %v731 = vld [vmem:[%s1 + $0x15c8] sm:$0xff]
    %v732 = vld [vmem:[%s1 + $0x15d0] sm:$0xff]
    %v733 = vld [vmem:[%s1 + $0x15d8] sm:$0xff]
    %v734 = vld [vmem:[%s1 + $0x15e0] sm:$0xff]
    %v735 = vld [vmem:[%s1 + $0x15e8] sm:$0xff]
    %v736 = vld [vmem:[%s1 + $0x15f0] sm:$0xff]
    %v737 = vld [vmem:[%s1 + $0x15f8] sm:$0xff]
    %v738 = vld [vmem:[%s1 + $0x1600] sm:$0xff]
    %v739 = vld [vmem:[%s1 + $0x1608] sm:$0xff]
    %v740 = vld [vmem:[%s1 + $0x1610] sm:$0xff]
    %v741 = vld [vmem:[%s1 + $0x1618] sm:$0xff]
    %v742 = vld [vmem:[%s1 + $0x1620] sm:$0xff]
    %v743 = vld [vmem:[%s1 + $0x1628] sm:$0xff]
    %v744 = vld [vmem:[%s1 + $0x1630] sm:$0xff]
    %v745 = vld [vmem:[%s1 + $0x1638] sm:$0xff]
    %v746 = vld [vmem:[%s1 + $0x1640] sm:$0xff]
    %v747 = vld [vmem:[%s1 + $0x1648] sm:$0xff]
    %v748 = vld [vmem:[%s1 + $0x1650] sm:$0xff]
    %v749 = vld [vmem:[%s1 + $0x1658] sm:$0xff]
    %v750 = vld [vmem:[%s1 + $0x1660] sm:$0xff]
    %v751 = vld [vmem:[%s1 + $0x1668] sm:$0xff]
    %v752 = vld [vmem:[%s1 + $0x1670] sm:$0xff]
    %v753 = vld [vmem:[%s1 + $0x1678] sm:$0xff]
    %v754 = vld [vmem:[%s1 + $0x1680] sm:$0xff]
    %v755 = vld [vmem:[%s1 + $0x1688] sm:$0xff]
    %v756 = vld [vmem:[%s1 + $0x1690] sm:$0xff]
    %v757 = vld [vmem:[%s1 + $0x1698] sm:$0xff]
    %v758 = vld [vmem:[%s1 + $0x16a0] sm:$0xff]
    %v759 = vld [vmem:[%s1 + $0x16a8] sm:$0xff]
    %v760 = vld [vmem:[%s1 + $0x16b0] sm:$0xff]
    %v761 = vld [vmem:[%s1 + $0x16b8] sm:$0xff]
    %v762 = vld [vmem:[%s1 + $0x16c0] sm:$0xff]
    %v763 = vld [vmem:[%s1 + $0x16c8] sm:$0xff]
    %v764 = vld [vmem:[%s1 + $0x16d0] sm:$0xff]
    %v765 = vld [vmem:[%s1 + $0x16d8] sm:$0xff]
    %v766 = vld [vmem:[%s1 + $0x16e0] sm:$0xff]
    %v767 = vld [vmem:[%s1 + $0x16e8] sm:$0xff]
    %v768 = vld [vmem:[%s1 + $0x16f0] sm:$0xff]
    %v769 = vld [vmem:[%s1 + $0x16f8] sm:$0xff]
    %v770 = vld [vmem:[%s1 + $0x1700] sm:$0xff]
    %v771 = vld [vmem:[%s1 + $0x1708] sm:$0xff]
    %v772 = vld [vmem:[%s1 + $0x1710] sm:$0xff]
    %v773 = vld [vmem:[%s1 + $0x1718] sm:$0xff]
    %v774 = vld [vmem:[%s1 + $0x1720] sm:$0xff]
    %v775 = vld [vmem:[%s1 + $0x1728] sm:$0xff]
    %v776 = vld [vmem:[%s1 + $0x1730] sm:$0xff]
    %v777 = vld [vmem:[%s1 + $0x1738] sm:$0xff]
    %v778 = vld [vmem:[%s1 + $0x1740] sm:$0xff]
    %v779 = vld [vmem:[%s1 + $0x1748] sm:$0xff]
    %v780 = vld [vmem:[%s1 + $0x1750] sm:$0xff]
    %v781 = vld [vmem:[%s1 + $0x1758] sm:$0xff]
    %v782 = vld [vmem:[%s1 + $0x1760] sm:$0xff]
    %v783 = vld [vmem:[%s1 + $0x1768] sm:$0xff]
    %v784 = vld [vmem:[%s1 + $0x1770] sm:$0xff]
    %v785 = vld [vmem:[%s1 + $0x1778] sm:$0xff]
    %v786 = vld [vmem:[%s1 + $0x1780] sm:$0xff]
    %v787 = vld [vmem:[%s1 + $0x1788] sm:$0xff]
    %v788 = vld [vmem:[%s1 + $0x1790] sm:$0xff]
    %v789 = vld [vmem:[%s1 + $0x1798] sm:$0xff]
    %v790 = vld [vmem:[%s1 + $0x17a0] sm:$0xff]
    %v791 = vld [vmem:[%s1 + $0x17a8] sm:$0xff]
    %v792 = vld [vmem:[%s1 + $0x17b0] sm:$0xff]
    %v793 = vld [vmem:[%s1 + $0x17b8] sm:$0xff]
    %v794 = vld [vmem:[%s1 + $0x17c0] sm:$0xff]
    %v795 = vld [vmem:[%s1 + $0x17c8] sm:$0xff]
    %v796 = vld [vmem:[%s1 + $0x17d0] sm:$0xff]
    %v797 = vld [vmem:[%s1 + $0x17d8] sm:$0xff]
    %v798 = vld [vmem:[%s1 + $0x17e0] sm:$0xff]
    %v799 = vld [vmem:[%s1 + $0x17e8] sm:$0xff]
    %v800 = vld [vmem:[%s1 + $0x17f0] sm:$0xff]
    %v801 = vld [vmem:[%s1 + $0x17f8] sm:$0xff]
    %v802 = vld [vmem:[%s1 + $0x1800] sm:$0xff]
    %v803 = vld [vmem:[%s1 + $0x1808] sm:$0xff]
    %v804 = vld [vmem:[%s1 + $0x1810] sm:$0xff]
    %v805 = vld [vmem:[%s1 + $0x1818] sm:$0xff]
    %v806 = vld [vmem:[%s1 + $0x1820] sm:$0xff]
    %v807 = vld [vmem:[%s1 + $0x1828] sm:$0xff]
    %v808 = vld [vmem:[%s1 + $0x1830] sm:$0xff]
    %v809 = vld [vmem:[%s1 + $0x1838] sm:$0xff]
    %v810 = vld [vmem:[%s1 + $0x1840] sm:$0xff]
    %v811 = vld [vmem:[%s1 + $0x1848] sm:$0xff]
    %v812 = vld [vmem:[%s1 + $0x1850] sm:$0xff]
    %v813 = vld [vmem:[%s1 + $0x1858] sm:$0xff]
    %v814 = vld [vmem:[%s1 + $0x1860] sm:$0xff]
    %v815 = vld [vmem:[%s1 + $0x1868] sm:$0xff]
    %v816 = vld [vmem:[%s1 + $0x1870] sm:$0xff]
    %v817 = vld [vmem:[%s1 + $0x1878] sm:$0xff]
    %v818 = vld [vmem:[%s1 + $0x1880] sm:$0xff]
    %v819 = vld [vmem:[%s1 + $0x1888] sm:$0xff]
    %v820 = vld [vmem:[%s1 + $0x1890] sm:$0xff]
    %v821 = vld [vmem:[%s1 + $0x1898] sm:$0xff]
    %v822 = vld [vmem:[%s1 + $0x18a0] sm:$0xff]
    %v823 = vld [vmem:[%s1 + $0x18a8] sm:$0xff]
    %v824 = vld [vmem:[%s1 + $0x18b0] sm:$0xff]
    %v825 = vld [vmem:[%s1 + $0x18b8] sm:$0xff]
    %v826 = vld [vmem:[%s1 + $0x18c0] sm:$0xff]
    %v827 = vld [vmem:[%s1 + $0x18c8] sm:$0xff]
    %v828 = vld [vmem:[%s1 + $0x18d0] sm:$0xff]
    %v829 = vld [vmem:[%s1 + $0x18d8] sm:$0xff]
    %v830 = vld [vmem:[%s1 + $0x18e0] sm:$0xff]
    %v831 = vld [vmem:[%s1 + $0x18e8] sm:$0xff]
    %v832 = vld [vmem:[%s1 + $0x18f0] sm:$0xff]
    %v833 = vld [vmem:[%s1 + $0x18f8] sm:$0xff]
    %v834 = vld [vmem:[%s2] sm:$0x1]
    %v836 = vlaneseq
    %v837 = vshrl.u32 %v836, 7
    %v838 = vsub.s32 0, %v837
    %v839 = vrot.slane %v834, %v838
    %v854 = vcombine.high %v21, %v21
    %v856 = vunpack.c.l.s4 1983009808
    %v857 = vunpack.c.0.s8 %v856
    %v858 = vlaneseq
    %v859 = vshrl.u32 %v858, 7
    %v860 = vsub.s32 %v857, %v859
    %v861 = vrot.slane %v21, %v860
    %v863 = vunpack.c.l.s4 1983009808
    %v864 = vunpack.c.0.s8 %v863
    %v865 = vlaneseq
    %v866 = vshrl.u32 %v865, 7
    %v867 = vsub.s32 %v864, %v866
    %v868 = vrot.slane %v854, %v867
    %v869 = vcombine.high %v861, %v861
    %v870 = vcombine.high %v868, %v868
    %v871 = vcombine.high %v22, %v22
    %v873 = vunpack.c.l.s4 1983009808
    %v874 = vunpack.c.0.s8 %v873
    %v875 = vlaneseq
    %v876 = vshrl.u32 %v875, 7
    %v877 = vsub.s32 %v874, %v876
    %v878 = vrot.slane %v22, %v877
    %v880 = vunpack.c.l.s4 1983009808
    %v881 = vunpack.c.0.s8 %v880
    %v882 = vlaneseq
    %v883 = vshrl.u32 %v882, 7
    %v884 = vsub.s32 %v881, %v883
    %v885 = vrot.slane %v871, %v884
    %v886 = vcombine.high %v878, %v878
    %v887 = vcombine.high %v885, %v885
    %v888 = vcombine.high %v23, %v23
    %v890 = vunpack.c.l.s4 1983009808
    %v891 = vunpack.c.0.s8 %v890
    %v892 = vlaneseq
    %v893 = vshrl.u32 %v892, 7
    %v894 = vsub.s32 %v891, %v893
    %v895 = vrot.slane %v23, %v894
    %v897 = vunpack.c.l.s4 1983009808
    %v898 = vunpack.c.0.s8 %v897
    %v899 = vlaneseq
    %v900 = vshrl.u32 %v899, 7
    %v901 = vsub.s32 %v898, %v900
    %v902 = vrot.slane %v888, %v901
    %v903 = vcombine.high %v895, %v895
    %v904 = vcombine.high %v902, %v902
    %v905 = vcombine.high %v24, %v24
    %v907 = vunpack.c.l.s4 1983009808
    %v908 = vunpack.c.0.s8 %v907
    %v909 = vlaneseq
    %v910 = vshrl.u32 %v909, 7
    %v911 = vsub.s32 %v908, %v910
    %v912 = vrot.slane %v24, %v911
    %v914 = vunpack.c.l.s4 1983009808
    %v915 = vunpack.c.0.s8 %v914
    %v916 = vlaneseq
    %v917 = vshrl.u32 %v916, 7
    %v918 = vsub.s32 %v915, %v917
    %v919 = vrot.slane %v905, %v918
    %v920 = vcombine.high %v912, %v912
    %v921 = vcombine.high %v919, %v919
    %v922 = vcombine.high %v25, %v25
    %v924 = vunpack.c.l.s4 1983009808
    %v925 = vunpack.c.0.s8 %v924
    %v926 = vlaneseq
    %v927 = vshrl.u32 %v926, 7
    %v928 = vsub.s32 %v925, %v927
    %v929 = vrot.slane %v25, %v928
    %v931 = vunpack.c.l.s4 1983009808
    %v932 = vunpack.c.0.s8 %v931
    %v933 = vlaneseq
    %v934 = vshrl.u32 %v933, 7
    %v935 = vsub.s32 %v932, %v934
    %v936 = vrot.slane %v922, %v935
    %v937 = vcombine.high %v929, %v929
    %v938 = vcombine.high %v936, %v936
    %v939 = vcombine.high %v26, %v26
    %v941 = vunpack.c.l.s4 1983009808
    %v942 = vunpack.c.0.s8 %v941
    %v943 = vlaneseq
    %v944 = vshrl.u32 %v943, 7
    %v945 = vsub.s32 %v942, %v944
    %v946 = vrot.slane %v26, %v945
    %v948 = vunpack.c.l.s4 1983009808
    %v949 = vunpack.c.0.s8 %v948
    %v950 = vlaneseq
    %v951 = vshrl.u32 %v950, 7
    %v952 = vsub.s32 %v949, %v951
    %v953 = vrot.slane %v939, %v952
    %v954 = vcombine.high %v946, %v946
    %v955 = vcombine.high %v953, %v953
    %v956 = vcombine.high %v27, %v27
    %v958 = vunpack.c.l.s4 1983009808
    %v959 = vunpack.c.0.s8 %v958
    %v960 = vlaneseq
    %v961 = vshrl.u32 %v960, 7
    %v962 = vsub.s32 %v959, %v961
    %v963 = vrot.slane %v27, %v962
    %v965 = vunpack.c.l.s4 1983009808
    %v966 = vunpack.c.0.s8 %v965
    %v967 = vlaneseq
    %v968 = vshrl.u32 %v967, 7
    %v969 = vsub.s32 %v966, %v968
    %v970 = vrot.slane %v956, %v969
    %v971 = vcombine.high %v963, %v963
    %v972 = vcombine.high %v970, %v970
    %v973 = vcombine.high %v28, %v28
    %v975 = vunpack.c.l.s4 1983009808
    %v976 = vunpack.c.0.s8 %v975
    %v977 = vlaneseq
    %v978 = vshrl.u32 %v977, 7
    %v979 = vsub.s32 %v976, %v978
    %v980 = vrot.slane %v28, %v979
    %v982 = vunpack.c.l.s4 1983009808
    %v983 = vunpack.c.0.s8 %v982
    %v984 = vlaneseq
    %v985 = vshrl.u32 %v984, 7
    %v986 = vsub.s32 %v983, %v985
    %v987 = vrot.slane %v973, %v986
    %v988 = vcombine.high %v980, %v980
    %v989 = vcombine.high %v987, %v987
    %v990 = vcombine.high %v29, %v29
    %v992 = vunpack.c.l.s4 1983009808
    %v993 = vunpack.c.0.s8 %v992
    %v994 = vlaneseq
    %v995 = vshrl.u32 %v994, 7
    %v996 = vsub.s32 %v993, %v995
    %v997 = vrot.slane %v29, %v996
    %v999 = vunpack.c.l.s4 1983009808
    %v1000 = vunpack.c.0.s8 %v999
    %v1001 = vlaneseq
    %v1002 = vshrl.u32 %v1001, 7
    %v1003 = vsub.s32 %v1000, %v1002
    %v1004 = vrot.slane %v990, %v1003
    %v1005 = vcombine.high %v997, %v997
    %v1006 = vcombine.high %v1004, %v1004
    %v1007 = vcombine.high %v30, %v30
    %v1009 = vunpack.c.l.s4 1983009808
    %v1010 = vunpack.c.0.s8 %v1009
    %v1011 = vlaneseq
    %v1012 = vshrl.u32 %v1011, 7
    %v1013 = vsub.s32 %v1010, %v1012
    %v1014 = vrot.slane %v30, %v1013
    %v1016 = vunpack.c.l.s4 1983009808
    %v1017 = vunpack.c.0.s8 %v1016
    %v1018 = vlaneseq
    %v1019 = vshrl.u32 %v1018, 7
    %v1020 = vsub.s32 %v1017, %v1019
    %v1021 = vrot.slane %v1007, %v1020
    %v1022 = vcombine.high %v1014, %v1014
    %v1023 = vcombine.high %v1021, %v1021
    %v1024 = vcombine.high %v31, %v31
    %v1026 = vunpack.c.l.s4 1983009808
    %v1027 = vunpack.c.0.s8 %v1026
    %v1028 = vlaneseq
    %v1029 = vshrl.u32 %v1028, 7
    %v1030 = vsub.s32 %v1027, %v1029
    %v1031 = vrot.slane %v31, %v1030
    %v1033 = vunpack.c.l.s4 1983009808
    %v1034 = vunpack.c.0.s8 %v1033
    %v1035 = vlaneseq
    %v1036 = vshrl.u32 %v1035, 7
    %v1037 = vsub.s32 %v1034, %v1036
    %v1038 = vrot.slane %v1024, %v1037
    %v1039 = vcombine.high %v1031, %v1031
    %v1040 = vcombine.high %v1038, %v1038
    %v1041 = vcombine.high %v32, %v32
    %v1043 = vunpack.c.l.s4 1983009808
    %v1044 = vunpack.c.0.s8 %v1043
    %v1045 = vlaneseq
    %v1046 = vshrl.u32 %v1045, 7
    %v1047 = vsub.s32 %v1044, %v1046
    %v1048 = vrot.slane %v32, %v1047
    %v1050 = vunpack.c.l.s4 1983009808
    %v1051 = vunpack.c.0.s8 %v1050
    %v1052 = vlaneseq
    %v1053 = vshrl.u32 %v1052, 7
    %v1054 = vsub.s32 %v1051, %v1053
    %v1055 = vrot.slane %v1041, %v1054
    %v1056 = vcombine.high %v1048, %v1048
    %v1057 = vcombine.high %v1055, %v1055
    %v1059 = vunpack.c.l.s4 1983009808
    %v1060 = vunpack.c.0.s8 %v1059
    %v1061 = vlaneseq
    %v1062 = vshrl.u32 %v1061, 7
    %v1063 = vsub.s32 %v1060, %v1062
    %v1064 = vrot.slane %v33, %v1063
    %v1065 = vcombine.high %v1064, %v1064
    %1116 = vmatprep.subr.mxu0 0.0
    %1117 = vmatpush1.msra.mxu0 %v34
    %1118 = vmatprep.subr.mxu0 0.0
    %1119 = vmatpush1.msra.mxu0 %v35
    %1120 = vmatprep.subr.mxu0 0.0
    %1121 = vmatpush1.msra.mxu0 %v36
    %1122 = vmatprep.subr.mxu0 0.0
    %1123 = vmatpush1.msra.mxu0 %v37
    %1124 = vmatprep.subr.mxu0 0.0
    %1125 = vmatpush1.msra.mxu0 %v38
    %1126 = vmatprep.subr.mxu0 0.0
    %1127 = vmatpush1.msra.mxu0 %v39
    %1128 = vmatprep.subr.mxu0 0.0
    %1129 = vmatpush1.msra.mxu0 %v40
    %1130 = vmatprep.subr.mxu0 0.0
    %1131 = vmatpush1.msra.mxu0 %v41
    %1132 = vmatprep.subr.mxu0 0.0
    %1133 = vmatpush1.msra.mxu0 %v42
    %1134 = vmatprep.subr.mxu0 0.0
    %1135 = vmatpush1.msra.mxu0 %v43
    %1136 = vmatprep.subr.mxu0 0.0
    %1137 = vmatpush1.msra.mxu0 %v44
    %1138 = vmatprep.subr.mxu0 0.0
    %1139 = vmatpush1.msra.mxu0 %v45
    %1140 = vmatprep.subr.mxu0 0.0
    %1141 = vmatpush1.msra.mxu0 %v46
    %1142 = vmatprep.subr.mxu0 0.0
    %1143 = vmatpush1.msra.mxu0 %v47
    %1144 = vmatprep.subr.mxu0 0.0
    %1145 = vmatpush1.msra.mxu0 %v48
    %1146 = vmatprep.subr.mxu0 0.0
    %1147 = vmatpush1.msra.mxu0 %v49
    %1148 = vmatprep.subr.mxu0 0.0
    %1149 = vmatpush1.msra.mxu0 %v50
    %1150 = vmatprep.subr.mxu0 0.0
    %1151 = vmatpush1.msra.mxu0 %v51
    %1152 = vmatprep.subr.mxu0 0.0
    %1153 = vmatpush1.msra.mxu0 %v52
    %1154 = vmatprep.subr.mxu0 0.0
    %1155 = vmatpush1.msra.mxu0 %v53
    %1156 = vmatprep.subr.mxu0 0.0
    %1157 = vmatpush1.msra.mxu0 %v54
    %1158 = vmatprep.subr.mxu0 0.0
    %1159 = vmatpush1.msra.mxu0 %v55
    %1160 = vmatprep.subr.mxu0 0.0
    %1161 = vmatpush1.msra.mxu0 %v56
    %1162 = vmatprep.subr.mxu0 0.0
    %1163 = vmatpush1.msra.mxu0 %v57
    %1164 = vmatprep.subr.mxu0 0.0
    %1165 = vmatpush1.msra.mxu0 %v58
    %1166 = vmatprep.subr.mxu0 0.0
    %1167 = vmatpush1.msra.mxu0 %v59
    %1168 = vmatprep.subr.mxu0 0.0
    %1169 = vmatpush1.msra.mxu0 %v60
    %1170 = vmatprep.subr.mxu0 0.0
    %1171 = vmatpush1.msra.mxu0 %v61
    %1172 = vmatprep.subr.mxu0 0.0
    %1173 = vmatpush1.msra.mxu0 %v62
    %1174 = vmatprep.subr.mxu0 0.0
    %1175 = vmatpush1.msra.mxu0 %v63
    %1176 = vmatprep.subr.mxu0 0.0
    %1177 = vmatpush1.msra.mxu0 %v64
    %1178 = vmatprep.subr.mxu0 0.0
    %1179 = vmatpush1.msra.mxu0 %v65
    %1180 = vmatprep.mubr.f32.mxu0 %v869
    %1181 = vmatmul.mubr.f32.gmra.mrb[0].mxu0 %v861
    %v1182 = vpop.f32.mrb[0].mxu0
    %v1183 = vadd.f32 %v839, %v1182
    %v1184 = vpop.f32.mrb[0].mxu0
    %1185 = vdwg.mxu0
    %1186 = vmatprep.subr.mxu0 0.0
    %1187 = vmatpush1.msra.mxu0 %v66
    %1188 = vmatprep.subr.mxu0 0.0
    %1189 = vmatpush1.msra.mxu0 %v67
    %1190 = vmatprep.subr.mxu0 0.0
    %1191 = vmatpush1.msra.mxu0 %v68
    %1192 = vmatprep.subr.mxu0 0.0
    %1193 = vmatpush1.msra.mxu0 %v69
    %1194 = vmatprep.subr.mxu0 0.0
    %1195 = vmatpush1.msra.mxu0 %v70
    %1196 = vmatprep.subr.mxu0 0.0
    %1197 = vmatpush1.msra.mxu0 %v71
    %1198 = vmatprep.subr.mxu0 0.0
    %1199 = vmatpush1.msra.mxu0 %v72
    %1200 = vmatprep.subr.mxu0 0.0
    %1201 = vmatpush1.msra.mxu0 %v73
    %1202 = vmatprep.subr.mxu0 0.0
    %1203 = vmatpush1.msra.mxu0 %v74
    %1204 = vmatprep.subr.mxu0 0.0
    %1205 = vmatpush1.msra.mxu0 %v75
    %1206 = vmatprep.subr.mxu0 0.0
    %1207 = vmatpush1.msra.mxu0 %v76
    %1208 = vmatprep.subr.mxu0 0.0
    %1209 = vmatpush1.msra.mxu0 %v77
    %1210 = vmatprep.subr.mxu0 0.0
    %1211 = vmatpush1.msra.mxu0 %v78
    %1212 = vmatprep.subr.mxu0 0.0
    %1213 = vmatpush1.msra.mxu0 %v79
    %1214 = vmatprep.subr.mxu0 0.0
    %1215 = vmatpush1.msra.mxu0 %v80
    %1216 = vmatprep.subr.mxu0 0.0
    %1217 = vmatpush1.msra.mxu0 %v81
    %1218 = vmatprep.subr.mxu0 0.0
    %1219 = vmatpush1.msra.mxu0 %v82
    %1220 = vmatprep.subr.mxu0 0.0
    %1221 = vmatpush1.msra.mxu0 %v83
    %1222 = vmatprep.subr.mxu0 0.0
    %1223 = vmatpush1.msra.mxu0 %v84
    %1224 = vmatprep.subr.mxu0 0.0
    %1225 = vmatpush1.msra.mxu0 %v85
    %1226 = vmatprep.subr.mxu0 0.0
    %1227 = vmatpush1.msra.mxu0 %v86
    %1228 = vmatprep.subr.mxu0 0.0
    %1229 = vmatpush1.msra.mxu0 %v87
    %1230 = vmatprep.subr.mxu0 0.0
    %1231 = vmatpush1.msra.mxu0 %v88
    %1232 = vmatprep.subr.mxu0 0.0
    %1233 = vmatpush1.msra.mxu0 %v89
    %1234 = vmatprep.subr.mxu0 0.0
    %1235 = vmatpush1.msra.mxu0 %v90
    %1236 = vmatprep.subr.mxu0 0.0
    %1237 = vmatpush1.msra.mxu0 %v91
    %1238 = vmatprep.subr.mxu0 0.0
    %1239 = vmatpush1.msra.mxu0 %v92
    %1240 = vmatprep.subr.mxu0 0.0
    %1241 = vmatpush1.msra.mxu0 %v93
    %1242 = vmatprep.subr.mxu0 0.0
    %1243 = vmatpush1.msra.mxu0 %v94
    %1244 = vmatprep.subr.mxu0 0.0
    %1245 = vmatpush1.msra.mxu0 %v95
    %1246 = vmatprep.subr.mxu0 0.0
    %1247 = vmatpush1.msra.mxu0 %v96
    %1248 = vmatprep.subr.mxu0 0.0
    %1249 = vmatpush1.msra.mxu0 %v97
    %1250 = vmatprep.mubr.f32.mxu0 %v870
    %1251 = vmatmul.mubr.f32.gmra.mrb[0].mxu0 %v868
    %v1252 = vpop.f32.mrb[0].mxu0
    %v1253 = vadd.f32 %v1183, %v1252
    %v1254 = vpop.f32.mrb[0].mxu0
    %1255 = vdwg.mxu0
    %1256 = vmatprep.subr.mxu0 0.0
    %1257 = vmatpush1.msra.mxu0 %v98
    %1258 = vmatprep.subr.mxu0 0.0
    %1259 = vmatpush1.msra.mxu0 %v99
    %1260 = vmatprep.subr.mxu0 0.0
    %1261 = vmatpush1.msra.mxu0 %v100
    %1262 = vmatprep.subr.mxu0 0.0
    %1263 = vmatpush1.msra.mxu0 %v101
    %1264 = vmatprep.subr.mxu0 0.0
    %1265 = vmatpush1.msra.mxu0 %v102
    %1266 = vmatprep.subr.mxu0 0.0
    %1267 = vmatpush1.msra.mxu0 %v103
    %1268 = vmatprep.subr.mxu0 0.0
    %1269 = vmatpush1.msra.mxu0 %v104
    %1270 = vmatprep.subr.mxu0 0.0
    %1271 = vmatpush1.msra.mxu0 %v105
    %1272 = vmatprep.subr.mxu0 0.0
    %1273 = vmatpush1.msra.mxu0 %v106
    %1274 = vmatprep.subr.mxu0 0.0
    %1275 = vmatpush1.msra.mxu0 %v107
    %1276 = vmatprep.subr.mxu0 0.0
    %1277 = vmatpush1.msra.mxu0 %v108
    %1278 = vmatprep.subr.mxu0 0.0
    %1279 = vmatpush1.msra.mxu0 %v109
    %1280 = vmatprep.subr.mxu0 0.0
    %1281 = vmatpush1.msra.mxu0 %v110
    %1282 = vmatprep.subr.mxu0 0.0
    %1283 = vmatpush1.msra.mxu0 %v111
    %1284 = vmatprep.subr.mxu0 0.0
    %1285 = vmatpush1.msra.mxu0 %v112
    %1286 = vmatprep.subr.mxu0 0.0
    %1287 = vmatpush1.msra.mxu0 %v113
    %1288 = vmatprep.subr.mxu0 0.0
    %1289 = vmatpush1.msra.mxu0 %v114
    %1290 = vmatprep.subr.mxu0 0.0
    %1291 = vmatpush1.msra.mxu0 %v115
    %1292 = vmatprep.subr.mxu0 0.0
    %1293 = vmatpush1.msra.mxu0 %v116
    %1294 = vmatprep.subr.mxu0 0.0
    %1295 = vmatpush1.msra.mxu0 %v117
    %1296 = vmatprep.subr.mxu0 0.0
    %1297 = vmatpush1.msra.mxu0 %v118
    %1298 = vmatprep.subr.mxu0 0.0
    %1299 = vmatpush1.msra.mxu0 %v119
    %1300 = vmatprep.subr.mxu0 0.0
    %1301 = vmatpush1.msra.mxu0 %v120
    %1302 = vmatprep.subr.mxu0 0.0
    %1303 = vmatpush1.msra.mxu0 %v121
    %1304 = vmatprep.subr.mxu0 0.0
    %1305 = vmatpush1.msra.mxu0 %v122
    %1306 = vmatprep.subr.mxu0 0.0
    %1307 = vmatpush1.msra.mxu0 %v123
    %1308 = vmatprep.subr.mxu0 0.0
    %1309 = vmatpush1.msra.mxu0 %v124
    %1310 = vmatprep.subr.mxu0 0.0
    %1311 = vmatpush1.msra.mxu0 %v125
    %1312 = vmatprep.subr.mxu0 0.0
    %1313 = vmatpush1.msra.mxu0 %v126
    %1314 = vmatprep.subr.mxu0 0.0
    %1315 = vmatpush1.msra.mxu0 %v127
    %1316 = vmatprep.subr.mxu0 0.0
    %1317 = vmatpush1.msra.mxu0 %v128
    %1318 = vmatprep.subr.mxu0 0.0
    %1319 = vmatpush1.msra.mxu0 %v129
    %1320 = vmatprep.mubr.f32.mxu0 %v886
    %1321 = vmatmul.mubr.f32.gmra.mrb[0].mxu0 %v878
    %v1322 = vpop.f32.mrb[0].mxu0
    %v1323 = vadd.f32 %v1253, %v1322
    %v1324 = vpop.f32.mrb[0].mxu0
    %1325 = vdwg.mxu0
    %1326 = vmatprep.subr.mxu0 0.0
    %1327 = vmatpush1.msra.mxu0 %v130
    %1328 = vmatprep.subr.mxu0 0.0
    %1329 = vmatpush1.msra.mxu0 %v131
    %1330 = vmatprep.subr.mxu0 0.0
    %1331 = vmatpush1.msra.mxu0 %v132
    %1332 = vmatprep.subr.mxu0 0.0
    %1333 = vmatpush1.msra.mxu0 %v133
    %1334 = vmatprep.subr.mxu0 0.0
    %1335 = vmatpush1.msra.mxu0 %v134
    %1336 = vmatprep.subr.mxu0 0.0
    %1337 = vmatpush1.msra.mxu0 %v135
    %1338 = vmatprep.subr.mxu0 0.0
    %1339 = vmatpush1.msra.mxu0 %v136
    %1340 = vmatprep.subr.mxu0 0.0
    %1341 = vmatpush1.msra.mxu0 %v137
    %1342 = vmatprep.subr.mxu0 0.0
    %1343 = vmatpush1.msra.mxu0 %v138
    %1344 = vmatprep.subr.mxu0 0.0
    %1345 = vmatpush1.msra.mxu0 %v139
    %1346 = vmatprep.subr.mxu0 0.0
    %1347 = vmatpush1.msra.mxu0 %v140
    %1348 = vmatprep.subr.mxu0 0.0
    %1349 = vmatpush1.msra.mxu0 %v141
    %1350 = vmatprep.subr.mxu0 0.0
    %1351 = vmatpush1.msra.mxu0 %v142
    %1352 = vmatprep.subr.mxu0 0.0
    %1353 = vmatpush1.msra.mxu0 %v143
    %1354 = vmatprep.subr.mxu0 0.0
    %1355 = vmatpush1.msra.mxu0 %v144
    %1356 = vmatprep.subr.mxu0 0.0
    %1357 = vmatpush1.msra.mxu0 %v145
    %1358 = vmatprep.subr.mxu0 0.0
    %1359 = vmatpush1.msra.mxu0 %v146
    %1360 = vmatprep.subr.mxu0 0.0
    %1361 = vmatpush1.msra.mxu0 %v147
    %1362 = vmatprep.subr.mxu0 0.0
    %1363 = vmatpush1.msra.mxu0 %v148
    %1364 = vmatprep.subr.mxu0 0.0
    %1365 = vmatpush1.msra.mxu0 %v149
    %1366 = vmatprep.subr.mxu0 0.0
    %1367 = vmatpush1.msra.mxu0 %v150
    %1368 = vmatprep.subr.mxu0 0.0
    %1369 = vmatpush1.msra.mxu0 %v151
    %1370 = vmatprep.subr.mxu0 0.0
    %1371 = vmatpush1.msra.mxu0 %v152
    %1372 = vmatprep.subr.mxu0 0.0
    %1373 = vmatpush1.msra.mxu0 %v153
    %1374 = vmatprep.subr.mxu0 0.0
    %1375 = vmatpush1.msra.mxu0 %v154
    %1376 = vmatprep.subr.mxu0 0.0
    %1377 = vmatpush1.msra.mxu0 %v155
    %1378 = vmatprep.subr.mxu0 0.0
    %1379 = vmatpush1.msra.mxu0 %v156
    %1380 = vmatprep.subr.mxu0 0.0
    %1381 = vmatpush1.msra.mxu0 %v157
    %1382 = vmatprep.subr.mxu0 0.0
    %1383 = vmatpush1.msra.mxu0 %v158
    %1384 = vmatprep.subr.mxu0 0.0
    %1385 = vmatpush1.msra.mxu0 %v159
    %1386 = vmatprep.subr.mxu0 0.0
    %1387 = vmatpush1.msra.mxu0 %v160
    %1388 = vmatprep.subr.mxu0 0.0
    %1389 = vmatpush1.msra.mxu0 %v161
    %1390 = vmatprep.mubr.f32.mxu0 %v887
    %1391 = vmatmul.mubr.f32.gmra.mrb[0].mxu0 %v885
    %v1392 = vpop.f32.mrb[0].mxu0
    %v1393 = vadd.f32 %v1323, %v1392
    %v1394 = vpop.f32.mrb[0].mxu0
    %1395 = vdwg.mxu0
    %1396 = vmatprep.subr.mxu0 0.0
    %1397 = vmatpush1.msra.mxu0 %v162
    %1398 = vmatprep.subr.mxu0 0.0
    %1399 = vmatpush1.msra.mxu0 %v163
    %1400 = vmatprep.subr.mxu0 0.0
    %1401 = vmatpush1.msra.mxu0 %v164
    %1402 = vmatprep.subr.mxu0 0.0
    %1403 = vmatpush1.msra.mxu0 %v165
    %1404 = vmatprep.subr.mxu0 0.0
    %1405 = vmatpush1.msra.mxu0 %v166
    %1406 = vmatprep.subr.mxu0 0.0
    %1407 = vmatpush1.msra.mxu0 %v167
    %1408 = vmatprep.subr.mxu0 0.0
    %1409 = vmatpush1.msra.mxu0 %v168
    %1410 = vmatprep.subr.mxu0 0.0
    %1411 = vmatpush1.msra.mxu0 %v169
    %1412 = vmatprep.subr.mxu0 0.0
    %1413 = vmatpush1.msra.mxu0 %v170
    %1414 = vmatprep.subr.mxu0 0.0
    %1415 = vmatpush1.msra.mxu0 %v171
    %1416 = vmatprep.subr.mxu0 0.0
    %1417 = vmatpush1.msra.mxu0 %v172
    %1418 = vmatprep.subr.mxu0 0.0
    %1419 = vmatpush1.msra.mxu0 %v173
    %1420 = vmatprep.subr.mxu0 0.0
    %1421 = vmatpush1.msra.mxu0 %v174
    %1422 = vmatprep.subr.mxu0 0.0
    %1423 = vmatpush1.msra.mxu0 %v175
    %1424 = vmatprep.subr.mxu0 0.0
    %1425 = vmatpush1.msra.mxu0 %v176
    %1426 = vmatprep.subr.mxu0 0.0
    %1427 = vmatpush1.msra.mxu0 %v177
    %1428 = vmatprep.subr.mxu0 0.0
    %1429 = vmatpush1.msra.mxu0 %v178
    %1430 = vmatprep.subr.mxu0 0.0
    %1431 = vmatpush1.msra.mxu0 %v179
    %1432 = vmatprep.subr.mxu0 0.0
    %1433 = vmatpush1.msra.mxu0 %v180
    %1434 = vmatprep.subr.mxu0 0.0
    %1435 = vmatpush1.msra.mxu0 %v181
    %1436 = vmatprep.subr.mxu0 0.0
    %1437 = vmatpush1.msra.mxu0 %v182
    %1438 = vmatprep.subr.mxu0 0.0
    %1439 = vmatpush1.msra.mxu0 %v183
    %1440 = vmatprep.subr.mxu0 0.0
    %1441 = vmatpush1.msra.mxu0 %v184
    %1442 = vmatprep.subr.mxu0 0.0
    %1443 = vmatpush1.msra.mxu0 %v185
    %1444 = vmatprep.subr.mxu0 0.0
    %1445 = vmatpush1.msra.mxu0 %v186
    %1446 = vmatprep.subr.mxu0 0.0
    %1447 = vmatpush1.msra.mxu0 %v187
    %1448 = vmatprep.subr.mxu0 0.0
    %1449 = vmatpush1.msra.mxu0 %v188
    %1450 = vmatprep.subr.mxu0 0.0
    %1451 = vmatpush1.msra.mxu0 %v189
    %1452 = vmatprep.subr.mxu0 0.0
    %1453 = vmatpush1.msra.mxu0 %v190
    %1454 = vmatprep.subr.mxu0 0.0
    %1455 = vmatpush1.msra.mxu0 %v191
    %1456 = vmatprep.subr.mxu0 0.0
    %1457 = vmatpush1.msra.mxu0 %v192
    %1458 = vmatprep.subr.mxu0 0.0
    %1459 = vmatpush1.msra.mxu0 %v193
    %1460 = vmatprep.mubr.f32.mxu0 %v903
    %1461 = vmatmul.mubr.f32.gmra.mrb[0].mxu0 %v895
    %v1462 = vpop.f32.mrb[0].mxu0
    %v1463 = vadd.f32 %v1393, %v1462
    %v1464 = vpop.f32.mrb[0].mxu0
    %1465 = vdwg.mxu0
    %1466 = vmatprep.subr.mxu0 0.0
    %1467 = vmatpush1.msra.mxu0 %v194
    %1468 = vmatprep.subr.mxu0 0.0
    %1469 = vmatpush1.msra.mxu0 %v195
    %1470 = vmatprep.subr.mxu0 0.0
    %1471 = vmatpush1.msra.mxu0 %v196
    %1472 = vmatprep.subr.mxu0 0.0
    %1473 = vmatpush1.msra.mxu0 %v197
    %1474 = vmatprep.subr.mxu0 0.0
    %1475 = vmatpush1.msra.mxu0 %v198
    %1476 = vmatprep.subr.mxu0 0.0
    %1477 = vmatpush1.msra.mxu0 %v199
    %1478 = vmatprep.subr.mxu0 0.0
    %1479 = vmatpush1.msra.mxu0 %v200
    %1480 = vmatprep.subr.mxu0 0.0
    %1481 = vmatpush1.msra.mxu0 %v201
    %1482 = vmatprep.subr.mxu0 0.0
    %1483 = vmatpush1.msra.mxu0 %v202
    %1484 = vmatprep.subr.mxu0 0.0
    %1485 = vmatpush1.msra.mxu0 %v203
    %1486 = vmatprep.subr.mxu0 0.0
    %1487 = vmatpush1.msra.mxu0 %v204
    %1488 = vmatprep.subr.mxu0 0.0
    %1489 = vmatpush1.msra.mxu0 %v205
    %1490 = vmatprep.subr.mxu0 0.0
    %1491 = vmatpush1.msra.mxu0 %v206
    %1492 = vmatprep.subr.mxu0 0.0
    %1493 = vmatpush1.msra.mxu0 %v207
    %1494 = vmatprep.subr.mxu0 0.0
    %1495 = vmatpush1.msra.mxu0 %v208
    %1496 = vmatprep.subr.mxu0 0.0
    %1497 = vmatpush1.msra.mxu0 %v209
    %1498 = vmatprep.subr.mxu0 0.0
    %1499 = vmatpush1.msra.mxu0 %v210
    %1500 = vmatprep.subr.mxu0 0.0
    %1501 = vmatpush1.msra.mxu0 %v211
    %1502 = vmatprep.subr.mxu0 0.0
    %1503 = vmatpush1.msra.mxu0 %v212
    %1504 = vmatprep.subr.mxu0 0.0
    %1505 = vmatpush1.msra.mxu0 %v213
    %1506 = vmatprep.subr.mxu0 0.0
    %1507 = vmatpush1.msra.mxu0 %v214
    %1508 = vmatprep.subr.mxu0 0.0
    %1509 = vmatpush1.msra.mxu0 %v215
    %1510 = vmatprep.subr.mxu0 0.0
    %1511 = vmatpush1.msra.mxu0 %v216
    %1512 = vmatprep.subr.mxu0 0.0
    %1513 = vmatpush1.msra.mxu0 %v217
    %1514 = vmatprep.subr.mxu0 0.0
    %1515 = vmatpush1.msra.mxu0 %v218
    %1516 = vmatprep.subr.mxu0 0.0
    %1517 = vmatpush1.msra.mxu0 %v219
    %1518 = vmatprep.subr.mxu0 0.0
    %1519 = vmatpush1.msra.mxu0 %v220
    %1520 = vmatprep.subr.mxu0 0.0
    %1521 = vmatpush1.msra.mxu0 %v221
    %1522 = vmatprep.subr.mxu0 0.0
    %1523 = vmatpush1.msra.mxu0 %v222
    %1524 = vmatprep.subr.mxu0 0.0
    %1525 = vmatpush1.msra.mxu0 %v223
    %1526 = vmatprep.subr.mxu0 0.0
    %1527 = vmatpush1.msra.mxu0 %v224
    %1528 = vmatprep.subr.mxu0 0.0
    %1529 = vmatpush1.msra.mxu0 %v225
    %1530 = vmatprep.mubr.f32.mxu0 %v904
    %1531 = vmatmul.mubr.f32.gmra.mrb[0].mxu0 %v902
    %v1532 = vpop.f32.mrb[0].mxu0
    %v1533 = vadd.f32 %v1463, %v1532
    %v1534 = vpop.f32.mrb[0].mxu0
    %1535 = vdwg.mxu0
    %1536 = vmatprep.subr.mxu0 0.0
    %1537 = vmatpush1.msra.mxu0 %v226
    %1538 = vmatprep.subr.mxu0 0.0
    %1539 = vmatpush1.msra.mxu0 %v227
    %1540 = vmatprep.subr.mxu0 0.0
    %1541 = vmatpush1.msra.mxu0 %v228
    %1542 = vmatprep.subr.mxu0 0.0
    %1543 = vmatpush1.msra.mxu0 %v229
    %1544 = vmatprep.subr.mxu0 0.0
    %1545 = vmatpush1.msra.mxu0 %v230
    %1546 = vmatprep.subr.mxu0 0.0
    %1547 = vmatpush1.msra.mxu0 %v231
    %1548 = vmatprep.subr.mxu0 0.0
    %1549 = vmatpush1.msra.mxu0 %v232
    %1550 = vmatprep.subr.mxu0 0.0
    %1551 = vmatpush1.msra.mxu0 %v233
    %1552 = vmatprep.subr.mxu0 0.0
    %1553 = vmatpush1.msra.mxu0 %v234
    %1554 = vmatprep.subr.mxu0 0.0
    %1555 = vmatpush1.msra.mxu0 %v235
    %1556 = vmatprep.subr.mxu0 0.0
    %1557 = vmatpush1.msra.mxu0 %v236
    %1558 = vmatprep.subr.mxu0 0.0
    %1559 = vmatpush1.msra.mxu0 %v237
    %1560 = vmatprep.subr.mxu0 0.0
    %1561 = vmatpush1.msra.mxu0 %v238
    %1562 = vmatprep.subr.mxu0 0.0
    %1563 = vmatpush1.msra.mxu0 %v239
    %1564 = vmatprep.subr.mxu0 0.0
    %1565 = vmatpush1.msra.mxu0 %v240
    %1566 = vmatprep.subr.mxu0 0.0
    %1567 = vmatpush1.msra.mxu0 %v241
    %1568 = vmatprep.subr.mxu0 0.0
    %1569 = vmatpush1.msra.mxu0 %v242
    %1570 = vmatprep.subr.mxu0 0.0
    %1571 = vmatpush1.msra.mxu0 %v243
    %1572 = vmatprep.subr.mxu0 0.0
    %1573 = vmatpush1.msra.mxu0 %v244
    %1574 = vmatprep.subr.mxu0 0.0
    %1575 = vmatpush1.msra.mxu0 %v245
    %1576 = vmatprep.subr.mxu0 0.0
    %1577 = vmatpush1.msra.mxu0 %v246
    %1578 = vmatprep.subr.mxu0 0.0
    %1579 = vmatpush1.msra.mxu0 %v247
    %1580 = vmatprep.subr.mxu0 0.0
    %1581 = vmatpush1.msra.mxu0 %v248
    %1582 = vmatprep.subr.mxu0 0.0
    %1583 = vmatpush1.msra.mxu0 %v249
    %1584 = vmatprep.subr.mxu0 0.0
    %1585 = vmatpush1.msra.mxu0 %v250
    %1586 = vmatprep.subr.mxu0 0.0
    %1587 = vmatpush1.msra.mxu0 %v251
    %1588 = vmatprep.subr.mxu0 0.0
    %1589 = vmatpush1.msra.mxu0 %v252
    %1590 = vmatprep.subr.mxu0 0.0
    %1591 = vmatpush1.msra.mxu0 %v253
    %1592 = vmatprep.subr.mxu0 0.0
    %1593 = vmatpush1.msra.mxu0 %v254
    %1594 = vmatprep.subr.mxu0 0.0
    %1595 = vmatpush1.msra.mxu0 %v255
    %1596 = vmatprep.subr.mxu0 0.0
    %1597 = vmatpush1.msra.mxu0 %v256
    %1598 = vmatprep.subr.mxu0 0.0
    %1599 = vmatpush1.msra.mxu0 %v257
    %1600 = vmatprep.mubr.f32.mxu0 %v920
    %1601 = vmatmul.mubr.f32.gmra.mrb[0].mxu0 %v912
    %v1602 = vpop.f32.mrb[0].mxu0
    %v1603 = vadd.f32 %v1533, %v1602
    %v1604 = vpop.f32.mrb[0].mxu0
    %1605 = vdwg.mxu0
    %1606 = vmatprep.subr.mxu0 0.0
    %1607 = vmatpush1.msra.mxu0 %v258
    %1608 = vmatprep.subr.mxu0 0.0
    %1609 = vmatpush1.msra.mxu0 %v259
    %1610 = vmatprep.subr.mxu0 0.0
    %1611 = vmatpush1.msra.mxu0 %v260
    %1612 = vmatprep.subr.mxu0 0.0
    %1613 = vmatpush1.msra.mxu0 %v261
    %1614 = vmatprep.subr.mxu0 0.0
    %1615 = vmatpush1.msra.mxu0 %v262
    %1616 = vmatprep.subr.mxu0 0.0
    %1617 = vmatpush1.msra.mxu0 %v263
    %1618 = vmatprep.subr.mxu0 0.0
    %1619 = vmatpush1.msra.mxu0 %v264
    %1620 = vmatprep.subr.mxu0 0.0
    %1621 = vmatpush1.msra.mxu0 %v265
    %1622 = vmatprep.subr.mxu0 0.0
    %1623 = vmatpush1.msra.mxu0 %v266
    %1624 = vmatprep.subr.mxu0 0.0
    %1625 = vmatpush1.msra.mxu0 %v267
    %1626 = vmatprep.subr.mxu0 0.0
    %1627 = vmatpush1.msra.mxu0 %v268
    %1628 = vmatprep.subr.mxu0 0.0
    %1629 = vmatpush1.msra.mxu0 %v269
    %1630 = vmatprep.subr.mxu0 0.0
    %1631 = vmatpush1.msra.mxu0 %v270
    %1632 = vmatprep.subr.mxu0 0.0
    %1633 = vmatpush1.msra.mxu0 %v271
    %1634 = vmatprep.subr.mxu0 0.0
    %1635 = vmatpush1.msra.mxu0 %v272
    %1636 = vmatprep.subr.mxu0 0.0
    %1637 = vmatpush1.msra.mxu0 %v273
    %1638 = vmatprep.subr.mxu0 0.0
    %1639 = vmatpush1.msra.mxu0 %v274
    %1640 = vmatprep.subr.mxu0 0.0
    %1641 = vmatpush1.msra.mxu0 %v275
    %1642 = vmatprep.subr.mxu0 0.0
    %1643 = vmatpush1.msra.mxu0 %v276
    %1644 = vmatprep.subr.mxu0 0.0
    %1645 = vmatpush1.msra.mxu0 %v277
    %1646 = vmatprep.subr.mxu0 0.0
    %1647 = vmatpush1.msra.mxu0 %v278
    %1648 = vmatprep.subr.mxu0 0.0
    %1649 = vmatpush1.msra.mxu0 %v279
    %1650 = vmatprep.subr.mxu0 0.0
    %1651 = vmatpush1.msra.mxu0 %v280
    %1652 = vmatprep.subr.mxu0 0.0
    %1653 = vmatpush1.msra.mxu0 %v281
    %1654 = vmatprep.subr.mxu0 0.0
    %1655 = vmatpush1.msra.mxu0 %v282
    %1656 = vmatprep.subr.mxu0 0.0
    %1657 = vmatpush1.msra.mxu0 %v283
    %1658 = vmatprep.subr.mxu0 0.0
    %1659 = vmatpush1.msra.mxu0 %v284
    %1660 = vmatprep.subr.mxu0 0.0
    %1661 = vmatpush1.msra.mxu0 %v285
    %1662 = vmatprep.subr.mxu0 0.0
    %1663 = vmatpush1.msra.mxu0 %v286
    %1664 = vmatprep.subr.mxu0 0.0
    %1665 = vmatpush1.msra.mxu0 %v287
    %1666 = vmatprep.subr.mxu0 0.0
    %1667 = vmatpush1.msra.mxu0 %v288
    %1668 = vmatprep.subr.mxu0 0.0
    %1669 = vmatpush1.msra.mxu0 %v289
    %1670 = vmatprep.mubr.f32.mxu0 %v921
    %1671 = vmatmul.mubr.f32.gmra.mrb[0].mxu0 %v919
    %v1672 = vpop.f32.mrb[0].mxu0
    %v1673 = vadd.f32 %v1603, %v1672
    %v1674 = vpop.f32.mrb[0].mxu0
    %1675 = vdwg.mxu0
    %1676 = vmatprep.subr.mxu0 0.0
    %1677 = vmatpush1.msra.mxu0 %v290
    %1678 = vmatprep.subr.mxu0 0.0
    %1679 = vmatpush1.msra.mxu0 %v291
    %1680 = vmatprep.subr.mxu0 0.0
    %1681 = vmatpush1.msra.mxu0 %v292
    %1682 = vmatprep.subr.mxu0 0.0
    %1683 = vmatpush1.msra.mxu0 %v293
    %1684 = vmatprep.subr.mxu0 0.0
    %1685 = vmatpush1.msra.mxu0 %v294
    %1686 = vmatprep.subr.mxu0 0.0
    %1687 = vmatpush1.msra.mxu0 %v295
    %1688 = vmatprep.subr.mxu0 0.0
    %1689 = vmatpush1.msra.mxu0 %v296
    %1690 = vmatprep.subr.mxu0 0.0
    %1691 = vmatpush1.msra.mxu0 %v297
    %1692 = vmatprep.subr.mxu0 0.0
    %1693 = vmatpush1.msra.mxu0 %v298
    %1694 = vmatprep.subr.mxu0 0.0
    %1695 = vmatpush1.msra.mxu0 %v299
    %1696 = vmatprep.subr.mxu0 0.0
    %1697 = vmatpush1.msra.mxu0 %v300
    %1698 = vmatprep.subr.mxu0 0.0
    %1699 = vmatpush1.msra.mxu0 %v301
    %1700 = vmatprep.subr.mxu0 0.0
    %1701 = vmatpush1.msra.mxu0 %v302
    %1702 = vmatprep.subr.mxu0 0.0
    %1703 = vmatpush1.msra.mxu0 %v303
    %1704 = vmatprep.subr.mxu0 0.0
    %1705 = vmatpush1.msra.mxu0 %v304
    %1706 = vmatprep.subr.mxu0 0.0
    %1707 = vmatpush1.msra.mxu0 %v305
    %1708 = vmatprep.subr.mxu0 0.0
    %1709 = vmatpush1.msra.mxu0 %v306
    %1710 = vmatprep.subr.mxu0 0.0
    %1711 = vmatpush1.msra.mxu0 %v307
    %1712 = vmatprep.subr.mxu0 0.0
    %1713 = vmatpush1.msra.mxu0 %v308
    %1714 = vmatprep.subr.mxu0 0.0
    %1715 = vmatpush1.msra.mxu0 %v309
    %1716 = vmatprep.subr.mxu0 0.0
    %1717 = vmatpush1.msra.mxu0 %v310
    %1718 = vmatprep.subr.mxu0 0.0
    %1719 = vmatpush1.msra.mxu0 %v311
    %1720 = vmatprep.subr.mxu0 0.0
    %1721 = vmatpush1.msra.mxu0 %v312
    %1722 = vmatprep.subr.mxu0 0.0
    %1723 = vmatpush1.msra.mxu0 %v313
    %1724 = vmatprep.subr.mxu0 0.0
    %1725 = vmatpush1.msra.mxu0 %v314
    %1726 = vmatprep.subr.mxu0 0.0
    %1727 = vmatpush1.msra.mxu0 %v315
    %1728 = vmatprep.subr.mxu0 0.0
    %1729 = vmatpush1.msra.mxu0 %v316
    %1730 = vmatprep.subr.mxu0 0.0
    %1731 = vmatpush1.msra.mxu0 %v317
    %1732 = vmatprep.subr.mxu0 0.0
    %1733 = vmatpush1.msra.mxu0 %v318
    %1734 = vmatprep.subr.mxu0 0.0
    %1735 = vmatpush1.msra.mxu0 %v319
    %1736 = vmatprep.subr.mxu0 0.0
    %1737 = vmatpush1.msra.mxu0 %v320
    %1738 = vmatprep.subr.mxu0 0.0
    %1739 = vmatpush1.msra.mxu0 %v321
    %1740 = vmatprep.mubr.f32.mxu0 %v937
    %1741 = vmatmul.mubr.f32.gmra.mrb[0].mxu0 %v929
    %v1742 = vpop.f32.mrb[0].mxu0
    %v1743 = vadd.f32 %v1673, %v1742
    %v1744 = vpop.f32.mrb[0].mxu0
    %1745 = vdwg.mxu0
    %1746 = vmatprep.subr.mxu0 0.0
    %1747 = vmatpush1.msra.mxu0 %v322
    %1748 = vmatprep.subr.mxu0 0.0
    %1749 = vmatpush1.msra.mxu0 %v323
    %1750 = vmatprep.subr.mxu0 0.0
    %1751 = vmatpush1.msra.mxu0 %v324
    %1752 = vmatprep.subr.mxu0 0.0
    %1753 = vmatpush1.msra.mxu0 %v325
    %1754 = vmatprep.subr.mxu0 0.0
    %1755 = vmatpush1.msra.mxu0 %v326
    %1756 = vmatprep.subr.mxu0 0.0
    %1757 = vmatpush1.msra.mxu0 %v327
    %1758 = vmatprep.subr.mxu0 0.0
    %1759 = vmatpush1.msra.mxu0 %v328
    %1760 = vmatprep.subr.mxu0 0.0
    %1761 = vmatpush1.msra.mxu0 %v329
    %1762 = vmatprep.subr.mxu0 0.0
    %1763 = vmatpush1.msra.mxu0 %v330
    %1764 = vmatprep.subr.mxu0 0.0
    %1765 = vmatpush1.msra.mxu0 %v331
    %1766 = vmatprep.subr.mxu0 0.0
    %1767 = vmatpush1.msra.mxu0 %v332
    %1768 = vmatprep.subr.mxu0 0.0
    %1769 = vmatpush1.msra.mxu0 %v333
    %1770 = vmatprep.subr.mxu0 0.0
    %1771 = vmatpush1.msra.mxu0 %v334
    %1772 = vmatprep.subr.mxu0 0.0
    %1773 = vmatpush1.msra.mxu0 %v335
    %1774 = vmatprep.subr.mxu0 0.0
    %1775 = vmatpush1.msra.mxu0 %v336
    %1776 = vmatprep.subr.mxu0 0.0
    %1777 = vmatpush1.msra.mxu0 %v337
    %1778 = vmatprep.subr.mxu0 0.0
    %1779 = vmatpush1.msra.mxu0 %v338
    %1780 = vmatprep.subr.mxu0 0.0
    %1781 = vmatpush1.msra.mxu0 %v339
    %1782 = vmatprep.subr.mxu0 0.0
    %1783 = vmatpush1.msra.mxu0 %v340
    %1784 = vmatprep.subr.mxu0 0.0
    %1785 = vmatpush1.msra.mxu0 %v341
    %1786 = vmatprep.subr.mxu0 0.0
    %1787 = vmatpush1.msra.mxu0 %v342
    %1788 = vmatprep.subr.mxu0 0.0
    %1789 = vmatpush1.msra.mxu0 %v343
    %1790 = vmatprep.subr.mxu0 0.0
    %1791 = vmatpush1.msra.mxu0 %v344
    %1792 = vmatprep.subr.mxu0 0.0
    %1793 = vmatpush1.msra.mxu0 %v345
    %1794 = vmatprep.subr.mxu0 0.0
    %1795 = vmatpush1.msra.mxu0 %v346
    %1796 = vmatprep.subr.mxu0 0.0
    %1797 = vmatpush1.msra.mxu0 %v347
    %1798 = vmatprep.subr.mxu0 0.0
    %1799 = vmatpush1.msra.mxu0 %v348
    %1800 = vmatprep.subr.mxu0 0.0
    %1801 = vmatpush1.msra.mxu0 %v349
    %1802 = vmatprep.subr.mxu0 0.0
    %1803 = vmatpush1.msra.mxu0 %v350
    %1804 = vmatprep.subr.mxu0 0.0
    %1805 = vmatpush1.msra.mxu0 %v351
    %1806 = vmatprep.subr.mxu0 0.0
    %1807 = vmatpush1.msra.mxu0 %v352
    %1808 = vmatprep.subr.mxu0 0.0
    %1809 = vmatpush1.msra.mxu0 %v353
    %1810 = vmatprep.mubr.f32.mxu0 %v938
    %1811 = vmatmul.mubr.f32.gmra.mrb[0].mxu0 %v936
    %v1812 = vpop.f32.mrb[0].mxu0
    %v1813 = vadd.f32 %v1743, %v1812
    %v1814 = vpop.f32.mrb[0].mxu0
    %1815 = vdwg.mxu0
    %1816 = vmatprep.subr.mxu0 0.0
    %1817 = vmatpush1.msra.mxu0 %v354
    %1818 = vmatprep.subr.mxu0 0.0
    %1819 = vmatpush1.msra.mxu0 %v355
    %1820 = vmatprep.subr.mxu0 0.0
    %1821 = vmatpush1.msra.mxu0 %v356
    %1822 = vmatprep.subr.mxu0 0.0
    %1823 = vmatpush1.msra.mxu0 %v357
    %1824 = vmatprep.subr.mxu0 0.0
    %1825 = vmatpush1.msra.mxu0 %v358
    %1826 = vmatprep.subr.mxu0 0.0
    %1827 = vmatpush1.msra.mxu0 %v359
    %1828 = vmatprep.subr.mxu0 0.0
    %1829 = vmatpush1.msra.mxu0 %v360
    %1830 = vmatprep.subr.mxu0 0.0
    %1831 = vmatpush1.msra.mxu0 %v361
    %1832 = vmatprep.subr.mxu0 0.0
    %1833 = vmatpush1.msra.mxu0 %v362
    %1834 = vmatprep.subr.mxu0 0.0
    %1835 = vmatpush1.msra.mxu0 %v363
    %1836 = vmatprep.subr.mxu0 0.0
    %1837 = vmatpush1.msra.mxu0 %v364
    %1838 = vmatprep.subr.mxu0 0.0
    %1839 = vmatpush1.msra.mxu0 %v365
    %1840 = vmatprep.subr.mxu0 0.0
    %1841 = vmatpush1.msra.mxu0 %v366
    %1842 = vmatprep.subr.mxu0 0.0
    %1843 = vmatpush1.msra.mxu0 %v367
    %1844 = vmatprep.subr.mxu0 0.0
    %1845 = vmatpush1.msra.mxu0 %v368
    %1846 = vmatprep.subr.mxu0 0.0
    %1847 = vmatpush1.msra.mxu0 %v369
    %1848 = vmatprep.subr.mxu0 0.0
    %1849 = vmatpush1.msra.mxu0 %v370
    %1850 = vmatprep.subr.mxu0 0.0
    %1851 = vmatpush1.msra.mxu0 %v371
    %1852 = vmatprep.subr.mxu0 0.0
    %1853 = vmatpush1.msra.mxu0 %v372
    %1854 = vmatprep.subr.mxu0 0.0
    %1855 = vmatpush1.msra.mxu0 %v373
    %1856 = vmatprep.subr.mxu0 0.0
    %1857 = vmatpush1.msra.mxu0 %v374
    %1858 = vmatprep.subr.mxu0 0.0
    %1859 = vmatpush1.msra.mxu0 %v375
    %1860 = vmatprep.subr.mxu0 0.0
    %1861 = vmatpush1.msra.mxu0 %v376
    %1862 = vmatprep.subr.mxu0 0.0
    %1863 = vmatpush1.msra.mxu0 %v377
    %1864 = vmatprep.subr.mxu0 0.0
    %1865 = vmatpush1.msra.mxu0 %v378
    %1866 = vmatprep.subr.mxu0 0.0
    %1867 = vmatpush1.msra.mxu0 %v379
    %1868 = vmatprep.subr.mxu0 0.0
    %1869 = vmatpush1.msra.mxu0 %v380
    %1870 = vmatprep.subr.mxu0 0.0
    %1871 = vmatpush1.msra.mxu0 %v381
    %1872 = vmatprep.subr.mxu0 0.0
    %1873 = vmatpush1.msra.mxu0 %v382
    %1874 = vmatprep.subr.mxu0 0.0
    %1875 = vmatpush1.msra.mxu0 %v383
    %1876 = vmatprep.subr.mxu0 0.0
    %1877 = vmatpush1.msra.mxu0 %v384
    %1878 = vmatprep.subr.mxu0 0.0
    %1879 = vmatpush1.msra.mxu0 %v385
    %1880 = vmatprep.mubr.f32.mxu0 %v954
    %1881 = vmatmul.mubr.f32.gmra.mrb[0].mxu0 %v946
    %v1882 = vpop.f32.mrb[0].mxu0
    %v1883 = vadd.f32 %v1813, %v1882
    %v1884 = vpop.f32.mrb[0].mxu0
    %1885 = vdwg.mxu0
    %1886 = vmatprep.subr.mxu0 0.0
    %1887 = vmatpush1.msra.mxu0 %v386
    %1888 = vmatprep.subr.mxu0 0.0
    %1889 = vmatpush1.msra.mxu0 %v387
    %1890 = vmatprep.subr.mxu0 0.0
    %1891 = vmatpush1.msra.mxu0 %v388
    %1892 = vmatprep.subr.mxu0 0.0
    %1893 = vmatpush1.msra.mxu0 %v389
    %1894 = vmatprep.subr.mxu0 0.0
    %1895 = vmatpush1.msra.mxu0 %v390
    %1896 = vmatprep.subr.mxu0 0.0
    %1897 = vmatpush1.msra.mxu0 %v391
    %1898 = vmatprep.subr.mxu0 0.0
    %1899 = vmatpush1.msra.mxu0 %v392
    %1900 = vmatprep.subr.mxu0 0.0
    %1901 = vmatpush1.msra.mxu0 %v393
    %1902 = vmatprep.subr.mxu0 0.0
    %1903 = vmatpush1.msra.mxu0 %v394
    %1904 = vmatprep.subr.mxu0 0.0
    %1905 = vmatpush1.msra.mxu0 %v395
    %1906 = vmatprep.subr.mxu0 0.0
    %1907 = vmatpush1.msra.mxu0 %v396
    %1908 = vmatprep.subr.mxu0 0.0
    %1909 = vmatpush1.msra.mxu0 %v397
    %1910 = vmatprep.subr.mxu0 0.0
    %1911 = vmatpush1.msra.mxu0 %v398
    %1912 = vmatprep.subr.mxu0 0.0
    %1913 = vmatpush1.msra.mxu0 %v399
    %1914 = vmatprep.subr.mxu0 0.0
    %1915 = vmatpush1.msra.mxu0 %v400
    %1916 = vmatprep.subr.mxu0 0.0
    %1917 = vmatpush1.msra.mxu0 %v401
    %1918 = vmatprep.subr.mxu0 0.0
    %1919 = vmatpush1.msra.mxu0 %v402
    %1920 = vmatprep.subr.mxu0 0.0
    %1921 = vmatpush1.msra.mxu0 %v403
    %1922 = vmatprep.subr.mxu0 0.0
    %1923 = vmatpush1.msra.mxu0 %v404
    %1924 = vmatprep.subr.mxu0 0.0
    %1925 = vmatpush1.msra.mxu0 %v405
    %1926 = vmatprep.subr.mxu0 0.0
    %1927 = vmatpush1.msra.mxu0 %v406
    %1928 = vmatprep.subr.mxu0 0.0
    %1929 = vmatpush1.msra.mxu0 %v407
    %1930 = vmatprep.subr.mxu0 0.0
    %1931 = vmatpush1.msra.mxu0 %v408
    %1932 = vmatprep.subr.mxu0 0.0
    %1933 = vmatpush1.msra.mxu0 %v409
    %1934 = vmatprep.subr.mxu0 0.0
    %1935 = vmatpush1.msra.mxu0 %v410
    %1936 = vmatprep.subr.mxu0 0.0
    %1937 = vmatpush1.msra.mxu0 %v411
    %1938 = vmatprep.subr.mxu0 0.0
    %1939 = vmatpush1.msra.mxu0 %v412
    %1940 = vmatprep.subr.mxu0 0.0
    %1941 = vmatpush1.msra.mxu0 %v413
    %1942 = vmatprep.subr.mxu0 0.0
    %1943 = vmatpush1.msra.mxu0 %v414
    %1944 = vmatprep.subr.mxu0 0.0
    %1945 = vmatpush1.msra.mxu0 %v415
    %1946 = vmatprep.subr.mxu0 0.0
    %1947 = vmatpush1.msra.mxu0 %v416
    %1948 = vmatprep.subr.mxu0 0.0
    %1949 = vmatpush1.msra.mxu0 %v417
    %1950 = vmatprep.mubr.f32.mxu0 %v955
    %1951 = vmatmul.mubr.f32.gmra.mrb[0].mxu0 %v953
    %v1952 = vpop.f32.mrb[0].mxu0
    %v1953 = vadd.f32 %v1883, %v1952
    %v1954 = vpop.f32.mrb[0].mxu0
    %1955 = vdwg.mxu0
    %1956 = vmatprep.subr.mxu0 0.0
    %1957 = vmatpush1.msra.mxu0 %v418
    %1958 = vmatprep.subr.mxu0 0.0
    %1959 = vmatpush1.msra.mxu0 %v419
    %1960 = vmatprep.subr.mxu0 0.0
    %1961 = vmatpush1.msra.mxu0 %v420
    %1962 = vmatprep.subr.mxu0 0.0
    %1963 = vmatpush1.msra.mxu0 %v421
    %1964 = vmatprep.subr.mxu0 0.0
    %1965 = vmatpush1.msra.mxu0 %v422
    %1966 = vmatprep.subr.mxu0 0.0
    %1967 = vmatpush1.msra.mxu0 %v423
    %1968 = vmatprep.subr.mxu0 0.0
    %1969 = vmatpush1.msra.mxu0 %v424
    %1970 = vmatprep.subr.mxu0 0.0
    %1971 = vmatpush1.msra.mxu0 %v425
    %1972 = vmatprep.subr.mxu0 0.0
    %1973 = vmatpush1.msra.mxu0 %v426
    %1974 = vmatprep.subr.mxu0 0.0
    %1975 = vmatpush1.msra.mxu0 %v427
    %1976 = vmatprep.subr.mxu0 0.0
    %1977 = vmatpush1.msra.mxu0 %v428
    %1978 = vmatprep.subr.mxu0 0.0
    %1979 = vmatpush1.msra.mxu0 %v429
    %1980 = vmatprep.subr.mxu0 0.0
    %1981 = vmatpush1.msra.mxu0 %v430
    %1982 = vmatprep.subr.mxu0 0.0
    %1983 = vmatpush1.msra.mxu0 %v431
    %1984 = vmatprep.subr.mxu0 0.0
    %1985 = vmatpush1.msra.mxu0 %v432
    %1986 = vmatprep.subr.mxu0 0.0
    %1987 = vmatpush1.msra.mxu0 %v433
    %1988 = vmatprep.subr.mxu0 0.0
    %1989 = vmatpush1.msra.mxu0 %v434
    %1990 = vmatprep.subr.mxu0 0.0
    %1991 = vmatpush1.msra.mxu0 %v435
    %1992 = vmatprep.subr.mxu0 0.0
    %1993 = vmatpush1.msra.mxu0 %v436
    %1994 = vmatprep.subr.mxu0 0.0
    %1995 = vmatpush1.msra.mxu0 %v437
    %1996 = vmatprep.subr.mxu0 0.0
    %1997 = vmatpush1.msra.mxu0 %v438
    %1998 = vmatprep.subr.mxu0 0.0
    %1999 = vmatpush1.msra.mxu0 %v439
    %2000 = vmatprep.subr.mxu0 0.0
    %2001 = vmatpush1.msra.mxu0 %v440
    %2002 = vmatprep.subr.mxu0 0.0
    %2003 = vmatpush1.msra.mxu0 %v441
    %2004 = vmatprep.subr.mxu0 0.0
    %2005 = vmatpush1.msra.mxu0 %v442
    %2006 = vmatprep.subr.mxu0 0.0
    %2007 = vmatpush1.msra.mxu0 %v443
    %2008 = vmatprep.subr.mxu0 0.0
    %2009 = vmatpush1.msra.mxu0 %v444
    %2010 = vmatprep.subr.mxu0 0.0
    %2011 = vmatpush1.msra.mxu0 %v445
    %2012 = vmatprep.subr.mxu0 0.0
    %2013 = vmatpush1.msra.mxu0 %v446
    %2014 = vmatprep.subr.mxu0 0.0
    %2015 = vmatpush1.msra.mxu0 %v447
    %2016 = vmatprep.subr.mxu0 0.0
    %2017 = vmatpush1.msra.mxu0 %v448
    %2018 = vmatprep.subr.mxu0 0.0
    %2019 = vmatpush1.msra.mxu0 %v449
    %2020 = vmatprep.mubr.f32.mxu0 %v971
    %2021 = vmatmul.mubr.f32.gmra.mrb[0].mxu0 %v963
    %v2022 = vpop.f32.mrb[0].mxu0
    %v2023 = vadd.f32 %v1953, %v2022
    %v2024 = vpop.f32.mrb[0].mxu0
    %2025 = vdwg.mxu0
    %2026 = vmatprep.subr.mxu0 0.0
    %2027 = vmatpush1.msra.mxu0 %v450
    %2028 = vmatprep.subr.mxu0 0.0
    %2029 = vmatpush1.msra.mxu0 %v451
    %2030 = vmatprep.subr.mxu0 0.0
    %2031 = vmatpush1.msra.mxu0 %v452
    %2032 = vmatprep.subr.mxu0 0.0
    %2033 = vmatpush1.msra.mxu0 %v453
    %2034 = vmatprep.subr.mxu0 0.0
    %2035 = vmatpush1.msra.mxu0 %v454
    %2036 = vmatprep.subr.mxu0 0.0
    %2037 = vmatpush1.msra.mxu0 %v455
    %2038 = vmatprep.subr.mxu0 0.0
    %2039 = vmatpush1.msra.mxu0 %v456
    %2040 = vmatprep.subr.mxu0 0.0
    %2041 = vmatpush1.msra.mxu0 %v457
    %2042 = vmatprep.subr.mxu0 0.0
    %2043 = vmatpush1.msra.mxu0 %v458
    %2044 = vmatprep.subr.mxu0 0.0
    %2045 = vmatpush1.msra.mxu0 %v459
    %2046 = vmatprep.subr.mxu0 0.0
    %2047 = vmatpush1.msra.mxu0 %v460
    %2048 = vmatprep.subr.mxu0 0.0
    %2049 = vmatpush1.msra.mxu0 %v461
    %2050 = vmatprep.subr.mxu0 0.0
    %2051 = vmatpush1.msra.mxu0 %v462
    %2052 = vmatprep.subr.mxu0 0.0
    %2053 = vmatpush1.msra.mxu0 %v463
    %2054 = vmatprep.subr.mxu0 0.0
    %2055 = vmatpush1.msra.mxu0 %v464
    %2056 = vmatprep.subr.mxu0 0.0
    %2057 = vmatpush1.msra.mxu0 %v465
    %2058 = vmatprep.subr.mxu0 0.0
    %2059 = vmatpush1.msra.mxu0 %v466
    %2060 = vmatprep.subr.mxu0 0.0
    %2061 = vmatpush1.msra.mxu0 %v467
    %2062 = vmatprep.subr.mxu0 0.0
    %2063 = vmatpush1.msra.mxu0 %v468
    %2064 = vmatprep.subr.mxu0 0.0
    %2065 = vmatpush1.msra.mxu0 %v469
    %2066 = vmatprep.subr.mxu0 0.0
    %2067 = vmatpush1.msra.mxu0 %v470
    %2068 = vmatprep.subr.mxu0 0.0
    %2069 = vmatpush1.msra.mxu0 %v471
    %2070 = vmatprep.subr.mxu0 0.0
    %2071 = vmatpush1.msra.mxu0 %v472
    %2072 = vmatprep.subr.mxu0 0.0
    %2073 = vmatpush1.msra.mxu0 %v473
    %2074 = vmatprep.subr.mxu0 0.0
    %2075 = vmatpush1.msra.mxu0 %v474
    %2076 = vmatprep.subr.mxu0 0.0
    %2077 = vmatpush1.msra.mxu0 %v475
    %2078 = vmatprep.subr.mxu0 0.0
    %2079 = vmatpush1.msra.mxu0 %v476
    %2080 = vmatprep.subr.mxu0 0.0
    %2081 = vmatpush1.msra.mxu0 %v477
    %2082 = vmatprep.subr.mxu0 0.0
    %2083 = vmatpush1.msra.mxu0 %v478
    %2084 = vmatprep.subr.mxu0 0.0
    %2085 = vmatpush1.msra.mxu0 %v479
    %2086 = vmatprep.subr.mxu0 0.0
    %2087 = vmatpush1.msra.mxu0 %v480
    %2088 = vmatprep.subr.mxu0 0.0
    %2089 = vmatpush1.msra.mxu0 %v481
    %2090 = vmatprep.mubr.f32.mxu0 %v972
    %2091 = vmatmul.mubr.f32.gmra.mrb[0].mxu0 %v970
    %v2092 = vpop.f32.mrb[0].mxu0
    %v2093 = vadd.f32 %v2023, %v2092
    %v2094 = vpop.f32.mrb[0].mxu0
    %2095 = vdwg.mxu0
    %2096 = vmatprep.subr.mxu0 0.0
    %2097 = vmatpush1.msra.mxu0 %v482
    %2098 = vmatprep.subr.mxu0 0.0
    %2099 = vmatpush1.msra.mxu0 %v483
    %2100 = vmatprep.subr.mxu0 0.0
    %2101 = vmatpush1.msra.mxu0 %v484
    %2102 = vmatprep.subr.mxu0 0.0
    %2103 = vmatpush1.msra.mxu0 %v485
    %2104 = vmatprep.subr.mxu0 0.0
    %2105 = vmatpush1.msra.mxu0 %v486
    %2106 = vmatprep.subr.mxu0 0.0
    %2107 = vmatpush1.msra.mxu0 %v487
    %2108 = vmatprep.subr.mxu0 0.0
    %2109 = vmatpush1.msra.mxu0 %v488
    %2110 = vmatprep.subr.mxu0 0.0
    %2111 = vmatpush1.msra.mxu0 %v489
    %2112 = vmatprep.subr.mxu0 0.0
    %2113 = vmatpush1.msra.mxu0 %v490
    %2114 = vmatprep.subr.mxu0 0.0
    %2115 = vmatpush1.msra.mxu0 %v491
    %2116 = vmatprep.subr.mxu0 0.0
    %2117 = vmatpush1.msra.mxu0 %v492
    %2118 = vmatprep.subr.mxu0 0.0
    %2119 = vmatpush1.msra.mxu0 %v493
    %2120 = vmatprep.subr.mxu0 0.0
    %2121 = vmatpush1.msra.mxu0 %v494
    %2122 = vmatprep.subr.mxu0 0.0
    %2123 = vmatpush1.msra.mxu0 %v495
    %2124 = vmatprep.subr.mxu0 0.0
    %2125 = vmatpush1.msra.mxu0 %v496
    %2126 = vmatprep.subr.mxu0 0.0
    %2127 = vmatpush1.msra.mxu0 %v497
    %2128 = vmatprep.subr.mxu0 0.0
    %2129 = vmatpush1.msra.mxu0 %v498
    %2130 = vmatprep.subr.mxu0 0.0
    %2131 = vmatpush1.msra.mxu0 %v499
    %2132 = vmatprep.subr.mxu0 0.0
    %2133 = vmatpush1.msra.mxu0 %v500
    %2134 = vmatprep.subr.mxu0 0.0
    %2135 = vmatpush1.msra.mxu0 %v501
    %2136 = vmatprep.subr.mxu0 0.0
    %2137 = vmatpush1.msra.mxu0 %v502
    %2138 = vmatprep.subr.mxu0 0.0
    %2139 = vmatpush1.msra.mxu0 %v503
    %2140 = vmatprep.subr.mxu0 0.0
    %2141 = vmatpush1.msra.mxu0 %v504
    %2142 = vmatprep.subr.mxu0 0.0
    %2143 = vmatpush1.msra.mxu0 %v505
    %2144 = vmatprep.subr.mxu0 0.0
    %2145 = vmatpush1.msra.mxu0 %v506
    %2146 = vmatprep.subr.mxu0 0.0
    %2147 = vmatpush1.msra.mxu0 %v507
    %2148 = vmatprep.subr.mxu0 0.0
    %2149 = vmatpush1.msra.mxu0 %v508
    %2150 = vmatprep.subr.mxu0 0.0
    %2151 = vmatpush1.msra.mxu0 %v509
    %2152 = vmatprep.subr.mxu0 0.0
    %2153 = vmatpush1.msra.mxu0 %v510
    %2154 = vmatprep.subr.mxu0 0.0
    %2155 = vmatpush1.msra.mxu0 %v511
    %2156 = vmatprep.subr.mxu0 0.0
    %2157 = vmatpush1.msra.mxu0 %v512
    %2158 = vmatprep.subr.mxu0 0.0
    %2159 = vmatpush1.msra.mxu0 %v513
    %2160 = vmatprep.mubr.f32.mxu0 %v988
    %2161 = vmatmul.mubr.f32.gmra.mrb[0].mxu0 %v980
    %v2162 = vpop.f32.mrb[0].mxu0
    %v2163 = vadd.f32 %v2093, %v2162
    %v2164 = vpop.f32.mrb[0].mxu0
    %2165 = vdwg.mxu0
    %2166 = vmatprep.subr.mxu0 0.0
    %2167 = vmatpush1.msra.mxu0 %v514
    %2168 = vmatprep.subr.mxu0 0.0
    %2169 = vmatpush1.msra.mxu0 %v515
    %2170 = vmatprep.subr.mxu0 0.0
    %2171 = vmatpush1.msra.mxu0 %v516
    %2172 = vmatprep.subr.mxu0 0.0
    %2173 = vmatpush1.msra.mxu0 %v517
    %2174 = vmatprep.subr.mxu0 0.0
    %2175 = vmatpush1.msra.mxu0 %v518
    %2176 = vmatprep.subr.mxu0 0.0
    %2177 = vmatpush1.msra.mxu0 %v519
    %2178 = vmatprep.subr.mxu0 0.0
    %2179 = vmatpush1.msra.mxu0 %v520
    %2180 = vmatprep.subr.mxu0 0.0
    %2181 = vmatpush1.msra.mxu0 %v521
    %2182 = vmatprep.subr.mxu0 0.0
    %2183 = vmatpush1.msra.mxu0 %v522
    %2184 = vmatprep.subr.mxu0 0.0
    %2185 = vmatpush1.msra.mxu0 %v523
    %2186 = vmatprep.subr.mxu0 0.0
    %2187 = vmatpush1.msra.mxu0 %v524
    %2188 = vmatprep.subr.mxu0 0.0
    %2189 = vmatpush1.msra.mxu0 %v525
    %2190 = vmatprep.subr.mxu0 0.0
    %2191 = vmatpush1.msra.mxu0 %v526
    %2192 = vmatprep.subr.mxu0 0.0
    %2193 = vmatpush1.msra.mxu0 %v527
    %2194 = vmatprep.subr.mxu0 0.0
    %2195 = vmatpush1.msra.mxu0 %v528
    %2196 = vmatprep.subr.mxu0 0.0
    %2197 = vmatpush1.msra.mxu0 %v529
    %2198 = vmatprep.subr.mxu0 0.0
    %2199 = vmatpush1.msra.mxu0 %v530
    %2200 = vmatprep.subr.mxu0 0.0
    %2201 = vmatpush1.msra.mxu0 %v531
    %2202 = vmatprep.subr.mxu0 0.0
    %2203 = vmatpush1.msra.mxu0 %v532
    %2204 = vmatprep.subr.mxu0 0.0
    %2205 = vmatpush1.msra.mxu0 %v533
    %2206 = vmatprep.subr.mxu0 0.0
    %2207 = vmatpush1.msra.mxu0 %v534
    %2208 = vmatprep.subr.mxu0 0.0
    %2209 = vmatpush1.msra.mxu0 %v535
    %2210 = vmatprep.subr.mxu0 0.0
    %2211 = vmatpush1.msra.mxu0 %v536
    %2212 = vmatprep.subr.mxu0 0.0
    %2213 = vmatpush1.msra.mxu0 %v537
    %2214 = vmatprep.subr.mxu0 0.0
    %2215 = vmatpush1.msra.mxu0 %v538
    %2216 = vmatprep.subr.mxu0 0.0
    %2217 = vmatpush1.msra.mxu0 %v539
    %2218 = vmatprep.subr.mxu0 0.0
    %2219 = vmatpush1.msra.mxu0 %v540
    %2220 = vmatprep.subr.mxu0 0.0
    %2221 = vmatpush1.msra.mxu0 %v541
    %2222 = vmatprep.subr.mxu0 0.0
    %2223 = vmatpush1.msra.mxu0 %v542
    %2224 = vmatprep.subr.mxu0 0.0
    %2225 = vmatpush1.msra.mxu0 %v543
    %2226 = vmatprep.subr.mxu0 0.0
    %2227 = vmatpush1.msra.mxu0 %v544
    %2228 = vmatprep.subr.mxu0 0.0
    %2229 = vmatpush1.msra.mxu0 %v545
    %2230 = vmatprep.mubr.f32.mxu0 %v989
    %2231 = vmatmul.mubr.f32.gmra.mrb[0].mxu0 %v987
    %v2232 = vpop.f32.mrb[0].mxu0
    %v2233 = vadd.f32 %v2163, %v2232
    %v2234 = vpop.f32.mrb[0].mxu0
    %2235 = vdwg.mxu0
    %2236 = vmatprep.subr.mxu0 0.0
    %2237 = vmatpush1.msra.mxu0 %v546
    %2238 = vmatprep.subr.mxu0 0.0
    %2239 = vmatpush1.msra.mxu0 %v547
    %2240 = vmatprep.subr.mxu0 0.0
    %2241 = vmatpush1.msra.mxu0 %v548
    %2242 = vmatprep.subr.mxu0 0.0
    %2243 = vmatpush1.msra.mxu0 %v549
    %2244 = vmatprep.subr.mxu0 0.0
    %2245 = vmatpush1.msra.mxu0 %v550
    %2246 = vmatprep.subr.mxu0 0.0
    %2247 = vmatpush1.msra.mxu0 %v551
    %2248 = vmatprep.subr.mxu0 0.0
    %2249 = vmatpush1.msra.mxu0 %v552
    %2250 = vmatprep.subr.mxu0 0.0
    %2251 = vmatpush1.msra.mxu0 %v553
    %2252 = vmatprep.subr.mxu0 0.0
    %2253 = vmatpush1.msra.mxu0 %v554
    %2254 = vmatprep.subr.mxu0 0.0
    %2255 = vmatpush1.msra.mxu0 %v555
    %2256 = vmatprep.subr.mxu0 0.0
    %2257 = vmatpush1.msra.mxu0 %v556
    %2258 = vmatprep.subr.mxu0 0.0
    %2259 = vmatpush1.msra.mxu0 %v557
    %2260 = vmatprep.subr.mxu0 0.0
    %2261 = vmatpush1.msra.mxu0 %v558
    %2262 = vmatprep.subr.mxu0 0.0
    %2263 = vmatpush1.msra.mxu0 %v559
    %2264 = vmatprep.subr.mxu0 0.0
    %2265 = vmatpush1.msra.mxu0 %v560
    %2266 = vmatprep.subr.mxu0 0.0
    %2267 = vmatpush1.msra.mxu0 %v561
    %2268 = vmatprep.subr.mxu0 0.0
    %2269 = vmatpush1.msra.mxu0 %v562
    %2270 = vmatprep.subr.mxu0 0.0
    %2271 = vmatpush1.msra.mxu0 %v563
    %2272 = vmatprep.subr.mxu0 0.0
    %2273 = vmatpush1.msra.mxu0 %v564
    %2274 = vmatprep.subr.mxu0 0.0
    %2275 = vmatpush1.msra.mxu0 %v565
    %2276 = vmatprep.subr.mxu0 0.0
    %2277 = vmatpush1.msra.mxu0 %v566
    %2278 = vmatprep.subr.mxu0 0.0
    %2279 = vmatpush1.msra.mxu0 %v567
    %2280 = vmatprep.subr.mxu0 0.0
    %2281 = vmatpush1.msra.mxu0 %v568
    %2282 = vmatprep.subr.mxu0 0.0
    %2283 = vmatpush1.msra.mxu0 %v569
    %2284 = vmatprep.subr.mxu0 0.0
    %2285 = vmatpush1.msra.mxu0 %v570
    %2286 = vmatprep.subr.mxu0 0.0
    %2287 = vmatpush1.msra.mxu0 %v571
    %2288 = vmatprep.subr.mxu0 0.0
    %2289 = vmatpush1.msra.mxu0 %v572
    %2290 = vmatprep.subr.mxu0 0.0
    %2291 = vmatpush1.msra.mxu0 %v573
    %2292 = vmatprep.subr.mxu0 0.0
    %2293 = vmatpush1.msra.mxu0 %v574
    %2294 = vmatprep.subr.mxu0 0.0
    %2295 = vmatpush1.msra.mxu0 %v575
    %2296 = vmatprep.subr.mxu0 0.0
    %2297 = vmatpush1.msra.mxu0 %v576
    %2298 = vmatprep.subr.mxu0 0.0
    %2299 = vmatpush1.msra.mxu0 %v577
    %2300 = vmatprep.mubr.f32.mxu0 %v1005
    %2301 = vmatmul.mubr.f32.gmra.mrb[0].mxu0 %v997
    %v2302 = vpop.f32.mrb[0].mxu0
    %v2303 = vadd.f32 %v2233, %v2302
    %v2304 = vpop.f32.mrb[0].mxu0
    %2305 = vdwg.mxu0
    %2306 = vmatprep.subr.mxu0 0.0
    %2307 = vmatpush1.msra.mxu0 %v578
    %2308 = vmatprep.subr.mxu0 0.0
    %2309 = vmatpush1.msra.mxu0 %v579
    %2310 = vmatprep.subr.mxu0 0.0
    %2311 = vmatpush1.msra.mxu0 %v580
    %2312 = vmatprep.subr.mxu0 0.0
    %2313 = vmatpush1.msra.mxu0 %v581
    %2314 = vmatprep.subr.mxu0 0.0
    %2315 = vmatpush1.msra.mxu0 %v582
    %2316 = vmatprep.subr.mxu0 0.0
    %2317 = vmatpush1.msra.mxu0 %v583
    %2318 = vmatprep.subr.mxu0 0.0
    %2319 = vmatpush1.msra.mxu0 %v584
    %2320 = vmatprep.subr.mxu0 0.0
    %2321 = vmatpush1.msra.mxu0 %v585
    %2322 = vmatprep.subr.mxu0 0.0
    %2323 = vmatpush1.msra.mxu0 %v586
    %2324 = vmatprep.subr.mxu0 0.0
    %2325 = vmatpush1.msra.mxu0 %v587
    %2326 = vmatprep.subr.mxu0 0.0
    %2327 = vmatpush1.msra.mxu0 %v588
    %2328 = vmatprep.subr.mxu0 0.0
    %2329 = vmatpush1.msra.mxu0 %v589
    %2330 = vmatprep.subr.mxu0 0.0
    %2331 = vmatpush1.msra.mxu0 %v590
    %2332 = vmatprep.subr.mxu0 0.0
    %2333 = vmatpush1.msra.mxu0 %v591
    %2334 = vmatprep.subr.mxu0 0.0
    %2335 = vmatpush1.msra.mxu0 %v592
    %2336 = vmatprep.subr.mxu0 0.0
    %2337 = vmatpush1.msra.mxu0 %v593
    %2338 = vmatprep.subr.mxu0 0.0
    %2339 = vmatpush1.msra.mxu0 %v594
    %2340 = vmatprep.subr.mxu0 0.0
    %2341 = vmatpush1.msra.mxu0 %v595
    %2342 = vmatprep.subr.mxu0 0.0
    %2343 = vmatpush1.msra.mxu0 %v596
    %2344 = vmatprep.subr.mxu0 0.0
    %2345 = vmatpush1.msra.mxu0 %v597
    %2346 = vmatprep.subr.mxu0 0.0
    %2347 = vmatpush1.msra.mxu0 %v598
    %2348 = vmatprep.subr.mxu0 0.0
    %2349 = vmatpush1.msra.mxu0 %v599
    %2350 = vmatprep.subr.mxu0 0.0
    %2351 = vmatpush1.msra.mxu0 %v600
    %2352 = vmatprep.subr.mxu0 0.0
    %2353 = vmatpush1.msra.mxu0 %v601
    %2354 = vmatprep.subr.mxu0 0.0
    %2355 = vmatpush1.msra.mxu0 %v602
    %2356 = vmatprep.subr.mxu0 0.0
    %2357 = vmatpush1.msra.mxu0 %v603
    %2358 = vmatprep.subr.mxu0 0.0
    %2359 = vmatpush1.msra.mxu0 %v604
    %2360 = vmatprep.subr.mxu0 0.0
    %2361 = vmatpush1.msra.mxu0 %v605
    %2362 = vmatprep.subr.mxu0 0.0
    %2363 = vmatpush1.msra.mxu0 %v606
    %2364 = vmatprep.subr.mxu0 0.0
    %2365 = vmatpush1.msra.mxu0 %v607
    %2366 = vmatprep.subr.mxu0 0.0
    %2367 = vmatpush1.msra.mxu0 %v608
    %2368 = vmatprep.subr.mxu0 0.0
    %2369 = vmatpush1.msra.mxu0 %v609
    %2370 = vmatprep.mubr.f32.mxu0 %v1006
    %2371 = vmatmul.mubr.f32.gmra.mrb[0].mxu0 %v1004
    %v2372 = vpop.f32.mrb[0].mxu0
    %v2373 = vadd.f32 %v2303, %v2372
    %v2374 = vpop.f32.mrb[0].mxu0
    %2375 = vdwg.mxu0
    %2376 = vmatprep.subr.mxu0 0.0
    %2377 = vmatpush1.msra.mxu0 %v610
    %2378 = vmatprep.subr.mxu0 0.0
    %2379 = vmatpush1.msra.mxu0 %v611
    %2380 = vmatprep.subr.mxu0 0.0
    %2381 = vmatpush1.msra.mxu0 %v612
    %2382 = vmatprep.subr.mxu0 0.0
    %2383 = vmatpush1.msra.mxu0 %v613
    %2384 = vmatprep.subr.mxu0 0.0
    %2385 = vmatpush1.msra.mxu0 %v614
    %2386 = vmatprep.subr.mxu0 0.0
    %2387 = vmatpush1.msra.mxu0 %v615
    %2388 = vmatprep.subr.mxu0 0.0
    %2389 = vmatpush1.msra.mxu0 %v616
    %2390 = vmatprep.subr.mxu0 0.0
    %2391 = vmatpush1.msra.mxu0 %v617
    %2392 = vmatprep.subr.mxu0 0.0
    %2393 = vmatpush1.msra.mxu0 %v618
    %2394 = vmatprep.subr.mxu0 0.0
    %2395 = vmatpush1.msra.mxu0 %v619
    %2396 = vmatprep.subr.mxu0 0.0
    %2397 = vmatpush1.msra.mxu0 %v620
    %2398 = vmatprep.subr.mxu0 0.0
    %2399 = vmatpush1.msra.mxu0 %v621
    %2400 = vmatprep.subr.mxu0 0.0
    %2401 = vmatpush1.msra.mxu0 %v622
    %2402 = vmatprep.subr.mxu0 0.0
    %2403 = vmatpush1.msra.mxu0 %v623
    %2404 = vmatprep.subr.mxu0 0.0
    %2405 = vmatpush1.msra.mxu0 %v624
    %2406 = vmatprep.subr.mxu0 0.0
    %2407 = vmatpush1.msra.mxu0 %v625
    %2408 = vmatprep.subr.mxu0 0.0
    %2409 = vmatpush1.msra.mxu0 %v626
    %2410 = vmatprep.subr.mxu0 0.0
    %2411 = vmatpush1.msra.mxu0 %v627
    %2412 = vmatprep.subr.mxu0 0.0
    %2413 = vmatpush1.msra.mxu0 %v628
    %2414 = vmatprep.subr.mxu0 0.0
    %2415 = vmatpush1.msra.mxu0 %v629
    %2416 = vmatprep.subr.mxu0 0.0
    %2417 = vmatpush1.msra.mxu0 %v630
    %2418 = vmatprep.subr.mxu0 0.0
    %2419 = vmatpush1.msra.mxu0 %v631
    %2420 = vmatprep.subr.mxu0 0.0
    %2421 = vmatpush1.msra.mxu0 %v632
    %2422 = vmatprep.subr.mxu0 0.0
    %2423 = vmatpush1.msra.mxu0 %v633
    %2424 = vmatprep.subr.mxu0 0.0
    %2425 = vmatpush1.msra.mxu0 %v634
    %2426 = vmatprep.subr.mxu0 0.0
    %2427 = vmatpush1.msra.mxu0 %v635
    %2428 = vmatprep.subr.mxu0 0.0
    %2429 = vmatpush1.msra.mxu0 %v636
    %2430 = vmatprep.subr.mxu0 0.0
    %2431 = vmatpush1.msra.mxu0 %v637
    %2432 = vmatprep.subr.mxu0 0.0
    %2433 = vmatpush1.msra.mxu0 %v638
    %2434 = vmatprep.subr.mxu0 0.0
    %2435 = vmatpush1.msra.mxu0 %v639
    %2436 = vmatprep.subr.mxu0 0.0
    %2437 = vmatpush1.msra.mxu0 %v640
    %2438 = vmatprep.subr.mxu0 0.0
    %2439 = vmatpush1.msra.mxu0 %v641
    %2440 = vmatprep.mubr.f32.mxu0 %v1022
    %2441 = vmatmul.mubr.f32.gmra.mrb[0].mxu0 %v1014
    %v2442 = vpop.f32.mrb[0].mxu0
    %v2443 = vadd.f32 %v2373, %v2442
    %v2444 = vpop.f32.mrb[0].mxu0
    %2445 = vdwg.mxu0
    %2446 = vmatprep.subr.mxu0 0.0
    %2447 = vmatpush1.msra.mxu0 %v642
    %2448 = vmatprep.subr.mxu0 0.0
    %2449 = vmatpush1.msra.mxu0 %v643
    %2450 = vmatprep.subr.mxu0 0.0
    %2451 = vmatpush1.msra.mxu0 %v644
    %2452 = vmatprep.subr.mxu0 0.0
    %2453 = vmatpush1.msra.mxu0 %v645
    %2454 = vmatprep.subr.mxu0 0.0
    %2455 = vmatpush1.msra.mxu0 %v646
    %2456 = vmatprep.subr.mxu0 0.0
    %2457 = vmatpush1.msra.mxu0 %v647
    %2458 = vmatprep.subr.mxu0 0.0
    %2459 = vmatpush1.msra.mxu0 %v648
    %2460 = vmatprep.subr.mxu0 0.0
    %2461 = vmatpush1.msra.mxu0 %v649
    %2462 = vmatprep.subr.mxu0 0.0
    %2463 = vmatpush1.msra.mxu0 %v650
    %2464 = vmatprep.subr.mxu0 0.0
    %2465 = vmatpush1.msra.mxu0 %v651
    %2466 = vmatprep.subr.mxu0 0.0
    %2467 = vmatpush1.msra.mxu0 %v652
    %2468 = vmatprep.subr.mxu0 0.0
    %2469 = vmatpush1.msra.mxu0 %v653
    %2470 = vmatprep.subr.mxu0 0.0
    %2471 = vmatpush1.msra.mxu0 %v654
    %2472 = vmatprep.subr.mxu0 0.0
    %2473 = vmatpush1.msra.mxu0 %v655
    %2474 = vmatprep.subr.mxu0 0.0
    %2475 = vmatpush1.msra.mxu0 %v656
    %2476 = vmatprep.subr.mxu0 0.0
    %2477 = vmatpush1.msra.mxu0 %v657
    %2478 = vmatprep.subr.mxu0 0.0
    %2479 = vmatpush1.msra.mxu0 %v658
    %2480 = vmatprep.subr.mxu0 0.0
    %2481 = vmatpush1.msra.mxu0 %v659
    %2482 = vmatprep.subr.mxu0 0.0
    %2483 = vmatpush1.msra.mxu0 %v660
    %2484 = vmatprep.subr.mxu0 0.0
    %2485 = vmatpush1.msra.mxu0 %v661
    %2486 = vmatprep.subr.mxu0 0.0
    %2487 = vmatpush1.msra.mxu0 %v662
    %2488 = vmatprep.subr.mxu0 0.0
    %2489 = vmatpush1.msra.mxu0 %v663
    %2490 = vmatprep.subr.mxu0 0.0
    %2491 = vmatpush1.msra.mxu0 %v664
    %2492 = vmatprep.subr.mxu0 0.0
    %2493 = vmatpush1.msra.mxu0 %v665
    %2494 = vmatprep.subr.mxu0 0.0
    %2495 = vmatpush1.msra.mxu0 %v666
    %2496 = vmatprep.subr.mxu0 0.0
    %2497 = vmatpush1.msra.mxu0 %v667
    %2498 = vmatprep.subr.mxu0 0.0
    %2499 = vmatpush1.msra.mxu0 %v668
    %2500 = vmatprep.subr.mxu0 0.0
    %2501 = vmatpush1.msra.mxu0 %v669
    %2502 = vmatprep.subr.mxu0 0.0
    %2503 = vmatpush1.msra.mxu0 %v670
    %2504 = vmatprep.subr.mxu0 0.0
    %2505 = vmatpush1.msra.mxu0 %v671
    %2506 = vmatprep.subr.mxu0 0.0
    %2507 = vmatpush1.msra.mxu0 %v672
    %2508 = vmatprep.subr.mxu0 0.0
    %2509 = vmatpush1.msra.mxu0 %v673
    %2510 = vmatprep.mubr.f32.mxu0 %v1023
    %2511 = vmatmul.mubr.f32.gmra.mrb[0].mxu0 %v1021
    %v2512 = vpop.f32.mrb[0].mxu0
    %v2513 = vadd.f32 %v2443, %v2512
    %v2514 = vpop.f32.mrb[0].mxu0
    %2515 = vdwg.mxu0
    %2516 = vmatprep.subr.mxu0 0.0
    %2517 = vmatpush1.msra.mxu0 %v674
    %2518 = vmatprep.subr.mxu0 0.0
    %2519 = vmatpush1.msra.mxu0 %v675
    %2520 = vmatprep.subr.mxu0 0.0
    %2521 = vmatpush1.msra.mxu0 %v676
    %2522 = vmatprep.subr.mxu0 0.0
    %2523 = vmatpush1.msra.mxu0 %v677
    %2524 = vmatprep.subr.mxu0 0.0
    %2525 = vmatpush1.msra.mxu0 %v678
    %2526 = vmatprep.subr.mxu0 0.0
    %2527 = vmatpush1.msra.mxu0 %v679
    %2528 = vmatprep.subr.mxu0 0.0
    %2529 = vmatpush1.msra.mxu0 %v680
    %2530 = vmatprep.subr.mxu0 0.0
    %2531 = vmatpush1.msra.mxu0 %v681
    %2532 = vmatprep.subr.mxu0 0.0
    %2533 = vmatpush1.msra.mxu0 %v682
    %2534 = vmatprep.subr.mxu0 0.0
    %2535 = vmatpush1.msra.mxu0 %v683
    %2536 = vmatprep.subr.mxu0 0.0
    %2537 = vmatpush1.msra.mxu0 %v684
    %2538 = vmatprep.subr.mxu0 0.0
    %2539 = vmatpush1.msra.mxu0 %v685
    %2540 = vmatprep.subr.mxu0 0.0
    %2541 = vmatpush1.msra.mxu0 %v686
    %2542 = vmatprep.subr.mxu0 0.0
    %2543 = vmatpush1.msra.mxu0 %v687
    %2544 = vmatprep.subr.mxu0 0.0
    %2545 = vmatpush1.msra.mxu0 %v688
    %2546 = vmatprep.subr.mxu0 0.0
    %2547 = vmatpush1.msra.mxu0 %v689
    %2548 = vmatprep.subr.mxu0 0.0
    %2549 = vmatpush1.msra.mxu0 %v690
    %2550 = vmatprep.subr.mxu0 0.0
    %2551 = vmatpush1.msra.mxu0 %v691
    %2552 = vmatprep.subr.mxu0 0.0
    %2553 = vmatpush1.msra.mxu0 %v692
    %2554 = vmatprep.subr.mxu0 0.0
    %2555 = vmatpush1.msra.mxu0 %v693
    %2556 = vmatprep.subr.mxu0 0.0
    %2557 = vmatpush1.msra.mxu0 %v694
    %2558 = vmatprep.subr.mxu0 0.0
    %2559 = vmatpush1.msra.mxu0 %v695
    %2560 = vmatprep.subr.mxu0 0.0
    %2561 = vmatpush1.msra.mxu0 %v696
    %2562 = vmatprep.subr.mxu0 0.0
    %2563 = vmatpush1.msra.mxu0 %v697
    %2564 = vmatprep.subr.mxu0 0.0
    %2565 = vmatpush1.msra.mxu0 %v698
    %2566 = vmatprep.subr.mxu0 0.0
    %2567 = vmatpush1.msra.mxu0 %v699
    %2568 = vmatprep.subr.mxu0 0.0
    %2569 = vmatpush1.msra.mxu0 %v700
    %2570 = vmatprep.subr.mxu0 0.0
    %2571 = vmatpush1.msra.mxu0 %v701
    %2572 = vmatprep.subr.mxu0 0.0
    %2573 = vmatpush1.msra.mxu0 %v702
    %2574 = vmatprep.subr.mxu0 0.0
    %2575 = vmatpush1.msra.mxu0 %v703
    %2576 = vmatprep.subr.mxu0 0.0
    %2577 = vmatpush1.msra.mxu0 %v704
    %2578 = vmatprep.subr.mxu0 0.0
    %2579 = vmatpush1.msra.mxu0 %v705
    %2580 = vmatprep.mubr.f32.mxu0 %v1039
    %2581 = vmatmul.mubr.f32.gmra.mrb[0].mxu0 %v1031
    %v2582 = vpop.f32.mrb[0].mxu0
    %v2583 = vadd.f32 %v2513, %v2582
    %v2584 = vpop.f32.mrb[0].mxu0
    %2585 = vdwg.mxu0
    %2586 = vmatprep.subr.mxu0 0.0
    %2587 = vmatpush1.msra.mxu0 %v706
    %2588 = vmatprep.subr.mxu0 0.0
    %2589 = vmatpush1.msra.mxu0 %v707
    %2590 = vmatprep.subr.mxu0 0.0
    %2591 = vmatpush1.msra.mxu0 %v708
    %2592 = vmatprep.subr.mxu0 0.0
    %2593 = vmatpush1.msra.mxu0 %v709
    %2594 = vmatprep.subr.mxu0 0.0
    %2595 = vmatpush1.msra.mxu0 %v710
    %2596 = vmatprep.subr.mxu0 0.0
    %2597 = vmatpush1.msra.mxu0 %v711
    %2598 = vmatprep.subr.mxu0 0.0
    %2599 = vmatpush1.msra.mxu0 %v712
    %2600 = vmatprep.subr.mxu0 0.0
    %2601 = vmatpush1.msra.mxu0 %v713
    %2602 = vmatprep.subr.mxu0 0.0
    %2603 = vmatpush1.msra.mxu0 %v714
    %2604 = vmatprep.subr.mxu0 0.0
    %2605 = vmatpush1.msra.mxu0 %v715
    %2606 = vmatprep.subr.mxu0 0.0
    %2607 = vmatpush1.msra.mxu0 %v716
    %2608 = vmatprep.subr.mxu0 0.0
    %2609 = vmatpush1.msra.mxu0 %v717
    %2610 = vmatprep.subr.mxu0 0.0
    %2611 = vmatpush1.msra.mxu0 %v718
    %2612 = vmatprep.subr.mxu0 0.0
    %2613 = vmatpush1.msra.mxu0 %v719
    %2614 = vmatprep.subr.mxu0 0.0
    %2615 = vmatpush1.msra.mxu0 %v720
    %2616 = vmatprep.subr.mxu0 0.0
    %2617 = vmatpush1.msra.mxu0 %v721
    %2618 = vmatprep.subr.mxu0 0.0
    %2619 = vmatpush1.msra.mxu0 %v722
    %2620 = vmatprep.subr.mxu0 0.0
    %2621 = vmatpush1.msra.mxu0 %v723
    %2622 = vmatprep.subr.mxu0 0.0
    %2623 = vmatpush1.msra.mxu0 %v724
    %2624 = vmatprep.subr.mxu0 0.0
    %2625 = vmatpush1.msra.mxu0 %v725
    %2626 = vmatprep.subr.mxu0 0.0
    %2627 = vmatpush1.msra.mxu0 %v726
    %2628 = vmatprep.subr.mxu0 0.0
    %2629 = vmatpush1.msra.mxu0 %v727
    %2630 = vmatprep.subr.mxu0 0.0
    %2631 = vmatpush1.msra.mxu0 %v728
    %2632 = vmatprep.subr.mxu0 0.0
    %2633 = vmatpush1.msra.mxu0 %v729
    %2634 = vmatprep.subr.mxu0 0.0
    %2635 = vmatpush1.msra.mxu0 %v730
    %2636 = vmatprep.subr.mxu0 0.0
    %2637 = vmatpush1.msra.mxu0 %v731
    %2638 = vmatprep.subr.mxu0 0.0
    %2639 = vmatpush1.msra.mxu0 %v732
    %2640 = vmatprep.subr.mxu0 0.0
    %2641 = vmatpush1.msra.mxu0 %v733
    %2642 = vmatprep.subr.mxu0 0.0
    %2643 = vmatpush1.msra.mxu0 %v734
    %2644 = vmatprep.subr.mxu0 0.0
    %2645 = vmatpush1.msra.mxu0 %v735
    %2646 = vmatprep.subr.mxu0 0.0
    %2647 = vmatpush1.msra.mxu0 %v736
    %2648 = vmatprep.subr.mxu0 0.0
    %2649 = vmatpush1.msra.mxu0 %v737
    %2650 = vmatprep.mubr.f32.mxu0 %v1040
    %2651 = vmatmul.mubr.f32.gmra.mrb[0].mxu0 %v1038
    %v2652 = vpop.f32.mrb[0].mxu0
    %v2653 = vadd.f32 %v2583, %v2652
    %v2654 = vpop.f32.mrb[0].mxu0
    %2655 = vdwg.mxu0
    %2656 = vmatprep.subr.mxu0 0.0
    %2657 = vmatpush1.msra.mxu0 %v738
    %2658 = vmatprep.subr.mxu0 0.0
    %2659 = vmatpush1.msra.mxu0 %v739
    %2660 = vmatprep.subr.mxu0 0.0
    %2661 = vmatpush1.msra.mxu0 %v740
    %2662 = vmatprep.subr.mxu0 0.0
    %2663 = vmatpush1.msra.mxu0 %v741
    %2664 = vmatprep.subr.mxu0 0.0
    %2665 = vmatpush1.msra.mxu0 %v742
    %2666 = vmatprep.subr.mxu0 0.0
    %2667 = vmatpush1.msra.mxu0 %v743
    %2668 = vmatprep.subr.mxu0 0.0
    %2669 = vmatpush1.msra.mxu0 %v744
    %2670 = vmatprep.subr.mxu0 0.0
    %2671 = vmatpush1.msra.mxu0 %v745
    %2672 = vmatprep.subr.mxu0 0.0
    %2673 = vmatpush1.msra.mxu0 %v746
    %2674 = vmatprep.subr.mxu0 0.0
    %2675 = vmatpush1.msra.mxu0 %v747
    %2676 = vmatprep.subr.mxu0 0.0
    %2677 = vmatpush1.msra.mxu0 %v748
    %2678 = vmatprep.subr.mxu0 0.0
    %2679 = vmatpush1.msra.mxu0 %v749
    %2680 = vmatprep.subr.mxu0 0.0
    %2681 = vmatpush1.msra.mxu0 %v750
    %2682 = vmatprep.subr.mxu0 0.0
    %2683 = vmatpush1.msra.mxu0 %v751
    %2684 = vmatprep.subr.mxu0 0.0
    %2685 = vmatpush1.msra.mxu0 %v752
    %2686 = vmatprep.subr.mxu0 0.0
    %2687 = vmatpush1.msra.mxu0 %v753
    %2688 = vmatprep.subr.mxu0 0.0
    %2689 = vmatpush1.msra.mxu0 %v754
    %2690 = vmatprep.subr.mxu0 0.0
    %2691 = vmatpush1.msra.mxu0 %v755
    %2692 = vmatprep.subr.mxu0 0.0
    %2693 = vmatpush1.msra.mxu0 %v756
    %2694 = vmatprep.subr.mxu0 0.0
    %2695 = vmatpush1.msra.mxu0 %v757
    %2696 = vmatprep.subr.mxu0 0.0
    %2697 = vmatpush1.msra.mxu0 %v758
    %2698 = vmatprep.subr.mxu0 0.0
    %2699 = vmatpush1.msra.mxu0 %v759
    %2700 = vmatprep.subr.mxu0 0.0
    %2701 = vmatpush1.msra.mxu0 %v760
    %2702 = vmatprep.subr.mxu0 0.0
    %2703 = vmatpush1.msra.mxu0 %v761
    %2704 = vmatprep.subr.mxu0 0.0
    %2705 = vmatpush1.msra.mxu0 %v762
    %2706 = vmatprep.subr.mxu0 0.0
    %2707 = vmatpush1.msra.mxu0 %v763
    %2708 = vmatprep.subr.mxu0 0.0
    %2709 = vmatpush1.msra.mxu0 %v764
    %2710 = vmatprep.subr.mxu0 0.0
    %2711 = vmatpush1.msra.mxu0 %v765
    %2712 = vmatprep.subr.mxu0 0.0
    %2713 = vmatpush1.msra.mxu0 %v766
    %2714 = vmatprep.subr.mxu0 0.0
    %2715 = vmatpush1.msra.mxu0 %v767
    %2716 = vmatprep.subr.mxu0 0.0
    %2717 = vmatpush1.msra.mxu0 %v768
    %2718 = vmatprep.subr.mxu0 0.0
    %2719 = vmatpush1.msra.mxu0 %v769
    %2720 = vmatprep.mubr.f32.mxu0 %v1056
    %2721 = vmatmul.mubr.f32.gmra.mrb[0].mxu0 %v1048
    %v2722 = vpop.f32.mrb[0].mxu0
    %v2723 = vadd.f32 %v2653, %v2722
    %v2724 = vpop.f32.mrb[0].mxu0
    %2725 = vdwg.mxu0
    %2726 = vmatprep.subr.mxu0 0.0
    %2727 = vmatpush1.msra.mxu0 %v770
    %2728 = vmatprep.subr.mxu0 0.0
    %2729 = vmatpush1.msra.mxu0 %v771
    %2730 = vmatprep.subr.mxu0 0.0
    %2731 = vmatpush1.msra.mxu0 %v772
    %2732 = vmatprep.subr.mxu0 0.0
    %2733 = vmatpush1.msra.mxu0 %v773
    %2734 = vmatprep.subr.mxu0 0.0
    %2735 = vmatpush1.msra.mxu0 %v774
    %2736 = vmatprep.subr.mxu0 0.0
    %2737 = vmatpush1.msra.mxu0 %v775
    %2738 = vmatprep.subr.mxu0 0.0
    %2739 = vmatpush1.msra.mxu0 %v776
    %2740 = vmatprep.subr.mxu0 0.0
    %2741 = vmatpush1.msra.mxu0 %v777
    %2742 = vmatprep.subr.mxu0 0.0
    %2743 = vmatpush1.msra.mxu0 %v778
    %2744 = vmatprep.subr.mxu0 0.0
    %2745 = vmatpush1.msra.mxu0 %v779
    %2746 = vmatprep.subr.mxu0 0.0
    %2747 = vmatpush1.msra.mxu0 %v780
    %2748 = vmatprep.subr.mxu0 0.0
    %2749 = vmatpush1.msra.mxu0 %v781
    %2750 = vmatprep.subr.mxu0 0.0
    %2751 = vmatpush1.msra.mxu0 %v782
    %2752 = vmatprep.subr.mxu0 0.0
    %2753 = vmatpush1.msra.mxu0 %v783
    %2754 = vmatprep.subr.mxu0 0.0
    %2755 = vmatpush1.msra.mxu0 %v784
    %2756 = vmatprep.subr.mxu0 0.0
    %2757 = vmatpush1.msra.mxu0 %v785
    %2758 = vmatprep.subr.mxu0 0.0
    %2759 = vmatpush1.msra.mxu0 %v786
    %2760 = vmatprep.subr.mxu0 0.0
    %2761 = vmatpush1.msra.mxu0 %v787
    %2762 = vmatprep.subr.mxu0 0.0
    %2763 = vmatpush1.msra.mxu0 %v788
    %2764 = vmatprep.subr.mxu0 0.0
    %2765 = vmatpush1.msra.mxu0 %v789
    %2766 = vmatprep.subr.mxu0 0.0
    %2767 = vmatpush1.msra.mxu0 %v790
    %2768 = vmatprep.subr.mxu0 0.0
    %2769 = vmatpush1.msra.mxu0 %v791
    %2770 = vmatprep.subr.mxu0 0.0
    %2771 = vmatpush1.msra.mxu0 %v792
    %2772 = vmatprep.subr.mxu0 0.0
    %2773 = vmatpush1.msra.mxu0 %v793
    %2774 = vmatprep.subr.mxu0 0.0
    %2775 = vmatpush1.msra.mxu0 %v794
    %2776 = vmatprep.subr.mxu0 0.0
    %2777 = vmatpush1.msra.mxu0 %v795
    %2778 = vmatprep.subr.mxu0 0.0
    %2779 = vmatpush1.msra.mxu0 %v796
    %2780 = vmatprep.subr.mxu0 0.0
    %2781 = vmatpush1.msra.mxu0 %v797
    %2782 = vmatprep.subr.mxu0 0.0
    %2783 = vmatpush1.msra.mxu0 %v798
    %2784 = vmatprep.subr.mxu0 0.0
    %2785 = vmatpush1.msra.mxu0 %v799
    %2786 = vmatprep.subr.mxu0 0.0
    %2787 = vmatpush1.msra.mxu0 %v800
    %2788 = vmatprep.subr.mxu0 0.0
    %2789 = vmatpush1.msra.mxu0 %v801
    %2790 = vmatprep.mubr.f32.mxu0 %v1057
    %2791 = vmatmul.mubr.f32.gmra.mrb[0].mxu0 %v1055
    %v2792 = vpop.f32.mrb[0].mxu0
    %v2793 = vadd.f32 %v2723, %v2792
    %v2794 = vpop.f32.mrb[0].mxu0
    %2795 = vdwg.mxu0
    %2796 = vmatprep.subr.mxu0 0.0
    %2797 = vmatpush1.msra.mxu0 %v802
    %2798 = vmatprep.subr.mxu0 0.0
    %2799 = vmatpush1.msra.mxu0 %v803
    %2800 = vmatprep.subr.mxu0 0.0
    %2801 = vmatpush1.msra.mxu0 %v804
    %2802 = vmatprep.subr.mxu0 0.0
    %2803 = vmatpush1.msra.mxu0 %v805
    %2804 = vmatprep.subr.mxu0 0.0
    %2805 = vmatpush1.msra.mxu0 %v806
    %2806 = vmatprep.subr.mxu0 0.0
    %2807 = vmatpush1.msra.mxu0 %v807
    %2808 = vmatprep.subr.mxu0 0.0
    %2809 = vmatpush1.msra.mxu0 %v808
    %2810 = vmatprep.subr.mxu0 0.0
    %2811 = vmatpush1.msra.mxu0 %v809
    %2812 = vmatprep.subr.mxu0 0.0
    %2813 = vmatpush1.msra.mxu0 %v810
    %2814 = vmatprep.subr.mxu0 0.0
    %2815 = vmatpush1.msra.mxu0 %v811
    %2816 = vmatprep.subr.mxu0 0.0
    %2817 = vmatpush1.msra.mxu0 %v812
    %2818 = vmatprep.subr.mxu0 0.0
    %2819 = vmatpush1.msra.mxu0 %v813
    %2820 = vmatprep.subr.mxu0 0.0
    %2821 = vmatpush1.msra.mxu0 %v814
    %2822 = vmatprep.subr.mxu0 0.0
    %2823 = vmatpush1.msra.mxu0 %v815
    %2824 = vmatprep.subr.mxu0 0.0
    %2825 = vmatpush1.msra.mxu0 %v816
    %2826 = vmatprep.subr.mxu0 0.0
    %2827 = vmatpush1.msra.mxu0 %v817
    %2828 = vmatprep.subr.mxu0 0.0
    %2829 = vmatpush1.msra.mxu0 %v818
    %2830 = vmatprep.subr.mxu0 0.0
    %2831 = vmatpush1.msra.mxu0 %v819
    %2832 = vmatprep.subr.mxu0 0.0
    %2833 = vmatpush1.msra.mxu0 %v820
    %2834 = vmatprep.subr.mxu0 0.0
    %2835 = vmatpush1.msra.mxu0 %v821
    %2836 = vmatprep.subr.mxu0 0.0
    %2837 = vmatpush1.msra.mxu0 %v822
    %2838 = vmatprep.subr.mxu0 0.0
    %2839 = vmatpush1.msra.mxu0 %v823
    %2840 = vmatprep.subr.mxu0 0.0
    %2841 = vmatpush1.msra.mxu0 %v824
    %2842 = vmatprep.subr.mxu0 0.0
    %2843 = vmatpush1.msra.mxu0 %v825
    %2844 = vmatprep.subr.mxu0 0.0
    %2845 = vmatpush1.msra.mxu0 %v826
    %2846 = vmatprep.subr.mxu0 0.0
    %2847 = vmatpush1.msra.mxu0 %v827
    %2848 = vmatprep.subr.mxu0 0.0
    %2849 = vmatpush1.msra.mxu0 %v828
    %2850 = vmatprep.subr.mxu0 0.0
    %2851 = vmatpush1.msra.mxu0 %v829
    %2852 = vmatprep.subr.mxu0 0.0
    %2853 = vmatpush1.msra.mxu0 %v830
    %2854 = vmatprep.subr.mxu0 0.0
    %2855 = vmatpush1.msra.mxu0 %v831
    %2856 = vmatprep.subr.mxu0 0.0
    %2857 = vmatpush1.msra.mxu0 %v832
    %2858 = vmatprep.subr.mxu0 0.0
    %2859 = vmatpush1.msra.mxu0 %v833
    %2860 = vmatprep.mubr.f32.mxu0 %v1065
    %2861 = vmatmul.mubr.f32.gmra.mrb[0].mxu0 %v1064
    %v2862 = vpop.f32.mrb[0].mxu0
    %v2863 = vadd.f32 %v2793, %v2862
    %v2864 = vpop.f32.mrb[0].mxu0
    %2865 = vdwg.mxu0
    %v2866 = vmax.f32 %v2863, 0.0
    %v2867 = vld [vmem:[%s3] sm:$0xff]
    %v2868 = vld [vmem:[%s3 + $0x8] sm:$0xff]
    %v2869 = vld [vmem:[%s3 + $0x10] sm:$0xff]
    %v2870 = vld [vmem:[%s3 + $0x18] sm:$0xff]
    %v2871 = vld [vmem:[%s3 + $0x20] sm:$0xff]
    %v2872 = vld [vmem:[%s3 + $0x28] sm:$0xff]
    %v2873 = vld [vmem:[%s3 + $0x30] sm:$0xff]
    %v2874 = vld [vmem:[%s3 + $0x38] sm:$0xff]
    %v2875 = vld [vmem:[%s3 + $0x40] sm:$0xff]
    %v2876 = vld [vmem:[%s3 + $0x48] sm:$0xff]
    %v2877 = vld [vmem:[%s3 + $0x50] sm:$0xff]
    %v2878 = vld [vmem:[%s3 + $0x58] sm:$0xff]
    %v2879 = vld [vmem:[%s3 + $0x60] sm:$0xff]
    %v2880 = vld [vmem:[%s3 + $0x68] sm:$0xff]
    %v2881 = vld [vmem:[%s3 + $0x70] sm:$0xff]
    %v2882 = vld [vmem:[%s3 + $0x78] sm:$0xff]
    %v2883 = vld [vmem:[%s4] sm:$0x1]
    %v2885 = vlaneseq
    %v2886 = vshrl.u32 %v2885, 7
    %v2887 = vsub.s32 0, %v2886
    %v2888 = vrot.slane %v2883, %v2887
    %2890 = vmatprep.subr.mxu0 0.0
    %2891 = vmatpush1.msra.mxu0 %v2867
    %2892 = vmatprep.subr.mxu0 0.0
    %2893 = vmatpush1.msra.mxu0 %v2868
    %2894 = vmatprep.subr.mxu0 0.0
    %2895 = vmatpush1.msra.mxu0 %v2869
    %2896 = vmatprep.subr.mxu0 0.0
    %2897 = vmatpush1.msra.mxu0 %v2870
    %2898 = vmatprep.subr.mxu0 0.0
    %2899 = vmatpush1.msra.mxu0 %v2871
    %2900 = vmatprep.subr.mxu0 0.0
    %2901 = vmatpush1.msra.mxu0 %v2872
    %2902 = vmatprep.subr.mxu0 0.0
    %2903 = vmatpush1.msra.mxu0 %v2873
    %2904 = vmatprep.subr.mxu0 0.0
    %2905 = vmatpush1.msra.mxu0 %v2874
    %2906 = vmatprep.subr.mxu0 0.0
    %2907 = vmatpush1.msra.mxu0 %v2875
    %2908 = vmatprep.subr.mxu0 0.0
    %2909 = vmatpush1.msra.mxu0 %v2876
    %2910 = vmatprep.subr.mxu0 0.0
    %2911 = vmatpush1.msra.mxu0 %v2877
    %2912 = vmatprep.subr.mxu0 0.0
    %2913 = vmatpush1.msra.mxu0 %v2878
    %2914 = vmatprep.subr.mxu0 0.0
    %2915 = vmatpush1.msra.mxu0 %v2879
    %2916 = vmatprep.subr.mxu0 0.0
    %2917 = vmatpush1.msra.mxu0 %v2880
    %2918 = vmatprep.subr.mxu0 0.0
    %2919 = vmatpush1.msra.mxu0 %v2881
    %2920 = vmatprep.subr.mxu0 0.0
    %2921 = vmatpush1.msra.mxu0 %v2882
    %2922 = vmatprep.subr.mxu0 0.0
    %2923 = vmatpush1.msra.mxu0 0.0
    %2924 = vmatprep.subr.mxu0 0.0
    %2925 = vmatpush1.msra.mxu0 0.0
    %2926 = vmatprep.subr.mxu0 0.0
    %2927 = vmatpush1.msra.mxu0 0.0
    %2928 = vmatprep.subr.mxu0 0.0
    %2929 = vmatpush1.msra.mxu0 0.0
    %2930 = vmatprep.subr.mxu0 0.0
    %2931 = vmatpush1.msra.mxu0 0.0
    %2932 = vmatprep.subr.mxu0 0.0
    %2933 = vmatpush1.msra.mxu0 0.0
    %2934 = vmatprep.subr.mxu0 0.0
    %2935 = vmatpush1.msra.mxu0 0.0
    %2936 = vmatprep.subr.mxu0 0.0
    %2937 = vmatpush1.msra.mxu0 0.0
    %2938 = vmatprep.subr.mxu0 0.0
    %2939 = vmatpush1.msra.mxu0 0.0
    %2940 = vmatprep.subr.mxu0 0.0
    %2941 = vmatpush1.msra.mxu0 0.0
    %2942 = vmatprep.subr.mxu0 0.0
    %2943 = vmatpush1.msra.mxu0 0.0
    %2944 = vmatprep.subr.mxu0 0.0
    %2945 = vmatpush1.msra.mxu0 0.0
    %2946 = vmatprep.subr.mxu0 0.0
    %2947 = vmatpush1.msra.mxu0 0.0
    %2948 = vmatprep.subr.mxu0 0.0
    %2949 = vmatpush1.msra.mxu0 0.0
    %2950 = vmatprep.subr.mxu0 0.0
    %2951 = vmatpush1.msra.mxu0 0.0
    %2952 = vmatprep.subr.mxu0 0.0
    %2953 = vmatpush1.msra.mxu0 0.0
    %2954 = vmatprep.mubr.f32.mxu0 0.0
    %2955 = vmatmul.mubr.f32.gmra.mrb[0].mxu0 %v2866
    %v2956 = vpop.f32.mrb[0].mxu0
    %v2957 = vadd.f32 %v2888, %v2956
    %v2958 = vpop.f32.mrb[0].mxu0
    %2959 = vdwg.mxu0
    %vm2960 = vcmask 1041408
    %v2961 = vsel %vm2960, %v2957, -inf
    %2962 = vmax.xlane.f32.xlu0 %v2961
    %v2963 = vpop.xlane.xlu0 %2962
    %v2964 = vsub.f32 %v2957, %v2963
    %v2965 = vmul.f32 %v2964, 1.442695
    %v2966 = vpow.pop %v2965
    %v2967 = vsel %vm2960, %v2966, 0.0
    %2968 = vadd.xlane.f32.xlu0 %v2967
    %v2969 = vpop.xlane.xlu0 %2968
    %v2970 = vlog2.pop %v2969
    %v2971 = vmul.f32 %v2970, 0.6931472
    %v2972 = vsub.f32 %v2964, %v2971
    %2973 = vst [vmem:[#allocation2] sm:$0x3] %v2972
    // Predicated region
    $region22: #{net_forward.5} parent=1 // pred_check
      _
    $region23: #{net_forward.5} parent=1 // pred_check_branch
      %2975 = sbr.rel (0) target = $region25
    $region24: #{net_forward.5} parent=1 // pred_region
      %s2977 = ssub.s32 32, 32
      %2978 = vsyncadd [#allocation3], %s2977
      %s2980 = sshll.u32 [#allocation2], 4
      %s2981 = int_to_ptr.vmem [resolvable:$true] %s2980
      %2983 = dma.vmem_to_hbm [thread:$0]  %s2981, 32, %s5, [#allocation3]
    $region25: #{net_forward.5} parent=1 // pred_fallthru
      _
    // Predicated region
    $region26: #{net_forward.5} parent=1 // pred_check
      _
    $region27: #{net_forward.5} parent=1 // pred_check_branch
      %2985 = sbr.rel (0) target = $region29
    $region28: #{net_forward.5} parent=1 // pred_region
      %2986 = dma.done [#allocation3], 32
    $region29: #{net_forward.5} parent=1 // pred_fallthru
      _
    %2987 = vsyncpa [#allocation3], 1

</llo_original>
